<compile_context>
chip_gen: v7x
topology: tpu7x:2x2x1
jax: 0.10.0
libtpu: 0.0.40
codegen_flags: <defaults>
</compile_context>

<pallas_src>
import functools

import jax
import jax.numpy as jnp
from jax.experimental import pallas as pl
from jax.experimental.pallas import tpu as pltpu


def criss_cross_kernel(x_ref, w_ref, b_ref, gamma_ref, o_ref,
                       xn_ref, qkv_ref, qkvt_ref, *, H, W, C, C8, Ht):
    """One (image-tile, query-row-tile) grid step of criss-cross attention.

    x_ref    : (Bt, C, H*W)    f32  NCHW image block (lane-dense, full image)
    w_ref    : (C, QKV)        bf16 fused [v|q|k] 1x1-conv weights
    b_ref    : (1, QKV)        f32  fused bias
    gamma_ref: (1,)            f32  (SMEM)
    o_ref    : (Bt, C, Ht*W)   f32  NCHW output tile (query rows h0..h0+Ht)
    xn_ref   : (Bt, H, W, C)   f32  scratch: full image, NHWC (residual)
    qkv_ref  : (Bt, H, W, QKV) bf16 scratch: fused projections, H-major
    qkvt_ref : (Bt, W, H, QKV) bf16 scratch: fused projections, W-major
    """
    Bt = x_ref.shape[0]
    QKV = C + 2 * C8
    h_idx = pl.program_id(1)

    # ---------------- per-image prologue (query-row tile 0) -----------------
    @pl.when(h_idx == 0)
    def _():
        # NCHW -> NHWC relayout in VMEM (replaces two wrapper HBM passes).
        x_nchw = x_ref[...].reshape(Bt, C, H, W)
        x4 = jnp.swapaxes(jnp.transpose(x_nchw, (0, 2, 1, 3)), -1, -2)
        xn_ref[...] = x4                                         # (Bt,H,W,C)
        # Fused [v|q|k] 1x1 convolutions: one bf16 MXU matmul, f32 accumulate.
        x2 = x4.reshape(Bt * H * W, C).astype(jnp.bfloat16)
        qkv = jnp.dot(x2, w_ref[...], preferred_element_type=jnp.float32)
        qkv = (qkv + b_ref[0]).reshape(Bt, H, W, QKV)
        qkv_ref[...] = qkv.astype(jnp.bfloat16)
        # Single W-major relayout per image for the column branch.
        qkvt_ref[...] = jnp.transpose(qkv, (0, 2, 1, 3)).astype(jnp.bfloat16)

    # --------------------------- per-tile slices -----------------------------
    if Ht == H:                       # single query-row tile: static reads
        qkv_tile = qkv_ref[...]
        x_tile = xn_ref[...]
    else:
        h0 = pl.multiple_of(h_idx * Ht, Ht)
        qkv_tile = qkv_ref[:, pl.ds(h0, Ht)]
        x_tile = xn_ref[:, pl.ds(h0, Ht)]

    v = qkv_tile[..., 0:C]                       # (Bt, Ht, W, C)   bf16
    q = qkv_tile[..., C:C + C8]                  # (Bt, Ht, W, C8)  bf16
    k = qkv_tile[..., C + C8:QKV]                # (Bt, Ht, W, C8)  bf16
    v_col = qkvt_ref[..., 0:C]                   # (Bt, W, H, C)    bf16 (full H)
    k_col = qkvt_ref[..., C + C8:QKV]            # (Bt, W, H, C8)   bf16 (full H)

    # ------------------------------ energies ---------------------------------
    if C8 >= 8:
        # Production path: contraction over C8 channels on the MXU.
        e_w = jnp.einsum("bhwd,bhud->bhwu", q, k,
                         preferred_element_type=jnp.float32)
        q_col = jnp.transpose(q.astype(jnp.float32),
                              (0, 2, 1, 3)).astype(jnp.bfloat16)
        e_h = jnp.einsum("bwhd,bwgd->bwhg", q_col, k_col,
                         preferred_element_type=jnp.float32)
    else:
        # Tiny C8 (test shapes): K=C8<=4 MXU matmuls are pathological; do C8
        # broadcast multiply-adds on the VPU instead (f32).
        qf = q.astype(jnp.float32)
        kf_sw = jnp.swapaxes(k.astype(jnp.float32), -1, -2)       # (Bt,Ht,C8,W)
        q_col = jnp.transpose(qf, (0, 2, 1, 3))                   # (Bt,W,Ht,C8)
        kc_sw = jnp.swapaxes(k_col.astype(jnp.float32), -1, -2)   # (Bt,W,C8,H)
        e_w = qf[..., 0:1] * kf_sw[:, :, 0:1, :]
        e_h = q_col[..., 0:1] * kc_sw[:, :, 0:1, :]
        for d in range(1, C8):
            e_w = e_w + qf[..., d:d + 1] * kf_sw[:, :, d:d + 1, :]
            e_h = e_h + q_col[..., d:d + 1] * kc_sw[:, :, d:d + 1, :]
    # e_w: (Bt, Ht, W, W)   e_h: (Bt, W, Ht, H)

    # -inf on the g == h diagonal of the column branch (matches INF()); the
    # row branch is intentionally unmasked, as in the PyTorch module.
    g_ids = jax.lax.broadcasted_iota(jnp.int32, (Ht, H), 1)
    h_ids = jax.lax.broadcasted_iota(jnp.int32, (Ht, H), 0) + h_idx * Ht
    e_h = jnp.where((g_ids == h_ids)[None, None, :, :], -jnp.inf, e_h)

    # ----- split softmax over the concatenated (H + W) axis (never built) ----
    m = jnp.maximum(jnp.transpose(jnp.max(e_h, axis=-1), (0, 2, 1)),
                    jnp.max(e_w, axis=-1))                        # (Bt, Ht, W)
    m_t = jnp.transpose(m, (0, 2, 1))                             # (Bt, W, Ht)
    p_h = jnp.exp(e_h - m_t[..., None])                           # (Bt, W, Ht, H)
    p_w = jnp.exp(e_w - m[..., None])                             # (Bt, Ht, W, W)
    denom = (jnp.transpose(jnp.sum(p_h, axis=-1), (0, 2, 1))
             + jnp.sum(p_w, axis=-1))                             # (Bt, Ht, W)
    inv = pl.reciprocal(denom, approx=True)                       # EUP reciprocal

    # ----- value aggregation: bf16 MXU batched matmuls, f32 accumulation -----
    out_h = jnp.einsum("zhg,zgc->zhc",
                       p_h.astype(jnp.bfloat16).reshape(Bt * W, Ht, H),
                       v_col.reshape(Bt * W, H, C),
                       preferred_element_type=jnp.float32)        # (Bt*W, Ht, C)
    out_h = jnp.transpose(out_h.reshape(Bt, W, Ht, C), (0, 2, 1, 3))
    out_w = jnp.einsum("zwu,zuc->zwc",
                       p_w.astype(jnp.bfloat16).reshape(Bt * Ht, W, W),
                       v.reshape(Bt * Ht, W, C),
                       preferred_element_type=jnp.float32)        # (Bt*Ht, W, C)
    out_w = out_w.reshape(Bt, Ht, W, C)

    # ----- epilogue: softmax normalization folded into the gamma scale -------
    gamma = gamma_ref[0]
    out = (gamma * inv[..., None]) * (out_h + out_w) + x_tile     # (Bt, Ht, W, C)

    # NHWC tile -> NCHW lane-dense store (Ht*W is a multiple of 128 or full).
    out_nchw = jnp.transpose(jnp.swapaxes(out, -1, -2), (0, 2, 1, 3))
    o_ref[...] = out_nchw.reshape(Bt, C, Ht * W).astype(o_ref.dtype)


def _divisors(n):
    return [d for d in range(1, n + 1) if n % d == 0]


def _vmem_limit_bytes():
    """Generation-aware scoped-VMEM limit: ~48 MiB on v7x (64 MiB physical),
    64 MiB on v5e / v6e (128 MiB physical)."""
    cap = 128 * 1024 * 1024
    try:
        cap = int(getattr(pltpu.get_tpu_info(), "vmem_capacity_bytes", cap))
    except Exception:
        pass
    return min(64 * 1024 * 1024, int(0.75 * cap))


def _vmem_bytes_estimate(bt, ht, H, W, C, C8):
    """Rough upper bound on the VMEM live set of one grid step."""
    QKV = C + 2 * C8
    f32, bf16 = 4, 2
    io = 2 * bt * C * H * W * f32 + 2 * bt * C * ht * W * f32      # 2x-buffered blocks
    scr = bt * H * W * (C * f32 + 2 * QKV * bf16)                  # persistent scratch
    trans = bt * (ht * W * W * (2 * f32 + bf16)                    # e_w / p_w
                  + W * ht * H * (2 * f32 + bf16)                  # e_h / p_h
                  + 4 * ht * W * C * f32                           # out_h/out_w/out/x_tile
                  + ht * W * QKV * (f32 + bf16))                   # qkv tile views
    return io + scr + trans


def _choose_tiling(B, H, W, C, C8, vmem_limit):
    """Pick (images-per-step, query-rows-per-step) from the VMEM budget with
    hard preferences for >= 2 total grid steps (pipelining) and >= 2 image
    steps on the parallel axis (feeds both v7x TensorCores)."""
    budget = int(0.8 * vmem_limit)            # headroom for Mosaic scratch
    candidates = []
    for bt in _divisors(B):
        for ht in _divisors(H):
            if ht != H and (ht * W) % 128 != 0:
                continue                      # keep the output block lane-dense
            est = _vmem_bytes_estimate(bt, ht, H, W, C, C8)
            steps_img = B // bt
            steps = steps_img * (H // ht)
            key = (est <= budget,
                   steps >= 2,
                   steps_img >= min(B, 2),
                   bt * ht if est <= budget else -est,
                   ht)
            candidates.append((key, (bt, ht)))
    candidates.sort(key=lambda c: c[0])
    return candidates[-1][1]


def criss_cross_attention(x_nchw, params):
    """x_nchw: (B, C, H, W) float32 — same layout as the PyTorch module."""
    wq, bq, wk, bk, wv, bv, gamma = params
    B, C, H, W = x_nchw.shape
    C8 = wq.shape[1]
    QKV = C + 2 * C8

    vmem_limit = _vmem_limit_bytes()
    bt, ht = _choose_tiling(B, H, W, C, C8, vmem_limit)

    # Lane-dense NCHW slab: (B, C, H*W).  No NCHW<->NHWC HBM transpose passes
    # at the XLA level; the relayout happens once per image inside the kernel.
    x_flat = x_nchw.astype(jnp.float32).reshape(B, C, H * W)

    # Fused 1x1-conv weights ordered [v | q | k] so the largest slice (v)
    # starts at lane offset 0.  Weights are bf16 MXU operands; bias stays f32.
    w_all = jnp.concatenate([wv, wq, wk], axis=1).astype(jnp.bfloat16)     # (C, QKV)
    b_all = jnp.concatenate([bv, bq, bk], axis=0).astype(jnp.float32).reshape(1, QKV)
    gamma_s = gamma.reshape(1).astype(jnp.float32)

    kernel = functools.partial(criss_cross_kernel, H=H, W=W, C=C, C8=C8, Ht=ht)

    out_flat = pl.pallas_call(
        kernel,
        out_shape=jax.ShapeDtypeStruct((B, C, H * W), jnp.float32),
        grid_spec=pltpu.PrefetchScalarGridSpec(
            num_scalar_prefetch=0,
            grid=(B // bt, H // ht),
            in_specs=[
                # Full image per step: the column branch needs every row's
                # k / v.  Its block index is constant along the h axis, so the
                # pipeline only fetches it once per image.
                pl.BlockSpec((bt, C, H * W), lambda b, h: (b, 0, 0)),
                pl.BlockSpec((C, QKV), lambda b, h: (0, 0)),
                pl.BlockSpec((1, QKV), lambda b, h: (0, 0)),
                pl.BlockSpec(memory_space=pltpu.MemorySpace.SMEM),         # gamma
            ],
            out_specs=pl.BlockSpec((bt, C, ht * W), lambda b, h: (b, 0, h)),
            scratch_shapes=[
                pltpu.VMEM((bt, H, W, C), jnp.float32),       # NHWC image (residual)
                pltpu.VMEM((bt, H, W, QKV), jnp.bfloat16),    # fused qkv, H-major
                pltpu.VMEM((bt, W, H, QKV), jnp.bfloat16),    # fused qkv, W-major
            ],
        ),
        compiler_params=pltpu.CompilerParams(
            # Image axis feeds v7x's two TensorCores; the h-tile axis carries
            # the per-image scratches, so it must stay "arbitrary".
            dimension_semantics=("parallel", "arbitrary"),
            vmem_limit_bytes=vmem_limit,
        ),
    )(x_flat, w_all, b_all, gamma_s)

    return out_flat.reshape(B, C, H, W)


def reference(x_nchw, params):
    """Pure-JAX f32 reference mirroring the PyTorch forward semantics."""
    wq, bq, wk, bk, wv, bv, gamma = params
    B, C, H, W = x_nchw.shape
    x = jnp.transpose(x_nchw, (0, 2, 3, 1))                    # NHWC
    q = x @ wq + bq
    k = x @ wk + bk
    v = x @ wv + bv
    e_h = jnp.einsum("bhwd,bgwd->bhwg", q, k)
    e_h = jnp.where(jnp.eye(H, dtype=bool)[:, None, :], -jnp.inf, e_h)
    e_w = jnp.einsum("bhwd,bhud->bhwu", q, k)
    att = jax.nn.softmax(jnp.concatenate([e_h, e_w], axis=-1), axis=-1)
    att_h, att_w = att[..., :H], att[..., H:]
    out_h = jnp.einsum("bhwg,bgwc->bhwc", att_h, v)
    out_w = jnp.einsum("bhwu,bhuc->bhwc", att_w, v)
    out = gamma[0] * (out_h + out_w) + x
    return jnp.transpose(out, (0, 3, 1, 2))


if __name__ == "__main__":
    B, C, H, W = 2, 16, 16, 16          # in_dim = 16  ->  q/k channels = 2
    C8 = C // 8
    key = jax.random.PRNGKey(0)
    k1, k2, k3, k4, k5, k6, k7, k8 = jax.random.split(key, 8)

    x = jax.random.normal(k1, (B, C, H, W), jnp.float32)

    # Deterministic parameters (shapes from the module's __init__); Conv2d 1x1
    # weights stored as (C_in, C_out) matrices.
    wq = 0.1 * jax.random.normal(k2, (C, C8), jnp.float32)
    bq = 0.1 * jax.random.normal(k3, (C8,), jnp.float32)
    wk = 0.1 * jax.random.normal(k4, (C, C8), jnp.float32)
    bk = 0.1 * jax.random.normal(k5, (C8,), jnp.float32)
    wv = 0.1 * jax.random.normal(k6, (C, C), jnp.float32)
    bv = 0.1 * jax.random.normal(k7, (C,), jnp.float32)
    # nn.Parameter(torch.zeros(1)) in the module; use a nonzero deterministic
    # value so the attention path actually contributes to the output.
    gamma = 0.5 + 0.1 * jax.random.normal(k8, (1,), jnp.float32)

    params = (wq, bq, wk, bk, wv, bv, gamma)

    out = criss_cross_attention(x, params)
    out = jax.block_until_ready(out)

    ref = reference(x, params)
    assert out.shape == (B, C, H, W)
    # Tolerance accounts for bf16 MXU operands (q/k/v projections, attention
    # maps, value aggregation) and the EUP approximate reciprocal; the f32
    # residual path is exact.
    assert jnp.allclose(out, ref, atol=3e-2, rtol=3e-2), (
        f"max abs err = {jnp.max(jnp.abs(out - ref))}")
    print("KERNEL_OK")
</pallas_src>

<mosaic_0001>
module attributes {stable_mosaic.version = 11 : i64} {
  func.func @criss_cross_kernel(%arg0: i32, %arg1: i32, %arg2: memref<1x16x256xf32, #tpu.memory_space<vmem>>, %arg3: memref<16x20xbf16, #tpu.memory_space<vmem>>, %arg4: memref<1x20xf32, #tpu.memory_space<vmem>>, %arg5: memref<1xf32, #tpu.memory_space<smem>>, %arg6: memref<1x16x256xf32, #tpu.memory_space<vmem>>, %arg7: memref<1x16x16x16xf32, #tpu.memory_space<vmem>>, %arg8: memref<1x16x16x20xbf16, #tpu.memory_space<vmem>>, %arg9: memref<1x16x16x20xbf16, #tpu.memory_space<vmem>>) attributes {dimension_semantics = [#tpu.dimension_semantics<parallel>, #tpu.dimension_semantics<arbitrary>], iteration_bounds = array<i64: 2, 1>, scalar_prefetch = 0 : i64, scratch_operands = 3 : i64, tpu.core_type = #tpu.core_type<tc>, window_params = [{transform_indices = @transform_0, window_bounds = array<i64: 1, 16, 256>}, {pipeline_mode = #tpu.pipeline_mode<synchronous>, transform_indices = @transform_1, window_bounds = array<i64: 16, 20>}, {pipeline_mode = #tpu.pipeline_mode<synchronous>, transform_indices = @transform_2, window_bounds = array<i64: 1, 20>}, {transform_indices = @transform_3, window_bounds = array<i64: 1>}, {transform_indices = @transform_4, window_bounds = array<i64: 1, 16, 256>}]} {
    %c0_i32 = arith.constant 0 : i32
    %0 = arith.cmpi eq, %arg1, %c0_i32 : i32
    %1 = arith.extui %0 : i1 to i32
    %c0_i32_0 = arith.constant 0 : i32
    %2 = arith.cmpi ne, %1, %c0_i32_0 : i32
    scf.if %2 {
      %c0_25 = arith.constant 0 : index
      %c0_26 = arith.constant 0 : index
      %c0_27 = arith.constant 0 : index
      %90 = vector.load %arg2[%c0_25, %c0_26, %c0_27] : memref<1x16x256xf32, #tpu.memory_space<vmem>>, vector<1x16x256xf32>
      %91 = vector.shape_cast %90 : vector<1x16x256xf32> to vector<1x16x16x16xf32>
      %92 = tpu.transpose %91, [0, 2, 1, 3] : vector<1x16x16x16xf32> -> vector<1x16x16x16xf32>
      %93 = tpu.transpose %92, [0, 1, 3, 2] : vector<1x16x16x16xf32> -> vector<1x16x16x16xf32>
      %c0_28 = arith.constant 0 : index
      %c0_29 = arith.constant 0 : index
      %c0_30 = arith.constant 0 : index
      %c0_31 = arith.constant 0 : index
      %94 = vector.load %arg7[%c0_28, %c0_29, %c0_30, %c0_31] : memref<1x16x16x16xf32, #tpu.memory_space<vmem>>, vector<1x16x16x16xf32>
      tpu.vector_store %arg7[%c0_28, %c0_29, %c0_30, %c0_31], %93 {strides = array<i32>} : memref<1x16x16x16xf32, #tpu.memory_space<vmem>>, vector<1x16x16x16xf32>,
      %95 = vector.shape_cast %93 : vector<1x16x16x16xf32> to vector<256x16xf32>
      %96 = arith.truncf %95 : vector<256x16xf32> to vector<256x16xbf16>
      %c0_32 = arith.constant 0 : index
      %c0_33 = arith.constant 0 : index
      %97 = vector.load %arg3[%c0_32, %c0_33] : memref<16x20xbf16, #tpu.memory_space<vmem>>, vector<16x20xbf16>
      %cst_34 = arith.constant dense<0.000000e+00> : vector<256x20xf32>
      %98 = tpu.matmul %96, %97, %cst_34 {dimension_numbers = #tpu.dot_dimension_numbers<[1], [0], [0], [1], [0, 0, 1, 1], [], []>} : vector<256x16xbf16>, vector<16x20xbf16>, vector<256x20xf32> -> vector<256x20xf32>
      %c0_35 = arith.constant 0 : index
      %c0_36 = arith.constant 0 : index
      %99 = vector.load %arg4[%c0_35, %c0_36] : memref<1x20xf32, #tpu.memory_space<vmem>>, vector<1x20xf32>
      %100 = vector.shape_cast %99 : vector<1x20xf32> to vector<20xf32>
      %101 = vector.shape_cast %100 : vector<20xf32> to vector<1x20xf32>
      %102 = vector.broadcast %101 : vector<1x20xf32> to vector<256x20xf32>
      %103 = arith.addf %98, %102 : vector<256x20xf32>
      %104 = vector.shape_cast %103 : vector<256x20xf32> to vector<1x16x16x20xf32>
      %105 = arith.truncf %104 : vector<1x16x16x20xf32> to vector<1x16x16x20xbf16>
      %c0_37 = arith.constant 0 : index
      %c0_38 = arith.constant 0 : index
      %c0_39 = arith.constant 0 : index
      %c0_40 = arith.constant 0 : index
      %106 = vector.load %arg8[%c0_37, %c0_38, %c0_39, %c0_40] : memref<1x16x16x20xbf16, #tpu.memory_space<vmem>>, vector<1x16x16x20xbf16>
      tpu.vector_store %arg8[%c0_37, %c0_38, %c0_39, %c0_40], %105 {strides = array<i32>} : memref<1x16x16x20xbf16, #tpu.memory_space<vmem>>, vector<1x16x16x20xbf16>,
      %107 = tpu.transpose %104, [0, 2, 1, 3] : vector<1x16x16x20xf32> -> vector<1x16x16x20xf32>
      %108 = arith.truncf %107 : vector<1x16x16x20xf32> to vector<1x16x16x20xbf16>
      %c0_41 = arith.constant 0 : index
      %c0_42 = arith.constant 0 : index
      %c0_43 = arith.constant 0 : index
      %c0_44 = arith.constant 0 : index
      %109 = vector.load %arg9[%c0_41, %c0_42, %c0_43, %c0_44] : memref<1x16x16x20xbf16, #tpu.memory_space<vmem>>, vector<1x16x16x20xbf16>
      tpu.vector_store %arg9[%c0_41, %c0_42, %c0_43, %c0_44], %108 {strides = array<i32>} : memref<1x16x16x20xbf16, #tpu.memory_space<vmem>>, vector<1x16x16x20xbf16>,
    } else {
    }
    %c0 = arith.constant 0 : index
    %c0_1 = arith.constant 0 : index
    %c0_2 = arith.constant 0 : index
    %c0_3 = arith.constant 0 : index
    %3 = vector.load %arg8[%c0, %c0_1, %c0_2, %c0_3] : memref<1x16x16x20xbf16, #tpu.memory_space<vmem>>, vector<1x16x16x20xbf16>
    %c0_4 = arith.constant 0 : index
    %c0_5 = arith.constant 0 : index
    %c0_6 = arith.constant 0 : index
    %c0_7 = arith.constant 0 : index
    %4 = vector.load %arg7[%c0_4, %c0_5, %c0_6, %c0_7] : memref<1x16x16x16xf32, #tpu.memory_space<vmem>>, vector<1x16x16x16xf32>
    %5 = vector.extract_strided_slice %3 {offsets = [0, 0, 0, 0], sizes = [1, 16, 16, 16], strides = [1, 1, 1, 1]} : vector<1x16x16x20xbf16> to vector<1x16x16x16xbf16>
    %6 = vector.extract_strided_slice %3 {offsets = [0, 0, 0, 16], sizes = [1, 16, 16, 2], strides = [1, 1, 1, 1]} : vector<1x16x16x20xbf16> to vector<1x16x16x2xbf16>
    %7 = vector.extract_strided_slice %3 {offsets = [0, 0, 0, 18], sizes = [1, 16, 16, 2], strides = [1, 1, 1, 1]} : vector<1x16x16x20xbf16> to vector<1x16x16x2xbf16>
    %c0_8 = arith.constant 0 : index
    %c0_9 = arith.constant 0 : index
    %c0_10 = arith.constant 0 : index
    %c0_11 = arith.constant 0 : index
    %8 = vector.load %arg9[%c0_8, %c0_9, %c0_10, %c0_11] : memref<1x16x16x20xbf16, #tpu.memory_space<vmem>>, vector<1x16x16x16xbf16>
    %c0_12 = arith.constant 0 : index
    %c0_13 = arith.constant 0 : index
    %c0_14 = arith.constant 0 : index
    %c18 = arith.constant 18 : index
    %9 = vector.load %arg9[%c0_12, %c0_13, %c0_14, %c18] : memref<1x16x16x20xbf16, #tpu.memory_space<vmem>>, vector<1x16x16x2xbf16>
    %10 = arith.extf %6 : vector<1x16x16x2xbf16> to vector<1x16x16x2xf32>
    %11 = arith.extf %7 : vector<1x16x16x2xbf16> to vector<1x16x16x2xf32>
    %12 = tpu.transpose %11, [0, 1, 3, 2] : vector<1x16x16x2xf32> -> vector<1x16x2x16xf32>
    %13 = tpu.transpose %10, [0, 2, 1, 3] : vector<1x16x16x2xf32> -> vector<1x16x16x2xf32>
    %14 = arith.extf %9 : vector<1x16x16x2xbf16> to vector<1x16x16x2xf32>
    %15 = tpu.transpose %14, [0, 1, 3, 2] : vector<1x16x16x2xf32> -> vector<1x16x2x16xf32>
    %16 = vector.extract_strided_slice %10 {offsets = [0, 0, 0, 0], sizes = [1, 16, 16, 1], strides = [1, 1, 1, 1]} : vector<1x16x16x2xf32> to vector<1x16x16x1xf32>
    %17 = vector.extract_strided_slice %12 {offsets = [0, 0, 0, 0], sizes = [1, 16, 1, 16], strides = [1, 1, 1, 1]} : vector<1x16x2x16xf32> to vector<1x16x1x16xf32>
    %18 = vector.broadcast %16 : vector<1x16x16x1xf32> to vector<1x16x16x16xf32>
    %19 = vector.broadcast %17 : vector<1x16x1x16xf32> to vector<1x16x16x16xf32>
    %20 = arith.mulf %18, %19 : vector<1x16x16x16xf32>
    %21 = vector.extract_strided_slice %13 {offsets = [0, 0, 0, 0], sizes = [1, 16, 16, 1], strides = [1, 1, 1, 1]} : vector<1x16x16x2xf32> to vector<1x16x16x1xf32>
    %22 = vector.extract_strided_slice %15 {offsets = [0, 0, 0, 0], sizes = [1, 16, 1, 16], strides = [1, 1, 1, 1]} : vector<1x16x2x16xf32> to vector<1x16x1x16xf32>
    %23 = vector.broadcast %21 : vector<1x16x16x1xf32> to vector<1x16x16x16xf32>
    %24 = vector.broadcast %22 : vector<1x16x1x16xf32> to vector<1x16x16x16xf32>
    %25 = arith.mulf %23, %24 : vector<1x16x16x16xf32>
    %26 = vector.extract_strided_slice %10 {offsets = [0, 0, 0, 1], sizes = [1, 16, 16, 1], strides = [1, 1, 1, 1]} : vector<1x16x16x2xf32> to vector<1x16x16x1xf32>
    %27 = vector.extract_strided_slice %12 {offsets = [0, 0, 1, 0], sizes = [1, 16, 1, 16], strides = [1, 1, 1, 1]} : vector<1x16x2x16xf32> to vector<1x16x1x16xf32>
    %28 = vector.broadcast %26 : vector<1x16x16x1xf32> to vector<1x16x16x16xf32>
    %29 = vector.broadcast %27 : vector<1x16x1x16xf32> to vector<1x16x16x16xf32>
    %30 = arith.mulf %28, %29 : vector<1x16x16x16xf32>
    %31 = arith.addf %20, %30 : vector<1x16x16x16xf32>
    %32 = vector.extract_strided_slice %13 {offsets = [0, 0, 0, 1], sizes = [1, 16, 16, 1], strides = [1, 1, 1, 1]} : vector<1x16x16x2xf32> to vector<1x16x16x1xf32>
    %33 = vector.extract_strided_slice %15 {offsets = [0, 0, 1, 0], sizes = [1, 16, 1, 16], strides = [1, 1, 1, 1]} : vector<1x16x2x16xf32> to vector<1x16x1x16xf32>
    %34 = vector.broadcast %32 : vector<1x16x16x1xf32> to vector<1x16x16x16xf32>
    %35 = vector.broadcast %33 : vector<1x16x1x16xf32> to vector<1x16x16x16xf32>
    %36 = arith.mulf %34, %35 : vector<1x16x16x16xf32>
    %37 = arith.addf %25, %36 : vector<1x16x16x16xf32>
    %38 = tpu.iota {dimensions = array<i32: 1>} : vector<16x16xi32>
    %39 = tpu.iota {dimensions = array<i32: 0>} : vector<16x16xi32>
    %c16_i32 = arith.constant 16 : i32
    %40 = arith.muli %arg1, %c16_i32 : i32
    %41 = vector.broadcast %40 : i32 to vector<16x16xi32>
    %42 = arith.addi %39, %41 : vector<16x16xi32>
    %43 = arith.cmpi eq, %38, %42 : vector<16x16xi32>
    %44 = vector.shape_cast %43 : vector<16x16xi1> to vector<1x1x16x16xi1>
    %cst = arith.constant 0xFF800000 : f32
    %45 = vector.shape_cast %44 : vector<1x1x16x16xi1> to vector<1x1x16x16xi1>
    %46 = vector.broadcast %45 : vector<1x1x16x16xi1> to vector<1x16x16x16xi1>
    %47 = vector.broadcast %cst : f32 to vector<1x16x16x16xf32>
    %48 = arith.select %46, %47, %37 : vector<1x16x16x16xi1>, vector<1x16x16x16xf32>
    %cst_15 = arith.constant dense<0xFF800000> : vector<1x16x16xf32>
    %49 = vector.multi_reduction <maximumf>, %48, %cst_15 [3] : vector<1x16x16x16xf32> to vector<1x16x16xf32>
    %50 = tpu.transpose %49, [0, 2, 1] : vector<1x16x16xf32> -> vector<1x16x16xf32>
    %cst_16 = arith.constant dense<0xFF800000> : vector<1x16x16xf32>
    %51 = vector.multi_reduction <maximumf>, %31, %cst_16 [3] : vector<1x16x16x16xf32> to vector<1x16x16xf32>
    %52 = arith.maximumf %50, %51 : vector<1x16x16xf32>
    %53 = tpu.transpose %52, [0, 2, 1] : vector<1x16x16xf32> -> vector<1x16x16xf32>
    %54 = vector.shape_cast %53 : vector<1x16x16xf32> to vector<1x16x16x1xf32>
    %55 = vector.broadcast %54 : vector<1x16x16x1xf32> to vector<1x16x16x16xf32>
    %56 = arith.subf %48, %55 : vector<1x16x16x16xf32>
    %57 = math.exp %56 : vector<1x16x16x16xf32>
    %58 = vector.shape_cast %52 : vector<1x16x16xf32> to vector<1x16x16x1xf32>
    %59 = vector.broadcast %58 : vector<1x16x16x1xf32> to vector<1x16x16x16xf32>
    %60 = arith.subf %31, %59 : vector<1x16x16x16xf32>
    %61 = math.exp %60 : vector<1x16x16x16xf32>
    %cst_17 = arith.constant dense<0.000000e+00> : vector<1x16x16xf32>
    %62 = vector.multi_reduction <add>, %57, %cst_17 [3] : vector<1x16x16x16xf32> to vector<1x16x16xf32>
    %63 = tpu.transpose %62, [0, 2, 1] : vector<1x16x16xf32> -> vector<1x16x16xf32>
    %cst_18 = arith.constant dense<0.000000e+00> : vector<1x16x16xf32>
    %64 = vector.multi_reduction <add>, %61, %cst_18 [3] : vector<1x16x16x16xf32> to vector<1x16x16xf32>
    %65 = arith.addf %63, %64 : vector<1x16x16xf32>
    %66 = tpu.reciprocal %65 {approx = true} : vector<1x16x16xf32> -> vector<1x16x16xf32>
    %67 = arith.truncf %57 : vector<1x16x16x16xf32> to vector<1x16x16x16xbf16>
    %68 = vector.shape_cast %67 : vector<1x16x16x16xbf16> to vector<16x16x16xbf16>
    %69 = vector.shape_cast %8 : vector<1x16x16x16xbf16> to vector<16x16x16xbf16>
    "tpu.trace_start"() <{level = 10 : i32, message = "zhg,zgc->zhc"}> : () -> ()
    %cst_19 = arith.constant dense<0.000000e+00> : vector<16x16x16xf32>
    %70 = tpu.matmul %68, %69, %cst_19 {dimension_numbers = #tpu.dot_dimension_numbers<[2], [1], [1], [2], [0, 0, 0, 1, 1, 2], [0], [0]>} : vector<16x16x16xbf16>, vector<16x16x16xbf16>, vector<16x16x16xf32> -> vector<16x16x16xf32>
    "tpu.trace_stop"() : () -> ()
    %71 = vector.shape_cast %70 : vector<16x16x16xf32> to vector<1x16x16x16xf32>
    %72 = tpu.transpose %71, [0, 2, 1, 3] : vector<1x16x16x16xf32> -> vector<1x16x16x16xf32>
    %73 = arith.truncf %61 : vector<1x16x16x16xf32> to vector<1x16x16x16xbf16>
    %74 = vector.shape_cast %73 : vector<1x16x16x16xbf16> to vector<16x16x16xbf16>
    %75 = vector.shape_cast %5 : vector<1x16x16x16xbf16> to vector<16x16x16xbf16>
    "tpu.trace_start"() <{level = 10 : i32, message = "zwu,zuc->zwc"}> : () -> ()
    %cst_20 = arith.constant dense<0.000000e+00> : vector<16x16x16xf32>
    %76 = tpu.matmul %74, %75, %cst_20 {dimension_numbers = #tpu.dot_dimension_numbers<[2], [1], [1], [2], [0, 0, 0, 1, 1, 2], [0], [0]>} : vector<16x16x16xbf16>, vector<16x16x16xbf16>, vector<16x16x16xf32> -> vector<16x16x16xf32>
    "tpu.trace_stop"() : () -> ()
    %77 = vector.shape_cast %76 : vector<16x16x16xf32> to vector<1x16x16x16xf32>
    %c0_21 = arith.constant 0 : index
    %78 = memref.load %arg5[%c0_21] : memref<1xf32, #tpu.memory_space<smem>>
    %79 = vector.shape_cast %66 : vector<1x16x16xf32> to vector<1x16x16x1xf32>
    %80 = vector.broadcast %78 : f32 to vector<1x16x16x1xf32>
    %81 = arith.mulf %80, %79 : vector<1x16x16x1xf32>
    %82 = arith.addf %72, %77 : vector<1x16x16x16xf32>
    %83 = vector.broadcast %81 : vector<1x16x16x1xf32> to vector<1x16x16x16xf32>
    %84 = arith.mulf %83, %82 : vector<1x16x16x16xf32>
    %85 = arith.addf %84, %4 : vector<1x16x16x16xf32>
    %86 = tpu.transpose %85, [0, 1, 3, 2] : vector<1x16x16x16xf32> -> vector<1x16x16x16xf32>
    %87 = tpu.transpose %86, [0, 2, 1, 3] : vector<1x16x16x16xf32> -> vector<1x16x16x16xf32>
    %88 = vector.shape_cast %87 : vector<1x16x16x16xf32> to vector<1x16x256xf32>
    %c0_22 = arith.constant 0 : index
    %c0_23 = arith.constant 0 : index
    %c0_24 = arith.constant 0 : index
    %89 = vector.load %arg6[%c0_22, %c0_23, %c0_24] : memref<1x16x256xf32, #tpu.memory_space<vmem>>, vector<1x16x256xf32>
    tpu.vector_store %arg6[%c0_22, %c0_23, %c0_24], %88 {strides = array<i32>} : memref<1x16x256xf32, #tpu.memory_space<vmem>>, vector<1x16x256xf32>,
    return
  }
  func.func @transform_0(%arg0: i32, %arg1: i32) -> (i32, i32, i32) {
    %c0_i32 = arith.constant 0 : i32
    %c0_i32_0 = arith.constant 0 : i32
    %c0_i32_1 = arith.constant 0 : i32
    return %arg0, %c0_i32, %c0_i32_0 : i32, i32, i32
  }
  func.func @transform_1(%arg0: i32, %arg1: i32) -> (i32, i32) {
    %c0_i32 = arith.constant 0 : i32
    %c0_i32_0 = arith.constant 0 : i32
    %c0_i32_1 = arith.constant 0 : i32
    return %c0_i32, %c0_i32_0 : i32, i32
  }
  func.func @transform_2(%arg0: i32, %arg1: i32) -> (i32, i32) {
    %c0_i32 = arith.constant 0 : i32
    %c0_i32_0 = arith.constant 0 : i32
    %c0_i32_1 = arith.constant 0 : i32
    return %c0_i32, %c0_i32_0 : i32, i32
  }
  func.func @transform_3(%arg0: i32, %arg1: i32) -> i32 {
    %c0_i32 = arith.constant 0 : i32
    %c0_i32_0 = arith.constant 0 : i32
    return %c0_i32 : i32
  }
  func.func @transform_4(%arg0: i32, %arg1: i32) -> (i32, i32, i32) {
    %c0_i32 = arith.constant 0 : i32
    %c0_i32_0 = arith.constant 0 : i32
    return %arg0, %c0_i32, %arg1 : i32, i32, i32
  }
}

</mosaic_0001>

<llo_original>
// kernel: tpu_custom_call.1
$region0: #{tpu_custom_call.1}
  #allocation0 [shape = 'u32[]', space=smem, size = 0x4, offset = 0x4, fixed_abs, tag = 'smem constant byte address 0x4 - core index']
  #allocation1 [shape = 'u32[144,128]{1,0:T(1,128)}', space=vmem, size = 0x12000, scoped, tag = 'internal scratch']
  #allocation2 [shape = 'f32[1,16,16,16]{3,2,1,0:T(8,128)}', space=vmem, size = 0x20000, scoped, tag = 'scratch operand']
  #allocation3 [shape = 'bf16[1,16,16,20]{3,2,1,0:T(16,128)(2,1)}', space=vmem, size = 0x10000, scoped, tag = 'scratch operand']
  #allocation4 [shape = 'bf16[1,16,16,20]{3,2,1,0:T(16,128)(2,1)}', space=vmem, size = 0x10000, scoped, tag = 'scratch operand']
  #allocation5 [shape = 'f32[1]{0:T(128)S(6)}', space=smem, size = 0x200, scoped, tag = 'scoped memory for tpu_custom_call.1']
  %s0 = inlined_call_operand.hbm [shape: f32[2,16,256], index: 0, kind: input, shape index: {}]
  %s1 = inlined_call_operand.hbm [shape: bf16[16,20], index: 1, kind: input, shape index: {}]
  %s2 = inlined_call_operand.hbm [shape: f32[1,20], index: 2, kind: input, shape index: {}]
  %s3 = inlined_call_operand.<no memory space> [shape: f32[1], index: 3, kind: input, shape index: {}]
  %s4 = inlined_call_operand.hbm [shape: f32[2,16,256], index: 4, kind: output, shape index: {}]
  %s5 = sld [smem:[#allocation0]]
  $region65: #{tpu_custom_call.1} parent=0
    _
  %s7 = ssub.s32 1, %s5
  %s8 = scalar_select 0, %s7, %s5
  %9 = sst [smem:[#allocation5]] %s3
  $region1: #{tpu_custom_call.1} parent=0
    #allocation6 [shape = 'u8[32768]{0}', space=vmem, size = 0x8000, scoped, tag = 'input window, operand 0']
    #allocation7 [shape = 's32[2]{0}', space=sflag, size = 0x8, scoped, tag = 'scoped memory for tpu_custom_call.1']
    #allocation8 [shape = 's32[2]{0}', space=sflag, size = 0x8, scoped, tag = 'scoped memory for tpu_custom_call.1']
    #allocation9 [shape = 'u8[4096]{0}', space=vmem, size = 0x1000, scoped, tag = 'input window, operand 1, single buffered']
    #allocation10 [shape = 's32[1]{0}', space=sflag, size = 0x4, scoped, tag = 'scoped memory for tpu_custom_call.1']
    #allocation11 [shape = 'u8[512]{0}', space=vmem, size = 0x400, scoped, tag = 'input window, operand 2, single buffered']
    #allocation12 [shape = 'u8[32768]{0}', space=vmem, size = 0x8000, scoped, tag = 'output window, operand 0']
    %10 = vsyncpa [#allocation7], 0
    %s11 = scalar_lea.sflag [#allocation7], 1
    %12 = vsyncpa %s11, 0
    %13 = vsyncpa [#allocation10], 0
    %14 = vsyncpa [#allocation8], 0
    %s15 = scalar_lea.sflag [#allocation8], 1
    %16 = vsyncpa %s15, 0
    loop: start=0, step=1, limit=4
    $region2: #{tpu_custom_call.1} parent=1 // loop_pre_header
      _
    $region3: #{tpu_custom_call.1} parent=1 // loop_header
      %s18 = sphi 0, %s22
      %p19 = scmp.ge.s32.totalorder %s18, 4
      %s25 = sphi 0, %s37
      %s26 = sphi 0, %s33
      %s27 = sphi 0, %s25
      %s28 = sphi 0, %s26
      %s29 = sphi 0, %s27
      %s30 = sphi 0, %s28
      %s40 = sphi 0, %s42
      %s43 = sphi 0, %s40
      %s44 = sphi 0, %s43
      %s60 = sphi 0, %s44
      %s64 = sphi 0, %s64
      %s66 = sphi 0, %s64
      %s67 = sphi 0, %s66
      %s81 = sphi 0, %s67
      %s85 = sphi 0, %s85
      %s87 = sphi 0, %s85
      %s88 = sphi 0, %s87
      %s102 = sphi 0, %s88
      %s106 = sphi 0, %s106
      %s108 = sphi 0, %s106
      %s109 = sphi 0, %s108
      %s123 = sphi 0, %s109
      %s131 = sphi 0, %s133
      %s134 = sphi 0, %s131
      %s135 = sphi 0, %s134
      %s151 = sphi 0, %s135
    $region4: #{tpu_custom_call.1} parent=1 // loop_header_branch
      %21 = sbr.rel (%p19) target = $region8
    $region5: #{tpu_custom_call.1} parent=1 // loop_body
      %s23 = ssub.s32 %s18, 1
      %s24 = ssub.s32 %s18, 2
      %s31 = sadd.s32 1, %s26
      %p32 = scmp.ge.s32.totalorder %s31, 1
      %s33 = scalar_select %p32, 0, %s31
      %s34 = sadd.s32 1, %s25
      %s35 = scalar_select %p32, %s34, %s25
      %p36 = scmp.ge.s32.totalorder %s35, 2
      %s37 = scalar_select %p36, 0, %s35
      %s38 = ssub.s32 %s25, %s37
      %p39 = scmp.eq.s32.totalorder %s38, 0
      %s41 = sadd.s32 %s40, 1
      %s42 = scalar_select %p39, %s40, %s41
      %p45 = pneg %p39
      %p46 = scmp.eq.s32.totalorder %s18, 1
      %p47 = por %p45, %p46
      %p48 = scmp.ne.s32.totalorder %s40, %s43
      %p49 = scmp.eq.s32.totalorder %s18, 0
      %p50 = por %p48, %p49
      %p51 = scmp.ne.s32.totalorder %s40, %s43
      %p52 = scmp.eq.s32.totalorder %s23, 1
      %p53 = por %p51, %p52
      %p54 = scmp.ne.s32.totalorder %s43, %s44
      %p55 = scmp.eq.s32.totalorder %s23, 0
      %p56 = por %p54, %p55
      %p57 = scmp.ne.s32.totalorder %s43, %s44
      %p58 = scmp.eq.s32.totalorder %s24, 1
      %p59 = por %p57, %p58
      %p61 = scmp.ne.s32.totalorder %s44, %s60
      %p62 = scmp.eq.s32.totalorder %s24, 0
      %p63 = por %p61, %p62
      %s65 = sadd.s32 %s64, 1
      %p68 = scmp.eq.s32.totalorder %s18, 1
      %p69 = scmp.ne.s32.totalorder %s64, %s66
      %p70 = scmp.eq.s32.totalorder %s18, 0
      %p71 = por %p69, %p70
      %p72 = scmp.ne.s32.totalorder %s64, %s66
      %p73 = scmp.eq.s32.totalorder %s23, 1
      %p74 = por %p72, %p73
      %p75 = scmp.ne.s32.totalorder %s66, %s67
      %p76 = scmp.eq.s32.totalorder %s23, 0
      %p77 = por %p75, %p76
      %p78 = scmp.ne.s32.totalorder %s66, %s67
      %p79 = scmp.eq.s32.totalorder %s24, 1
      %p80 = por %p78, %p79
      %p82 = scmp.ne.s32.totalorder %s67, %s81
      %p83 = scmp.eq.s32.totalorder %s24, 0
      %p84 = por %p82, %p83
      %s86 = sadd.s32 %s85, 1
      %p89 = scmp.eq.s32.totalorder %s18, 1
      %p90 = scmp.ne.s32.totalorder %s85, %s87
      %p91 = scmp.eq.s32.totalorder %s18, 0
      %p92 = por %p90, %p91
      %p93 = scmp.ne.s32.totalorder %s85, %s87
      %p94 = scmp.eq.s32.totalorder %s23, 1
      %p95 = por %p93, %p94
      %p96 = scmp.ne.s32.totalorder %s87, %s88
      %p97 = scmp.eq.s32.totalorder %s23, 0
      %p98 = por %p96, %p97
      %p99 = scmp.ne.s32.totalorder %s87, %s88
      %p100 = scmp.eq.s32.totalorder %s24, 1
      %p101 = por %p99, %p100
      %p103 = scmp.ne.s32.totalorder %s88, %s102
      %p104 = scmp.eq.s32.totalorder %s24, 0
      %p105 = por %p103, %p104
      %s107 = sadd.s32 %s106, 1
      %p110 = scmp.eq.s32.totalorder %s18, 1
      %p111 = scmp.ne.s32.totalorder %s106, %s108
      %p112 = scmp.eq.s32.totalorder %s18, 0
      %p113 = por %p111, %p112
      %p114 = scmp.ne.s32.totalorder %s106, %s108
      %p115 = scmp.eq.s32.totalorder %s23, 1
      %p116 = por %p114, %p115
      %p117 = scmp.ne.s32.totalorder %s108, %s109
      %p118 = scmp.eq.s32.totalorder %s23, 0
      %p119 = por %p117, %p118
      %p120 = scmp.ne.s32.totalorder %s108, %s109
      %p121 = scmp.eq.s32.totalorder %s24, 1
      %p122 = por %p120, %p121
      %p124 = scmp.ne.s32.totalorder %s109, %s123
      %p125 = scmp.eq.s32.totalorder %s24, 0
      %p126 = por %p124, %p125
      %s127 = ssub.s32 %s25, %s37
      %s128 = ssub.s32 %s26, %s33
      %s129 = sor.u32 %s127, %s128
      %p130 = scmp.eq.s32.totalorder %s129, 0
      %s132 = sadd.s32 %s131, 1
      %s133 = scalar_select %p130, %s131, %s132
      %p136 = pneg %p130
      %p137 = scmp.eq.s32.totalorder %s18, 1
      %p138 = por %p136, %p137
      %p139 = scmp.ne.s32.totalorder %s131, %s134
      %p140 = scmp.eq.s32.totalorder %s18, 0
      %p141 = por %p139, %p140
      %p142 = scmp.ne.s32.totalorder %s131, %s134
      %p143 = scmp.eq.s32.totalorder %s23, 1
      %p144 = por %p142, %p143
      %p145 = scmp.ne.s32.totalorder %s134, %s135
      %p146 = scmp.eq.s32.totalorder %s23, 0
      %p147 = por %p145, %p146
      %p148 = scmp.ne.s32.totalorder %s134, %s135
      %p149 = scmp.eq.s32.totalorder %s24, 1
      %p150 = por %p148, %p149
      %p152 = scmp.ne.s32.totalorder %s135, %s151
      %p153 = scmp.eq.s32.totalorder %s24, 0
      %p154 = por %p152, %p153
      %p155 = scmp.le.s32.totalorder 1, %s18
      %p156 = scmp.lt.s32.totalorder %s18, 3
      %p157 = pnand %p155, %p156
      %p158 = pneg %p157
      // Predicated region
      $region9: #{tpu_custom_call.1} parent=5 // pred_check
        _
      $region10: #{tpu_custom_call.1} parent=5 // pred_check_branch
        %160 = sbr.rel (%p157) target = $region12
      $region11: #{tpu_custom_call.1} parent=5 // pred_region
        %s161 = ssub.s32 %s18, 1
        // Predicated region
        $region13: #{tpu_custom_call.1} parent=11 // pred_check
          %p162 = pneg %p77
        $region14: #{tpu_custom_call.1} parent=11 // pred_check_branch
          %164 = sbr.rel (%p162) target = $region16
        $region15: #{tpu_custom_call.1} parent=11 // pred_region
          %s166 = ssub.s32 128, 128
          %167 = vsyncadd [#allocation10], %s166
          %s168 = sshll.u32 [#allocation9], 4
          %s169 = int_to_ptr.vmem [resolvable:$true] %s168
          %174 = dma.hbm_to_vmem [thread:$0]  %s1, 128, %s169, [#allocation10], 64, 64, 4
        $region16: #{tpu_custom_call.1} parent=11 // pred_fallthru
          _
        // Predicated region
        $region17: #{tpu_custom_call.1} parent=11 // pred_check
          %p175 = pneg %p98
        $region18: #{tpu_custom_call.1} parent=11 // pred_check_branch
          %177 = sbr.rel (%p175) target = $region20
        $region19: #{tpu_custom_call.1} parent=11 // pred_region
          %s179 = ssub.s32 16, 16
          %180 = vsyncadd [#allocation10], %s179
          %s182 = sshll.u32 [#allocation11], 4
          %s183 = int_to_ptr.vmem [resolvable:$true] %s182
          %185 = dma.hbm_to_vmem [thread:$0]  %s2, 16, %s183, [#allocation10]
        $region20: #{tpu_custom_call.1} parent=11 // pred_fallthru
          _
        // Predicated region
        $region21: #{tpu_custom_call.1} parent=11 // pred_check
          %p186 = pneg %p119
        $region22: #{tpu_custom_call.1} parent=11 // pred_check_branch
          %188 = sbr.rel (%p186) target = $region24
        $region23: #{tpu_custom_call.1} parent=11 // pred_region
          _
        $region24: #{tpu_custom_call.1} parent=11 // pred_fallthru
          _
      $region12: #{tpu_custom_call.1} parent=5 // pred_fallthru
        _
      %p189 = scmp.lt.s32.totalorder %s18, 2
      // Predicated region
      $region25: #{tpu_custom_call.1} parent=5 // pred_check
        %p190 = pneg %p189
      $region26: #{tpu_custom_call.1} parent=5 // pred_check_branch
        %192 = sbr.rel (%p190) target = $region28
      $region27: #{tpu_custom_call.1} parent=5 // pred_region
        // Predicated region
        $region29: #{tpu_custom_call.1} parent=27 // pred_check
          %p193 = pneg %p50
        $region30: #{tpu_custom_call.1} parent=27 // pred_check_branch
          %195 = sbr.rel (%p193) target = $region32
        $region31: #{tpu_custom_call.1} parent=27 // pred_region
          %s196 = sand.u32 %s40, 1
          %s197 = scalar_lea.sflag [#allocation7], %s196
          %s198 = sand.u32 %s40, 1
          %s199 = smul.addr %s198, 32
          %s200 = scalar_lea.vmem [#allocation6], %s199
          %s202 = ssub.s32 512, 512
          %203 = vsyncadd %s197, %s202
          %s204 = smul.addr %s25, 4
          %s205 = smul.addr %s204, 128
          %s206 = scalar_lea.hbm %s0, %s205
          %s207 = sshll.u32 %s200, 4
          %s208 = int_to_ptr.vmem [resolvable:$true] %s207
          %213 = dma.hbm_to_vmem [thread:$0]  %s206, 512, %s208, %s197, 256, 256, 16
        $region32: #{tpu_custom_call.1} parent=27 // pred_fallthru
          _
      $region28: #{tpu_custom_call.1} parent=5 // pred_fallthru
        _
      %p214 = scmp.le.s32.totalorder 1, %s18
      %p215 = scmp.lt.s32.totalorder %s18, 3
      %p216 = pnand %p214, %p215
      %p217 = pneg %p216
      // Predicated region
      $region33: #{tpu_custom_call.1} parent=5 // pred_check
        _
      $region34: #{tpu_custom_call.1} parent=5 // pred_check_branch
        %219 = sbr.rel (%p216) target = $region36
      $region35: #{tpu_custom_call.1} parent=5 // pred_region
        %s220 = ssub.s32 %s18, 1
        %s221 = sand.u32 %s43, 1
        %s222 = scalar_lea.sflag [#allocation7], %s221
        %s223 = sand.u32 %s43, 1
        %s224 = smul.addr %s223, 32
        %s225 = scalar_lea.vmem [#allocation6], %s224
        // Predicated region
        $region37: #{tpu_custom_call.1} parent=35 // pred_check
          %p226 = pneg %p56
        $region38: #{tpu_custom_call.1} parent=35 // pred_check_branch
          %228 = sbr.rel (%p226) target = $region40
        $region39: #{tpu_custom_call.1} parent=35 // pred_region
          %229 = dma.done %s222, 512
        $region40: #{tpu_custom_call.1} parent=35 // pred_fallthru
          _
        // Predicated region
        $region41: #{tpu_custom_call.1} parent=35 // pred_check
          %p230 = pneg %p77
        $region42: #{tpu_custom_call.1} parent=35 // pred_check_branch
          %232 = sbr.rel (%p230) target = $region44
        $region43: #{tpu_custom_call.1} parent=35 // pred_region
          %233 = dma.done [#allocation10], 128
        $region44: #{tpu_custom_call.1} parent=35 // pred_fallthru
          _
        // Predicated region
        $region45: #{tpu_custom_call.1} parent=35 // pred_check
          %p234 = pneg %p98
        $region46: #{tpu_custom_call.1} parent=35 // pred_check_branch
          %236 = sbr.rel (%p234) target = $region48
        $region47: #{tpu_custom_call.1} parent=35 // pred_region
          %237 = dma.done [#allocation10], 16
        $region48: #{tpu_custom_call.1} parent=35 // pred_fallthru
          _
        %s238 = sand.u32 %s43, 1
        %s239 = scalar_lea.sflag [#allocation7], %s238
        %s240 = sand.u32 %s43, 1
        %s241 = smul.addr %s240, 32
        %s242 = scalar_lea.vmem [#allocation6], %s241
        %p243 = pneg %p56
        %p244 = pneg %p53
        %p245 = pneg %p77
        %p246 = pneg %p74
        %p247 = pneg %p98
        %p248 = pneg %p95
        %p249 = pneg %p119
        %p250 = pneg %p116
        %p251 = pneg %p147
        %p252 = pneg %p144
        %s253 = sand.u32 %s134, 1
        %s254 = scalar_lea.sflag [#allocation8], %s253
        %s255 = sand.u32 %s134, 1
        %s256 = smul.addr %s255, 32
        %s257 = scalar_lea.vmem [#allocation12], %s256
        %s258 = smul.u32 2, %s28
        %p260 = scmp.eq.s32.totalorder %s28, 0
        // Predicated region
        $region49: #{tpu_custom_call.1} parent=35 // pred_check
          %p261 = pneg %p260
        $region50: #{tpu_custom_call.1} parent=35 // pred_check_branch
          %263 = sbr.rel (%p261) target = $region52
        $region51: #{tpu_custom_call.1} parent=35 // pred_region
          %v264 = vld [vmem:[%s225] sm:$0xff]
          %v265 = vld [vmem:[%s225 + $0x8] sm:$0xff]
          %v266 = vld [vmem:[%s225 + $0x10] sm:$0xff]
          %v267 = vld [vmem:[%s225 + $0x18] sm:$0xff]
          %270 = vrot.lane.b32.xlu0 %v264, 112
          %v271 = vpop.permute.xlu0 %270
          %272 = vrot.lane.b32.xlu0 %v266, 112
          %v273 = vpop.permute.xlu0 %272
          %276 = vrot.lane.b32.xlu0 %v264, 96
          %v277 = vpop.permute.xlu0 %276
          %278 = vrot.lane.b32.xlu0 %v266, 96
          %v279 = vpop.permute.xlu0 %278
          %282 = vrot.lane.b32.xlu0 %v264, 80
          %v283 = vpop.permute.xlu0 %282
          %284 = vrot.lane.b32.xlu0 %v266, 80
          %v285 = vpop.permute.xlu0 %284
          %288 = vrot.lane.b32.xlu0 %v264, 64
          %v289 = vpop.permute.xlu0 %288
          %290 = vrot.lane.b32.xlu0 %v266, 64
          %v291 = vpop.permute.xlu0 %290
          %294 = vrot.lane.b32.xlu0 %v264, 48
          %v295 = vpop.permute.xlu0 %294
          %296 = vrot.lane.b32.xlu0 %v266, 48
          %v297 = vpop.permute.xlu0 %296
          %300 = vrot.lane.b32.xlu0 %v264, 32
          %v301 = vpop.permute.xlu0 %300
          %302 = vrot.lane.b32.xlu0 %v266, 32
          %v303 = vpop.permute.xlu0 %302
          %306 = vrot.lane.b32.xlu0 %v264, 16
          %v307 = vpop.permute.xlu0 %306
          %308 = vrot.lane.b32.xlu0 %v266, 16
          %v309 = vpop.permute.xlu0 %308
          %314 = vrot.lane.b32.xlu0 %v265, 112
          %v315 = vpop.permute.xlu0 %314
          %316 = vrot.lane.b32.xlu0 %v267, 112
          %v317 = vpop.permute.xlu0 %316
          %320 = vrot.lane.b32.xlu0 %v265, 96
          %v321 = vpop.permute.xlu0 %320
          %322 = vrot.lane.b32.xlu0 %v267, 96
          %v323 = vpop.permute.xlu0 %322
          %326 = vrot.lane.b32.xlu0 %v265, 80
          %v327 = vpop.permute.xlu0 %326
          %328 = vrot.lane.b32.xlu0 %v267, 80
          %v329 = vpop.permute.xlu0 %328
          %332 = vrot.lane.b32.xlu0 %v265, 64
          %v333 = vpop.permute.xlu0 %332
          %334 = vrot.lane.b32.xlu0 %v267, 64
          %v335 = vpop.permute.xlu0 %334
          %338 = vrot.lane.b32.xlu0 %v265, 48
          %v339 = vpop.permute.xlu0 %338
          %340 = vrot.lane.b32.xlu0 %v267, 48
          %v341 = vpop.permute.xlu0 %340
          %344 = vrot.lane.b32.xlu0 %v265, 32
          %v345 = vpop.permute.xlu0 %344
          %346 = vrot.lane.b32.xlu0 %v267, 32
          %v347 = vpop.permute.xlu0 %346
          %350 = vrot.lane.b32.xlu0 %v265, 16
          %v351 = vpop.permute.xlu0 %350
          %352 = vrot.lane.b32.xlu0 %v267, 16
          %v353 = vpop.permute.xlu0 %352
          %v356 = vcombine.low %v264, %v277
          %v357 = vcombine.high %v264, %v277
          %v359 = vunpack.c.l.s4 1983009808
          %v360 = vunpack.c.0.s8 %v359
          %v361 = vlaneseq
          %v362 = vshrl.u32 %v361, 7
          %v363 = vsub.s32 %v360, %v362
          %v364 = vrot.slane %v356, %v363
          %v366 = vunpack.c.l.s4 1983009808
          %v367 = vunpack.c.0.s8 %v366
          %v368 = vlaneseq
          %v369 = vshrl.u32 %v368, 7
          %v370 = vsub.s32 %v367, %v369
          %v371 = vrot.slane %v357, %v370
          %v372 = vcombine.low %v271, %v283
          %v373 = vcombine.high %v271, %v283
          %v375 = vunpack.c.l.s4 1983009808
          %v376 = vunpack.c.0.s8 %v375
          %v377 = vlaneseq
          %v378 = vshrl.u32 %v377, 7
          %v379 = vsub.s32 %v376, %v378
          %v380 = vrot.slane %v372, %v379
          %v382 = vunpack.c.l.s4 1983009808
          %v383 = vunpack.c.0.s8 %v382
          %v384 = vlaneseq
          %v385 = vshrl.u32 %v384, 7
          %v386 = vsub.s32 %v383, %v385
          %v387 = vrot.slane %v373, %v386
          %v388 = vcombine.low %v289, %v301
          %v389 = vcombine.high %v289, %v301
          %v391 = vunpack.c.l.s4 1983009808
          %v392 = vunpack.c.0.s8 %v391
          %v393 = vlaneseq
          %v394 = vshrl.u32 %v393, 7
          %v395 = vsub.s32 %v392, %v394
          %v396 = vrot.slane %v388, %v395
          %v398 = vunpack.c.l.s4 1983009808
          %v399 = vunpack.c.0.s8 %v398
          %v400 = vlaneseq
          %v401 = vshrl.u32 %v400, 7
          %v402 = vsub.s32 %v399, %v401
          %v403 = vrot.slane %v389, %v402
          %v404 = vcombine.low %v295, %v307
          %v405 = vcombine.high %v295, %v307
          %v407 = vunpack.c.l.s4 1983009808
          %v408 = vunpack.c.0.s8 %v407
          %v409 = vlaneseq
          %v410 = vshrl.u32 %v409, 7
          %v411 = vsub.s32 %v408, %v410
          %v412 = vrot.slane %v404, %v411
          %v414 = vunpack.c.l.s4 1983009808
          %v415 = vunpack.c.0.s8 %v414
          %v416 = vlaneseq
          %v417 = vshrl.u32 %v416, 7
          %v418 = vsub.s32 %v415, %v417
          %v419 = vrot.slane %v405, %v418
          %v420 = vcombine.low %v364, %v380
          %v421 = vcombine.high %v364, %v380
          %v423 = vunpack.c.l.s4 1934713408
          %v424 = vunpack.c.0.s8 %v423
          %v425 = vlaneseq
          %v426 = vshrl.u32 %v425, 7
          %v427 = vsub.s32 %v424, %v426
          %v428 = vrot.slane %v420, %v427
          %v430 = vunpack.c.l.s4 1934713408
          %v431 = vunpack.c.0.s8 %v430
          %v432 = vlaneseq
          %v433 = vshrl.u32 %v432, 7
          %v434 = vsub.s32 %v431, %v433
          %v435 = vrot.slane %v421, %v434
          %v436 = vcombine.low %v371, %v387
          %v437 = vcombine.high %v371, %v387
          %v439 = vunpack.c.l.s4 1934713408
          %v440 = vunpack.c.0.s8 %v439
          %v441 = vlaneseq
          %v442 = vshrl.u32 %v441, 7
          %v443 = vsub.s32 %v440, %v442
          %v444 = vrot.slane %v436, %v443
          %v446 = vunpack.c.l.s4 1934713408
          %v447 = vunpack.c.0.s8 %v446
          %v448 = vlaneseq
          %v449 = vshrl.u32 %v448, 7
          %v450 = vsub.s32 %v447, %v449
          %v451 = vrot.slane %v437, %v450
          %v452 = vcombine.low %v396, %v412
          %v453 = vcombine.high %v396, %v412
          %v455 = vunpack.c.l.s4 1934713408
          %v456 = vunpack.c.0.s8 %v455
          %v457 = vlaneseq
          %v458 = vshrl.u32 %v457, 7
          %v459 = vsub.s32 %v456, %v458
          %v460 = vrot.slane %v452, %v459
          %v462 = vunpack.c.l.s4 1934713408
          %v463 = vunpack.c.0.s8 %v462
          %v464 = vlaneseq
          %v465 = vshrl.u32 %v464, 7
          %v466 = vsub.s32 %v463, %v465
          %v467 = vrot.slane %v453, %v466
          %v468 = vcombine.low %v403, %v419
          %v469 = vcombine.high %v403, %v419
          %v471 = vunpack.c.l.s4 1934713408
          %v472 = vunpack.c.0.s8 %v471
          %v473 = vlaneseq
          %v474 = vshrl.u32 %v473, 7
          %v475 = vsub.s32 %v472, %v474
          %v476 = vrot.slane %v468, %v475
          %v478 = vunpack.c.l.s4 1934713408
          %v479 = vunpack.c.0.s8 %v478
          %v480 = vlaneseq
          %v481 = vshrl.u32 %v480, 7
          %v482 = vsub.s32 %v479, %v481
          %v483 = vrot.slane %v469, %v482
          %v484 = vcombine.low %v428, %v460
          %v485 = vcombine.high %v428, %v460
          %v486 = vcombine.low %v435, %v467
          %v487 = vcombine.high %v435, %v467
          %v488 = vcombine.low %v444, %v476
          %v489 = vcombine.high %v444, %v476
          %v490 = vcombine.low %v451, %v483
          %v491 = vcombine.high %v451, %v483
          %v492 = vcombine.low %v265, %v321
          %v493 = vcombine.high %v265, %v321
          %v495 = vunpack.c.l.s4 1983009808
          %v496 = vunpack.c.0.s8 %v495
          %v497 = vlaneseq
          %v498 = vshrl.u32 %v497, 7
          %v499 = vsub.s32 %v496, %v498
          %v500 = vrot.slane %v492, %v499
          %v502 = vunpack.c.l.s4 1983009808
          %v503 = vunpack.c.0.s8 %v502
          %v504 = vlaneseq
          %v505 = vshrl.u32 %v504, 7
          %v506 = vsub.s32 %v503, %v505
          %v507 = vrot.slane %v493, %v506
          %v508 = vcombine.low %v315, %v327
          %v509 = vcombine.high %v315, %v327
          %v511 = vunpack.c.l.s4 1983009808
          %v512 = vunpack.c.0.s8 %v511
          %v513 = vlaneseq
          %v514 = vshrl.u32 %v513, 7
          %v515 = vsub.s32 %v512, %v514
          %v516 = vrot.slane %v508, %v515
          %v518 = vunpack.c.l.s4 1983009808
          %v519 = vunpack.c.0.s8 %v518
          %v520 = vlaneseq
          %v521 = vshrl.u32 %v520, 7
          %v522 = vsub.s32 %v519, %v521
          %v523 = vrot.slane %v509, %v522
          %v524 = vcombine.low %v333, %v345
          %v525 = vcombine.high %v333, %v345
          %v527 = vunpack.c.l.s4 1983009808
          %v528 = vunpack.c.0.s8 %v527
          %v529 = vlaneseq
          %v530 = vshrl.u32 %v529, 7
          %v531 = vsub.s32 %v528, %v530
          %v532 = vrot.slane %v524, %v531
          %v534 = vunpack.c.l.s4 1983009808
          %v535 = vunpack.c.0.s8 %v534
          %v536 = vlaneseq
          %v537 = vshrl.u32 %v536, 7
          %v538 = vsub.s32 %v535, %v537
          %v539 = vrot.slane %v525, %v538
          %v540 = vcombine.low %v339, %v351
          %v541 = vcombine.high %v339, %v351
          %v543 = vunpack.c.l.s4 1983009808
          %v544 = vunpack.c.0.s8 %v543
          %v545 = vlaneseq
          %v546 = vshrl.u32 %v545, 7
          %v547 = vsub.s32 %v544, %v546
          %v548 = vrot.slane %v540, %v547
          %v550 = vunpack.c.l.s4 1983009808
          %v551 = vunpack.c.0.s8 %v550
          %v552 = vlaneseq
          %v553 = vshrl.u32 %v552, 7
          %v554 = vsub.s32 %v551, %v553
          %v555 = vrot.slane %v541, %v554
          %v556 = vcombine.low %v500, %v516
          %v557 = vcombine.high %v500, %v516
          %v559 = vunpack.c.l.s4 1934713408
          %v560 = vunpack.c.0.s8 %v559
          %v561 = vlaneseq
          %v562 = vshrl.u32 %v561, 7
          %v563 = vsub.s32 %v560, %v562
          %v564 = vrot.slane %v556, %v563
          %v566 = vunpack.c.l.s4 1934713408
          %v567 = vunpack.c.0.s8 %v566
          %v568 = vlaneseq
          %v569 = vshrl.u32 %v568, 7
          %v570 = vsub.s32 %v567, %v569
          %v571 = vrot.slane %v557, %v570
          %v572 = vcombine.low %v507, %v523
          %v573 = vcombine.high %v507, %v523
          %v575 = vunpack.c.l.s4 1934713408
          %v576 = vunpack.c.0.s8 %v575
          %v577 = vlaneseq
          %v578 = vshrl.u32 %v577, 7
          %v579 = vsub.s32 %v576, %v578
          %v580 = vrot.slane %v572, %v579
          %v582 = vunpack.c.l.s4 1934713408
          %v583 = vunpack.c.0.s8 %v582
          %v584 = vlaneseq
          %v585 = vshrl.u32 %v584, 7
          %v586 = vsub.s32 %v583, %v585
          %v587 = vrot.slane %v573, %v586
          %v588 = vcombine.low %v532, %v548
          %v589 = vcombine.high %v532, %v548
          %v591 = vunpack.c.l.s4 1934713408
          %v592 = vunpack.c.0.s8 %v591
          %v593 = vlaneseq
          %v594 = vshrl.u32 %v593, 7
          %v595 = vsub.s32 %v592, %v594
          %v596 = vrot.slane %v588, %v595
          %v598 = vunpack.c.l.s4 1934713408
          %v599 = vunpack.c.0.s8 %v598
          %v600 = vlaneseq
          %v601 = vshrl.u32 %v600, 7
          %v602 = vsub.s32 %v599, %v601
          %v603 = vrot.slane %v589, %v602
          %v604 = vcombine.low %v539, %v555
          %v605 = vcombine.high %v539, %v555
          %v607 = vunpack.c.l.s4 1934713408
          %v608 = vunpack.c.0.s8 %v607
          %v609 = vlaneseq
          %v610 = vshrl.u32 %v609, 7
          %v611 = vsub.s32 %v608, %v610
          %v612 = vrot.slane %v604, %v611
          %v614 = vunpack.c.l.s4 1934713408
          %v615 = vunpack.c.0.s8 %v614
          %v616 = vlaneseq
          %v617 = vshrl.u32 %v616, 7
          %v618 = vsub.s32 %v615, %v617
          %v619 = vrot.slane %v605, %v618
          %v620 = vcombine.low %v564, %v596
          %v621 = vcombine.high %v564, %v596
          %v622 = vcombine.low %v571, %v603
          %v623 = vcombine.high %v571, %v603
          %v624 = vcombine.low %v580, %v612
          %v625 = vcombine.high %v580, %v612
          %v626 = vcombine.low %v587, %v619
          %v627 = vcombine.high %v587, %v619
          %v628 = vcombine.low %v266, %v279
          %v629 = vcombine.high %v266, %v279
          %v631 = vunpack.c.l.s4 1983009808
          %v632 = vunpack.c.0.s8 %v631
          %v633 = vlaneseq
          %v634 = vshrl.u32 %v633, 7
          %v635 = vsub.s32 %v632, %v634
          %v636 = vrot.slane %v628, %v635
          %v638 = vunpack.c.l.s4 1983009808
          %v639 = vunpack.c.0.s8 %v638
          %v640 = vlaneseq
          %v641 = vshrl.u32 %v640, 7
          %v642 = vsub.s32 %v639, %v641
          %v643 = vrot.slane %v629, %v642
          %v644 = vcombine.low %v273, %v285
          %v645 = vcombine.high %v273, %v285
          %v647 = vunpack.c.l.s4 1983009808
          %v648 = vunpack.c.0.s8 %v647
          %v649 = vlaneseq
          %v650 = vshrl.u32 %v649, 7
          %v651 = vsub.s32 %v648, %v650
          %v652 = vrot.slane %v644, %v651
          %v654 = vunpack.c.l.s4 1983009808
          %v655 = vunpack.c.0.s8 %v654
          %v656 = vlaneseq
          %v657 = vshrl.u32 %v656, 7
          %v658 = vsub.s32 %v655, %v657
          %v659 = vrot.slane %v645, %v658
          %v660 = vcombine.low %v291, %v303
          %v661 = vcombine.high %v291, %v303
          %v663 = vunpack.c.l.s4 1983009808
          %v664 = vunpack.c.0.s8 %v663
          %v665 = vlaneseq
          %v666 = vshrl.u32 %v665, 7
          %v667 = vsub.s32 %v664, %v666
          %v668 = vrot.slane %v660, %v667
          %v670 = vunpack.c.l.s4 1983009808
          %v671 = vunpack.c.0.s8 %v670
          %v672 = vlaneseq
          %v673 = vshrl.u32 %v672, 7
          %v674 = vsub.s32 %v671, %v673
          %v675 = vrot.slane %v661, %v674
          %v676 = vcombine.low %v297, %v309
          %v677 = vcombine.high %v297, %v309
          %v679 = vunpack.c.l.s4 1983009808
          %v680 = vunpack.c.0.s8 %v679
          %v681 = vlaneseq
          %v682 = vshrl.u32 %v681, 7
          %v683 = vsub.s32 %v680, %v682
          %v684 = vrot.slane %v676, %v683
          %v686 = vunpack.c.l.s4 1983009808
          %v687 = vunpack.c.0.s8 %v686
          %v688 = vlaneseq
          %v689 = vshrl.u32 %v688, 7
          %v690 = vsub.s32 %v687, %v689
          %v691 = vrot.slane %v677, %v690
          %v692 = vcombine.low %v636, %v652
          %v693 = vcombine.high %v636, %v652
          %v695 = vunpack.c.l.s4 1934713408
          %v696 = vunpack.c.0.s8 %v695
          %v697 = vlaneseq
          %v698 = vshrl.u32 %v697, 7
          %v699 = vsub.s32 %v696, %v698
          %v700 = vrot.slane %v692, %v699
          %v702 = vunpack.c.l.s4 1934713408
          %v703 = vunpack.c.0.s8 %v702
          %v704 = vlaneseq
          %v705 = vshrl.u32 %v704, 7
          %v706 = vsub.s32 %v703, %v705
          %v707 = vrot.slane %v693, %v706
          %v708 = vcombine.low %v643, %v659
          %v709 = vcombine.high %v643, %v659
          %v711 = vunpack.c.l.s4 1934713408
          %v712 = vunpack.c.0.s8 %v711
          %v713 = vlaneseq
          %v714 = vshrl.u32 %v713, 7
          %v715 = vsub.s32 %v712, %v714
          %v716 = vrot.slane %v708, %v715
          %v718 = vunpack.c.l.s4 1934713408
          %v719 = vunpack.c.0.s8 %v718
          %v720 = vlaneseq
          %v721 = vshrl.u32 %v720, 7
          %v722 = vsub.s32 %v719, %v721
          %v723 = vrot.slane %v709, %v722
          %v724 = vcombine.low %v668, %v684
          %v725 = vcombine.high %v668, %v684
          %v727 = vunpack.c.l.s4 1934713408
          %v728 = vunpack.c.0.s8 %v727
          %v729 = vlaneseq
          %v730 = vshrl.u32 %v729, 7
          %v731 = vsub.s32 %v728, %v730
          %v732 = vrot.slane %v724, %v731
          %v734 = vunpack.c.l.s4 1934713408
          %v735 = vunpack.c.0.s8 %v734
          %v736 = vlaneseq
          %v737 = vshrl.u32 %v736, 7
          %v738 = vsub.s32 %v735, %v737
          %v739 = vrot.slane %v725, %v738
          %v740 = vcombine.low %v675, %v691
          %v741 = vcombine.high %v675, %v691
          %v743 = vunpack.c.l.s4 1934713408
          %v744 = vunpack.c.0.s8 %v743
          %v745 = vlaneseq
          %v746 = vshrl.u32 %v745, 7
          %v747 = vsub.s32 %v744, %v746
          %v748 = vrot.slane %v740, %v747
          %v750 = vunpack.c.l.s4 1934713408
          %v751 = vunpack.c.0.s8 %v750
          %v752 = vlaneseq
          %v753 = vshrl.u32 %v752, 7
          %v754 = vsub.s32 %v751, %v753
          %v755 = vrot.slane %v741, %v754
          %v756 = vcombine.low %v700, %v732
          %v757 = vcombine.high %v700, %v732
          %v758 = vcombine.low %v707, %v739
          %v759 = vcombine.high %v707, %v739
          %v760 = vcombine.low %v716, %v748
          %v761 = vcombine.high %v716, %v748
          %v762 = vcombine.low %v723, %v755
          %v763 = vcombine.high %v723, %v755
          %v764 = vcombine.low %v267, %v323
          %v765 = vcombine.high %v267, %v323
          %v767 = vunpack.c.l.s4 1983009808
          %v768 = vunpack.c.0.s8 %v767
          %v769 = vlaneseq
          %v770 = vshrl.u32 %v769, 7
          %v771 = vsub.s32 %v768, %v770
          %v772 = vrot.slane %v764, %v771
          %v774 = vunpack.c.l.s4 1983009808
          %v775 = vunpack.c.0.s8 %v774
          %v776 = vlaneseq
          %v777 = vshrl.u32 %v776, 7
          %v778 = vsub.s32 %v775, %v777
          %v779 = vrot.slane %v765, %v778
          %v780 = vcombine.low %v317, %v329
          %v781 = vcombine.high %v317, %v329
          %v783 = vunpack.c.l.s4 1983009808
          %v784 = vunpack.c.0.s8 %v783
          %v785 = vlaneseq
          %v786 = vshrl.u32 %v785, 7
          %v787 = vsub.s32 %v784, %v786
          %v788 = vrot.slane %v780, %v787
          %v790 = vunpack.c.l.s4 1983009808
          %v791 = vunpack.c.0.s8 %v790
          %v792 = vlaneseq
          %v793 = vshrl.u32 %v792, 7
          %v794 = vsub.s32 %v791, %v793
          %v795 = vrot.slane %v781, %v794
          %v796 = vcombine.low %v335, %v347
          %v797 = vcombine.high %v335, %v347
          %v799 = vunpack.c.l.s4 1983009808
          %v800 = vunpack.c.0.s8 %v799
          %v801 = vlaneseq
          %v802 = vshrl.u32 %v801, 7
          %v803 = vsub.s32 %v800, %v802
          %v804 = vrot.slane %v796, %v803
          %v806 = vunpack.c.l.s4 1983009808
          %v807 = vunpack.c.0.s8 %v806
          %v808 = vlaneseq
          %v809 = vshrl.u32 %v808, 7
          %v810 = vsub.s32 %v807, %v809
          %v811 = vrot.slane %v797, %v810
          %v812 = vcombine.low %v341, %v353
          %v813 = vcombine.high %v341, %v353
          %v815 = vunpack.c.l.s4 1983009808
          %v816 = vunpack.c.0.s8 %v815
          %v817 = vlaneseq
          %v818 = vshrl.u32 %v817, 7
          %v819 = vsub.s32 %v816, %v818
          %v820 = vrot.slane %v812, %v819
          %v822 = vunpack.c.l.s4 1983009808
          %v823 = vunpack.c.0.s8 %v822
          %v824 = vlaneseq
          %v825 = vshrl.u32 %v824, 7
          %v826 = vsub.s32 %v823, %v825
          %v827 = vrot.slane %v813, %v826
          %v828 = vcombine.low %v772, %v788
          %v829 = vcombine.high %v772, %v788
          %v831 = vunpack.c.l.s4 1934713408
          %v832 = vunpack.c.0.s8 %v831
          %v833 = vlaneseq
          %v834 = vshrl.u32 %v833, 7
          %v835 = vsub.s32 %v832, %v834
          %v836 = vrot.slane %v828, %v835
          %v838 = vunpack.c.l.s4 1934713408
          %v839 = vunpack.c.0.s8 %v838
          %v840 = vlaneseq
          %v841 = vshrl.u32 %v840, 7
          %v842 = vsub.s32 %v839, %v841
          %v843 = vrot.slane %v829, %v842
          %v844 = vcombine.low %v779, %v795
          %v845 = vcombine.high %v779, %v795
          %v847 = vunpack.c.l.s4 1934713408
          %v848 = vunpack.c.0.s8 %v847
          %v849 = vlaneseq
          %v850 = vshrl.u32 %v849, 7
          %v851 = vsub.s32 %v848, %v850
          %v852 = vrot.slane %v844, %v851
          %v854 = vunpack.c.l.s4 1934713408
          %v855 = vunpack.c.0.s8 %v854
          %v856 = vlaneseq
          %v857 = vshrl.u32 %v856, 7
          %v858 = vsub.s32 %v855, %v857
          %v859 = vrot.slane %v845, %v858
          %v860 = vcombine.low %v804, %v820
          %v861 = vcombine.high %v804, %v820
          %v863 = vunpack.c.l.s4 1934713408
          %v864 = vunpack.c.0.s8 %v863
          %v865 = vlaneseq
          %v866 = vshrl.u32 %v865, 7
          %v867 = vsub.s32 %v864, %v866
          %v868 = vrot.slane %v860, %v867
          %v870 = vunpack.c.l.s4 1934713408
          %v871 = vunpack.c.0.s8 %v870
          %v872 = vlaneseq
          %v873 = vshrl.u32 %v872, 7
          %v874 = vsub.s32 %v871, %v873
          %v875 = vrot.slane %v861, %v874
          %v876 = vcombine.low %v811, %v827
          %v877 = vcombine.high %v811, %v827
          %v879 = vunpack.c.l.s4 1934713408
          %v880 = vunpack.c.0.s8 %v879
          %v881 = vlaneseq
          %v882 = vshrl.u32 %v881, 7
          %v883 = vsub.s32 %v880, %v882
          %v884 = vrot.slane %v876, %v883
          %v886 = vunpack.c.l.s4 1934713408
          %v887 = vunpack.c.0.s8 %v886
          %v888 = vlaneseq
          %v889 = vshrl.u32 %v888, 7
          %v890 = vsub.s32 %v887, %v889
          %v891 = vrot.slane %v877, %v890
          %v892 = vcombine.low %v836, %v868
          %v893 = vcombine.high %v836, %v868
          %v894 = vcombine.low %v843, %v875
          %v895 = vcombine.high %v843, %v875
          %v896 = vcombine.low %v852, %v884
          %v897 = vcombine.high %v852, %v884
          %v898 = vcombine.low %v859, %v891
          %v899 = vcombine.high %v859, %v891
          %v900 = vcombine.low %v484, %v486
          %v901 = vcombine.high %v484, %v486
          %v903 = vunpack.c.l.s4 1983009808
          %v904 = vunpack.c.0.s8 %v903
          %v905 = vlaneseq
          %v906 = vshrl.u32 %v905, 7
          %v907 = vsub.s32 %v904, %v906
          %v908 = vrot.slane %v900, %v907
          %v910 = vunpack.c.l.s4 1983009808
          %v911 = vunpack.c.0.s8 %v910
          %v912 = vlaneseq
          %v913 = vshrl.u32 %v912, 7
          %v914 = vsub.s32 %v911, %v913
          %v915 = vrot.slane %v901, %v914
          %v916 = vcombine.low %v485, %v487
          %v917 = vcombine.high %v485, %v487
          %v919 = vunpack.c.l.s4 1983009808
          %v920 = vunpack.c.0.s8 %v919
          %v921 = vlaneseq
          %v922 = vshrl.u32 %v921, 7
          %v923 = vsub.s32 %v920, %v922
          %v924 = vrot.slane %v916, %v923
          %v926 = vunpack.c.l.s4 1983009808
          %v927 = vunpack.c.0.s8 %v926
          %v928 = vlaneseq
          %v929 = vshrl.u32 %v928, 7
          %v930 = vsub.s32 %v927, %v929
          %v931 = vrot.slane %v917, %v930
          %v932 = vcombine.low %v488, %v490
          %v933 = vcombine.high %v488, %v490
          %v935 = vunpack.c.l.s4 1983009808
          %v936 = vunpack.c.0.s8 %v935
          %v937 = vlaneseq
          %v938 = vshrl.u32 %v937, 7
          %v939 = vsub.s32 %v936, %v938
          %v940 = vrot.slane %v932, %v939
          %v942 = vunpack.c.l.s4 1983009808
          %v943 = vunpack.c.0.s8 %v942
          %v944 = vlaneseq
          %v945 = vshrl.u32 %v944, 7
          %v946 = vsub.s32 %v943, %v945
          %v947 = vrot.slane %v933, %v946
          %v948 = vcombine.low %v489, %v491
          %v949 = vcombine.high %v489, %v491
          %v951 = vunpack.c.l.s4 1983009808
          %v952 = vunpack.c.0.s8 %v951
          %v953 = vlaneseq
          %v954 = vshrl.u32 %v953, 7
          %v955 = vsub.s32 %v952, %v954
          %v956 = vrot.slane %v948, %v955
          %v958 = vunpack.c.l.s4 1983009808
          %v959 = vunpack.c.0.s8 %v958
          %v960 = vlaneseq
          %v961 = vshrl.u32 %v960, 7
          %v962 = vsub.s32 %v959, %v961
          %v963 = vrot.slane %v949, %v962
          %v964 = vcombine.low %v908, %v924
          %v965 = vcombine.high %v908, %v924
          %v967 = vunpack.c.l.s4 1934713408
          %v968 = vunpack.c.0.s8 %v967
          %v969 = vlaneseq
          %v970 = vshrl.u32 %v969, 7
          %v971 = vsub.s32 %v968, %v970
          %v972 = vrot.slane %v964, %v971
          %v974 = vunpack.c.l.s4 1934713408
          %v975 = vunpack.c.0.s8 %v974
          %v976 = vlaneseq
          %v977 = vshrl.u32 %v976, 7
          %v978 = vsub.s32 %v975, %v977
          %v979 = vrot.slane %v965, %v978
          %v980 = vcombine.low %v915, %v931
          %v981 = vcombine.high %v915, %v931
          %v983 = vunpack.c.l.s4 1934713408
          %v984 = vunpack.c.0.s8 %v983
          %v985 = vlaneseq
          %v986 = vshrl.u32 %v985, 7
          %v987 = vsub.s32 %v984, %v986
          %v988 = vrot.slane %v980, %v987
          %v990 = vunpack.c.l.s4 1934713408
          %v991 = vunpack.c.0.s8 %v990
          %v992 = vlaneseq
          %v993 = vshrl.u32 %v992, 7
          %v994 = vsub.s32 %v991, %v993
          %v995 = vrot.slane %v981, %v994
          %v996 = vcombine.low %v940, %v956
          %v997 = vcombine.high %v940, %v956
          %v999 = vunpack.c.l.s4 1934713408
          %v1000 = vunpack.c.0.s8 %v999
          %v1001 = vlaneseq
          %v1002 = vshrl.u32 %v1001, 7
          %v1003 = vsub.s32 %v1000, %v1002
          %v1004 = vrot.slane %v996, %v1003
          %v1006 = vunpack.c.l.s4 1934713408
          %v1007 = vunpack.c.0.s8 %v1006
          %v1008 = vlaneseq
          %v1009 = vshrl.u32 %v1008, 7
          %v1010 = vsub.s32 %v1007, %v1009
          %v1011 = vrot.slane %v997, %v1010
          %v1012 = vcombine.low %v947, %v963
          %v1013 = vcombine.high %v947, %v963
          %v1015 = vunpack.c.l.s4 1934713408
          %v1016 = vunpack.c.0.s8 %v1015
          %v1017 = vlaneseq
          %v1018 = vshrl.u32 %v1017, 7
          %v1019 = vsub.s32 %v1016, %v1018
          %v1020 = vrot.slane %v1012, %v1019
          %v1022 = vunpack.c.l.s4 1934713408
          %v1023 = vunpack.c.0.s8 %v1022
          %v1024 = vlaneseq
          %v1025 = vshrl.u32 %v1024, 7
          %v1026 = vsub.s32 %v1023, %v1025
          %v1027 = vrot.slane %v1013, %v1026
          %v1028 = vcombine.low %v972, %v1004
          %v1029 = vcombine.high %v972, %v1004
          %v1030 = vcombine.low %v979, %v1011
          %v1031 = vcombine.high %v979, %v1011
          %v1032 = vcombine.low %v988, %v1020
          %v1033 = vcombine.high %v988, %v1020
          %v1034 = vcombine.low %v995, %v1027
          %v1035 = vcombine.high %v995, %v1027
          %v1036 = vcombine.low %v756, %v758
          %v1037 = vcombine.high %v756, %v758
          %v1039 = vunpack.c.l.s4 1983009808
          %v1040 = vunpack.c.0.s8 %v1039
          %v1041 = vlaneseq
          %v1042 = vshrl.u32 %v1041, 7
          %v1043 = vsub.s32 %v1040, %v1042
          %v1044 = vrot.slane %v1036, %v1043
          %v1046 = vunpack.c.l.s4 1983009808
          %v1047 = vunpack.c.0.s8 %v1046
          %v1048 = vlaneseq
          %v1049 = vshrl.u32 %v1048, 7
          %v1050 = vsub.s32 %v1047, %v1049
          %v1051 = vrot.slane %v1037, %v1050
          %v1052 = vcombine.low %v757, %v759
          %v1053 = vcombine.high %v757, %v759
          %v1055 = vunpack.c.l.s4 1983009808
          %v1056 = vunpack.c.0.s8 %v1055
          %v1057 = vlaneseq
          %v1058 = vshrl.u32 %v1057, 7
          %v1059 = vsub.s32 %v1056, %v1058
          %v1060 = vrot.slane %v1052, %v1059
          %v1062 = vunpack.c.l.s4 1983009808
          %v1063 = vunpack.c.0.s8 %v1062
          %v1064 = vlaneseq
          %v1065 = vshrl.u32 %v1064, 7
          %v1066 = vsub.s32 %v1063, %v1065
          %v1067 = vrot.slane %v1053, %v1066
          %v1068 = vcombine.low %v760, %v762
          %v1069 = vcombine.high %v760, %v762
          %v1071 = vunpack.c.l.s4 1983009808
          %v1072 = vunpack.c.0.s8 %v1071
          %v1073 = vlaneseq
          %v1074 = vshrl.u32 %v1073, 7
          %v1075 = vsub.s32 %v1072, %v1074
          %v1076 = vrot.slane %v1068, %v1075
          %v1078 = vunpack.c.l.s4 1983009808
          %v1079 = vunpack.c.0.s8 %v1078
          %v1080 = vlaneseq
          %v1081 = vshrl.u32 %v1080, 7
          %v1082 = vsub.s32 %v1079, %v1081
          %v1083 = vrot.slane %v1069, %v1082
          %v1084 = vcombine.low %v761, %v763
          %v1085 = vcombine.high %v761, %v763
          %v1087 = vunpack.c.l.s4 1983009808
          %v1088 = vunpack.c.0.s8 %v1087
          %v1089 = vlaneseq
          %v1090 = vshrl.u32 %v1089, 7
          %v1091 = vsub.s32 %v1088, %v1090
          %v1092 = vrot.slane %v1084, %v1091
          %v1094 = vunpack.c.l.s4 1983009808
          %v1095 = vunpack.c.0.s8 %v1094
          %v1096 = vlaneseq
          %v1097 = vshrl.u32 %v1096, 7
          %v1098 = vsub.s32 %v1095, %v1097
          %v1099 = vrot.slane %v1085, %v1098
          %v1100 = vcombine.low %v1044, %v1060
          %v1101 = vcombine.high %v1044, %v1060
          %v1103 = vunpack.c.l.s4 1934713408
          %v1104 = vunpack.c.0.s8 %v1103
          %v1105 = vlaneseq
          %v1106 = vshrl.u32 %v1105, 7
          %v1107 = vsub.s32 %v1104, %v1106
          %v1108 = vrot.slane %v1100, %v1107
          %v1110 = vunpack.c.l.s4 1934713408
          %v1111 = vunpack.c.0.s8 %v1110
          %v1112 = vlaneseq
          %v1113 = vshrl.u32 %v1112, 7
          %v1114 = vsub.s32 %v1111, %v1113
          %v1115 = vrot.slane %v1101, %v1114
          %v1116 = vcombine.low %v1051, %v1067
          %v1117 = vcombine.high %v1051, %v1067
          %v1119 = vunpack.c.l.s4 1934713408
          %v1120 = vunpack.c.0.s8 %v1119
          %v1121 = vlaneseq
          %v1122 = vshrl.u32 %v1121, 7
          %v1123 = vsub.s32 %v1120, %v1122
          %v1124 = vrot.slane %v1116, %v1123
          %v1126 = vunpack.c.l.s4 1934713408
          %v1127 = vunpack.c.0.s8 %v1126
          %v1128 = vlaneseq
          %v1129 = vshrl.u32 %v1128, 7
          %v1130 = vsub.s32 %v1127, %v1129
          %v1131 = vrot.slane %v1117, %v1130
          %v1132 = vcombine.low %v1076, %v1092
          %v1133 = vcombine.high %v1076, %v1092
          %v1135 = vunpack.c.l.s4 1934713408
          %v1136 = vunpack.c.0.s8 %v1135
          %v1137 = vlaneseq
          %v1138 = vshrl.u32 %v1137, 7
          %v1139 = vsub.s32 %v1136, %v1138
          %v1140 = vrot.slane %v1132, %v1139
          %v1142 = vunpack.c.l.s4 1934713408
          %v1143 = vunpack.c.0.s8 %v1142
          %v1144 = vlaneseq
          %v1145 = vshrl.u32 %v1144, 7
          %v1146 = vsub.s32 %v1143, %v1145
          %v1147 = vrot.slane %v1133, %v1146
          %v1148 = vcombine.low %v1083, %v1099
          %v1149 = vcombine.high %v1083, %v1099
          %v1151 = vunpack.c.l.s4 1934713408
          %v1152 = vunpack.c.0.s8 %v1151
          %v1153 = vlaneseq
          %v1154 = vshrl.u32 %v1153, 7
          %v1155 = vsub.s32 %v1152, %v1154
          %v1156 = vrot.slane %v1148, %v1155
          %v1158 = vunpack.c.l.s4 1934713408
          %v1159 = vunpack.c.0.s8 %v1158
          %v1160 = vlaneseq
          %v1161 = vshrl.u32 %v1160, 7
          %v1162 = vsub.s32 %v1159, %v1161
          %v1163 = vrot.slane %v1149, %v1162
          %v1164 = vcombine.low %v1108, %v1140
          %v1165 = vcombine.high %v1108, %v1140
          %v1166 = vcombine.low %v1115, %v1147
          %v1167 = vcombine.high %v1115, %v1147
          %v1168 = vcombine.low %v1124, %v1156
          %v1169 = vcombine.high %v1124, %v1156
          %v1170 = vcombine.low %v1131, %v1163
          %v1171 = vcombine.high %v1131, %v1163
          %v1172 = vcombine.low %v620, %v622
          %v1173 = vcombine.high %v620, %v622
          %v1175 = vunpack.c.l.s4 1983009808
          %v1176 = vunpack.c.0.s8 %v1175
          %v1177 = vlaneseq
          %v1178 = vshrl.u32 %v1177, 7
          %v1179 = vsub.s32 %v1176, %v1178
          %v1180 = vrot.slane %v1172, %v1179
          %v1182 = vunpack.c.l.s4 1983009808
          %v1183 = vunpack.c.0.s8 %v1182
          %v1184 = vlaneseq
          %v1185 = vshrl.u32 %v1184, 7
          %v1186 = vsub.s32 %v1183, %v1185
          %v1187 = vrot.slane %v1173, %v1186
          %v1188 = vcombine.low %v621, %v623
          %v1189 = vcombine.high %v621, %v623
          %v1191 = vunpack.c.l.s4 1983009808
          %v1192 = vunpack.c.0.s8 %v1191
          %v1193 = vlaneseq
          %v1194 = vshrl.u32 %v1193, 7
          %v1195 = vsub.s32 %v1192, %v1194
          %v1196 = vrot.slane %v1188, %v1195
          %v1198 = vunpack.c.l.s4 1983009808
          %v1199 = vunpack.c.0.s8 %v1198
          %v1200 = vlaneseq
          %v1201 = vshrl.u32 %v1200, 7
          %v1202 = vsub.s32 %v1199, %v1201
          %v1203 = vrot.slane %v1189, %v1202
          %v1204 = vcombine.low %v624, %v626
          %v1205 = vcombine.high %v624, %v626
          %v1207 = vunpack.c.l.s4 1983009808
          %v1208 = vunpack.c.0.s8 %v1207
          %v1209 = vlaneseq
          %v1210 = vshrl.u32 %v1209, 7
          %v1211 = vsub.s32 %v1208, %v1210
          %v1212 = vrot.slane %v1204, %v1211
          %v1214 = vunpack.c.l.s4 1983009808
          %v1215 = vunpack.c.0.s8 %v1214
          %v1216 = vlaneseq
          %v1217 = vshrl.u32 %v1216, 7
          %v1218 = vsub.s32 %v1215, %v1217
          %v1219 = vrot.slane %v1205, %v1218
          %v1220 = vcombine.low %v625, %v627
          %v1221 = vcombine.high %v625, %v627
          %v1223 = vunpack.c.l.s4 1983009808
          %v1224 = vunpack.c.0.s8 %v1223
          %v1225 = vlaneseq
          %v1226 = vshrl.u32 %v1225, 7
          %v1227 = vsub.s32 %v1224, %v1226
          %v1228 = vrot.slane %v1220, %v1227
          %v1230 = vunpack.c.l.s4 1983009808
          %v1231 = vunpack.c.0.s8 %v1230
          %v1232 = vlaneseq
          %v1233 = vshrl.u32 %v1232, 7
          %v1234 = vsub.s32 %v1231, %v1233
          %v1235 = vrot.slane %v1221, %v1234
          %v1236 = vcombine.low %v1180, %v1196
          %v1237 = vcombine.high %v1180, %v1196
          %v1239 = vunpack.c.l.s4 1934713408
          %v1240 = vunpack.c.0.s8 %v1239
          %v1241 = vlaneseq
          %v1242 = vshrl.u32 %v1241, 7
          %v1243 = vsub.s32 %v1240, %v1242
          %v1244 = vrot.slane %v1236, %v1243
          %v1246 = vunpack.c.l.s4 1934713408
          %v1247 = vunpack.c.0.s8 %v1246
          %v1248 = vlaneseq
          %v1249 = vshrl.u32 %v1248, 7
          %v1250 = vsub.s32 %v1247, %v1249
          %v1251 = vrot.slane %v1237, %v1250
          %v1252 = vcombine.low %v1187, %v1203
          %v1253 = vcombine.high %v1187, %v1203
          %v1255 = vunpack.c.l.s4 1934713408
          %v1256 = vunpack.c.0.s8 %v1255
          %v1257 = vlaneseq
          %v1258 = vshrl.u32 %v1257, 7
          %v1259 = vsub.s32 %v1256, %v1258
          %v1260 = vrot.slane %v1252, %v1259
          %v1262 = vunpack.c.l.s4 1934713408
          %v1263 = vunpack.c.0.s8 %v1262
          %v1264 = vlaneseq
          %v1265 = vshrl.u32 %v1264, 7
          %v1266 = vsub.s32 %v1263, %v1265
          %v1267 = vrot.slane %v1253, %v1266
          %v1268 = vcombine.low %v1212, %v1228
          %v1269 = vcombine.high %v1212, %v1228
          %v1271 = vunpack.c.l.s4 1934713408
          %v1272 = vunpack.c.0.s8 %v1271
          %v1273 = vlaneseq
          %v1274 = vshrl.u32 %v1273, 7
          %v1275 = vsub.s32 %v1272, %v1274
          %v1276 = vrot.slane %v1268, %v1275
          %v1278 = vunpack.c.l.s4 1934713408
          %v1279 = vunpack.c.0.s8 %v1278
          %v1280 = vlaneseq
          %v1281 = vshrl.u32 %v1280, 7
          %v1282 = vsub.s32 %v1279, %v1281
          %v1283 = vrot.slane %v1269, %v1282
          %v1284 = vcombine.low %v1219, %v1235
          %v1285 = vcombine.high %v1219, %v1235
          %v1287 = vunpack.c.l.s4 1934713408
          %v1288 = vunpack.c.0.s8 %v1287
          %v1289 = vlaneseq
          %v1290 = vshrl.u32 %v1289, 7
          %v1291 = vsub.s32 %v1288, %v1290
          %v1292 = vrot.slane %v1284, %v1291
          %v1294 = vunpack.c.l.s4 1934713408
          %v1295 = vunpack.c.0.s8 %v1294
          %v1296 = vlaneseq
          %v1297 = vshrl.u32 %v1296, 7
          %v1298 = vsub.s32 %v1295, %v1297
          %v1299 = vrot.slane %v1285, %v1298
          %v1300 = vcombine.low %v1244, %v1276
          %v1301 = vcombine.high %v1244, %v1276
          %v1302 = vcombine.low %v1251, %v1283
          %v1303 = vcombine.high %v1251, %v1283
          %v1304 = vcombine.low %v1260, %v1292
          %v1305 = vcombine.high %v1260, %v1292
          %v1306 = vcombine.low %v1267, %v1299
          %v1307 = vcombine.high %v1267, %v1299
          %v1308 = vcombine.low %v892, %v894
          %v1309 = vcombine.high %v892, %v894
          %v1311 = vunpack.c.l.s4 1983009808
          %v1312 = vunpack.c.0.s8 %v1311
          %v1313 = vlaneseq
          %v1314 = vshrl.u32 %v1313, 7
          %v1315 = vsub.s32 %v1312, %v1314
          %v1316 = vrot.slane %v1308, %v1315
          %v1318 = vunpack.c.l.s4 1983009808
          %v1319 = vunpack.c.0.s8 %v1318
          %v1320 = vlaneseq
          %v1321 = vshrl.u32 %v1320, 7
          %v1322 = vsub.s32 %v1319, %v1321
          %v1323 = vrot.slane %v1309, %v1322
          %v1324 = vcombine.low %v893, %v895
          %v1325 = vcombine.high %v893, %v895
          %v1327 = vunpack.c.l.s4 1983009808
          %v1328 = vunpack.c.0.s8 %v1327
          %v1329 = vlaneseq
          %v1330 = vshrl.u32 %v1329, 7
          %v1331 = vsub.s32 %v1328, %v1330
          %v1332 = vrot.slane %v1324, %v1331
          %v1334 = vunpack.c.l.s4 1983009808
          %v1335 = vunpack.c.0.s8 %v1334
          %v1336 = vlaneseq
          %v1337 = vshrl.u32 %v1336, 7
          %v1338 = vsub.s32 %v1335, %v1337
          %v1339 = vrot.slane %v1325, %v1338
          %v1340 = vcombine.low %v896, %v898
          %v1341 = vcombine.high %v896, %v898
          %v1343 = vunpack.c.l.s4 1983009808
          %v1344 = vunpack.c.0.s8 %v1343
          %v1345 = vlaneseq
          %v1346 = vshrl.u32 %v1345, 7
          %v1347 = vsub.s32 %v1344, %v1346
          %v1348 = vrot.slane %v1340, %v1347
          %v1350 = vunpack.c.l.s4 1983009808
          %v1351 = vunpack.c.0.s8 %v1350
          %v1352 = vlaneseq
          %v1353 = vshrl.u32 %v1352, 7
          %v1354 = vsub.s32 %v1351, %v1353
          %v1355 = vrot.slane %v1341, %v1354
          %v1356 = vcombine.low %v897, %v899
          %v1357 = vcombine.high %v897, %v899
          %v1359 = vunpack.c.l.s4 1983009808
          %v1360 = vunpack.c.0.s8 %v1359
          %v1361 = vlaneseq
          %v1362 = vshrl.u32 %v1361, 7
          %v1363 = vsub.s32 %v1360, %v1362
          %v1364 = vrot.slane %v1356, %v1363
          %v1366 = vunpack.c.l.s4 1983009808
          %v1367 = vunpack.c.0.s8 %v1366
          %v1368 = vlaneseq
          %v1369 = vshrl.u32 %v1368, 7
          %v1370 = vsub.s32 %v1367, %v1369
          %v1371 = vrot.slane %v1357, %v1370
          %v1372 = vcombine.low %v1316, %v1332
          %v1373 = vcombine.high %v1316, %v1332
          %v1375 = vunpack.c.l.s4 1934713408
          %v1376 = vunpack.c.0.s8 %v1375
          %v1377 = vlaneseq
          %v1378 = vshrl.u32 %v1377, 7
          %v1379 = vsub.s32 %v1376, %v1378
          %v1380 = vrot.slane %v1372, %v1379
          %v1382 = vunpack.c.l.s4 1934713408
          %v1383 = vunpack.c.0.s8 %v1382
          %v1384 = vlaneseq
          %v1385 = vshrl.u32 %v1384, 7
          %v1386 = vsub.s32 %v1383, %v1385
          %v1387 = vrot.slane %v1373, %v1386
          %v1388 = vcombine.low %v1323, %v1339
          %v1389 = vcombine.high %v1323, %v1339
          %v1391 = vunpack.c.l.s4 1934713408
          %v1392 = vunpack.c.0.s8 %v1391
          %v1393 = vlaneseq
          %v1394 = vshrl.u32 %v1393, 7
          %v1395 = vsub.s32 %v1392, %v1394
          %v1396 = vrot.slane %v1388, %v1395
          %v1398 = vunpack.c.l.s4 1934713408
          %v1399 = vunpack.c.0.s8 %v1398
          %v1400 = vlaneseq
          %v1401 = vshrl.u32 %v1400, 7
          %v1402 = vsub.s32 %v1399, %v1401
          %v1403 = vrot.slane %v1389, %v1402
          %v1404 = vcombine.low %v1348, %v1364
          %v1405 = vcombine.high %v1348, %v1364
          %v1407 = vunpack.c.l.s4 1934713408
          %v1408 = vunpack.c.0.s8 %v1407
          %v1409 = vlaneseq
          %v1410 = vshrl.u32 %v1409, 7
          %v1411 = vsub.s32 %v1408, %v1410
          %v1412 = vrot.slane %v1404, %v1411
          %v1414 = vunpack.c.l.s4 1934713408
          %v1415 = vunpack.c.0.s8 %v1414
          %v1416 = vlaneseq
          %v1417 = vshrl.u32 %v1416, 7
          %v1418 = vsub.s32 %v1415, %v1417
          %v1419 = vrot.slane %v1405, %v1418
          %v1420 = vcombine.low %v1355, %v1371
          %v1421 = vcombine.high %v1355, %v1371
          %v1423 = vunpack.c.l.s4 1934713408
          %v1424 = vunpack.c.0.s8 %v1423
          %v1425 = vlaneseq
          %v1426 = vshrl.u32 %v1425, 7
          %v1427 = vsub.s32 %v1424, %v1426
          %v1428 = vrot.slane %v1420, %v1427
          %v1430 = vunpack.c.l.s4 1934713408
          %v1431 = vunpack.c.0.s8 %v1430
          %v1432 = vlaneseq
          %v1433 = vshrl.u32 %v1432, 7
          %v1434 = vsub.s32 %v1431, %v1433
          %v1435 = vrot.slane %v1421, %v1434
          %v1436 = vcombine.low %v1380, %v1412
          %v1437 = vcombine.high %v1380, %v1412
          %v1438 = vcombine.low %v1387, %v1419
          %v1439 = vcombine.high %v1387, %v1419
          %v1440 = vcombine.low %v1396, %v1428
          %v1441 = vcombine.high %v1396, %v1428
          %v1442 = vcombine.low %v1403, %v1435
          %v1443 = vcombine.high %v1403, %v1435
          %1444 = vxpose.xlu0.b32.start [1/16] %v1028, 128
          %1445 = vxpose.xlu0.b32.cont [2/16] %v1164, 128
          %1446 = vxpose.xlu0.b32.cont [3/16] 0.0, 128
          %1447 = vxpose.xlu0.b32.cont [4/16] 0.0, 128
          %1448 = vxpose.xlu0.b32.cont [5/16] 0.0, 128
          %1449 = vxpose.xlu0.b32.cont [6/16] 0.0, 128
          %1450 = vxpose.xlu0.b32.cont [7/16] 0.0, 128
          %1451 = vxpose.xlu0.b32.cont [8/16] 0.0, 128
          %1452 = vxpose.xlu0.b32.cont [9/16] 0.0, 128
          %1453 = vxpose.xlu0.b32.cont [10/16] 0.0, 128
          %1454 = vxpose.xlu0.b32.cont [11/16] 0.0, 128
          %1455 = vxpose.xlu0.b32.cont [12/16] 0.0, 128
          %1456 = vxpose.xlu0.b32.cont [13/16] 0.0, 128
          %1457 = vxpose.xlu0.b32.cont [14/16] 0.0, 128
          %1458 = vxpose.xlu0.b32.cont [15/16] 0.0, 128
          %1459 = vxpose.xlu0.b32.end [16/16] 0.0, 128
          %v1460 = vpop.trf.xlu0
          %v1461 = vpop.trf.xlu0
          %v1462 = vpop.trf.xlu0
          %v1463 = vpop.trf.xlu0
          %v1464 = vpop.trf.xlu0
          %v1465 = vpop.trf.xlu0
          %v1466 = vpop.trf.xlu0
          %v1467 = vpop.trf.xlu0
          %v1468 = vpop.trf.xlu0
          %v1469 = vpop.trf.xlu0
          %v1470 = vpop.trf.xlu0
          %v1471 = vpop.trf.xlu0
          %v1472 = vpop.trf.xlu0
          %v1473 = vpop.trf.xlu0
          %v1474 = vpop.trf.xlu0
          %v1475 = vpop.trf.xlu0
          %1476 = vxpose.xlu0.b32.start [1/16] %v1029, 128
          %1477 = vxpose.xlu0.b32.cont [2/16] %v1165, 128
          %1478 = vxpose.xlu0.b32.cont [3/16] 0.0, 128
          %1479 = vxpose.xlu0.b32.cont [4/16] 0.0, 128
          %1480 = vxpose.xlu0.b32.cont [5/16] 0.0, 128
          %1481 = vxpose.xlu0.b32.cont [6/16] 0.0, 128
          %1482 = vxpose.xlu0.b32.cont [7/16] 0.0, 128
          %1483 = vxpose.xlu0.b32.cont [8/16] 0.0, 128
          %1484 = vxpose.xlu0.b32.cont [9/16] 0.0, 128
          %1485 = vxpose.xlu0.b32.cont [10/16] 0.0, 128
          %1486 = vxpose.xlu0.b32.cont [11/16] 0.0, 128
          %1487 = vxpose.xlu0.b32.cont [12/16] 0.0, 128
          %1488 = vxpose.xlu0.b32.cont [13/16] 0.0, 128
          %1489 = vxpose.xlu0.b32.cont [14/16] 0.0, 128
          %1490 = vxpose.xlu0.b32.cont [15/16] 0.0, 128
          %1491 = vxpose.xlu0.b32.end [16/16] 0.0, 128
          %v1492 = vpop.trf.xlu0
          %v1493 = vpop.trf.xlu0
          %v1494 = vpop.trf.xlu0
          %v1495 = vpop.trf.xlu0
          %v1496 = vpop.trf.xlu0
          %v1497 = vpop.trf.xlu0
          %v1498 = vpop.trf.xlu0
          %v1499 = vpop.trf.xlu0
          %v1500 = vpop.trf.xlu0
          %v1501 = vpop.trf.xlu0
          %v1502 = vpop.trf.xlu0
          %v1503 = vpop.trf.xlu0
          %v1504 = vpop.trf.xlu0
          %v1505 = vpop.trf.xlu0
          %v1506 = vpop.trf.xlu0
          %v1507 = vpop.trf.xlu0
          %1508 = vxpose.xlu0.b32.start [1/16] %v1030, 128
          %1509 = vxpose.xlu0.b32.cont [2/16] %v1166, 128
          %1510 = vxpose.xlu0.b32.cont [3/16] 0.0, 128
          %1511 = vxpose.xlu0.b32.cont [4/16] 0.0, 128
          %1512 = vxpose.xlu0.b32.cont [5/16] 0.0, 128
          %1513 = vxpose.xlu0.b32.cont [6/16] 0.0, 128
          %1514 = vxpose.xlu0.b32.cont [7/16] 0.0, 128
          %1515 = vxpose.xlu0.b32.cont [8/16] 0.0, 128
          %1516 = vxpose.xlu0.b32.cont [9/16] 0.0, 128
          %1517 = vxpose.xlu0.b32.cont [10/16] 0.0, 128
          %1518 = vxpose.xlu0.b32.cont [11/16] 0.0, 128
          %1519 = vxpose.xlu0.b32.cont [12/16] 0.0, 128
          %1520 = vxpose.xlu0.b32.cont [13/16] 0.0, 128
          %1521 = vxpose.xlu0.b32.cont [14/16] 0.0, 128
          %1522 = vxpose.xlu0.b32.cont [15/16] 0.0, 128
          %1523 = vxpose.xlu0.b32.end [16/16] 0.0, 128
          %v1524 = vpop.trf.xlu0
          %v1525 = vpop.trf.xlu0
          %v1526 = vpop.trf.xlu0
          %v1527 = vpop.trf.xlu0
          %v1528 = vpop.trf.xlu0
          %v1529 = vpop.trf.xlu0
          %v1530 = vpop.trf.xlu0
          %v1531 = vpop.trf.xlu0
          %v1532 = vpop.trf.xlu0
          %v1533 = vpop.trf.xlu0
          %v1534 = vpop.trf.xlu0
          %v1535 = vpop.trf.xlu0
          %v1536 = vpop.trf.xlu0
          %v1537 = vpop.trf.xlu0
          %v1538 = vpop.trf.xlu0
          %v1539 = vpop.trf.xlu0
          %1540 = vxpose.xlu0.b32.start [1/16] %v1031, 128
          %1541 = vxpose.xlu0.b32.cont [2/16] %v1167, 128
          %1542 = vxpose.xlu0.b32.cont [3/16] 0.0, 128
          %1543 = vxpose.xlu0.b32.cont [4/16] 0.0, 128
          %1544 = vxpose.xlu0.b32.cont [5/16] 0.0, 128
          %1545 = vxpose.xlu0.b32.cont [6/16] 0.0, 128
          %1546 = vxpose.xlu0.b32.cont [7/16] 0.0, 128
          %1547 = vxpose.xlu0.b32.cont [8/16] 0.0, 128
          %1548 = vxpose.xlu0.b32.cont [9/16] 0.0, 128
          %1549 = vxpose.xlu0.b32.cont [10/16] 0.0, 128
          %1550 = vxpose.xlu0.b32.cont [11/16] 0.0, 128
          %1551 = vxpose.xlu0.b32.cont [12/16] 0.0, 128
          %1552 = vxpose.xlu0.b32.cont [13/16] 0.0, 128
          %1553 = vxpose.xlu0.b32.cont [14/16] 0.0, 128
          %1554 = vxpose.xlu0.b32.cont [15/16] 0.0, 128
          %1555 = vxpose.xlu0.b32.end [16/16] 0.0, 128
          %v1556 = vpop.trf.xlu0
          %v1557 = vpop.trf.xlu0
          %v1558 = vpop.trf.xlu0
          %v1559 = vpop.trf.xlu0
          %v1560 = vpop.trf.xlu0
          %v1561 = vpop.trf.xlu0
          %v1562 = vpop.trf.xlu0
          %v1563 = vpop.trf.xlu0
          %v1564 = vpop.trf.xlu0
          %v1565 = vpop.trf.xlu0
          %v1566 = vpop.trf.xlu0
          %v1567 = vpop.trf.xlu0
          %v1568 = vpop.trf.xlu0
          %v1569 = vpop.trf.xlu0
          %v1570 = vpop.trf.xlu0
          %v1571 = vpop.trf.xlu0
          %1572 = vxpose.xlu0.b32.start [1/16] %v1032, 128
          %1573 = vxpose.xlu0.b32.cont [2/16] %v1168, 128
          %1574 = vxpose.xlu0.b32.cont [3/16] 0.0, 128
          %1575 = vxpose.xlu0.b32.cont [4/16] 0.0, 128
          %1576 = vxpose.xlu0.b32.cont [5/16] 0.0, 128
          %1577 = vxpose.xlu0.b32.cont [6/16] 0.0, 128
          %1578 = vxpose.xlu0.b32.cont [7/16] 0.0, 128
          %1579 = vxpose.xlu0.b32.cont [8/16] 0.0, 128
          %1580 = vxpose.xlu0.b32.cont [9/16] 0.0, 128
          %1581 = vxpose.xlu0.b32.cont [10/16] 0.0, 128
          %1582 = vxpose.xlu0.b32.cont [11/16] 0.0, 128
          %1583 = vxpose.xlu0.b32.cont [12/16] 0.0, 128
          %1584 = vxpose.xlu0.b32.cont [13/16] 0.0, 128
          %1585 = vxpose.xlu0.b32.cont [14/16] 0.0, 128
          %1586 = vxpose.xlu0.b32.cont [15/16] 0.0, 128
          %1587 = vxpose.xlu0.b32.end [16/16] 0.0, 128
          %v1588 = vpop.trf.xlu0
          %v1589 = vpop.trf.xlu0
          %v1590 = vpop.trf.xlu0
          %v1591 = vpop.trf.xlu0
          %v1592 = vpop.trf.xlu0
          %v1593 = vpop.trf.xlu0
          %v1594 = vpop.trf.xlu0
          %v1595 = vpop.trf.xlu0
          %v1596 = vpop.trf.xlu0
          %v1597 = vpop.trf.xlu0
          %v1598 = vpop.trf.xlu0
          %v1599 = vpop.trf.xlu0
          %v1600 = vpop.trf.xlu0
          %v1601 = vpop.trf.xlu0
          %v1602 = vpop.trf.xlu0
          %v1603 = vpop.trf.xlu0
          %1604 = vxpose.xlu0.b32.start [1/16] %v1033, 128
          %1605 = vxpose.xlu0.b32.cont [2/16] %v1169, 128
          %1606 = vxpose.xlu0.b32.cont [3/16] 0.0, 128
          %1607 = vxpose.xlu0.b32.cont [4/16] 0.0, 128
          %1608 = vxpose.xlu0.b32.cont [5/16] 0.0, 128
          %1609 = vxpose.xlu0.b32.cont [6/16] 0.0, 128
          %1610 = vxpose.xlu0.b32.cont [7/16] 0.0, 128
          %1611 = vxpose.xlu0.b32.cont [8/16] 0.0, 128
          %1612 = vxpose.xlu0.b32.cont [9/16] 0.0, 128
          %1613 = vxpose.xlu0.b32.cont [10/16] 0.0, 128
          %1614 = vxpose.xlu0.b32.cont [11/16] 0.0, 128
          %1615 = vxpose.xlu0.b32.cont [12/16] 0.0, 128
          %1616 = vxpose.xlu0.b32.cont [13/16] 0.0, 128
          %1617 = vxpose.xlu0.b32.cont [14/16] 0.0, 128
          %1618 = vxpose.xlu0.b32.cont [15/16] 0.0, 128
          %1619 = vxpose.xlu0.b32.end [16/16] 0.0, 128
          %v1620 = vpop.trf.xlu0
          %v1621 = vpop.trf.xlu0
          %v1622 = vpop.trf.xlu0
          %v1623 = vpop.trf.xlu0
          %v1624 = vpop.trf.xlu0
          %v1625 = vpop.trf.xlu0
          %v1626 = vpop.trf.xlu0
          %v1627 = vpop.trf.xlu0
          %v1628 = vpop.trf.xlu0
          %v1629 = vpop.trf.xlu0
          %v1630 = vpop.trf.xlu0
          %v1631 = vpop.trf.xlu0
          %v1632 = vpop.trf.xlu0
          %v1633 = vpop.trf.xlu0
          %v1634 = vpop.trf.xlu0
          %v1635 = vpop.trf.xlu0
          %1636 = vxpose.xlu0.b32.start [1/16] %v1034, 128
          %1637 = vxpose.xlu0.b32.cont [2/16] %v1170, 128
          %1638 = vxpose.xlu0.b32.cont [3/16] 0.0, 128
          %1639 = vxpose.xlu0.b32.cont [4/16] 0.0, 128
          %1640 = vxpose.xlu0.b32.cont [5/16] 0.0, 128
          %1641 = vxpose.xlu0.b32.cont [6/16] 0.0, 128
          %1642 = vxpose.xlu0.b32.cont [7/16] 0.0, 128
          %1643 = vxpose.xlu0.b32.cont [8/16] 0.0, 128
          %1644 = vxpose.xlu0.b32.cont [9/16] 0.0, 128
          %1645 = vxpose.xlu0.b32.cont [10/16] 0.0, 128
          %1646 = vxpose.xlu0.b32.cont [11/16] 0.0, 128
          %1647 = vxpose.xlu0.b32.cont [12/16] 0.0, 128
          %1648 = vxpose.xlu0.b32.cont [13/16] 0.0, 128
          %1649 = vxpose.xlu0.b32.cont [14/16] 0.0, 128
          %1650 = vxpose.xlu0.b32.cont [15/16] 0.0, 128
          %1651 = vxpose.xlu0.b32.end [16/16] 0.0, 128
          %v1652 = vpop.trf.xlu0
          %v1653 = vpop.trf.xlu0
          %v1654 = vpop.trf.xlu0
          %v1655 = vpop.trf.xlu0
          %v1656 = vpop.trf.xlu0
          %v1657 = vpop.trf.xlu0
          %v1658 = vpop.trf.xlu0
          %v1659 = vpop.trf.xlu0
          %v1660 = vpop.trf.xlu0
          %v1661 = vpop.trf.xlu0
          %v1662 = vpop.trf.xlu0
          %v1663 = vpop.trf.xlu0
          %v1664 = vpop.trf.xlu0
          %v1665 = vpop.trf.xlu0
          %v1666 = vpop.trf.xlu0
          %v1667 = vpop.trf.xlu0
          %1668 = vxpose.xlu0.b32.start [1/16] %v1035, 128
          %1669 = vxpose.xlu0.b32.cont [2/16] %v1171, 128
          %1670 = vxpose.xlu0.b32.cont [3/16] 0.0, 128
          %1671 = vxpose.xlu0.b32.cont [4/16] 0.0, 128
          %1672 = vxpose.xlu0.b32.cont [5/16] 0.0, 128
          %1673 = vxpose.xlu0.b32.cont [6/16] 0.0, 128
          %1674 = vxpose.xlu0.b32.cont [7/16] 0.0, 128
          %1675 = vxpose.xlu0.b32.cont [8/16] 0.0, 128
          %1676 = vxpose.xlu0.b32.cont [9/16] 0.0, 128
          %1677 = vxpose.xlu0.b32.cont [10/16] 0.0, 128
          %1678 = vxpose.xlu0.b32.cont [11/16] 0.0, 128
          %1679 = vxpose.xlu0.b32.cont [12/16] 0.0, 128
          %1680 = vxpose.xlu0.b32.cont [13/16] 0.0, 128
          %1681 = vxpose.xlu0.b32.cont [14/16] 0.0, 128
          %1682 = vxpose.xlu0.b32.cont [15/16] 0.0, 128
          %1683 = vxpose.xlu0.b32.end [16/16] 0.0, 128
          %v1684 = vpop.trf.xlu0
          %v1685 = vpop.trf.xlu0
          %v1686 = vpop.trf.xlu0
          %v1687 = vpop.trf.xlu0
          %v1688 = vpop.trf.xlu0
          %v1689 = vpop.trf.xlu0
          %v1690 = vpop.trf.xlu0
          %v1691 = vpop.trf.xlu0
          %v1692 = vpop.trf.xlu0
          %v1693 = vpop.trf.xlu0
          %v1694 = vpop.trf.xlu0
          %v1695 = vpop.trf.xlu0
          %v1696 = vpop.trf.xlu0
          %v1697 = vpop.trf.xlu0
          %v1698 = vpop.trf.xlu0
          %v1699 = vpop.trf.xlu0
          %1700 = vxpose.xlu0.b32.start [1/16] %v1300, 128
          %1701 = vxpose.xlu0.b32.cont [2/16] %v1436, 128
          %1702 = vxpose.xlu0.b32.cont [3/16] 0.0, 128
          %1703 = vxpose.xlu0.b32.cont [4/16] 0.0, 128
          %1704 = vxpose.xlu0.b32.cont [5/16] 0.0, 128
          %1705 = vxpose.xlu0.b32.cont [6/16] 0.0, 128
          %1706 = vxpose.xlu0.b32.cont [7/16] 0.0, 128
          %1707 = vxpose.xlu0.b32.cont [8/16] 0.0, 128
          %1708 = vxpose.xlu0.b32.cont [9/16] 0.0, 128
          %1709 = vxpose.xlu0.b32.cont [10/16] 0.0, 128
          %1710 = vxpose.xlu0.b32.cont [11/16] 0.0, 128
          %1711 = vxpose.xlu0.b32.cont [12/16] 0.0, 128
          %1712 = vxpose.xlu0.b32.cont [13/16] 0.0, 128
          %1713 = vxpose.xlu0.b32.cont [14/16] 0.0, 128
          %1714 = vxpose.xlu0.b32.cont [15/16] 0.0, 128
          %1715 = vxpose.xlu0.b32.end [16/16] 0.0, 128
          %v1716 = vpop.trf.xlu0
          %v1717 = vpop.trf.xlu0
          %v1718 = vpop.trf.xlu0
          %v1719 = vpop.trf.xlu0
          %v1720 = vpop.trf.xlu0
          %v1721 = vpop.trf.xlu0
          %v1722 = vpop.trf.xlu0
          %v1723 = vpop.trf.xlu0
          %v1724 = vpop.trf.xlu0
          %v1725 = vpop.trf.xlu0
          %v1726 = vpop.trf.xlu0
          %v1727 = vpop.trf.xlu0
          %v1728 = vpop.trf.xlu0
          %v1729 = vpop.trf.xlu0
          %v1730 = vpop.trf.xlu0
          %v1731 = vpop.trf.xlu0
          %1732 = vxpose.xlu0.b32.start [1/16] %v1301, 128
          %1733 = vxpose.xlu0.b32.cont [2/16] %v1437, 128
          %1734 = vxpose.xlu0.b32.cont [3/16] 0.0, 128
          %1735 = vxpose.xlu0.b32.cont [4/16] 0.0, 128
          %1736 = vxpose.xlu0.b32.cont [5/16] 0.0, 128
          %1737 = vxpose.xlu0.b32.cont [6/16] 0.0, 128
          %1738 = vxpose.xlu0.b32.cont [7/16] 0.0, 128
          %1739 = vxpose.xlu0.b32.cont [8/16] 0.0, 128
          %1740 = vxpose.xlu0.b32.cont [9/16] 0.0, 128
          %1741 = vxpose.xlu0.b32.cont [10/16] 0.0, 128
          %1742 = vxpose.xlu0.b32.cont [11/16] 0.0, 128
          %1743 = vxpose.xlu0.b32.cont [12/16] 0.0, 128
          %1744 = vxpose.xlu0.b32.cont [13/16] 0.0, 128
          %1745 = vxpose.xlu0.b32.cont [14/16] 0.0, 128
          %1746 = vxpose.xlu0.b32.cont [15/16] 0.0, 128
          %1747 = vxpose.xlu0.b32.end [16/16] 0.0, 128
          %v1748 = vpop.trf.xlu0
          %v1749 = vpop.trf.xlu0
          %v1750 = vpop.trf.xlu0
          %v1751 = vpop.trf.xlu0
          %v1752 = vpop.trf.xlu0
          %v1753 = vpop.trf.xlu0
          %v1754 = vpop.trf.xlu0
          %v1755 = vpop.trf.xlu0
          %v1756 = vpop.trf.xlu0
          %v1757 = vpop.trf.xlu0
          %v1758 = vpop.trf.xlu0
          %v1759 = vpop.trf.xlu0
          %v1760 = vpop.trf.xlu0
          %v1761 = vpop.trf.xlu0
          %v1762 = vpop.trf.xlu0
          %v1763 = vpop.trf.xlu0
          %1764 = vxpose.xlu0.b32.start [1/16] %v1302, 128
          %1765 = vxpose.xlu0.b32.cont [2/16] %v1438, 128
          %1766 = vxpose.xlu0.b32.cont [3/16] 0.0, 128
          %1767 = vxpose.xlu0.b32.cont [4/16] 0.0, 128
          %1768 = vxpose.xlu0.b32.cont [5/16] 0.0, 128
          %1769 = vxpose.xlu0.b32.cont [6/16] 0.0, 128
          %1770 = vxpose.xlu0.b32.cont [7/16] 0.0, 128
          %1771 = vxpose.xlu0.b32.cont [8/16] 0.0, 128
          %1772 = vxpose.xlu0.b32.cont [9/16] 0.0, 128
          %1773 = vxpose.xlu0.b32.cont [10/16] 0.0, 128
          %1774 = vxpose.xlu0.b32.cont [11/16] 0.0, 128
          %1775 = vxpose.xlu0.b32.cont [12/16] 0.0, 128
          %1776 = vxpose.xlu0.b32.cont [13/16] 0.0, 128
          %1777 = vxpose.xlu0.b32.cont [14/16] 0.0, 128
          %1778 = vxpose.xlu0.b32.cont [15/16] 0.0, 128
          %1779 = vxpose.xlu0.b32.end [16/16] 0.0, 128
          %v1780 = vpop.trf.xlu0
          %v1781 = vpop.trf.xlu0
          %v1782 = vpop.trf.xlu0
          %v1783 = vpop.trf.xlu0
          %v1784 = vpop.trf.xlu0
          %v1785 = vpop.trf.xlu0
          %v1786 = vpop.trf.xlu0
          %v1787 = vpop.trf.xlu0
          %v1788 = vpop.trf.xlu0
          %v1789 = vpop.trf.xlu0
          %v1790 = vpop.trf.xlu0
          %v1791 = vpop.trf.xlu0
          %v1792 = vpop.trf.xlu0
          %v1793 = vpop.trf.xlu0
          %v1794 = vpop.trf.xlu0
          %v1795 = vpop.trf.xlu0
          %1796 = vxpose.xlu0.b32.start [1/16] %v1303, 128
          %1797 = vxpose.xlu0.b32.cont [2/16] %v1439, 128
          %1798 = vxpose.xlu0.b32.cont [3/16] 0.0, 128
          %1799 = vxpose.xlu0.b32.cont [4/16] 0.0, 128
          %1800 = vxpose.xlu0.b32.cont [5/16] 0.0, 128
          %1801 = vxpose.xlu0.b32.cont [6/16] 0.0, 128
          %1802 = vxpose.xlu0.b32.cont [7/16] 0.0, 128
          %1803 = vxpose.xlu0.b32.cont [8/16] 0.0, 128
          %1804 = vxpose.xlu0.b32.cont [9/16] 0.0, 128
          %1805 = vxpose.xlu0.b32.cont [10/16] 0.0, 128
          %1806 = vxpose.xlu0.b32.cont [11/16] 0.0, 128
          %1807 = vxpose.xlu0.b32.cont [12/16] 0.0, 128
          %1808 = vxpose.xlu0.b32.cont [13/16] 0.0, 128
          %1809 = vxpose.xlu0.b32.cont [14/16] 0.0, 128
          %1810 = vxpose.xlu0.b32.cont [15/16] 0.0, 128
          %1811 = vxpose.xlu0.b32.end [16/16] 0.0, 128
          %v1812 = vpop.trf.xlu0
          %v1813 = vpop.trf.xlu0
          %v1814 = vpop.trf.xlu0
          %v1815 = vpop.trf.xlu0
          %v1816 = vpop.trf.xlu0
          %v1817 = vpop.trf.xlu0
          %v1818 = vpop.trf.xlu0
          %v1819 = vpop.trf.xlu0
          %v1820 = vpop.trf.xlu0
          %v1821 = vpop.trf.xlu0
          %v1822 = vpop.trf.xlu0
          %v1823 = vpop.trf.xlu0
          %v1824 = vpop.trf.xlu0
          %v1825 = vpop.trf.xlu0
          %v1826 = vpop.trf.xlu0
          %v1827 = vpop.trf.xlu0
          %1828 = vxpose.xlu0.b32.start [1/16] %v1304, 128
          %1829 = vxpose.xlu0.b32.cont [2/16] %v1440, 128
          %1830 = vxpose.xlu0.b32.cont [3/16] 0.0, 128
          %1831 = vxpose.xlu0.b32.cont [4/16] 0.0, 128
          %1832 = vxpose.xlu0.b32.cont [5/16] 0.0, 128
          %1833 = vxpose.xlu0.b32.cont [6/16] 0.0, 128
          %1834 = vxpose.xlu0.b32.cont [7/16] 0.0, 128
          %1835 = vxpose.xlu0.b32.cont [8/16] 0.0, 128
          %1836 = vxpose.xlu0.b32.cont [9/16] 0.0, 128
          %1837 = vxpose.xlu0.b32.cont [10/16] 0.0, 128
          %1838 = vxpose.xlu0.b32.cont [11/16] 0.0, 128
          %1839 = vxpose.xlu0.b32.cont [12/16] 0.0, 128
          %1840 = vxpose.xlu0.b32.cont [13/16] 0.0, 128
          %1841 = vxpose.xlu0.b32.cont [14/16] 0.0, 128
          %1842 = vxpose.xlu0.b32.cont [15/16] 0.0, 128
          %1843 = vxpose.xlu0.b32.end [16/16] 0.0, 128
          %v1844 = vpop.trf.xlu0
          %v1845 = vpop.trf.xlu0
          %v1846 = vpop.trf.xlu0
          %v1847 = vpop.trf.xlu0
          %v1848 = vpop.trf.xlu0
          %v1849 = vpop.trf.xlu0
          %v1850 = vpop.trf.xlu0
          %v1851 = vpop.trf.xlu0
          %v1852 = vpop.trf.xlu0
          %v1853 = vpop.trf.xlu0
          %v1854 = vpop.trf.xlu0
          %v1855 = vpop.trf.xlu0
          %v1856 = vpop.trf.xlu0
          %v1857 = vpop.trf.xlu0
          %v1858 = vpop.trf.xlu0
          %v1859 = vpop.trf.xlu0
          %1860 = vxpose.xlu0.b32.start [1/16] %v1305, 128
          %1861 = vxpose.xlu0.b32.cont [2/16] %v1441, 128
          %1862 = vxpose.xlu0.b32.cont [3/16] 0.0, 128
          %1863 = vxpose.xlu0.b32.cont [4/16] 0.0, 128
          %1864 = vxpose.xlu0.b32.cont [5/16] 0.0, 128
          %1865 = vxpose.xlu0.b32.cont [6/16] 0.0, 128
          %1866 = vxpose.xlu0.b32.cont [7/16] 0.0, 128
          %1867 = vxpose.xlu0.b32.cont [8/16] 0.0, 128
          %1868 = vxpose.xlu0.b32.cont [9/16] 0.0, 128
          %1869 = vxpose.xlu0.b32.cont [10/16] 0.0, 128
          %1870 = vxpose.xlu0.b32.cont [11/16] 0.0, 128
          %1871 = vxpose.xlu0.b32.cont [12/16] 0.0, 128
          %1872 = vxpose.xlu0.b32.cont [13/16] 0.0, 128
          %1873 = vxpose.xlu0.b32.cont [14/16] 0.0, 128
          %1874 = vxpose.xlu0.b32.cont [15/16] 0.0, 128
          %1875 = vxpose.xlu0.b32.end [16/16] 0.0, 128
          %v1876 = vpop.trf.xlu0
          %v1877 = vpop.trf.xlu0
          %v1878 = vpop.trf.xlu0
          %v1879 = vpop.trf.xlu0
          %v1880 = vpop.trf.xlu0
          %v1881 = vpop.trf.xlu0
          %v1882 = vpop.trf.xlu0
          %v1883 = vpop.trf.xlu0
          %v1884 = vpop.trf.xlu0
          %v1885 = vpop.trf.xlu0
          %v1886 = vpop.trf.xlu0
          %v1887 = vpop.trf.xlu0
          %v1888 = vpop.trf.xlu0
          %v1889 = vpop.trf.xlu0
          %v1890 = vpop.trf.xlu0
          %v1891 = vpop.trf.xlu0
          %1892 = vxpose.xlu0.b32.start [1/16] %v1306, 128
          %1893 = vxpose.xlu0.b32.cont [2/16] %v1442, 128
          %1894 = vxpose.xlu0.b32.cont [3/16] 0.0, 128
          %1895 = vxpose.xlu0.b32.cont [4/16] 0.0, 128
          %1896 = vxpose.xlu0.b32.cont [5/16] 0.0, 128
          %1897 = vxpose.xlu0.b32.cont [6/16] 0.0, 128
          %1898 = vxpose.xlu0.b32.cont [7/16] 0.0, 128
          %1899 = vxpose.xlu0.b32.cont [8/16] 0.0, 128
          %1900 = vxpose.xlu0.b32.cont [9/16] 0.0, 128
          %1901 = vxpose.xlu0.b32.cont [10/16] 0.0, 128
          %1902 = vxpose.xlu0.b32.cont [11/16] 0.0, 128
          %1903 = vxpose.xlu0.b32.cont [12/16] 0.0, 128
          %1904 = vxpose.xlu0.b32.cont [13/16] 0.0, 128
          %1905 = vxpose.xlu0.b32.cont [14/16] 0.0, 128
          %1906 = vxpose.xlu0.b32.cont [15/16] 0.0, 128
          %1907 = vxpose.xlu0.b32.end [16/16] 0.0, 128
          %v1908 = vpop.trf.xlu0
          %v1909 = vpop.trf.xlu0
          %v1910 = vpop.trf.xlu0
          %v1911 = vpop.trf.xlu0
          %v1912 = vpop.trf.xlu0
          %v1913 = vpop.trf.xlu0
          %v1914 = vpop.trf.xlu0
          %v1915 = vpop.trf.xlu0
          %v1916 = vpop.trf.xlu0
          %v1917 = vpop.trf.xlu0
          %v1918 = vpop.trf.xlu0
          %v1919 = vpop.trf.xlu0
          %v1920 = vpop.trf.xlu0
          %v1921 = vpop.trf.xlu0
          %v1922 = vpop.trf.xlu0
          %v1923 = vpop.trf.xlu0
          %1924 = vxpose.xlu0.b32.start [1/16] %v1307, 128
          %1925 = vxpose.xlu0.b32.cont [2/16] %v1443, 128
          %1926 = vxpose.xlu0.b32.cont [3/16] 0.0, 128
          %1927 = vxpose.xlu0.b32.cont [4/16] 0.0, 128
          %1928 = vxpose.xlu0.b32.cont [5/16] 0.0, 128
          %1929 = vxpose.xlu0.b32.cont [6/16] 0.0, 128
          %1930 = vxpose.xlu0.b32.cont [7/16] 0.0, 128
          %1931 = vxpose.xlu0.b32.cont [8/16] 0.0, 128
          %1932 = vxpose.xlu0.b32.cont [9/16] 0.0, 128
          %1933 = vxpose.xlu0.b32.cont [10/16] 0.0, 128
          %1934 = vxpose.xlu0.b32.cont [11/16] 0.0, 128
          %1935 = vxpose.xlu0.b32.cont [12/16] 0.0, 128
          %1936 = vxpose.xlu0.b32.cont [13/16] 0.0, 128
          %1937 = vxpose.xlu0.b32.cont [14/16] 0.0, 128
          %1938 = vxpose.xlu0.b32.cont [15/16] 0.0, 128
          %1939 = vxpose.xlu0.b32.end [16/16] 0.0, 128
          %v1940 = vpop.trf.xlu0
          %v1941 = vpop.trf.xlu0
          %v1942 = vpop.trf.xlu0
          %v1943 = vpop.trf.xlu0
          %v1944 = vpop.trf.xlu0
          %v1945 = vpop.trf.xlu0
          %v1946 = vpop.trf.xlu0
          %v1947 = vpop.trf.xlu0
          %v1948 = vpop.trf.xlu0
          %v1949 = vpop.trf.xlu0
          %v1950 = vpop.trf.xlu0
          %v1951 = vpop.trf.xlu0
          %v1952 = vpop.trf.xlu0
          %v1953 = vpop.trf.xlu0
          %v1954 = vpop.trf.xlu0
          %v1955 = vpop.trf.xlu0
          %vm1956 = vcmask 130048
          %1957 = vst.msk [vmem:[#allocation2] sm:$0xff] %vm1956, %v1460
          %1958 = vst.msk [vmem:[#allocation2 + $0x8] sm:$0xff] %vm1956, %v1461
          %1959 = vst.msk [vmem:[#allocation2 + $0x10] sm:$0xff] %vm1956, %v1492
          %1960 = vst.msk [vmem:[#allocation2 + $0x18] sm:$0xff] %vm1956, %v1493
          %1961 = vst.msk [vmem:[#allocation2 + $0x20] sm:$0xff] %vm1956, %v1524
          %1962 = vst.msk [vmem:[#allocation2 + $0x28] sm:$0xff] %vm1956, %v1525
          %1963 = vst.msk [vmem:[#allocation2 + $0x30] sm:$0xff] %vm1956, %v1556
          %1964 = vst.msk [vmem:[#allocation2 + $0x38] sm:$0xff] %vm1956, %v1557
          %1965 = vst.msk [vmem:[#allocation2 + $0x40] sm:$0xff] %vm1956, %v1588
          %1966 = vst.msk [vmem:[#allocation2 + $0x48] sm:$0xff] %vm1956, %v1589
          %1967 = vst.msk [vmem:[#allocation2 + $0x50] sm:$0xff] %vm1956, %v1620
          %1968 = vst.msk [vmem:[#allocation2 + $0x58] sm:$0xff] %vm1956, %v1621
          %1969 = vst.msk [vmem:[#allocation2 + $0x60] sm:$0xff] %vm1956, %v1652
          %1970 = vst.msk [vmem:[#allocation2 + $0x68] sm:$0xff] %vm1956, %v1653
          %1971 = vst.msk [vmem:[#allocation2 + $0x70] sm:$0xff] %vm1956, %v1684
          %1972 = vst.msk [vmem:[#allocation2 + $0x78] sm:$0xff] %vm1956, %v1685
          %1973 = vst.msk [vmem:[#allocation2 + $0x80] sm:$0xff] %vm1956, %v1716
          %1974 = vst.msk [vmem:[#allocation2 + $0x88] sm:$0xff] %vm1956, %v1717
          %1975 = vst.msk [vmem:[#allocation2 + $0x90] sm:$0xff] %vm1956, %v1748
          %1976 = vst.msk [vmem:[#allocation2 + $0x98] sm:$0xff] %vm1956, %v1749
          %1977 = vst.msk [vmem:[#allocation2 + $0xa0] sm:$0xff] %vm1956, %v1780
          %1978 = vst.msk [vmem:[#allocation2 + $0xa8] sm:$0xff] %vm1956, %v1781
          %1979 = vst.msk [vmem:[#allocation2 + $0xb0] sm:$0xff] %vm1956, %v1812
          %1980 = vst.msk [vmem:[#allocation2 + $0xb8] sm:$0xff] %vm1956, %v1813
          %1981 = vst.msk [vmem:[#allocation2 + $0xc0] sm:$0xff] %vm1956, %v1844
          %1982 = vst.msk [vmem:[#allocation2 + $0xc8] sm:$0xff] %vm1956, %v1845
          %1983 = vst.msk [vmem:[#allocation2 + $0xd0] sm:$0xff] %vm1956, %v1876
          %1984 = vst.msk [vmem:[#allocation2 + $0xd8] sm:$0xff] %vm1956, %v1877
          %1985 = vst.msk [vmem:[#allocation2 + $0xe0] sm:$0xff] %vm1956, %v1908
          %1986 = vst.msk [vmem:[#allocation2 + $0xe8] sm:$0xff] %vm1956, %v1909
          %1987 = vst.msk [vmem:[#allocation2 + $0xf0] sm:$0xff] %vm1956, %v1940
          %1988 = vst.msk [vmem:[#allocation2 + $0xf8] sm:$0xff] %vm1956, %v1941
          %v1989 = vpack.c.bf16 %v1461, %v1460
          %v1990 = vpack.c.bf16 %v1493, %v1492
          %v1991 = vpack.c.bf16 %v1525, %v1524
          %v1992 = vpack.c.bf16 %v1557, %v1556
          %v1993 = vpack.c.bf16 %v1589, %v1588
          %v1994 = vpack.c.bf16 %v1621, %v1620
          %v1995 = vpack.c.bf16 %v1653, %v1652
          %v1996 = vpack.c.bf16 %v1685, %v1684
          %v1997 = vpack.c.bf16 %v1717, %v1716
          %v1998 = vpack.c.bf16 %v1749, %v1748
          %v1999 = vpack.c.bf16 %v1781, %v1780
          %v2000 = vpack.c.bf16 %v1813, %v1812
          %v2001 = vpack.c.bf16 %v1845, %v1844
          %v2002 = vpack.c.bf16 %v1877, %v1876
          %v2003 = vpack.c.bf16 %v1909, %v1908
          %v2004 = vpack.c.bf16 %v1941, %v1940
          %v2005 = vld [vmem:[#allocation9] sm:$0xf]
          %v2006 = vld [vmem:[#allocation9 + $0x4] sm:$0xf]
          %v2007 = vld [vmem:[#allocation11] sm:$0x1]
          %v2009 = vlaneseq
          %v2010 = vshrl.u32 %v2009, 7
          %v2011 = vsub.s32 0, %v2010
          %v2012 = vrot.slane %v2007, %v2011
          %v2016 = vunpack.c.l.b16 %v2005
          %v2017 = vunpack.c.l.b16 %v2006
          %v2018 = vpack.c.b16 %v2017, %v2016
          %v2021 = vsel %vm1956, %v1989, 0
          %v2024 = vsel %vm1956, %v1990, 0
          %v2027 = vsel %vm1956, %v1991, 0
          %v2030 = vsel %vm1956, %v1992, 0
          %v2033 = vsel %vm1956, %v1993, 0
          %v2036 = vsel %vm1956, %v1994, 0
          %v2039 = vsel %vm1956, %v1995, 0
          %v2042 = vsel %vm1956, %v1996, 0
          %v2045 = vsel %vm1956, %v1997, 0
          %v2048 = vsel %vm1956, %v1998, 0
          %v2051 = vsel %vm1956, %v1999, 0
          %v2054 = vsel %vm1956, %v2000, 0
          %v2057 = vsel %vm1956, %v2001, 0
          %v2060 = vsel %vm1956, %v2002, 0
          %v2063 = vsel %vm1956, %v2003, 0
          %v2066 = vsel %vm1956, %v2004, 0
          %2068 = vmatprep.subr.bf16.mxu0 0
          %2069 = vmatpush1.bf16.msra.mxu0 %v2018
          %2070 = vmatprep.subr.bf16.mxu0 0
          %2071 = vmatpush1.bf16.msra.mxu0 0
          %2072 = vmatprep.subr.bf16.mxu0 0
          %2073 = vmatpush1.bf16.msra.mxu0 0
          %2074 = vmatprep.subr.bf16.mxu0 0
          %2075 = vmatpush1.bf16.msra.mxu0 0
          %2076 = vmatprep.subr.bf16.mxu0 0
          %2077 = vmatpush1.bf16.msra.mxu0 0
          %2078 = vmatprep.subr.bf16.mxu0 0
          %2079 = vmatpush1.bf16.msra.mxu0 0
          %2080 = vmatprep.subr.bf16.mxu0 0
          %2081 = vmatpush1.bf16.msra.mxu0 0
          %2082 = vmatprep.subr.bf16.mxu0 0
          %2083 = vmatpush1.bf16.msra.mxu0 0
          %2084 = vmatprep.subr.bf16.mxu0 0
          %2085 = vmatpush1.bf16.msra.mxu0 0
          %2086 = vmatprep.subr.bf16.mxu0 0
          %2087 = vmatpush1.bf16.msra.mxu0 0
          %2088 = vmatprep.subr.bf16.mxu0 0
          %2089 = vmatpush1.bf16.msra.mxu0 0
          %2090 = vmatprep.subr.bf16.mxu0 0
          %2091 = vmatpush1.bf16.msra.mxu0 0
          %2092 = vmatprep.subr.bf16.mxu0 0
          %2093 = vmatpush1.bf16.msra.mxu0 0
          %2094 = vmatprep.subr.bf16.mxu0 0
          %2095 = vmatpush1.bf16.msra.mxu0 0
          %2096 = vmatprep.subr.bf16.mxu0 0
          %2097 = vmatpush1.bf16.msra.mxu0 0
          %2098 = vmatprep.subr.bf16.mxu0 0
          %2099 = vmatpush1.bf16.msra.mxu0 0
          %2100 = vmatprep.mubr.bf16.mxu0 0
          %2101 = vmatmul.mubr.bf16.gmra.mrb[0].mxu0 %v2021
          %v2102 = vpop.f32.mrb[0].mxu0
          %v2103 = vadd.f32 %v2012, %v2102
          %v2104 = vpop.f32.mrb[0].mxu0
          %v2105 = vpop.f32.mrb[0].mxu0
          %v2106 = vadd.f32 %v2012, %v2105
          %v2107 = vpop.f32.mrb[0].mxu0
          %2108 = vmatprep.mubr.bf16.mxu0 0
          %2109 = vmatmul.mubr.bf16.gmra.mrb[0].mxu0 %v2024
          %v2110 = vpop.f32.mrb[0].mxu0
          %v2111 = vadd.f32 %v2012, %v2110
          %v2112 = vpop.f32.mrb[0].mxu0
          %v2113 = vpop.f32.mrb[0].mxu0
          %v2114 = vadd.f32 %v2012, %v2113
          %v2115 = vpop.f32.mrb[0].mxu0
          %2116 = vmatprep.mubr.bf16.mxu0 0
          %2117 = vmatmul.mubr.bf16.gmra.mrb[0].mxu0 %v2027
          %v2118 = vpop.f32.mrb[0].mxu0
          %v2119 = vadd.f32 %v2012, %v2118
          %v2120 = vpop.f32.mrb[0].mxu0
          %v2121 = vpop.f32.mrb[0].mxu0
          %v2122 = vadd.f32 %v2012, %v2121
          %v2123 = vpop.f32.mrb[0].mxu0
          %2124 = vmatprep.mubr.bf16.mxu0 0
          %2125 = vmatmul.mubr.bf16.gmra.mrb[0].mxu0 %v2030
          %v2126 = vpop.f32.mrb[0].mxu0
          %v2127 = vadd.f32 %v2012, %v2126
          %v2128 = vpop.f32.mrb[0].mxu0
          %v2129 = vpop.f32.mrb[0].mxu0
          %v2130 = vadd.f32 %v2012, %v2129
          %v2131 = vpop.f32.mrb[0].mxu0
          %2132 = vmatprep.mubr.bf16.mxu0 0
          %2133 = vmatmul.mubr.bf16.gmra.mrb[0].mxu0 %v2033
          %v2134 = vpop.f32.mrb[0].mxu0
          %v2135 = vadd.f32 %v2012, %v2134
          %v2136 = vpop.f32.mrb[0].mxu0
          %v2137 = vpop.f32.mrb[0].mxu0
          %v2138 = vadd.f32 %v2012, %v2137
          %v2139 = vpop.f32.mrb[0].mxu0
          %2140 = vmatprep.mubr.bf16.mxu0 0
          %2141 = vmatmul.mubr.bf16.gmra.mrb[0].mxu0 %v2036
          %v2142 = vpop.f32.mrb[0].mxu0
          %v2143 = vadd.f32 %v2012, %v2142
          %v2144 = vpop.f32.mrb[0].mxu0
          %v2145 = vpop.f32.mrb[0].mxu0
          %v2146 = vadd.f32 %v2012, %v2145
          %v2147 = vpop.f32.mrb[0].mxu0
          %2148 = vmatprep.mubr.bf16.mxu0 0
          %2149 = vmatmul.mubr.bf16.gmra.mrb[0].mxu0 %v2039
          %v2150 = vpop.f32.mrb[0].mxu0
          %v2151 = vadd.f32 %v2012, %v2150
          %v2152 = vpop.f32.mrb[0].mxu0
          %v2153 = vpop.f32.mrb[0].mxu0
          %v2154 = vadd.f32 %v2012, %v2153
          %v2155 = vpop.f32.mrb[0].mxu0
          %2156 = vmatprep.mubr.bf16.mxu0 0
          %2157 = vmatmul.mubr.bf16.gmra.mrb[0].mxu0 %v2042
          %v2158 = vpop.f32.mrb[0].mxu0
          %v2159 = vadd.f32 %v2012, %v2158
          %v2160 = vpop.f32.mrb[0].mxu0
          %v2161 = vpop.f32.mrb[0].mxu0
          %v2162 = vadd.f32 %v2012, %v2161
          %v2163 = vpop.f32.mrb[0].mxu0
          %2164 = vmatprep.mubr.bf16.mxu0 0
          %2165 = vmatmul.mubr.bf16.gmra.mrb[0].mxu0 %v2045
          %v2166 = vpop.f32.mrb[0].mxu0
          %v2167 = vadd.f32 %v2012, %v2166
          %v2168 = vpop.f32.mrb[0].mxu0
          %v2169 = vpop.f32.mrb[0].mxu0
          %v2170 = vadd.f32 %v2012, %v2169
          %v2171 = vpop.f32.mrb[0].mxu0
          %2172 = vmatprep.mubr.bf16.mxu0 0
          %2173 = vmatmul.mubr.bf16.gmra.mrb[0].mxu0 %v2048
          %v2174 = vpop.f32.mrb[0].mxu0
          %v2175 = vadd.f32 %v2012, %v2174
          %v2176 = vpop.f32.mrb[0].mxu0
          %v2177 = vpop.f32.mrb[0].mxu0
          %v2178 = vadd.f32 %v2012, %v2177
          %v2179 = vpop.f32.mrb[0].mxu0
          %2180 = vmatprep.mubr.bf16.mxu0 0
          %2181 = vmatmul.mubr.bf16.gmra.mrb[0].mxu0 %v2051
          %v2182 = vpop.f32.mrb[0].mxu0
          %v2183 = vadd.f32 %v2012, %v2182
          %v2184 = vpop.f32.mrb[0].mxu0
          %v2185 = vpop.f32.mrb[0].mxu0
          %v2186 = vadd.f32 %v2012, %v2185
          %v2187 = vpop.f32.mrb[0].mxu0
          %2188 = vmatprep.mubr.bf16.mxu0 0
          %2189 = vmatmul.mubr.bf16.gmra.mrb[0].mxu0 %v2054
          %v2190 = vpop.f32.mrb[0].mxu0
          %v2191 = vadd.f32 %v2012, %v2190
          %v2192 = vpop.f32.mrb[0].mxu0
          %v2193 = vpop.f32.mrb[0].mxu0
          %v2194 = vadd.f32 %v2012, %v2193
          %v2195 = vpop.f32.mrb[0].mxu0
          %2196 = vmatprep.mubr.bf16.mxu0 0
          %2197 = vmatmul.mubr.bf16.gmra.mrb[0].mxu0 %v2057
          %v2198 = vpop.f32.mrb[0].mxu0
          %v2199 = vadd.f32 %v2012, %v2198
          %v2200 = vpop.f32.mrb[0].mxu0
          %v2201 = vpop.f32.mrb[0].mxu0
          %v2202 = vadd.f32 %v2012, %v2201
          %v2203 = vpop.f32.mrb[0].mxu0
          %2204 = vmatprep.mubr.bf16.mxu0 0
          %2205 = vmatmul.mubr.bf16.gmra.mrb[0].mxu0 %v2060
          %v2206 = vpop.f32.mrb[0].mxu0
          %v2207 = vadd.f32 %v2012, %v2206
          %v2208 = vpop.f32.mrb[0].mxu0
          %v2209 = vpop.f32.mrb[0].mxu0
          %v2210 = vadd.f32 %v2012, %v2209
          %v2211 = vpop.f32.mrb[0].mxu0
          %2212 = vmatprep.mubr.bf16.mxu0 0
          %2213 = vmatmul.mubr.bf16.gmra.mrb[0].mxu0 %v2063
          %v2214 = vpop.f32.mrb[0].mxu0
          %v2215 = vadd.f32 %v2012, %v2214
          %v2216 = vpop.f32.mrb[0].mxu0
          %v2217 = vpop.f32.mrb[0].mxu0
          %v2218 = vadd.f32 %v2012, %v2217
          %v2219 = vpop.f32.mrb[0].mxu0
          %2220 = vmatprep.mubr.bf16.mxu0 0
          %2221 = vmatmul.mubr.bf16.gmra.mrb[0].mxu0 %v2066
          %v2222 = vpop.f32.mrb[0].mxu0
          %v2223 = vadd.f32 %v2012, %v2222
          %v2224 = vpop.f32.mrb[0].mxu0
          %v2225 = vpop.f32.mrb[0].mxu0
          %v2226 = vadd.f32 %v2012, %v2225
          %v2227 = vpop.f32.mrb[0].mxu0
          %2228 = vdwg.mxu0
          %v2229 = vpack.c.bf16 %v2106, %v2103
          %v2230 = vpack.c.bf16 %v2114, %v2111
          %v2231 = vpack.c.bf16 %v2122, %v2119
          %v2232 = vpack.c.bf16 %v2130, %v2127
          %v2233 = vpack.c.bf16 %v2138, %v2135
          %v2234 = vpack.c.bf16 %v2146, %v2143
          %v2235 = vpack.c.bf16 %v2154, %v2151
          %v2236 = vpack.c.bf16 %v2162, %v2159
          %v2237 = vpack.c.bf16 %v2170, %v2167
          %v2238 = vpack.c.bf16 %v2178, %v2175
          %v2239 = vpack.c.bf16 %v2186, %v2183
          %v2240 = vpack.c.bf16 %v2194, %v2191
          %v2241 = vpack.c.bf16 %v2202, %v2199
          %v2242 = vpack.c.bf16 %v2210, %v2207
          %v2243 = vpack.c.bf16 %v2218, %v2215
          %v2244 = vpack.c.bf16 %v2226, %v2223
          %vm2245 = vcmask 162816
          %2246 = vst.msk [vmem:[#allocation3] sm:$0xff] %vm2245, %v2229
          %2247 = vst.msk [vmem:[#allocation3 + $0x8] sm:$0xff] %vm2245, %v2230
          %2248 = vst.msk [vmem:[#allocation3 + $0x10] sm:$0xff] %vm2245, %v2231
          %2249 = vst.msk [vmem:[#allocation3 + $0x18] sm:$0xff] %vm2245, %v2232
          %2250 = vst.msk [vmem:[#allocation3 + $0x20] sm:$0xff] %vm2245, %v2233
          %2251 = vst.msk [vmem:[#allocation3 + $0x28] sm:$0xff] %vm2245, %v2234
          %2252 = vst.msk [vmem:[#allocation3 + $0x30] sm:$0xff] %vm2245, %v2235
          %2253 = vst.msk [vmem:[#allocation3 + $0x38] sm:$0xff] %vm2245, %v2236
          %2254 = vst.msk [vmem:[#allocation3 + $0x40] sm:$0xff] %vm2245, %v2237
          %2255 = vst.msk [vmem:[#allocation3 + $0x48] sm:$0xff] %vm2245, %v2238
          %2256 = vst.msk [vmem:[#allocation3 + $0x50] sm:$0xff] %vm2245, %v2239
          %2257 = vst.msk [vmem:[#allocation3 + $0x58] sm:$0xff] %vm2245, %v2240
          %2258 = vst.msk [vmem:[#allocation3 + $0x60] sm:$0xff] %vm2245, %v2241
          %2259 = vst.msk [vmem:[#allocation3 + $0x68] sm:$0xff] %vm2245, %v2242
          %2260 = vst.msk [vmem:[#allocation3 + $0x70] sm:$0xff] %vm2245, %v2243
          %2261 = vst.msk [vmem:[#allocation3 + $0x78] sm:$0xff] %vm2245, %v2244
          %v2262 = vcombine.low %v2103, %v2119
          %v2263 = vcombine.high %v2103, %v2119
          %v2265 = vunpack.c.l.s4 1983009808
          %v2266 = vunpack.c.0.s8 %v2265
          %v2267 = vlaneseq
          %v2268 = vshrl.u32 %v2267, 7
          %v2269 = vsub.s32 %v2266, %v2268
          %v2270 = vrot.slane %v2262, %v2269
          %v2272 = vunpack.c.l.s4 1983009808
          %v2273 = vunpack.c.0.s8 %v2272
          %v2274 = vlaneseq
          %v2275 = vshrl.u32 %v2274, 7
          %v2276 = vsub.s32 %v2273, %v2275
          %v2277 = vrot.slane %v2263, %v2276
          %v2278 = vcombine.low %v2111, %v2127
          %v2279 = vcombine.high %v2111, %v2127
          %v2281 = vunpack.c.l.s4 1983009808
          %v2282 = vunpack.c.0.s8 %v2281
          %v2283 = vlaneseq
          %v2284 = vshrl.u32 %v2283, 7
          %v2285 = vsub.s32 %v2282, %v2284
          %v2286 = vrot.slane %v2278, %v2285
          %v2288 = vunpack.c.l.s4 1983009808
          %v2289 = vunpack.c.0.s8 %v2288
          %v2290 = vlaneseq
          %v2291 = vshrl.u32 %v2290, 7
          %v2292 = vsub.s32 %v2289, %v2291
          %v2293 = vrot.slane %v2279, %v2292
          %v2294 = vcombine.low %v2135, %v2151
          %v2295 = vcombine.high %v2135, %v2151
          %v2297 = vunpack.c.l.s4 1983009808
          %v2298 = vunpack.c.0.s8 %v2297
          %v2299 = vlaneseq
          %v2300 = vshrl.u32 %v2299, 7
          %v2301 = vsub.s32 %v2298, %v2300
          %v2302 = vrot.slane %v2294, %v2301
          %v2304 = vunpack.c.l.s4 1983009808
          %v2305 = vunpack.c.0.s8 %v2304
          %v2306 = vlaneseq
          %v2307 = vshrl.u32 %v2306, 7
          %v2308 = vsub.s32 %v2305, %v2307
          %v2309 = vrot.slane %v2295, %v2308
          %v2310 = vcombine.low %v2143, %v2159
          %v2311 = vcombine.high %v2143, %v2159
          %v2313 = vunpack.c.l.s4 1983009808
          %v2314 = vunpack.c.0.s8 %v2313
          %v2315 = vlaneseq
          %v2316 = vshrl.u32 %v2315, 7
          %v2317 = vsub.s32 %v2314, %v2316
          %v2318 = vrot.slane %v2310, %v2317
          %v2320 = vunpack.c.l.s4 1983009808
          %v2321 = vunpack.c.0.s8 %v2320
          %v2322 = vlaneseq
          %v2323 = vshrl.u32 %v2322, 7
          %v2324 = vsub.s32 %v2321, %v2323
          %v2325 = vrot.slane %v2311, %v2324
          %v2326 = vcombine.low %v2270, %v2286
          %v2327 = vcombine.high %v2270, %v2286
          %v2329 = vunpack.c.l.s4 1934713408
          %v2330 = vunpack.c.0.s8 %v2329
          %v2331 = vlaneseq
          %v2332 = vshrl.u32 %v2331, 7
          %v2333 = vsub.s32 %v2330, %v2332
          %v2334 = vrot.slane %v2326, %v2333
          %v2336 = vunpack.c.l.s4 1934713408
          %v2337 = vunpack.c.0.s8 %v2336
          %v2338 = vlaneseq
          %v2339 = vshrl.u32 %v2338, 7
          %v2340 = vsub.s32 %v2337, %v2339
          %v2341 = vrot.slane %v2327, %v2340
          %v2342 = vcombine.low %v2277, %v2293
          %v2343 = vcombine.high %v2277, %v2293
          %v2345 = vunpack.c.l.s4 1934713408
          %v2346 = vunpack.c.0.s8 %v2345
          %v2347 = vlaneseq
          %v2348 = vshrl.u32 %v2347, 7
          %v2349 = vsub.s32 %v2346, %v2348
          %v2350 = vrot.slane %v2342, %v2349
          %v2352 = vunpack.c.l.s4 1934713408
          %v2353 = vunpack.c.0.s8 %v2352
          %v2354 = vlaneseq
          %v2355 = vshrl.u32 %v2354, 7
          %v2356 = vsub.s32 %v2353, %v2355
          %v2357 = vrot.slane %v2343, %v2356
          %v2358 = vcombine.low %v2302, %v2318
          %v2359 = vcombine.high %v2302, %v2318
          %v2361 = vunpack.c.l.s4 1934713408
          %v2362 = vunpack.c.0.s8 %v2361
          %v2363 = vlaneseq
          %v2364 = vshrl.u32 %v2363, 7
          %v2365 = vsub.s32 %v2362, %v2364
          %v2366 = vrot.slane %v2358, %v2365
          %v2368 = vunpack.c.l.s4 1934713408
          %v2369 = vunpack.c.0.s8 %v2368
          %v2370 = vlaneseq
          %v2371 = vshrl.u32 %v2370, 7
          %v2372 = vsub.s32 %v2369, %v2371
          %v2373 = vrot.slane %v2359, %v2372
          %v2374 = vcombine.low %v2309, %v2325
          %v2375 = vcombine.high %v2309, %v2325
          %v2377 = vunpack.c.l.s4 1934713408
          %v2378 = vunpack.c.0.s8 %v2377
          %v2379 = vlaneseq
          %v2380 = vshrl.u32 %v2379, 7
          %v2381 = vsub.s32 %v2378, %v2380
          %v2382 = vrot.slane %v2374, %v2381
          %v2384 = vunpack.c.l.s4 1934713408
          %v2385 = vunpack.c.0.s8 %v2384
          %v2386 = vlaneseq
          %v2387 = vshrl.u32 %v2386, 7
          %v2388 = vsub.s32 %v2385, %v2387
          %v2389 = vrot.slane %v2375, %v2388
          %v2390 = vcombine.low %v2334, %v2366
          %v2391 = vcombine.high %v2334, %v2366
          %v2392 = vcombine.low %v2341, %v2373
          %v2393 = vcombine.high %v2341, %v2373
          %v2394 = vcombine.low %v2350, %v2382
          %v2395 = vcombine.high %v2350, %v2382
          %v2396 = vcombine.low %v2357, %v2389
          %v2397 = vcombine.high %v2357, %v2389
          %v2398 = vcombine.low %v2167, %v2183
          %v2399 = vcombine.high %v2167, %v2183
          %v2401 = vunpack.c.l.s4 1983009808
          %v2402 = vunpack.c.0.s8 %v2401
          %v2403 = vlaneseq
          %v2404 = vshrl.u32 %v2403, 7
          %v2405 = vsub.s32 %v2402, %v2404
          %v2406 = vrot.slane %v2398, %v2405
          %v2408 = vunpack.c.l.s4 1983009808
          %v2409 = vunpack.c.0.s8 %v2408
          %v2410 = vlaneseq
          %v2411 = vshrl.u32 %v2410, 7
          %v2412 = vsub.s32 %v2409, %v2411
          %v2413 = vrot.slane %v2399, %v2412
          %v2414 = vcombine.low %v2175, %v2191
          %v2415 = vcombine.high %v2175, %v2191
          %v2417 = vunpack.c.l.s4 1983009808
          %v2418 = vunpack.c.0.s8 %v2417
          %v2419 = vlaneseq
          %v2420 = vshrl.u32 %v2419, 7
          %v2421 = vsub.s32 %v2418, %v2420
          %v2422 = vrot.slane %v2414, %v2421
          %v2424 = vunpack.c.l.s4 1983009808
          %v2425 = vunpack.c.0.s8 %v2424
          %v2426 = vlaneseq
          %v2427 = vshrl.u32 %v2426, 7
          %v2428 = vsub.s32 %v2425, %v2427
          %v2429 = vrot.slane %v2415, %v2428
          %v2430 = vcombine.low %v2199, %v2215
          %v2431 = vcombine.high %v2199, %v2215
          %v2433 = vunpack.c.l.s4 1983009808
          %v2434 = vunpack.c.0.s8 %v2433
          %v2435 = vlaneseq
          %v2436 = vshrl.u32 %v2435, 7
          %v2437 = vsub.s32 %v2434, %v2436
          %v2438 = vrot.slane %v2430, %v2437
          %v2440 = vunpack.c.l.s4 1983009808
          %v2441 = vunpack.c.0.s8 %v2440
          %v2442 = vlaneseq
          %v2443 = vshrl.u32 %v2442, 7
          %v2444 = vsub.s32 %v2441, %v2443
          %v2445 = vrot.slane %v2431, %v2444
          %v2446 = vcombine.low %v2207, %v2223
          %v2447 = vcombine.high %v2207, %v2223
          %v2449 = vunpack.c.l.s4 1983009808
          %v2450 = vunpack.c.0.s8 %v2449
          %v2451 = vlaneseq
          %v2452 = vshrl.u32 %v2451, 7
          %v2453 = vsub.s32 %v2450, %v2452
          %v2454 = vrot.slane %v2446, %v2453
          %v2456 = vunpack.c.l.s4 1983009808
          %v2457 = vunpack.c.0.s8 %v2456
          %v2458 = vlaneseq
          %v2459 = vshrl.u32 %v2458, 7
          %v2460 = vsub.s32 %v2457, %v2459
          %v2461 = vrot.slane %v2447, %v2460
          %v2462 = vcombine.low %v2406, %v2422
          %v2463 = vcombine.high %v2406, %v2422
          %v2465 = vunpack.c.l.s4 1934713408
          %v2466 = vunpack.c.0.s8 %v2465
          %v2467 = vlaneseq
          %v2468 = vshrl.u32 %v2467, 7
          %v2469 = vsub.s32 %v2466, %v2468
          %v2470 = vrot.slane %v2462, %v2469
          %v2472 = vunpack.c.l.s4 1934713408
          %v2473 = vunpack.c.0.s8 %v2472
          %v2474 = vlaneseq
          %v2475 = vshrl.u32 %v2474, 7
          %v2476 = vsub.s32 %v2473, %v2475
          %v2477 = vrot.slane %v2463, %v2476
          %v2478 = vcombine.low %v2413, %v2429
          %v2479 = vcombine.high %v2413, %v2429
          %v2481 = vunpack.c.l.s4 1934713408
          %v2482 = vunpack.c.0.s8 %v2481
          %v2483 = vlaneseq
          %v2484 = vshrl.u32 %v2483, 7
          %v2485 = vsub.s32 %v2482, %v2484
          %v2486 = vrot.slane %v2478, %v2485
          %v2488 = vunpack.c.l.s4 1934713408
          %v2489 = vunpack.c.0.s8 %v2488
          %v2490 = vlaneseq
          %v2491 = vshrl.u32 %v2490, 7
          %v2492 = vsub.s32 %v2489, %v2491
          %v2493 = vrot.slane %v2479, %v2492
          %v2494 = vcombine.low %v2438, %v2454
          %v2495 = vcombine.high %v2438, %v2454
          %v2497 = vunpack.c.l.s4 1934713408
          %v2498 = vunpack.c.0.s8 %v2497
          %v2499 = vlaneseq
          %v2500 = vshrl.u32 %v2499, 7
          %v2501 = vsub.s32 %v2498, %v2500
          %v2502 = vrot.slane %v2494, %v2501
          %v2504 = vunpack.c.l.s4 1934713408
          %v2505 = vunpack.c.0.s8 %v2504
          %v2506 = vlaneseq
          %v2507 = vshrl.u32 %v2506, 7
          %v2508 = vsub.s32 %v2505, %v2507
          %v2509 = vrot.slane %v2495, %v2508
          %v2510 = vcombine.low %v2445, %v2461
          %v2511 = vcombine.high %v2445, %v2461
          %v2513 = vunpack.c.l.s4 1934713408
          %v2514 = vunpack.c.0.s8 %v2513
          %v2515 = vlaneseq
          %v2516 = vshrl.u32 %v2515, 7
          %v2517 = vsub.s32 %v2514, %v2516
          %v2518 = vrot.slane %v2510, %v2517
          %v2520 = vunpack.c.l.s4 1934713408
          %v2521 = vunpack.c.0.s8 %v2520
          %v2522 = vlaneseq
          %v2523 = vshrl.u32 %v2522, 7
          %v2524 = vsub.s32 %v2521, %v2523
          %v2525 = vrot.slane %v2511, %v2524
          %v2526 = vcombine.low %v2470, %v2502
          %v2527 = vcombine.high %v2470, %v2502
          %v2528 = vcombine.low %v2477, %v2509
          %v2529 = vcombine.high %v2477, %v2509
          %v2530 = vcombine.low %v2486, %v2518
          %v2531 = vcombine.high %v2486, %v2518
          %v2532 = vcombine.low %v2493, %v2525
          %v2533 = vcombine.high %v2493, %v2525
          %v2534 = vcombine.low %v2106, %v2122
          %v2535 = vcombine.high %v2106, %v2122
          %v2537 = vunpack.c.l.s4 1983009808
          %v2538 = vunpack.c.0.s8 %v2537
          %v2539 = vlaneseq
          %v2540 = vshrl.u32 %v2539, 7
          %v2541 = vsub.s32 %v2538, %v2540
          %v2542 = vrot.slane %v2534, %v2541
          %v2544 = vunpack.c.l.s4 1983009808
          %v2545 = vunpack.c.0.s8 %v2544
          %v2546 = vlaneseq
          %v2547 = vshrl.u32 %v2546, 7
          %v2548 = vsub.s32 %v2545, %v2547
          %v2549 = vrot.slane %v2535, %v2548
          %v2550 = vcombine.low %v2114, %v2130
          %v2551 = vcombine.high %v2114, %v2130
          %v2553 = vunpack.c.l.s4 1983009808
          %v2554 = vunpack.c.0.s8 %v2553
          %v2555 = vlaneseq
          %v2556 = vshrl.u32 %v2555, 7
          %v2557 = vsub.s32 %v2554, %v2556
          %v2558 = vrot.slane %v2550, %v2557
          %v2560 = vunpack.c.l.s4 1983009808
          %v2561 = vunpack.c.0.s8 %v2560
          %v2562 = vlaneseq
          %v2563 = vshrl.u32 %v2562, 7
          %v2564 = vsub.s32 %v2561, %v2563
          %v2565 = vrot.slane %v2551, %v2564
          %v2566 = vcombine.low %v2138, %v2154
          %v2567 = vcombine.high %v2138, %v2154
          %v2569 = vunpack.c.l.s4 1983009808
          %v2570 = vunpack.c.0.s8 %v2569
          %v2571 = vlaneseq
          %v2572 = vshrl.u32 %v2571, 7
          %v2573 = vsub.s32 %v2570, %v2572
          %v2574 = vrot.slane %v2566, %v2573
          %v2576 = vunpack.c.l.s4 1983009808
          %v2577 = vunpack.c.0.s8 %v2576
          %v2578 = vlaneseq
          %v2579 = vshrl.u32 %v2578, 7
          %v2580 = vsub.s32 %v2577, %v2579
          %v2581 = vrot.slane %v2567, %v2580
          %v2582 = vcombine.low %v2146, %v2162
          %v2583 = vcombine.high %v2146, %v2162
          %v2585 = vunpack.c.l.s4 1983009808
          %v2586 = vunpack.c.0.s8 %v2585
          %v2587 = vlaneseq
          %v2588 = vshrl.u32 %v2587, 7
          %v2589 = vsub.s32 %v2586, %v2588
          %v2590 = vrot.slane %v2582, %v2589
          %v2592 = vunpack.c.l.s4 1983009808
          %v2593 = vunpack.c.0.s8 %v2592
          %v2594 = vlaneseq
          %v2595 = vshrl.u32 %v2594, 7
          %v2596 = vsub.s32 %v2593, %v2595
          %v2597 = vrot.slane %v2583, %v2596
          %v2598 = vcombine.low %v2542, %v2558
          %v2599 = vcombine.high %v2542, %v2558
          %v2601 = vunpack.c.l.s4 1934713408
          %v2602 = vunpack.c.0.s8 %v2601
          %v2603 = vlaneseq
          %v2604 = vshrl.u32 %v2603, 7
          %v2605 = vsub.s32 %v2602, %v2604
          %v2606 = vrot.slane %v2598, %v2605
          %v2608 = vunpack.c.l.s4 1934713408
          %v2609 = vunpack.c.0.s8 %v2608
          %v2610 = vlaneseq
          %v2611 = vshrl.u32 %v2610, 7
          %v2612 = vsub.s32 %v2609, %v2611
          %v2613 = vrot.slane %v2599, %v2612
          %v2614 = vcombine.low %v2549, %v2565
          %v2615 = vcombine.high %v2549, %v2565
          %v2617 = vunpack.c.l.s4 1934713408
          %v2618 = vunpack.c.0.s8 %v2617
          %v2619 = vlaneseq
          %v2620 = vshrl.u32 %v2619, 7
          %v2621 = vsub.s32 %v2618, %v2620
          %v2622 = vrot.slane %v2614, %v2621
          %v2624 = vunpack.c.l.s4 1934713408
          %v2625 = vunpack.c.0.s8 %v2624
          %v2626 = vlaneseq
          %v2627 = vshrl.u32 %v2626, 7
          %v2628 = vsub.s32 %v2625, %v2627
          %v2629 = vrot.slane %v2615, %v2628
          %v2630 = vcombine.low %v2574, %v2590
          %v2631 = vcombine.high %v2574, %v2590
          %v2633 = vunpack.c.l.s4 1934713408
          %v2634 = vunpack.c.0.s8 %v2633
          %v2635 = vlaneseq
          %v2636 = vshrl.u32 %v2635, 7
          %v2637 = vsub.s32 %v2634, %v2636
          %v2638 = vrot.slane %v2630, %v2637
          %v2640 = vunpack.c.l.s4 1934713408
          %v2641 = vunpack.c.0.s8 %v2640
          %v2642 = vlaneseq
          %v2643 = vshrl.u32 %v2642, 7
          %v2644 = vsub.s32 %v2641, %v2643
          %v2645 = vrot.slane %v2631, %v2644
          %v2646 = vcombine.low %v2581, %v2597
          %v2647 = vcombine.high %v2581, %v2597
          %v2649 = vunpack.c.l.s4 1934713408
          %v2650 = vunpack.c.0.s8 %v2649
          %v2651 = vlaneseq
          %v2652 = vshrl.u32 %v2651, 7
          %v2653 = vsub.s32 %v2650, %v2652
          %v2654 = vrot.slane %v2646, %v2653
          %v2656 = vunpack.c.l.s4 1934713408
          %v2657 = vunpack.c.0.s8 %v2656
          %v2658 = vlaneseq
          %v2659 = vshrl.u32 %v2658, 7
          %v2660 = vsub.s32 %v2657, %v2659
          %v2661 = vrot.slane %v2647, %v2660
          %v2662 = vcombine.low %v2606, %v2638
          %v2663 = vcombine.high %v2606, %v2638
          %v2664 = vcombine.low %v2613, %v2645
          %v2665 = vcombine.high %v2613, %v2645
          %v2666 = vcombine.low %v2622, %v2654
          %v2667 = vcombine.high %v2622, %v2654
          %v2668 = vcombine.low %v2629, %v2661
          %v2669 = vcombine.high %v2629, %v2661
          %v2670 = vcombine.low %v2170, %v2186
          %v2671 = vcombine.high %v2170, %v2186
          %v2673 = vunpack.c.l.s4 1983009808
          %v2674 = vunpack.c.0.s8 %v2673
          %v2675 = vlaneseq
          %v2676 = vshrl.u32 %v2675, 7
          %v2677 = vsub.s32 %v2674, %v2676
          %v2678 = vrot.slane %v2670, %v2677
          %v2680 = vunpack.c.l.s4 1983009808
          %v2681 = vunpack.c.0.s8 %v2680
          %v2682 = vlaneseq
          %v2683 = vshrl.u32 %v2682, 7
          %v2684 = vsub.s32 %v2681, %v2683
          %v2685 = vrot.slane %v2671, %v2684
          %v2686 = vcombine.low %v2178, %v2194
          %v2687 = vcombine.high %v2178, %v2194
          %v2689 = vunpack.c.l.s4 1983009808
          %v2690 = vunpack.c.0.s8 %v2689
          %v2691 = vlaneseq
          %v2692 = vshrl.u32 %v2691, 7
          %v2693 = vsub.s32 %v2690, %v2692
          %v2694 = vrot.slane %v2686, %v2693
          %v2696 = vunpack.c.l.s4 1983009808
          %v2697 = vunpack.c.0.s8 %v2696
          %v2698 = vlaneseq
          %v2699 = vshrl.u32 %v2698, 7
          %v2700 = vsub.s32 %v2697, %v2699
          %v2701 = vrot.slane %v2687, %v2700
          %v2702 = vcombine.low %v2202, %v2218
          %v2703 = vcombine.high %v2202, %v2218
          %v2705 = vunpack.c.l.s4 1983009808
          %v2706 = vunpack.c.0.s8 %v2705
          %v2707 = vlaneseq
          %v2708 = vshrl.u32 %v2707, 7
          %v2709 = vsub.s32 %v2706, %v2708
          %v2710 = vrot.slane %v2702, %v2709
          %v2712 = vunpack.c.l.s4 1983009808
          %v2713 = vunpack.c.0.s8 %v2712
          %v2714 = vlaneseq
          %v2715 = vshrl.u32 %v2714, 7
          %v2716 = vsub.s32 %v2713, %v2715
          %v2717 = vrot.slane %v2703, %v2716
          %v2718 = vcombine.low %v2210, %v2226
          %v2719 = vcombine.high %v2210, %v2226
          %v2721 = vunpack.c.l.s4 1983009808
          %v2722 = vunpack.c.0.s8 %v2721
          %v2723 = vlaneseq
          %v2724 = vshrl.u32 %v2723, 7
          %v2725 = vsub.s32 %v2722, %v2724
          %v2726 = vrot.slane %v2718, %v2725
          %v2728 = vunpack.c.l.s4 1983009808
          %v2729 = vunpack.c.0.s8 %v2728
          %v2730 = vlaneseq
          %v2731 = vshrl.u32 %v2730, 7
          %v2732 = vsub.s32 %v2729, %v2731
          %v2733 = vrot.slane %v2719, %v2732
          %v2734 = vcombine.low %v2678, %v2694
          %v2735 = vcombine.high %v2678, %v2694
          %v2737 = vunpack.c.l.s4 1934713408
          %v2738 = vunpack.c.0.s8 %v2737
          %v2739 = vlaneseq
          %v2740 = vshrl.u32 %v2739, 7
          %v2741 = vsub.s32 %v2738, %v2740
          %v2742 = vrot.slane %v2734, %v2741
          %v2744 = vunpack.c.l.s4 1934713408
          %v2745 = vunpack.c.0.s8 %v2744
          %v2746 = vlaneseq
          %v2747 = vshrl.u32 %v2746, 7
          %v2748 = vsub.s32 %v2745, %v2747
          %v2749 = vrot.slane %v2735, %v2748
          %v2750 = vcombine.low %v2685, %v2701
          %v2751 = vcombine.high %v2685, %v2701
          %v2753 = vunpack.c.l.s4 1934713408
          %v2754 = vunpack.c.0.s8 %v2753
          %v2755 = vlaneseq
          %v2756 = vshrl.u32 %v2755, 7
          %v2757 = vsub.s32 %v2754, %v2756
          %v2758 = vrot.slane %v2750, %v2757
          %v2760 = vunpack.c.l.s4 1934713408
          %v2761 = vunpack.c.0.s8 %v2760
          %v2762 = vlaneseq
          %v2763 = vshrl.u32 %v2762, 7
          %v2764 = vsub.s32 %v2761, %v2763
          %v2765 = vrot.slane %v2751, %v2764
          %v2766 = vcombine.low %v2710, %v2726
          %v2767 = vcombine.high %v2710, %v2726
          %v2769 = vunpack.c.l.s4 1934713408
          %v2770 = vunpack.c.0.s8 %v2769
          %v2771 = vlaneseq
          %v2772 = vshrl.u32 %v2771, 7
          %v2773 = vsub.s32 %v2770, %v2772
          %v2774 = vrot.slane %v2766, %v2773
          %v2776 = vunpack.c.l.s4 1934713408
          %v2777 = vunpack.c.0.s8 %v2776
          %v2778 = vlaneseq
          %v2779 = vshrl.u32 %v2778, 7
          %v2780 = vsub.s32 %v2777, %v2779
          %v2781 = vrot.slane %v2767, %v2780
          %v2782 = vcombine.low %v2717, %v2733
          %v2783 = vcombine.high %v2717, %v2733
          %v2785 = vunpack.c.l.s4 1934713408
          %v2786 = vunpack.c.0.s8 %v2785
          %v2787 = vlaneseq
          %v2788 = vshrl.u32 %v2787, 7
          %v2789 = vsub.s32 %v2786, %v2788
          %v2790 = vrot.slane %v2782, %v2789
          %v2792 = vunpack.c.l.s4 1934713408
          %v2793 = vunpack.c.0.s8 %v2792
          %v2794 = vlaneseq
          %v2795 = vshrl.u32 %v2794, 7
          %v2796 = vsub.s32 %v2793, %v2795
          %v2797 = vrot.slane %v2783, %v2796
          %v2798 = vcombine.low %v2742, %v2774
          %v2799 = vcombine.high %v2742, %v2774
          %v2800 = vcombine.low %v2749, %v2781
          %v2801 = vcombine.high %v2749, %v2781
          %v2802 = vcombine.low %v2758, %v2790
          %v2803 = vcombine.high %v2758, %v2790
          %v2804 = vcombine.low %v2765, %v2797
          %v2805 = vcombine.high %v2765, %v2797
          %v2806 = vpack.c.bf16 %v2526, %v2390
          %v2807 = vpack.c.bf16 %v2527, %v2391
          %v2808 = vpack.c.bf16 %v2528, %v2392
          %v2809 = vpack.c.bf16 %v2529, %v2393
          %v2810 = vpack.c.bf16 %v2530, %v2394
          %v2811 = vpack.c.bf16 %v2531, %v2395
          %v2812 = vpack.c.bf16 %v2532, %v2396
          %v2813 = vpack.c.bf16 %v2533, %v2397
          %v2814 = vpack.c.bf16 %v2798, %v2662
          %v2815 = vpack.c.bf16 %v2799, %v2663
          %v2816 = vpack.c.bf16 %v2800, %v2664
          %v2817 = vpack.c.bf16 %v2801, %v2665
          %v2818 = vpack.c.bf16 %v2802, %v2666
          %v2819 = vpack.c.bf16 %v2803, %v2667
          %v2820 = vpack.c.bf16 %v2804, %v2668
          %v2821 = vpack.c.bf16 %v2805, %v2669
          %2822 = vst.msk [vmem:[#allocation4] sm:$0xff] %vm2245, %v2806
          %2823 = vst.msk [vmem:[#allocation4 + $0x8] sm:$0xff] %vm2245, %v2807
          %2824 = vst.msk [vmem:[#allocation4 + $0x10] sm:$0xff] %vm2245, %v2808
          %2825 = vst.msk [vmem:[#allocation4 + $0x18] sm:$0xff] %vm2245, %v2809
          %2826 = vst.msk [vmem:[#allocation4 + $0x20] sm:$0xff] %vm2245, %v2810
          %2827 = vst.msk [vmem:[#allocation4 + $0x28] sm:$0xff] %vm2245, %v2811
          %2828 = vst.msk [vmem:[#allocation4 + $0x30] sm:$0xff] %vm2245, %v2812
          %2829 = vst.msk [vmem:[#allocation4 + $0x38] sm:$0xff] %vm2245, %v2813
          %2830 = vst.msk [vmem:[#allocation4 + $0x40] sm:$0xff] %vm2245, %v2814
          %2831 = vst.msk [vmem:[#allocation4 + $0x48] sm:$0xff] %vm2245, %v2815
          %2832 = vst.msk [vmem:[#allocation4 + $0x50] sm:$0xff] %vm2245, %v2816
          %2833 = vst.msk [vmem:[#allocation4 + $0x58] sm:$0xff] %vm2245, %v2817
          %2834 = vst.msk [vmem:[#allocation4 + $0x60] sm:$0xff] %vm2245, %v2818
          %2835 = vst.msk [vmem:[#allocation4 + $0x68] sm:$0xff] %vm2245, %v2819
          %2836 = vst.msk [vmem:[#allocation4 + $0x70] sm:$0xff] %vm2245, %v2820
          %2837 = vst.msk [vmem:[#allocation4 + $0x78] sm:$0xff] %vm2245, %v2821
        $region52: #{tpu_custom_call.1} parent=35 // pred_fallthru
          _
        %v2838 = vld [vmem:[#allocation3] sm:$0xff]
        %v2839 = vld [vmem:[#allocation3 + $0x8] sm:$0xff]
        %v2840 = vld [vmem:[#allocation3 + $0x10] sm:$0xff]
        %v2841 = vld [vmem:[#allocation3 + $0x18] sm:$0xff]
        %v2842 = vld [vmem:[#allocation3 + $0x20] sm:$0xff]
        %v2843 = vld [vmem:[#allocation3 + $0x28] sm:$0xff]
        %v2844 = vld [vmem:[#allocation3 + $0x30] sm:$0xff]
        %v2845 = vld [vmem:[#allocation3 + $0x38] sm:$0xff]
        %v2846 = vld [vmem:[#allocation3 + $0x40] sm:$0xff]
        %v2847 = vld [vmem:[#allocation3 + $0x48] sm:$0xff]
        %v2848 = vld [vmem:[#allocation3 + $0x50] sm:$0xff]
        %v2849 = vld [vmem:[#allocation3 + $0x58] sm:$0xff]
        %v2850 = vld [vmem:[#allocation3 + $0x60] sm:$0xff]
        %v2851 = vld [vmem:[#allocation3 + $0x68] sm:$0xff]
        %v2852 = vld [vmem:[#allocation3 + $0x70] sm:$0xff]
        %v2853 = vld [vmem:[#allocation3 + $0x78] sm:$0xff]
        %v2854 = vld [vmem:[#allocation2] sm:$0xff]
        %v2855 = vld [vmem:[#allocation2 + $0x8] sm:$0xff]
        %v2856 = vld [vmem:[#allocation2 + $0x10] sm:$0xff]
        %v2857 = vld [vmem:[#allocation2 + $0x18] sm:$0xff]
        %v2858 = vld [vmem:[#allocation2 + $0x20] sm:$0xff]
        %v2859 = vld [vmem:[#allocation2 + $0x28] sm:$0xff]
        %v2860 = vld [vmem:[#allocation2 + $0x30] sm:$0xff]
        %v2861 = vld [vmem:[#allocation2 + $0x38] sm:$0xff]
        %v2862 = vld [vmem:[#allocation2 + $0x40] sm:$0xff]
        %v2863 = vld [vmem:[#allocation2 + $0x48] sm:$0xff]
        %v2864 = vld [vmem:[#allocation2 + $0x50] sm:$0xff]
        %v2865 = vld [vmem:[#allocation2 + $0x58] sm:$0xff]
        %v2866 = vld [vmem:[#allocation2 + $0x60] sm:$0xff]
        %v2867 = vld [vmem:[#allocation2 + $0x68] sm:$0xff]
        %v2868 = vld [vmem:[#allocation2 + $0x70] sm:$0xff]
        %v2869 = vld [vmem:[#allocation2 + $0x78] sm:$0xff]
        %v2870 = vld [vmem:[#allocation2 + $0x80] sm:$0xff]
        %v2871 = vld [vmem:[#allocation2 + $0x88] sm:$0xff]
        %v2872 = vld [vmem:[#allocation2 + $0x90] sm:$0xff]
        %v2873 = vld [vmem:[#allocation2 + $0x98] sm:$0xff]
        %v2874 = vld [vmem:[#allocation2 + $0xa0] sm:$0xff]
        %v2875 = vld [vmem:[#allocation2 + $0xa8] sm:$0xff]
        %v2876 = vld [vmem:[#allocation2 + $0xb0] sm:$0xff]
        %v2877 = vld [vmem:[#allocation2 + $0xb8] sm:$0xff]
        %v2878 = vld [vmem:[#allocation2 + $0xc0] sm:$0xff]
        %v2879 = vld [vmem:[#allocation2 + $0xc8] sm:$0xff]
        %v2880 = vld [vmem:[#allocation2 + $0xd0] sm:$0xff]
        %v2881 = vld [vmem:[#allocation2 + $0xd8] sm:$0xff]
        %v2882 = vld [vmem:[#allocation2 + $0xe0] sm:$0xff]
        %v2883 = vld [vmem:[#allocation2 + $0xe8] sm:$0xff]
        %v2884 = vld [vmem:[#allocation2 + $0xf0] sm:$0xff]
        %v2885 = vld [vmem:[#allocation2 + $0xf8] sm:$0xff]
        %v2886 = vld [vmem:[#allocation4] sm:$0xff]
        %v2887 = vld [vmem:[#allocation4 + $0x8] sm:$0xff]
        %v2888 = vld [vmem:[#allocation4 + $0x10] sm:$0xff]
        %v2889 = vld [vmem:[#allocation4 + $0x18] sm:$0xff]
        %v2890 = vld [vmem:[#allocation4 + $0x20] sm:$0xff]
        %v2891 = vld [vmem:[#allocation4 + $0x28] sm:$0xff]
        %v2892 = vld [vmem:[#allocation4 + $0x30] sm:$0xff]
        %v2893 = vld [vmem:[#allocation4 + $0x38] sm:$0xff]
        %v2894 = vld [vmem:[#allocation4 + $0x40] sm:$0xff]
        %v2895 = vld [vmem:[#allocation4 + $0x48] sm:$0xff]
        %v2896 = vld [vmem:[#allocation4 + $0x50] sm:$0xff]
        %v2897 = vld [vmem:[#allocation4 + $0x58] sm:$0xff]
        %v2898 = vld [vmem:[#allocation4 + $0x60] sm:$0xff]
        %v2899 = vld [vmem:[#allocation4 + $0x68] sm:$0xff]
        %v2900 = vld [vmem:[#allocation4 + $0x70] sm:$0xff]
        %v2901 = vld [vmem:[#allocation4 + $0x78] sm:$0xff]
        %v2902 = vunpack.c.l.bf16 %v2838
        %v2903 = vunpack.c.h.bf16 %v2838
        %v2904 = vunpack.c.l.bf16 %v2839
        %v2905 = vunpack.c.h.bf16 %v2839
        %v2906 = vunpack.c.l.bf16 %v2840
        %v2907 = vunpack.c.h.bf16 %v2840
        %v2908 = vunpack.c.l.bf16 %v2841
        %v2909 = vunpack.c.h.bf16 %v2841
        %v2910 = vunpack.c.l.bf16 %v2842
        %v2911 = vunpack.c.h.bf16 %v2842
        %v2912 = vunpack.c.l.bf16 %v2843
        %v2913 = vunpack.c.h.bf16 %v2843
        %v2914 = vunpack.c.l.bf16 %v2844
        %v2915 = vunpack.c.h.bf16 %v2844
        %v2916 = vunpack.c.l.bf16 %v2845
        %v2917 = vunpack.c.h.bf16 %v2845
        %v2918 = vunpack.c.l.bf16 %v2846
        %v2919 = vunpack.c.h.bf16 %v2846
        %v2920 = vunpack.c.l.bf16 %v2847
        %v2921 = vunpack.c.h.bf16 %v2847
        %v2922 = vunpack.c.l.bf16 %v2848
        %v2923 = vunpack.c.h.bf16 %v2848
        %v2924 = vunpack.c.l.bf16 %v2849
        %v2925 = vunpack.c.h.bf16 %v2849
        %v2926 = vunpack.c.l.bf16 %v2850
        %v2927 = vunpack.c.h.bf16 %v2850
        %v2928 = vunpack.c.l.bf16 %v2851
        %v2929 = vunpack.c.h.bf16 %v2851
        %v2930 = vunpack.c.l.bf16 %v2852
        %v2931 = vunpack.c.h.bf16 %v2852
        %v2932 = vunpack.c.l.bf16 %v2853
        %v2933 = vunpack.c.h.bf16 %v2853
        %2966 = vrot.lane.b32.xlu0 %v2902, 110
        %v2967 = vpop.permute.xlu0 %2966
        %2968 = vrot.lane.b32.xlu0 %v2903, 110
        %v2969 = vpop.permute.xlu0 %2968
        %2970 = vrot.lane.b32.xlu0 %v2904, 110
        %v2971 = vpop.permute.xlu0 %2970
        %2972 = vrot.lane.b32.xlu0 %v2905, 110
        %v2973 = vpop.permute.xlu0 %2972
        %2974 = vrot.lane.b32.xlu0 %v2906, 110
        %v2975 = vpop.permute.xlu0 %2974
        %2976 = vrot.lane.b32.xlu0 %v2907, 110
        %v2977 = vpop.permute.xlu0 %2976
        %2978 = vrot.lane.b32.xlu0 %v2908, 110
        %v2979 = vpop.permute.xlu0 %2978
        %2980 = vrot.lane.b32.xlu0 %v2909, 110
        %v2981 = vpop.permute.xlu0 %2980
        %2982 = vrot.lane.b32.xlu0 %v2910, 110
        %v2983 = vpop.permute.xlu0 %2982
        %2984 = vrot.lane.b32.xlu0 %v2911, 110
        %v2985 = vpop.permute.xlu0 %2984
        %2986 = vrot.lane.b32.xlu0 %v2912, 110
        %v2987 = vpop.permute.xlu0 %2986
        %2988 = vrot.lane.b32.xlu0 %v2913, 110
        %v2989 = vpop.permute.xlu0 %2988
        %2990 = vrot.lane.b32.xlu0 %v2914, 110
        %v2991 = vpop.permute.xlu0 %2990
        %2992 = vrot.lane.b32.xlu0 %v2915, 110
        %v2993 = vpop.permute.xlu0 %2992
        %2994 = vrot.lane.b32.xlu0 %v2916, 110
        %v2995 = vpop.permute.xlu0 %2994
        %2996 = vrot.lane.b32.xlu0 %v2917, 110
        %v2997 = vpop.permute.xlu0 %2996
        %2998 = vrot.lane.b32.xlu0 %v2918, 110
        %v2999 = vpop.permute.xlu0 %2998
        %3000 = vrot.lane.b32.xlu0 %v2919, 110
        %v3001 = vpop.permute.xlu0 %3000
        %3002 = vrot.lane.b32.xlu0 %v2920, 110
        %v3003 = vpop.permute.xlu0 %3002
        %3004 = vrot.lane.b32.xlu0 %v2921, 110
        %v3005 = vpop.permute.xlu0 %3004
        %3006 = vrot.lane.b32.xlu0 %v2922, 110
        %v3007 = vpop.permute.xlu0 %3006
        %3008 = vrot.lane.b32.xlu0 %v2923, 110
        %v3009 = vpop.permute.xlu0 %3008
        %3010 = vrot.lane.b32.xlu0 %v2924, 110
        %v3011 = vpop.permute.xlu0 %3010
        %3012 = vrot.lane.b32.xlu0 %v2925, 110
        %v3013 = vpop.permute.xlu0 %3012
        %3014 = vrot.lane.b32.xlu0 %v2926, 110
        %v3015 = vpop.permute.xlu0 %3014
        %3016 = vrot.lane.b32.xlu0 %v2927, 110
        %v3017 = vpop.permute.xlu0 %3016
        %3018 = vrot.lane.b32.xlu0 %v2928, 110
        %v3019 = vpop.permute.xlu0 %3018
        %3020 = vrot.lane.b32.xlu0 %v2929, 110
        %v3021 = vpop.permute.xlu0 %3020
        %3022 = vrot.lane.b32.xlu0 %v2930, 110
        %v3023 = vpop.permute.xlu0 %3022
        %3024 = vrot.lane.b32.xlu0 %v2931, 110
        %v3025 = vpop.permute.xlu0 %3024
        %3026 = vrot.lane.b32.xlu0 %v2932, 110
        %v3027 = vpop.permute.xlu0 %3026
        %3028 = vrot.lane.b32.xlu0 %v2933, 110
        %v3029 = vpop.permute.xlu0 %3028
        %3062 = vxpose.xlu0.b32.start [1/16] %v2967, 128
        %3063 = vxpose.xlu0.b32.cont [2/16] %v2969, 128
        %3064 = vxpose.xlu0.b32.cont [3/16] 0.0, 128
        %3065 = vxpose.xlu0.b32.cont [4/16] 0.0, 128
        %3066 = vxpose.xlu0.b32.cont [5/16] 0.0, 128
        %3067 = vxpose.xlu0.b32.cont [6/16] 0.0, 128
        %3068 = vxpose.xlu0.b32.cont [7/16] 0.0, 128
        %3069 = vxpose.xlu0.b32.cont [8/16] 0.0, 128
        %3070 = vxpose.xlu0.b32.cont [9/16] 0.0, 128
        %3071 = vxpose.xlu0.b32.cont [10/16] 0.0, 128
        %3072 = vxpose.xlu0.b32.cont [11/16] 0.0, 128
        %3073 = vxpose.xlu0.b32.cont [12/16] 0.0, 128
        %3074 = vxpose.xlu0.b32.cont [13/16] 0.0, 128
        %3075 = vxpose.xlu0.b32.cont [14/16] 0.0, 128
        %3076 = vxpose.xlu0.b32.cont [15/16] 0.0, 128
        %3077 = vxpose.xlu0.b32.end [16/16] 0.0, 128
        %v3078 = vpop.trf.xlu0
        %v3079 = vpop.trf.xlu0
        %v3080 = vpop.trf.xlu0
        %v3081 = vpop.trf.xlu0
        %v3082 = vpop.trf.xlu0
        %v3083 = vpop.trf.xlu0
        %v3084 = vpop.trf.xlu0
        %v3085 = vpop.trf.xlu0
        %v3086 = vpop.trf.xlu0
        %v3087 = vpop.trf.xlu0
        %v3088 = vpop.trf.xlu0
        %v3089 = vpop.trf.xlu0
        %v3090 = vpop.trf.xlu0
        %v3091 = vpop.trf.xlu0
        %v3092 = vpop.trf.xlu0
        %v3093 = vpop.trf.xlu0
        %3094 = vxpose.xlu0.b32.start [1/16] %v2971, 128
        %3095 = vxpose.xlu0.b32.cont [2/16] %v2973, 128
        %3096 = vxpose.xlu0.b32.cont [3/16] 0.0, 128
        %3097 = vxpose.xlu0.b32.cont [4/16] 0.0, 128
        %3098 = vxpose.xlu0.b32.cont [5/16] 0.0, 128
        %3099 = vxpose.xlu0.b32.cont [6/16] 0.0, 128
        %3100 = vxpose.xlu0.b32.cont [7/16] 0.0, 128
        %3101 = vxpose.xlu0.b32.cont [8/16] 0.0, 128
        %3102 = vxpose.xlu0.b32.cont [9/16] 0.0, 128
        %3103 = vxpose.xlu0.b32.cont [10/16] 0.0, 128
        %3104 = vxpose.xlu0.b32.cont [11/16] 0.0, 128
        %3105 = vxpose.xlu0.b32.cont [12/16] 0.0, 128
        %3106 = vxpose.xlu0.b32.cont [13/16] 0.0, 128
        %3107 = vxpose.xlu0.b32.cont [14/16] 0.0, 128
        %3108 = vxpose.xlu0.b32.cont [15/16] 0.0, 128
        %3109 = vxpose.xlu0.b32.end [16/16] 0.0, 128
        %v3110 = vpop.trf.xlu0
        %v3111 = vpop.trf.xlu0
        %v3112 = vpop.trf.xlu0
        %v3113 = vpop.trf.xlu0
        %v3114 = vpop.trf.xlu0
        %v3115 = vpop.trf.xlu0
        %v3116 = vpop.trf.xlu0
        %v3117 = vpop.trf.xlu0
        %v3118 = vpop.trf.xlu0
        %v3119 = vpop.trf.xlu0
        %v3120 = vpop.trf.xlu0
        %v3121 = vpop.trf.xlu0
        %v3122 = vpop.trf.xlu0
        %v3123 = vpop.trf.xlu0
        %v3124 = vpop.trf.xlu0
        %v3125 = vpop.trf.xlu0
        %3126 = vxpose.xlu0.b32.start [1/16] %v2975, 128
        %3127 = vxpose.xlu0.b32.cont [2/16] %v2977, 128
        %3128 = vxpose.xlu0.b32.cont [3/16] 0.0, 128
        %3129 = vxpose.xlu0.b32.cont [4/16] 0.0, 128
        %3130 = vxpose.xlu0.b32.cont [5/16] 0.0, 128
        %3131 = vxpose.xlu0.b32.cont [6/16] 0.0, 128
        %3132 = vxpose.xlu0.b32.cont [7/16] 0.0, 128
        %3133 = vxpose.xlu0.b32.cont [8/16] 0.0, 128
        %3134 = vxpose.xlu0.b32.cont [9/16] 0.0, 128
        %3135 = vxpose.xlu0.b32.cont [10/16] 0.0, 128
        %3136 = vxpose.xlu0.b32.cont [11/16] 0.0, 128
        %3137 = vxpose.xlu0.b32.cont [12/16] 0.0, 128
        %3138 = vxpose.xlu0.b32.cont [13/16] 0.0, 128
        %3139 = vxpose.xlu0.b32.cont [14/16] 0.0, 128
        %3140 = vxpose.xlu0.b32.cont [15/16] 0.0, 128
        %3141 = vxpose.xlu0.b32.end [16/16] 0.0, 128
        %v3142 = vpop.trf.xlu0
        %v3143 = vpop.trf.xlu0
        %v3144 = vpop.trf.xlu0
        %v3145 = vpop.trf.xlu0
        %v3146 = vpop.trf.xlu0
        %v3147 = vpop.trf.xlu0
        %v3148 = vpop.trf.xlu0
        %v3149 = vpop.trf.xlu0
        %v3150 = vpop.trf.xlu0
        %v3151 = vpop.trf.xlu0
        %v3152 = vpop.trf.xlu0
        %v3153 = vpop.trf.xlu0
        %v3154 = vpop.trf.xlu0
        %v3155 = vpop.trf.xlu0
        %v3156 = vpop.trf.xlu0
        %v3157 = vpop.trf.xlu0
        %3158 = vxpose.xlu0.b32.start [1/16] %v2979, 128
        %3159 = vxpose.xlu0.b32.cont [2/16] %v2981, 128
        %3160 = vxpose.xlu0.b32.cont [3/16] 0.0, 128
        %3161 = vxpose.xlu0.b32.cont [4/16] 0.0, 128
        %3162 = vxpose.xlu0.b32.cont [5/16] 0.0, 128
        %3163 = vxpose.xlu0.b32.cont [6/16] 0.0, 128
        %3164 = vxpose.xlu0.b32.cont [7/16] 0.0, 128
        %3165 = vxpose.xlu0.b32.cont [8/16] 0.0, 128
        %3166 = vxpose.xlu0.b32.cont [9/16] 0.0, 128
        %3167 = vxpose.xlu0.b32.cont [10/16] 0.0, 128
        %3168 = vxpose.xlu0.b32.cont [11/16] 0.0, 128
        %3169 = vxpose.xlu0.b32.cont [12/16] 0.0, 128
        %3170 = vxpose.xlu0.b32.cont [13/16] 0.0, 128
        %3171 = vxpose.xlu0.b32.cont [14/16] 0.0, 128
        %3172 = vxpose.xlu0.b32.cont [15/16] 0.0, 128
        %3173 = vxpose.xlu0.b32.end [16/16] 0.0, 128
        %v3174 = vpop.trf.xlu0
        %v3175 = vpop.trf.xlu0
        %v3176 = vpop.trf.xlu0
        %v3177 = vpop.trf.xlu0
        %v3178 = vpop.trf.xlu0
        %v3179 = vpop.trf.xlu0
        %v3180 = vpop.trf.xlu0
        %v3181 = vpop.trf.xlu0
        %v3182 = vpop.trf.xlu0
        %v3183 = vpop.trf.xlu0
        %v3184 = vpop.trf.xlu0
        %v3185 = vpop.trf.xlu0
        %v3186 = vpop.trf.xlu0
        %v3187 = vpop.trf.xlu0
        %v3188 = vpop.trf.xlu0
        %v3189 = vpop.trf.xlu0
        %3190 = vxpose.xlu0.b32.start [1/16] %v2983, 128
        %3191 = vxpose.xlu0.b32.cont [2/16] %v2985, 128
        %3192 = vxpose.xlu0.b32.cont [3/16] 0.0, 128
        %3193 = vxpose.xlu0.b32.cont [4/16] 0.0, 128
        %3194 = vxpose.xlu0.b32.cont [5/16] 0.0, 128
        %3195 = vxpose.xlu0.b32.cont [6/16] 0.0, 128
        %3196 = vxpose.xlu0.b32.cont [7/16] 0.0, 128
        %3197 = vxpose.xlu0.b32.cont [8/16] 0.0, 128
        %3198 = vxpose.xlu0.b32.cont [9/16] 0.0, 128
        %3199 = vxpose.xlu0.b32.cont [10/16] 0.0, 128
        %3200 = vxpose.xlu0.b32.cont [11/16] 0.0, 128
        %3201 = vxpose.xlu0.b32.cont [12/16] 0.0, 128
        %3202 = vxpose.xlu0.b32.cont [13/16] 0.0, 128
        %3203 = vxpose.xlu0.b32.cont [14/16] 0.0, 128
        %3204 = vxpose.xlu0.b32.cont [15/16] 0.0, 128
        %3205 = vxpose.xlu0.b32.end [16/16] 0.0, 128
        %v3206 = vpop.trf.xlu0
        %v3207 = vpop.trf.xlu0
        %v3208 = vpop.trf.xlu0
        %v3209 = vpop.trf.xlu0
        %v3210 = vpop.trf.xlu0
        %v3211 = vpop.trf.xlu0
        %v3212 = vpop.trf.xlu0
        %v3213 = vpop.trf.xlu0
        %v3214 = vpop.trf.xlu0
        %v3215 = vpop.trf.xlu0
        %v3216 = vpop.trf.xlu0
        %v3217 = vpop.trf.xlu0
        %v3218 = vpop.trf.xlu0
        %v3219 = vpop.trf.xlu0
        %v3220 = vpop.trf.xlu0
        %v3221 = vpop.trf.xlu0
        %3222 = vxpose.xlu0.b32.start [1/16] %v2987, 128
        %3223 = vxpose.xlu0.b32.cont [2/16] %v2989, 128
        %3224 = vxpose.xlu0.b32.cont [3/16] 0.0, 128
        %3225 = vxpose.xlu0.b32.cont [4/16] 0.0, 128
        %3226 = vxpose.xlu0.b32.cont [5/16] 0.0, 128
        %3227 = vxpose.xlu0.b32.cont [6/16] 0.0, 128
        %3228 = vxpose.xlu0.b32.cont [7/16] 0.0, 128
        %3229 = vxpose.xlu0.b32.cont [8/16] 0.0, 128
        %3230 = vxpose.xlu0.b32.cont [9/16] 0.0, 128
        %3231 = vxpose.xlu0.b32.cont [10/16] 0.0, 128
        %3232 = vxpose.xlu0.b32.cont [11/16] 0.0, 128
        %3233 = vxpose.xlu0.b32.cont [12/16] 0.0, 128
        %3234 = vxpose.xlu0.b32.cont [13/16] 0.0, 128
        %3235 = vxpose.xlu0.b32.cont [14/16] 0.0, 128
        %3236 = vxpose.xlu0.b32.cont [15/16] 0.0, 128
        %3237 = vxpose.xlu0.b32.end [16/16] 0.0, 128
        %v3238 = vpop.trf.xlu0
        %v3239 = vpop.trf.xlu0
        %v3240 = vpop.trf.xlu0
        %v3241 = vpop.trf.xlu0
        %v3242 = vpop.trf.xlu0
        %v3243 = vpop.trf.xlu0
        %v3244 = vpop.trf.xlu0
        %v3245 = vpop.trf.xlu0
        %v3246 = vpop.trf.xlu0
        %v3247 = vpop.trf.xlu0
        %v3248 = vpop.trf.xlu0
        %v3249 = vpop.trf.xlu0
        %v3250 = vpop.trf.xlu0
        %v3251 = vpop.trf.xlu0
        %v3252 = vpop.trf.xlu0
        %v3253 = vpop.trf.xlu0
        %3254 = vxpose.xlu0.b32.start [1/16] %v2991, 128
        %3255 = vxpose.xlu0.b32.cont [2/16] %v2993, 128
        %3256 = vxpose.xlu0.b32.cont [3/16] 0.0, 128
        %3257 = vxpose.xlu0.b32.cont [4/16] 0.0, 128
        %3258 = vxpose.xlu0.b32.cont [5/16] 0.0, 128
        %3259 = vxpose.xlu0.b32.cont [6/16] 0.0, 128
        %3260 = vxpose.xlu0.b32.cont [7/16] 0.0, 128
        %3261 = vxpose.xlu0.b32.cont [8/16] 0.0, 128
        %3262 = vxpose.xlu0.b32.cont [9/16] 0.0, 128
        %3263 = vxpose.xlu0.b32.cont [10/16] 0.0, 128
        %3264 = vxpose.xlu0.b32.cont [11/16] 0.0, 128
        %3265 = vxpose.xlu0.b32.cont [12/16] 0.0, 128
        %3266 = vxpose.xlu0.b32.cont [13/16] 0.0, 128
        %3267 = vxpose.xlu0.b32.cont [14/16] 0.0, 128
        %3268 = vxpose.xlu0.b32.cont [15/16] 0.0, 128
        %3269 = vxpose.xlu0.b32.end [16/16] 0.0, 128
        %v3270 = vpop.trf.xlu0
        %v3271 = vpop.trf.xlu0
        %v3272 = vpop.trf.xlu0
        %v3273 = vpop.trf.xlu0
        %v3274 = vpop.trf.xlu0
        %v3275 = vpop.trf.xlu0
        %v3276 = vpop.trf.xlu0
        %v3277 = vpop.trf.xlu0
        %v3278 = vpop.trf.xlu0
        %v3279 = vpop.trf.xlu0
        %v3280 = vpop.trf.xlu0
        %v3281 = vpop.trf.xlu0
        %v3282 = vpop.trf.xlu0
        %v3283 = vpop.trf.xlu0
        %v3284 = vpop.trf.xlu0
        %v3285 = vpop.trf.xlu0
        %3286 = vxpose.xlu0.b32.start [1/16] %v2995, 128
        %3287 = vxpose.xlu0.b32.cont [2/16] %v2997, 128
        %3288 = vxpose.xlu0.b32.cont [3/16] 0.0, 128
        %3289 = vxpose.xlu0.b32.cont [4/16] 0.0, 128
        %3290 = vxpose.xlu0.b32.cont [5/16] 0.0, 128
        %3291 = vxpose.xlu0.b32.cont [6/16] 0.0, 128
        %3292 = vxpose.xlu0.b32.cont [7/16] 0.0, 128
        %3293 = vxpose.xlu0.b32.cont [8/16] 0.0, 128
        %3294 = vxpose.xlu0.b32.cont [9/16] 0.0, 128
        %3295 = vxpose.xlu0.b32.cont [10/16] 0.0, 128
        %3296 = vxpose.xlu0.b32.cont [11/16] 0.0, 128
        %3297 = vxpose.xlu0.b32.cont [12/16] 0.0, 128
        %3298 = vxpose.xlu0.b32.cont [13/16] 0.0, 128
        %3299 = vxpose.xlu0.b32.cont [14/16] 0.0, 128
        %3300 = vxpose.xlu0.b32.cont [15/16] 0.0, 128
        %3301 = vxpose.xlu0.b32.end [16/16] 0.0, 128
        %v3302 = vpop.trf.xlu0
        %v3303 = vpop.trf.xlu0
        %v3304 = vpop.trf.xlu0
        %v3305 = vpop.trf.xlu0
        %v3306 = vpop.trf.xlu0
        %v3307 = vpop.trf.xlu0
        %v3308 = vpop.trf.xlu0
        %v3309 = vpop.trf.xlu0
        %v3310 = vpop.trf.xlu0
        %v3311 = vpop.trf.xlu0
        %v3312 = vpop.trf.xlu0
        %v3313 = vpop.trf.xlu0
        %v3314 = vpop.trf.xlu0
        %v3315 = vpop.trf.xlu0
        %v3316 = vpop.trf.xlu0
        %v3317 = vpop.trf.xlu0
        %3318 = vxpose.xlu0.b32.start [1/16] %v2999, 128
        %3319 = vxpose.xlu0.b32.cont [2/16] %v3001, 128
        %3320 = vxpose.xlu0.b32.cont [3/16] 0.0, 128
        %3321 = vxpose.xlu0.b32.cont [4/16] 0.0, 128
        %3322 = vxpose.xlu0.b32.cont [5/16] 0.0, 128
        %3323 = vxpose.xlu0.b32.cont [6/16] 0.0, 128
        %3324 = vxpose.xlu0.b32.cont [7/16] 0.0, 128
        %3325 = vxpose.xlu0.b32.cont [8/16] 0.0, 128
        %3326 = vxpose.xlu0.b32.cont [9/16] 0.0, 128
        %3327 = vxpose.xlu0.b32.cont [10/16] 0.0, 128
        %3328 = vxpose.xlu0.b32.cont [11/16] 0.0, 128
        %3329 = vxpose.xlu0.b32.cont [12/16] 0.0, 128
        %3330 = vxpose.xlu0.b32.cont [13/16] 0.0, 128
        %3331 = vxpose.xlu0.b32.cont [14/16] 0.0, 128
        %3332 = vxpose.xlu0.b32.cont [15/16] 0.0, 128
        %3333 = vxpose.xlu0.b32.end [16/16] 0.0, 128
        %v3334 = vpop.trf.xlu0
        %v3335 = vpop.trf.xlu0
        %v3336 = vpop.trf.xlu0
        %v3337 = vpop.trf.xlu0
        %v3338 = vpop.trf.xlu0
        %v3339 = vpop.trf.xlu0
        %v3340 = vpop.trf.xlu0
        %v3341 = vpop.trf.xlu0
        %v3342 = vpop.trf.xlu0
        %v3343 = vpop.trf.xlu0
        %v3344 = vpop.trf.xlu0
        %v3345 = vpop.trf.xlu0
        %v3346 = vpop.trf.xlu0
        %v3347 = vpop.trf.xlu0
        %v3348 = vpop.trf.xlu0
        %v3349 = vpop.trf.xlu0
        %3350 = vxpose.xlu0.b32.start [1/16] %v3003, 128
        %3351 = vxpose.xlu0.b32.cont [2/16] %v3005, 128
        %3352 = vxpose.xlu0.b32.cont [3/16] 0.0, 128
        %3353 = vxpose.xlu0.b32.cont [4/16] 0.0, 128
        %3354 = vxpose.xlu0.b32.cont [5/16] 0.0, 128
        %3355 = vxpose.xlu0.b32.cont [6/16] 0.0, 128
        %3356 = vxpose.xlu0.b32.cont [7/16] 0.0, 128
        %3357 = vxpose.xlu0.b32.cont [8/16] 0.0, 128
        %3358 = vxpose.xlu0.b32.cont [9/16] 0.0, 128
        %3359 = vxpose.xlu0.b32.cont [10/16] 0.0, 128
        %3360 = vxpose.xlu0.b32.cont [11/16] 0.0, 128
        %3361 = vxpose.xlu0.b32.cont [12/16] 0.0, 128
        %3362 = vxpose.xlu0.b32.cont [13/16] 0.0, 128
        %3363 = vxpose.xlu0.b32.cont [14/16] 0.0, 128
        %3364 = vxpose.xlu0.b32.cont [15/16] 0.0, 128
        %3365 = vxpose.xlu0.b32.end [16/16] 0.0, 128
        %v3366 = vpop.trf.xlu0
        %v3367 = vpop.trf.xlu0
        %v3368 = vpop.trf.xlu0
        %v3369 = vpop.trf.xlu0
        %v3370 = vpop.trf.xlu0
        %v3371 = vpop.trf.xlu0
        %v3372 = vpop.trf.xlu0
        %v3373 = vpop.trf.xlu0
        %v3374 = vpop.trf.xlu0
        %v3375 = vpop.trf.xlu0
        %v3376 = vpop.trf.xlu0
        %v3377 = vpop.trf.xlu0
        %v3378 = vpop.trf.xlu0
        %v3379 = vpop.trf.xlu0
        %v3380 = vpop.trf.xlu0
        %v3381 = vpop.trf.xlu0
        %3382 = vxpose.xlu0.b32.start [1/16] %v3007, 128
        %3383 = vxpose.xlu0.b32.cont [2/16] %v3009, 128
        %3384 = vxpose.xlu0.b32.cont [3/16] 0.0, 128
        %3385 = vxpose.xlu0.b32.cont [4/16] 0.0, 128
        %3386 = vxpose.xlu0.b32.cont [5/16] 0.0, 128
        %3387 = vxpose.xlu0.b32.cont [6/16] 0.0, 128
        %3388 = vxpose.xlu0.b32.cont [7/16] 0.0, 128
        %3389 = vxpose.xlu0.b32.cont [8/16] 0.0, 128
        %3390 = vxpose.xlu0.b32.cont [9/16] 0.0, 128
        %3391 = vxpose.xlu0.b32.cont [10/16] 0.0, 128
        %3392 = vxpose.xlu0.b32.cont [11/16] 0.0, 128
        %3393 = vxpose.xlu0.b32.cont [12/16] 0.0, 128
        %3394 = vxpose.xlu0.b32.cont [13/16] 0.0, 128
        %3395 = vxpose.xlu0.b32.cont [14/16] 0.0, 128
        %3396 = vxpose.xlu0.b32.cont [15/16] 0.0, 128
        %3397 = vxpose.xlu0.b32.end [16/16] 0.0, 128
        %v3398 = vpop.trf.xlu0
        %v3399 = vpop.trf.xlu0
        %v3400 = vpop.trf.xlu0
        %v3401 = vpop.trf.xlu0
        %v3402 = vpop.trf.xlu0
        %v3403 = vpop.trf.xlu0
        %v3404 = vpop.trf.xlu0
        %v3405 = vpop.trf.xlu0
        %v3406 = vpop.trf.xlu0
        %v3407 = vpop.trf.xlu0
        %v3408 = vpop.trf.xlu0
        %v3409 = vpop.trf.xlu0
        %v3410 = vpop.trf.xlu0
        %v3411 = vpop.trf.xlu0
        %v3412 = vpop.trf.xlu0
        %v3413 = vpop.trf.xlu0
        %3414 = vxpose.xlu0.b32.start [1/16] %v3011, 128
        %3415 = vxpose.xlu0.b32.cont [2/16] %v3013, 128
        %3416 = vxpose.xlu0.b32.cont [3/16] 0.0, 128
        %3417 = vxpose.xlu0.b32.cont [4/16] 0.0, 128
        %3418 = vxpose.xlu0.b32.cont [5/16] 0.0, 128
        %3419 = vxpose.xlu0.b32.cont [6/16] 0.0, 128
        %3420 = vxpose.xlu0.b32.cont [7/16] 0.0, 128
        %3421 = vxpose.xlu0.b32.cont [8/16] 0.0, 128
        %3422 = vxpose.xlu0.b32.cont [9/16] 0.0, 128
        %3423 = vxpose.xlu0.b32.cont [10/16] 0.0, 128
        %3424 = vxpose.xlu0.b32.cont [11/16] 0.0, 128
        %3425 = vxpose.xlu0.b32.cont [12/16] 0.0, 128
        %3426 = vxpose.xlu0.b32.cont [13/16] 0.0, 128
        %3427 = vxpose.xlu0.b32.cont [14/16] 0.0, 128
        %3428 = vxpose.xlu0.b32.cont [15/16] 0.0, 128
        %3429 = vxpose.xlu0.b32.end [16/16] 0.0, 128
        %v3430 = vpop.trf.xlu0
        %v3431 = vpop.trf.xlu0
        %v3432 = vpop.trf.xlu0
        %v3433 = vpop.trf.xlu0
        %v3434 = vpop.trf.xlu0
        %v3435 = vpop.trf.xlu0
        %v3436 = vpop.trf.xlu0
        %v3437 = vpop.trf.xlu0
        %v3438 = vpop.trf.xlu0
        %v3439 = vpop.trf.xlu0
        %v3440 = vpop.trf.xlu0
        %v3441 = vpop.trf.xlu0
        %v3442 = vpop.trf.xlu0
        %v3443 = vpop.trf.xlu0
        %v3444 = vpop.trf.xlu0
        %v3445 = vpop.trf.xlu0
        %3446 = vxpose.xlu0.b32.start [1/16] %v3015, 128
        %3447 = vxpose.xlu0.b32.cont [2/16] %v3017, 128
        %3448 = vxpose.xlu0.b32.cont [3/16] 0.0, 128
        %3449 = vxpose.xlu0.b32.cont [4/16] 0.0, 128
        %3450 = vxpose.xlu0.b32.cont [5/16] 0.0, 128
        %3451 = vxpose.xlu0.b32.cont [6/16] 0.0, 128
        %3452 = vxpose.xlu0.b32.cont [7/16] 0.0, 128
        %3453 = vxpose.xlu0.b32.cont [8/16] 0.0, 128
        %3454 = vxpose.xlu0.b32.cont [9/16] 0.0, 128
        %3455 = vxpose.xlu0.b32.cont [10/16] 0.0, 128
        %3456 = vxpose.xlu0.b32.cont [11/16] 0.0, 128
        %3457 = vxpose.xlu0.b32.cont [12/16] 0.0, 128
        %3458 = vxpose.xlu0.b32.cont [13/16] 0.0, 128
        %3459 = vxpose.xlu0.b32.cont [14/16] 0.0, 128
        %3460 = vxpose.xlu0.b32.cont [15/16] 0.0, 128
        %3461 = vxpose.xlu0.b32.end [16/16] 0.0, 128
        %v3462 = vpop.trf.xlu0
        %v3463 = vpop.trf.xlu0
        %v3464 = vpop.trf.xlu0
        %v3465 = vpop.trf.xlu0
        %v3466 = vpop.trf.xlu0
        %v3467 = vpop.trf.xlu0
        %v3468 = vpop.trf.xlu0
        %v3469 = vpop.trf.xlu0
        %v3470 = vpop.trf.xlu0
        %v3471 = vpop.trf.xlu0
        %v3472 = vpop.trf.xlu0
        %v3473 = vpop.trf.xlu0
        %v3474 = vpop.trf.xlu0
        %v3475 = vpop.trf.xlu0
        %v3476 = vpop.trf.xlu0
        %v3477 = vpop.trf.xlu0
        %3478 = vxpose.xlu0.b32.start [1/16] %v3019, 128
        %3479 = vxpose.xlu0.b32.cont [2/16] %v3021, 128
        %3480 = vxpose.xlu0.b32.cont [3/16] 0.0, 128
        %3481 = vxpose.xlu0.b32.cont [4/16] 0.0, 128
        %3482 = vxpose.xlu0.b32.cont [5/16] 0.0, 128
        %3483 = vxpose.xlu0.b32.cont [6/16] 0.0, 128
        %3484 = vxpose.xlu0.b32.cont [7/16] 0.0, 128
        %3485 = vxpose.xlu0.b32.cont [8/16] 0.0, 128
        %3486 = vxpose.xlu0.b32.cont [9/16] 0.0, 128
        %3487 = vxpose.xlu0.b32.cont [10/16] 0.0, 128
        %3488 = vxpose.xlu0.b32.cont [11/16] 0.0, 128
        %3489 = vxpose.xlu0.b32.cont [12/16] 0.0, 128
        %3490 = vxpose.xlu0.b32.cont [13/16] 0.0, 128
        %3491 = vxpose.xlu0.b32.cont [14/16] 0.0, 128
        %3492 = vxpose.xlu0.b32.cont [15/16] 0.0, 128
        %3493 = vxpose.xlu0.b32.end [16/16] 0.0, 128
        %v3494 = vpop.trf.xlu0
        %v3495 = vpop.trf.xlu0
        %v3496 = vpop.trf.xlu0
        %v3497 = vpop.trf.xlu0
        %v3498 = vpop.trf.xlu0
        %v3499 = vpop.trf.xlu0
        %v3500 = vpop.trf.xlu0
        %v3501 = vpop.trf.xlu0
        %v3502 = vpop.trf.xlu0
        %v3503 = vpop.trf.xlu0
        %v3504 = vpop.trf.xlu0
        %v3505 = vpop.trf.xlu0
        %v3506 = vpop.trf.xlu0
        %v3507 = vpop.trf.xlu0
        %v3508 = vpop.trf.xlu0
        %v3509 = vpop.trf.xlu0
        %3510 = vxpose.xlu0.b32.start [1/16] %v3023, 128
        %3511 = vxpose.xlu0.b32.cont [2/16] %v3025, 128
        %3512 = vxpose.xlu0.b32.cont [3/16] 0.0, 128
        %3513 = vxpose.xlu0.b32.cont [4/16] 0.0, 128
        %3514 = vxpose.xlu0.b32.cont [5/16] 0.0, 128
        %3515 = vxpose.xlu0.b32.cont [6/16] 0.0, 128
        %3516 = vxpose.xlu0.b32.cont [7/16] 0.0, 128
        %3517 = vxpose.xlu0.b32.cont [8/16] 0.0, 128
        %3518 = vxpose.xlu0.b32.cont [9/16] 0.0, 128
        %3519 = vxpose.xlu0.b32.cont [10/16] 0.0, 128
        %3520 = vxpose.xlu0.b32.cont [11/16] 0.0, 128
        %3521 = vxpose.xlu0.b32.cont [12/16] 0.0, 128
        %3522 = vxpose.xlu0.b32.cont [13/16] 0.0, 128
        %3523 = vxpose.xlu0.b32.cont [14/16] 0.0, 128
        %3524 = vxpose.xlu0.b32.cont [15/16] 0.0, 128
        %3525 = vxpose.xlu0.b32.end [16/16] 0.0, 128
        %v3526 = vpop.trf.xlu0
        %v3527 = vpop.trf.xlu0
        %v3528 = vpop.trf.xlu0
        %v3529 = vpop.trf.xlu0
        %v3530 = vpop.trf.xlu0
        %v3531 = vpop.trf.xlu0
        %v3532 = vpop.trf.xlu0
        %v3533 = vpop.trf.xlu0
        %v3534 = vpop.trf.xlu0
        %v3535 = vpop.trf.xlu0
        %v3536 = vpop.trf.xlu0
        %v3537 = vpop.trf.xlu0
        %v3538 = vpop.trf.xlu0
        %v3539 = vpop.trf.xlu0
        %v3540 = vpop.trf.xlu0
        %v3541 = vpop.trf.xlu0
        %3542 = vxpose.xlu0.b32.start [1/16] %v3027, 128
        %3543 = vxpose.xlu0.b32.cont [2/16] %v3029, 128
        %3544 = vxpose.xlu0.b32.cont [3/16] 0.0, 128
        %3545 = vxpose.xlu0.b32.cont [4/16] 0.0, 128
        %3546 = vxpose.xlu0.b32.cont [5/16] 0.0, 128
        %3547 = vxpose.xlu0.b32.cont [6/16] 0.0, 128
        %3548 = vxpose.xlu0.b32.cont [7/16] 0.0, 128
        %3549 = vxpose.xlu0.b32.cont [8/16] 0.0, 128
        %3550 = vxpose.xlu0.b32.cont [9/16] 0.0, 128
        %3551 = vxpose.xlu0.b32.cont [10/16] 0.0, 128
        %3552 = vxpose.xlu0.b32.cont [11/16] 0.0, 128
        %3553 = vxpose.xlu0.b32.cont [12/16] 0.0, 128
        %3554 = vxpose.xlu0.b32.cont [13/16] 0.0, 128
        %3555 = vxpose.xlu0.b32.cont [14/16] 0.0, 128
        %3556 = vxpose.xlu0.b32.cont [15/16] 0.0, 128
        %3557 = vxpose.xlu0.b32.end [16/16] 0.0, 128
        %v3558 = vpop.trf.xlu0
        %v3559 = vpop.trf.xlu0
        %v3560 = vpop.trf.xlu0
        %v3561 = vpop.trf.xlu0
        %v3562 = vpop.trf.xlu0
        %v3563 = vpop.trf.xlu0
        %v3564 = vpop.trf.xlu0
        %v3565 = vpop.trf.xlu0
        %v3566 = vpop.trf.xlu0
        %v3567 = vpop.trf.xlu0
        %v3568 = vpop.trf.xlu0
        %v3569 = vpop.trf.xlu0
        %v3570 = vpop.trf.xlu0
        %v3571 = vpop.trf.xlu0
        %v3572 = vpop.trf.xlu0
        %v3573 = vpop.trf.xlu0
        %3574 = vrot.lane.b32.xlu0 %v2902, 112
        %v3575 = vpop.permute.xlu0 %3574
        %3576 = vrot.lane.b32.xlu0 %v2903, 112
        %v3577 = vpop.permute.xlu0 %3576
        %3578 = vrot.lane.b32.xlu0 %v2904, 112
        %v3579 = vpop.permute.xlu0 %3578
        %3580 = vrot.lane.b32.xlu0 %v2905, 112
        %v3581 = vpop.permute.xlu0 %3580
        %3582 = vrot.lane.b32.xlu0 %v2906, 112
        %v3583 = vpop.permute.xlu0 %3582
        %3584 = vrot.lane.b32.xlu0 %v2907, 112
        %v3585 = vpop.permute.xlu0 %3584
        %3586 = vrot.lane.b32.xlu0 %v2908, 112
        %v3587 = vpop.permute.xlu0 %3586
        %3588 = vrot.lane.b32.xlu0 %v2909, 112
        %v3589 = vpop.permute.xlu0 %3588
        %3590 = vrot.lane.b32.xlu0 %v2910, 112
        %v3591 = vpop.permute.xlu0 %3590
        %3592 = vrot.lane.b32.xlu0 %v2911, 112
        %v3593 = vpop.permute.xlu0 %3592
        %3594 = vrot.lane.b32.xlu0 %v2912, 112
        %v3595 = vpop.permute.xlu0 %3594
        %3596 = vrot.lane.b32.xlu0 %v2913, 112
        %v3597 = vpop.permute.xlu0 %3596
        %3598 = vrot.lane.b32.xlu0 %v2914, 112
        %v3599 = vpop.permute.xlu0 %3598
        %3600 = vrot.lane.b32.xlu0 %v2915, 112
        %v3601 = vpop.permute.xlu0 %3600
        %3602 = vrot.lane.b32.xlu0 %v2916, 112
        %v3603 = vpop.permute.xlu0 %3602
        %3604 = vrot.lane.b32.xlu0 %v2917, 112
        %v3605 = vpop.permute.xlu0 %3604
        %3606 = vrot.lane.b32.xlu0 %v2918, 112
        %v3607 = vpop.permute.xlu0 %3606
        %3608 = vrot.lane.b32.xlu0 %v2919, 112
        %v3609 = vpop.permute.xlu0 %3608
        %3610 = vrot.lane.b32.xlu0 %v2920, 112
        %v3611 = vpop.permute.xlu0 %3610
        %3612 = vrot.lane.b32.xlu0 %v2921, 112
        %v3613 = vpop.permute.xlu0 %3612
        %3614 = vrot.lane.b32.xlu0 %v2922, 112
        %v3615 = vpop.permute.xlu0 %3614
        %3616 = vrot.lane.b32.xlu0 %v2923, 112
        %v3617 = vpop.permute.xlu0 %3616
        %3618 = vrot.lane.b32.xlu0 %v2924, 112
        %v3619 = vpop.permute.xlu0 %3618
        %3620 = vrot.lane.b32.xlu0 %v2925, 112
        %v3621 = vpop.permute.xlu0 %3620
        %3622 = vrot.lane.b32.xlu0 %v2926, 112
        %v3623 = vpop.permute.xlu0 %3622
        %3624 = vrot.lane.b32.xlu0 %v2927, 112
        %v3625 = vpop.permute.xlu0 %3624
        %3626 = vrot.lane.b32.xlu0 %v2928, 112
        %v3627 = vpop.permute.xlu0 %3626
        %3628 = vrot.lane.b32.xlu0 %v2929, 112
        %v3629 = vpop.permute.xlu0 %3628
        %3630 = vrot.lane.b32.xlu0 %v2930, 112
        %v3631 = vpop.permute.xlu0 %3630
        %3632 = vrot.lane.b32.xlu0 %v2931, 112
        %v3633 = vpop.permute.xlu0 %3632
        %3634 = vrot.lane.b32.xlu0 %v2932, 112
        %v3635 = vpop.permute.xlu0 %3634
        %3636 = vrot.lane.b32.xlu0 %v2933, 112
        %v3637 = vpop.permute.xlu0 %3636
        %v3670 = vcombine.low %v3575, %v3583
        %v3671 = vcombine.high %v3575, %v3583
        %v3673 = vunpack.c.l.s4 1983009808
        %v3674 = vunpack.c.0.s8 %v3673
        %v3675 = vlaneseq
        %v3676 = vshrl.u32 %v3675, 7
        %v3677 = vsub.s32 %v3674, %v3676
        %v3678 = vrot.slane %v3670, %v3677
        %v3680 = vunpack.c.l.s4 1983009808
        %v3681 = vunpack.c.0.s8 %v3680
        %v3682 = vlaneseq
        %v3683 = vshrl.u32 %v3682, 7
        %v3684 = vsub.s32 %v3681, %v3683
        %v3685 = vrot.slane %v3671, %v3684
        %v3686 = vcombine.low %v3579, %v3587
        %v3687 = vcombine.high %v3579, %v3587
        %v3689 = vunpack.c.l.s4 1983009808
        %v3690 = vunpack.c.0.s8 %v3689
        %v3691 = vlaneseq
        %v3692 = vshrl.u32 %v3691, 7
        %v3693 = vsub.s32 %v3690, %v3692
        %v3694 = vrot.slane %v3686, %v3693
        %v3696 = vunpack.c.l.s4 1983009808
        %v3697 = vunpack.c.0.s8 %v3696
        %v3698 = vlaneseq
        %v3699 = vshrl.u32 %v3698, 7
        %v3700 = vsub.s32 %v3697, %v3699
        %v3701 = vrot.slane %v3687, %v3700
        %v3702 = vcombine.low %v3591, %v3599
        %v3703 = vcombine.high %v3591, %v3599
        %v3705 = vunpack.c.l.s4 1983009808
        %v3706 = vunpack.c.0.s8 %v3705
        %v3707 = vlaneseq
        %v3708 = vshrl.u32 %v3707, 7
        %v3709 = vsub.s32 %v3706, %v3708
        %v3710 = vrot.slane %v3702, %v3709
        %v3712 = vunpack.c.l.s4 1983009808
        %v3713 = vunpack.c.0.s8 %v3712
        %v3714 = vlaneseq
        %v3715 = vshrl.u32 %v3714, 7
        %v3716 = vsub.s32 %v3713, %v3715
        %v3717 = vrot.slane %v3703, %v3716
        %v3718 = vcombine.low %v3595, %v3603
        %v3719 = vcombine.high %v3595, %v3603
        %v3721 = vunpack.c.l.s4 1983009808
        %v3722 = vunpack.c.0.s8 %v3721
        %v3723 = vlaneseq
        %v3724 = vshrl.u32 %v3723, 7
        %v3725 = vsub.s32 %v3722, %v3724
        %v3726 = vrot.slane %v3718, %v3725
        %v3728 = vunpack.c.l.s4 1983009808
        %v3729 = vunpack.c.0.s8 %v3728
        %v3730 = vlaneseq
        %v3731 = vshrl.u32 %v3730, 7
        %v3732 = vsub.s32 %v3729, %v3731
        %v3733 = vrot.slane %v3719, %v3732
        %v3734 = vcombine.low %v3678, %v3694
        %v3735 = vcombine.high %v3678, %v3694
        %v3737 = vunpack.c.l.s4 1934713408
        %v3738 = vunpack.c.0.s8 %v3737
        %v3739 = vlaneseq
        %v3740 = vshrl.u32 %v3739, 7
        %v3741 = vsub.s32 %v3738, %v3740
        %v3742 = vrot.slane %v3734, %v3741
        %v3744 = vunpack.c.l.s4 1934713408
        %v3745 = vunpack.c.0.s8 %v3744
        %v3746 = vlaneseq
        %v3747 = vshrl.u32 %v3746, 7
        %v3748 = vsub.s32 %v3745, %v3747
        %v3749 = vrot.slane %v3735, %v3748
        %v3750 = vcombine.low %v3685, %v3701
        %v3751 = vcombine.high %v3685, %v3701
        %v3753 = vunpack.c.l.s4 1934713408
        %v3754 = vunpack.c.0.s8 %v3753
        %v3755 = vlaneseq
        %v3756 = vshrl.u32 %v3755, 7
        %v3757 = vsub.s32 %v3754, %v3756
        %v3758 = vrot.slane %v3750, %v3757
        %v3760 = vunpack.c.l.s4 1934713408
        %v3761 = vunpack.c.0.s8 %v3760
        %v3762 = vlaneseq
        %v3763 = vshrl.u32 %v3762, 7
        %v3764 = vsub.s32 %v3761, %v3763
        %v3765 = vrot.slane %v3751, %v3764
        %v3766 = vcombine.low %v3710, %v3726
        %v3767 = vcombine.high %v3710, %v3726
        %v3769 = vunpack.c.l.s4 1934713408
        %v3770 = vunpack.c.0.s8 %v3769
        %v3771 = vlaneseq
        %v3772 = vshrl.u32 %v3771, 7
        %v3773 = vsub.s32 %v3770, %v3772
        %v3774 = vrot.slane %v3766, %v3773
        %v3776 = vunpack.c.l.s4 1934713408
        %v3777 = vunpack.c.0.s8 %v3776
        %v3778 = vlaneseq
        %v3779 = vshrl.u32 %v3778, 7
        %v3780 = vsub.s32 %v3777, %v3779
        %v3781 = vrot.slane %v3767, %v3780
        %v3782 = vcombine.low %v3717, %v3733
        %v3783 = vcombine.high %v3717, %v3733
        %v3785 = vunpack.c.l.s4 1934713408
        %v3786 = vunpack.c.0.s8 %v3785
        %v3787 = vlaneseq
        %v3788 = vshrl.u32 %v3787, 7
        %v3789 = vsub.s32 %v3786, %v3788
        %v3790 = vrot.slane %v3782, %v3789
        %v3792 = vunpack.c.l.s4 1934713408
        %v3793 = vunpack.c.0.s8 %v3792
        %v3794 = vlaneseq
        %v3795 = vshrl.u32 %v3794, 7
        %v3796 = vsub.s32 %v3793, %v3795
        %v3797 = vrot.slane %v3783, %v3796
        %v3798 = vcombine.low %v3742, %v3774
        %v3799 = vcombine.high %v3742, %v3774
        %v3800 = vcombine.low %v3749, %v3781
        %v3801 = vcombine.high %v3749, %v3781
        %v3802 = vcombine.low %v3758, %v3790
        %v3803 = vcombine.high %v3758, %v3790
        %v3804 = vcombine.low %v3765, %v3797
        %v3805 = vcombine.high %v3765, %v3797
        %v3806 = vcombine.low %v3607, %v3615
        %v3807 = vcombine.high %v3607, %v3615
        %v3809 = vunpack.c.l.s4 1983009808
        %v3810 = vunpack.c.0.s8 %v3809
        %v3811 = vlaneseq
        %v3812 = vshrl.u32 %v3811, 7
        %v3813 = vsub.s32 %v3810, %v3812
        %v3814 = vrot.slane %v3806, %v3813
        %v3816 = vunpack.c.l.s4 1983009808
        %v3817 = vunpack.c.0.s8 %v3816
        %v3818 = vlaneseq
        %v3819 = vshrl.u32 %v3818, 7
        %v3820 = vsub.s32 %v3817, %v3819
        %v3821 = vrot.slane %v3807, %v3820
        %v3822 = vcombine.low %v3611, %v3619
        %v3823 = vcombine.high %v3611, %v3619
        %v3825 = vunpack.c.l.s4 1983009808
        %v3826 = vunpack.c.0.s8 %v3825
        %v3827 = vlaneseq
        %v3828 = vshrl.u32 %v3827, 7
        %v3829 = vsub.s32 %v3826, %v3828
        %v3830 = vrot.slane %v3822, %v3829
        %v3832 = vunpack.c.l.s4 1983009808
        %v3833 = vunpack.c.0.s8 %v3832
        %v3834 = vlaneseq
        %v3835 = vshrl.u32 %v3834, 7
        %v3836 = vsub.s32 %v3833, %v3835
        %v3837 = vrot.slane %v3823, %v3836
        %v3838 = vcombine.low %v3623, %v3631
        %v3839 = vcombine.high %v3623, %v3631
        %v3841 = vunpack.c.l.s4 1983009808
        %v3842 = vunpack.c.0.s8 %v3841
        %v3843 = vlaneseq
        %v3844 = vshrl.u32 %v3843, 7
        %v3845 = vsub.s32 %v3842, %v3844
        %v3846 = vrot.slane %v3838, %v3845
        %v3848 = vunpack.c.l.s4 1983009808
        %v3849 = vunpack.c.0.s8 %v3848
        %v3850 = vlaneseq
        %v3851 = vshrl.u32 %v3850, 7
        %v3852 = vsub.s32 %v3849, %v3851
        %v3853 = vrot.slane %v3839, %v3852
        %v3854 = vcombine.low %v3627, %v3635
        %v3855 = vcombine.high %v3627, %v3635
        %v3857 = vunpack.c.l.s4 1983009808
        %v3858 = vunpack.c.0.s8 %v3857
        %v3859 = vlaneseq
        %v3860 = vshrl.u32 %v3859, 7
        %v3861 = vsub.s32 %v3858, %v3860
        %v3862 = vrot.slane %v3854, %v3861
        %v3864 = vunpack.c.l.s4 1983009808
        %v3865 = vunpack.c.0.s8 %v3864
        %v3866 = vlaneseq
        %v3867 = vshrl.u32 %v3866, 7
        %v3868 = vsub.s32 %v3865, %v3867
        %v3869 = vrot.slane %v3855, %v3868
        %v3870 = vcombine.low %v3814, %v3830
        %v3871 = vcombine.high %v3814, %v3830
        %v3873 = vunpack.c.l.s4 1934713408
        %v3874 = vunpack.c.0.s8 %v3873
        %v3875 = vlaneseq
        %v3876 = vshrl.u32 %v3875, 7
        %v3877 = vsub.s32 %v3874, %v3876
        %v3878 = vrot.slane %v3870, %v3877
        %v3880 = vunpack.c.l.s4 1934713408
        %v3881 = vunpack.c.0.s8 %v3880
        %v3882 = vlaneseq
        %v3883 = vshrl.u32 %v3882, 7
        %v3884 = vsub.s32 %v3881, %v3883
        %v3885 = vrot.slane %v3871, %v3884
        %v3886 = vcombine.low %v3821, %v3837
        %v3887 = vcombine.high %v3821, %v3837
        %v3889 = vunpack.c.l.s4 1934713408
        %v3890 = vunpack.c.0.s8 %v3889
        %v3891 = vlaneseq
        %v3892 = vshrl.u32 %v3891, 7
        %v3893 = vsub.s32 %v3890, %v3892
        %v3894 = vrot.slane %v3886, %v3893
        %v3896 = vunpack.c.l.s4 1934713408
        %v3897 = vunpack.c.0.s8 %v3896
        %v3898 = vlaneseq
        %v3899 = vshrl.u32 %v3898, 7
        %v3900 = vsub.s32 %v3897, %v3899
        %v3901 = vrot.slane %v3887, %v3900
        %v3902 = vcombine.low %v3846, %v3862
        %v3903 = vcombine.high %v3846, %v3862
        %v3905 = vunpack.c.l.s4 1934713408
        %v3906 = vunpack.c.0.s8 %v3905
        %v3907 = vlaneseq
        %v3908 = vshrl.u32 %v3907, 7
        %v3909 = vsub.s32 %v3906, %v3908
        %v3910 = vrot.slane %v3902, %v3909
        %v3912 = vunpack.c.l.s4 1934713408
        %v3913 = vunpack.c.0.s8 %v3912
        %v3914 = vlaneseq
        %v3915 = vshrl.u32 %v3914, 7
        %v3916 = vsub.s32 %v3913, %v3915
        %v3917 = vrot.slane %v3903, %v3916
        %v3918 = vcombine.low %v3853, %v3869
        %v3919 = vcombine.high %v3853, %v3869
        %v3921 = vunpack.c.l.s4 1934713408
        %v3922 = vunpack.c.0.s8 %v3921
        %v3923 = vlaneseq
        %v3924 = vshrl.u32 %v3923, 7
        %v3925 = vsub.s32 %v3922, %v3924
        %v3926 = vrot.slane %v3918, %v3925
        %v3928 = vunpack.c.l.s4 1934713408
        %v3929 = vunpack.c.0.s8 %v3928
        %v3930 = vlaneseq
        %v3931 = vshrl.u32 %v3930, 7
        %v3932 = vsub.s32 %v3929, %v3931
        %v3933 = vrot.slane %v3919, %v3932
        %v3934 = vcombine.low %v3878, %v3910
        %v3935 = vcombine.high %v3878, %v3910
        %v3936 = vcombine.low %v3885, %v3917
        %v3937 = vcombine.high %v3885, %v3917
        %v3938 = vcombine.low %v3894, %v3926
        %v3939 = vcombine.high %v3894, %v3926
        %v3940 = vcombine.low %v3901, %v3933
        %v3941 = vcombine.high %v3901, %v3933
        %v3942 = vcombine.low %v3577, %v3585
        %v3943 = vcombine.high %v3577, %v3585
        %v3945 = vunpack.c.l.s4 1983009808
        %v3946 = vunpack.c.0.s8 %v3945
        %v3947 = vlaneseq
        %v3948 = vshrl.u32 %v3947, 7
        %v3949 = vsub.s32 %v3946, %v3948
        %v3950 = vrot.slane %v3942, %v3949
        %v3952 = vunpack.c.l.s4 1983009808
        %v3953 = vunpack.c.0.s8 %v3952
        %v3954 = vlaneseq
        %v3955 = vshrl.u32 %v3954, 7
        %v3956 = vsub.s32 %v3953, %v3955
        %v3957 = vrot.slane %v3943, %v3956
        %v3958 = vcombine.low %v3581, %v3589
        %v3959 = vcombine.high %v3581, %v3589
        %v3961 = vunpack.c.l.s4 1983009808
        %v3962 = vunpack.c.0.s8 %v3961
        %v3963 = vlaneseq
        %v3964 = vshrl.u32 %v3963, 7
        %v3965 = vsub.s32 %v3962, %v3964
        %v3966 = vrot.slane %v3958, %v3965
        %v3968 = vunpack.c.l.s4 1983009808
        %v3969 = vunpack.c.0.s8 %v3968
        %v3970 = vlaneseq
        %v3971 = vshrl.u32 %v3970, 7
        %v3972 = vsub.s32 %v3969, %v3971
        %v3973 = vrot.slane %v3959, %v3972
        %v3974 = vcombine.low %v3593, %v3601
        %v3975 = vcombine.high %v3593, %v3601
        %v3977 = vunpack.c.l.s4 1983009808
        %v3978 = vunpack.c.0.s8 %v3977
        %v3979 = vlaneseq
        %v3980 = vshrl.u32 %v3979, 7
        %v3981 = vsub.s32 %v3978, %v3980
        %v3982 = vrot.slane %v3974, %v3981
        %v3984 = vunpack.c.l.s4 1983009808
        %v3985 = vunpack.c.0.s8 %v3984
        %v3986 = vlaneseq
        %v3987 = vshrl.u32 %v3986, 7
        %v3988 = vsub.s32 %v3985, %v3987
        %v3989 = vrot.slane %v3975, %v3988
        %v3990 = vcombine.low %v3597, %v3605
        %v3991 = vcombine.high %v3597, %v3605
        %v3993 = vunpack.c.l.s4 1983009808
        %v3994 = vunpack.c.0.s8 %v3993
        %v3995 = vlaneseq
        %v3996 = vshrl.u32 %v3995, 7
        %v3997 = vsub.s32 %v3994, %v3996
        %v3998 = vrot.slane %v3990, %v3997
        %v4000 = vunpack.c.l.s4 1983009808
        %v4001 = vunpack.c.0.s8 %v4000
        %v4002 = vlaneseq
        %v4003 = vshrl.u32 %v4002, 7
        %v4004 = vsub.s32 %v4001, %v4003
        %v4005 = vrot.slane %v3991, %v4004
        %v4006 = vcombine.low %v3950, %v3966
        %v4007 = vcombine.high %v3950, %v3966
        %v4009 = vunpack.c.l.s4 1934713408
        %v4010 = vunpack.c.0.s8 %v4009
        %v4011 = vlaneseq
        %v4012 = vshrl.u32 %v4011, 7
        %v4013 = vsub.s32 %v4010, %v4012
        %v4014 = vrot.slane %v4006, %v4013
        %v4016 = vunpack.c.l.s4 1934713408
        %v4017 = vunpack.c.0.s8 %v4016
        %v4018 = vlaneseq
        %v4019 = vshrl.u32 %v4018, 7
        %v4020 = vsub.s32 %v4017, %v4019
        %v4021 = vrot.slane %v4007, %v4020
        %v4022 = vcombine.low %v3957, %v3973
        %v4023 = vcombine.high %v3957, %v3973
        %v4025 = vunpack.c.l.s4 1934713408
        %v4026 = vunpack.c.0.s8 %v4025
        %v4027 = vlaneseq
        %v4028 = vshrl.u32 %v4027, 7
        %v4029 = vsub.s32 %v4026, %v4028
        %v4030 = vrot.slane %v4022, %v4029
        %v4032 = vunpack.c.l.s4 1934713408
        %v4033 = vunpack.c.0.s8 %v4032
        %v4034 = vlaneseq
        %v4035 = vshrl.u32 %v4034, 7
        %v4036 = vsub.s32 %v4033, %v4035
        %v4037 = vrot.slane %v4023, %v4036
        %v4038 = vcombine.low %v3982, %v3998
        %v4039 = vcombine.high %v3982, %v3998
        %v4041 = vunpack.c.l.s4 1934713408
        %v4042 = vunpack.c.0.s8 %v4041
        %v4043 = vlaneseq
        %v4044 = vshrl.u32 %v4043, 7
        %v4045 = vsub.s32 %v4042, %v4044
        %v4046 = vrot.slane %v4038, %v4045
        %v4048 = vunpack.c.l.s4 1934713408
        %v4049 = vunpack.c.0.s8 %v4048
        %v4050 = vlaneseq
        %v4051 = vshrl.u32 %v4050, 7
        %v4052 = vsub.s32 %v4049, %v4051
        %v4053 = vrot.slane %v4039, %v4052
        %v4054 = vcombine.low %v3989, %v4005
        %v4055 = vcombine.high %v3989, %v4005
        %v4057 = vunpack.c.l.s4 1934713408
        %v4058 = vunpack.c.0.s8 %v4057
        %v4059 = vlaneseq
        %v4060 = vshrl.u32 %v4059, 7
        %v4061 = vsub.s32 %v4058, %v4060
        %v4062 = vrot.slane %v4054, %v4061
        %v4064 = vunpack.c.l.s4 1934713408
        %v4065 = vunpack.c.0.s8 %v4064
        %v4066 = vlaneseq
        %v4067 = vshrl.u32 %v4066, 7
        %v4068 = vsub.s32 %v4065, %v4067
        %v4069 = vrot.slane %v4055, %v4068
        %v4070 = vcombine.low %v4014, %v4046
        %v4071 = vcombine.high %v4014, %v4046
        %v4072 = vcombine.low %v4021, %v4053
        %v4073 = vcombine.high %v4021, %v4053
        %v4074 = vcombine.low %v4030, %v4062
        %v4075 = vcombine.high %v4030, %v4062
        %v4076 = vcombine.low %v4037, %v4069
        %v4077 = vcombine.high %v4037, %v4069
        %v4078 = vcombine.low %v3609, %v3617
        %v4079 = vcombine.high %v3609, %v3617
        %v4081 = vunpack.c.l.s4 1983009808
        %v4082 = vunpack.c.0.s8 %v4081
        %v4083 = vlaneseq
        %v4084 = vshrl.u32 %v4083, 7
        %v4085 = vsub.s32 %v4082, %v4084
        %v4086 = vrot.slane %v4078, %v4085
        %v4088 = vunpack.c.l.s4 1983009808
        %v4089 = vunpack.c.0.s8 %v4088
        %v4090 = vlaneseq
        %v4091 = vshrl.u32 %v4090, 7
        %v4092 = vsub.s32 %v4089, %v4091
        %v4093 = vrot.slane %v4079, %v4092
        %v4094 = vcombine.low %v3613, %v3621
        %v4095 = vcombine.high %v3613, %v3621
        %v4097 = vunpack.c.l.s4 1983009808
        %v4098 = vunpack.c.0.s8 %v4097
        %v4099 = vlaneseq
        %v4100 = vshrl.u32 %v4099, 7
        %v4101 = vsub.s32 %v4098, %v4100
        %v4102 = vrot.slane %v4094, %v4101
        %v4104 = vunpack.c.l.s4 1983009808
        %v4105 = vunpack.c.0.s8 %v4104
        %v4106 = vlaneseq
        %v4107 = vshrl.u32 %v4106, 7
        %v4108 = vsub.s32 %v4105, %v4107
        %v4109 = vrot.slane %v4095, %v4108
        %v4110 = vcombine.low %v3625, %v3633
        %v4111 = vcombine.high %v3625, %v3633
        %v4113 = vunpack.c.l.s4 1983009808
        %v4114 = vunpack.c.0.s8 %v4113
        %v4115 = vlaneseq
        %v4116 = vshrl.u32 %v4115, 7
        %v4117 = vsub.s32 %v4114, %v4116
        %v4118 = vrot.slane %v4110, %v4117
        %v4120 = vunpack.c.l.s4 1983009808
        %v4121 = vunpack.c.0.s8 %v4120
        %v4122 = vlaneseq
        %v4123 = vshrl.u32 %v4122, 7
        %v4124 = vsub.s32 %v4121, %v4123
        %v4125 = vrot.slane %v4111, %v4124
        %v4126 = vcombine.low %v3629, %v3637
        %v4127 = vcombine.high %v3629, %v3637
        %v4129 = vunpack.c.l.s4 1983009808
        %v4130 = vunpack.c.0.s8 %v4129
        %v4131 = vlaneseq
        %v4132 = vshrl.u32 %v4131, 7
        %v4133 = vsub.s32 %v4130, %v4132
        %v4134 = vrot.slane %v4126, %v4133
        %v4136 = vunpack.c.l.s4 1983009808
        %v4137 = vunpack.c.0.s8 %v4136
        %v4138 = vlaneseq
        %v4139 = vshrl.u32 %v4138, 7
        %v4140 = vsub.s32 %v4137, %v4139
        %v4141 = vrot.slane %v4127, %v4140
        %v4142 = vcombine.low %v4086, %v4102
        %v4143 = vcombine.high %v4086, %v4102
        %v4145 = vunpack.c.l.s4 1934713408
        %v4146 = vunpack.c.0.s8 %v4145
        %v4147 = vlaneseq
        %v4148 = vshrl.u32 %v4147, 7
        %v4149 = vsub.s32 %v4146, %v4148
        %v4150 = vrot.slane %v4142, %v4149
        %v4152 = vunpack.c.l.s4 1934713408
        %v4153 = vunpack.c.0.s8 %v4152
        %v4154 = vlaneseq
        %v4155 = vshrl.u32 %v4154, 7
        %v4156 = vsub.s32 %v4153, %v4155
        %v4157 = vrot.slane %v4143, %v4156
        %v4158 = vcombine.low %v4093, %v4109
        %v4159 = vcombine.high %v4093, %v4109
        %v4161 = vunpack.c.l.s4 1934713408
        %v4162 = vunpack.c.0.s8 %v4161
        %v4163 = vlaneseq
        %v4164 = vshrl.u32 %v4163, 7
        %v4165 = vsub.s32 %v4162, %v4164
        %v4166 = vrot.slane %v4158, %v4165
        %v4168 = vunpack.c.l.s4 1934713408
        %v4169 = vunpack.c.0.s8 %v4168
        %v4170 = vlaneseq
        %v4171 = vshrl.u32 %v4170, 7
        %v4172 = vsub.s32 %v4169, %v4171
        %v4173 = vrot.slane %v4159, %v4172
        %v4174 = vcombine.low %v4118, %v4134
        %v4175 = vcombine.high %v4118, %v4134
        %v4177 = vunpack.c.l.s4 1934713408
        %v4178 = vunpack.c.0.s8 %v4177
        %v4179 = vlaneseq
        %v4180 = vshrl.u32 %v4179, 7
        %v4181 = vsub.s32 %v4178, %v4180
        %v4182 = vrot.slane %v4174, %v4181
        %v4184 = vunpack.c.l.s4 1934713408
        %v4185 = vunpack.c.0.s8 %v4184
        %v4186 = vlaneseq
        %v4187 = vshrl.u32 %v4186, 7
        %v4188 = vsub.s32 %v4185, %v4187
        %v4189 = vrot.slane %v4175, %v4188
        %v4190 = vcombine.low %v4125, %v4141
        %v4191 = vcombine.high %v4125, %v4141
        %v4193 = vunpack.c.l.s4 1934713408
        %v4194 = vunpack.c.0.s8 %v4193
        %v4195 = vlaneseq
        %v4196 = vshrl.u32 %v4195, 7
        %v4197 = vsub.s32 %v4194, %v4196
        %v4198 = vrot.slane %v4190, %v4197
        %v4200 = vunpack.c.l.s4 1934713408
        %v4201 = vunpack.c.0.s8 %v4200
        %v4202 = vlaneseq
        %v4203 = vshrl.u32 %v4202, 7
        %v4204 = vsub.s32 %v4201, %v4203
        %v4205 = vrot.slane %v4191, %v4204
        %v4206 = vcombine.low %v4150, %v4182
        %v4207 = vcombine.high %v4150, %v4182
        %v4208 = vcombine.low %v4157, %v4189
        %v4209 = vcombine.high %v4157, %v4189
        %v4210 = vcombine.low %v4166, %v4198
        %v4211 = vcombine.high %v4166, %v4198
        %v4212 = vcombine.low %v4173, %v4205
        %v4213 = vcombine.high %v4173, %v4205
        %v4214 = vunpack.c.l.bf16 %v2886
        %v4215 = vunpack.c.h.bf16 %v2886
        %v4216 = vunpack.c.l.bf16 %v2887
        %v4217 = vunpack.c.h.bf16 %v2887
        %v4218 = vunpack.c.l.bf16 %v2888
        %v4219 = vunpack.c.h.bf16 %v2888
        %v4220 = vunpack.c.l.bf16 %v2889
        %v4221 = vunpack.c.h.bf16 %v2889
        %v4222 = vunpack.c.l.bf16 %v2890
        %v4223 = vunpack.c.h.bf16 %v2890
        %v4224 = vunpack.c.l.bf16 %v2891
        %v4225 = vunpack.c.h.bf16 %v2891
        %v4226 = vunpack.c.l.bf16 %v2892
        %v4227 = vunpack.c.h.bf16 %v2892
        %v4228 = vunpack.c.l.bf16 %v2893
        %v4229 = vunpack.c.h.bf16 %v2893
        %v4230 = vunpack.c.l.bf16 %v2894
        %v4231 = vunpack.c.h.bf16 %v2894
        %v4232 = vunpack.c.l.bf16 %v2895
        %v4233 = vunpack.c.h.bf16 %v2895
        %v4234 = vunpack.c.l.bf16 %v2896
        %v4235 = vunpack.c.h.bf16 %v2896
        %v4236 = vunpack.c.l.bf16 %v2897
        %v4237 = vunpack.c.h.bf16 %v2897
        %v4238 = vunpack.c.l.bf16 %v2898
        %v4239 = vunpack.c.h.bf16 %v2898
        %v4240 = vunpack.c.l.bf16 %v2899
        %v4241 = vunpack.c.h.bf16 %v2899
        %v4242 = vunpack.c.l.bf16 %v2900
        %v4243 = vunpack.c.h.bf16 %v2900
        %v4244 = vunpack.c.l.bf16 %v2901
        %v4245 = vunpack.c.h.bf16 %v2901
        %4278 = vrot.lane.b32.xlu0 %v4214, 110
        %v4279 = vpop.permute.xlu0 %4278
        %4280 = vrot.lane.b32.xlu0 %v4215, 110
        %v4281 = vpop.permute.xlu0 %4280
        %4282 = vrot.lane.b32.xlu0 %v4216, 110
        %v4283 = vpop.permute.xlu0 %4282
        %4284 = vrot.lane.b32.xlu0 %v4217, 110
        %v4285 = vpop.permute.xlu0 %4284
        %4286 = vrot.lane.b32.xlu0 %v4218, 110
        %v4287 = vpop.permute.xlu0 %4286
        %4288 = vrot.lane.b32.xlu0 %v4219, 110
        %v4289 = vpop.permute.xlu0 %4288
        %4290 = vrot.lane.b32.xlu0 %v4220, 110
        %v4291 = vpop.permute.xlu0 %4290
        %4292 = vrot.lane.b32.xlu0 %v4221, 110
        %v4293 = vpop.permute.xlu0 %4292
        %4294 = vrot.lane.b32.xlu0 %v4222, 110
        %v4295 = vpop.permute.xlu0 %4294
        %4296 = vrot.lane.b32.xlu0 %v4223, 110
        %v4297 = vpop.permute.xlu0 %4296
        %4298 = vrot.lane.b32.xlu0 %v4224, 110
        %v4299 = vpop.permute.xlu0 %4298
        %4300 = vrot.lane.b32.xlu0 %v4225, 110
        %v4301 = vpop.permute.xlu0 %4300
        %4302 = vrot.lane.b32.xlu0 %v4226, 110
        %v4303 = vpop.permute.xlu0 %4302
        %4304 = vrot.lane.b32.xlu0 %v4227, 110
        %v4305 = vpop.permute.xlu0 %4304
        %4306 = vrot.lane.b32.xlu0 %v4228, 110
        %v4307 = vpop.permute.xlu0 %4306
        %4308 = vrot.lane.b32.xlu0 %v4229, 110
        %v4309 = vpop.permute.xlu0 %4308
        %4310 = vrot.lane.b32.xlu0 %v4230, 110
        %v4311 = vpop.permute.xlu0 %4310
        %4312 = vrot.lane.b32.xlu0 %v4231, 110
        %v4313 = vpop.permute.xlu0 %4312
        %4314 = vrot.lane.b32.xlu0 %v4232, 110
        %v4315 = vpop.permute.xlu0 %4314
        %4316 = vrot.lane.b32.xlu0 %v4233, 110
        %v4317 = vpop.permute.xlu0 %4316
        %4318 = vrot.lane.b32.xlu0 %v4234, 110
        %v4319 = vpop.permute.xlu0 %4318
        %4320 = vrot.lane.b32.xlu0 %v4235, 110
        %v4321 = vpop.permute.xlu0 %4320
        %4322 = vrot.lane.b32.xlu0 %v4236, 110
        %v4323 = vpop.permute.xlu0 %4322
        %4324 = vrot.lane.b32.xlu0 %v4237, 110
        %v4325 = vpop.permute.xlu0 %4324
        %4326 = vrot.lane.b32.xlu0 %v4238, 110
        %v4327 = vpop.permute.xlu0 %4326
        %4328 = vrot.lane.b32.xlu0 %v4239, 110
        %v4329 = vpop.permute.xlu0 %4328
        %4330 = vrot.lane.b32.xlu0 %v4240, 110
        %v4331 = vpop.permute.xlu0 %4330
        %4332 = vrot.lane.b32.xlu0 %v4241, 110
        %v4333 = vpop.permute.xlu0 %4332
        %4334 = vrot.lane.b32.xlu0 %v4242, 110
        %v4335 = vpop.permute.xlu0 %4334
        %4336 = vrot.lane.b32.xlu0 %v4243, 110
        %v4337 = vpop.permute.xlu0 %4336
        %4338 = vrot.lane.b32.xlu0 %v4244, 110
        %v4339 = vpop.permute.xlu0 %4338
        %4340 = vrot.lane.b32.xlu0 %v4245, 110
        %v4341 = vpop.permute.xlu0 %4340
        %4374 = vxpose.xlu0.b32.start [1/16] %v4279, 128
        %4375 = vxpose.xlu0.b32.cont [2/16] %v4281, 128
        %4376 = vxpose.xlu0.b32.cont [3/16] 0.0, 128
        %4377 = vxpose.xlu0.b32.cont [4/16] 0.0, 128
        %4378 = vxpose.xlu0.b32.cont [5/16] 0.0, 128
        %4379 = vxpose.xlu0.b32.cont [6/16] 0.0, 128
        %4380 = vxpose.xlu0.b32.cont [7/16] 0.0, 128
        %4381 = vxpose.xlu0.b32.cont [8/16] 0.0, 128
        %4382 = vxpose.xlu0.b32.cont [9/16] 0.0, 128
        %4383 = vxpose.xlu0.b32.cont [10/16] 0.0, 128
        %4384 = vxpose.xlu0.b32.cont [11/16] 0.0, 128
        %4385 = vxpose.xlu0.b32.cont [12/16] 0.0, 128
        %4386 = vxpose.xlu0.b32.cont [13/16] 0.0, 128
        %4387 = vxpose.xlu0.b32.cont [14/16] 0.0, 128
        %4388 = vxpose.xlu0.b32.cont [15/16] 0.0, 128
        %4389 = vxpose.xlu0.b32.end [16/16] 0.0, 128
        %v4390 = vpop.trf.xlu0
        %v4391 = vpop.trf.xlu0
        %v4392 = vpop.trf.xlu0
        %v4393 = vpop.trf.xlu0
        %v4394 = vpop.trf.xlu0
        %v4395 = vpop.trf.xlu0
        %v4396 = vpop.trf.xlu0
        %v4397 = vpop.trf.xlu0
        %v4398 = vpop.trf.xlu0
        %v4399 = vpop.trf.xlu0
        %v4400 = vpop.trf.xlu0
        %v4401 = vpop.trf.xlu0
        %v4402 = vpop.trf.xlu0
        %v4403 = vpop.trf.xlu0
        %v4404 = vpop.trf.xlu0
        %v4405 = vpop.trf.xlu0
        %4406 = vxpose.xlu0.b32.start [1/16] %v4283, 128
        %4407 = vxpose.xlu0.b32.cont [2/16] %v4285, 128
        %4408 = vxpose.xlu0.b32.cont [3/16] 0.0, 128
        %4409 = vxpose.xlu0.b32.cont [4/16] 0.0, 128
        %4410 = vxpose.xlu0.b32.cont [5/16] 0.0, 128
        %4411 = vxpose.xlu0.b32.cont [6/16] 0.0, 128
        %4412 = vxpose.xlu0.b32.cont [7/16] 0.0, 128
        %4413 = vxpose.xlu0.b32.cont [8/16] 0.0, 128
        %4414 = vxpose.xlu0.b32.cont [9/16] 0.0, 128
        %4415 = vxpose.xlu0.b32.cont [10/16] 0.0, 128
        %4416 = vxpose.xlu0.b32.cont [11/16] 0.0, 128
        %4417 = vxpose.xlu0.b32.cont [12/16] 0.0, 128
        %4418 = vxpose.xlu0.b32.cont [13/16] 0.0, 128
        %4419 = vxpose.xlu0.b32.cont [14/16] 0.0, 128
        %4420 = vxpose.xlu0.b32.cont [15/16] 0.0, 128
        %4421 = vxpose.xlu0.b32.end [16/16] 0.0, 128
        %v4422 = vpop.trf.xlu0
        %v4423 = vpop.trf.xlu0
        %v4424 = vpop.trf.xlu0
        %v4425 = vpop.trf.xlu0
        %v4426 = vpop.trf.xlu0
        %v4427 = vpop.trf.xlu0
        %v4428 = vpop.trf.xlu0
        %v4429 = vpop.trf.xlu0
        %v4430 = vpop.trf.xlu0
        %v4431 = vpop.trf.xlu0
        %v4432 = vpop.trf.xlu0
        %v4433 = vpop.trf.xlu0
        %v4434 = vpop.trf.xlu0
        %v4435 = vpop.trf.xlu0
        %v4436 = vpop.trf.xlu0
        %v4437 = vpop.trf.xlu0
        %4438 = vxpose.xlu0.b32.start [1/16] %v4287, 128
        %4439 = vxpose.xlu0.b32.cont [2/16] %v4289, 128
        %4440 = vxpose.xlu0.b32.cont [3/16] 0.0, 128
        %4441 = vxpose.xlu0.b32.cont [4/16] 0.0, 128
        %4442 = vxpose.xlu0.b32.cont [5/16] 0.0, 128
        %4443 = vxpose.xlu0.b32.cont [6/16] 0.0, 128
        %4444 = vxpose.xlu0.b32.cont [7/16] 0.0, 128
        %4445 = vxpose.xlu0.b32.cont [8/16] 0.0, 128
        %4446 = vxpose.xlu0.b32.cont [9/16] 0.0, 128
        %4447 = vxpose.xlu0.b32.cont [10/16] 0.0, 128
        %4448 = vxpose.xlu0.b32.cont [11/16] 0.0, 128
        %4449 = vxpose.xlu0.b32.cont [12/16] 0.0, 128
        %4450 = vxpose.xlu0.b32.cont [13/16] 0.0, 128
        %4451 = vxpose.xlu0.b32.cont [14/16] 0.0, 128
        %4452 = vxpose.xlu0.b32.cont [15/16] 0.0, 128
        %4453 = vxpose.xlu0.b32.end [16/16] 0.0, 128
        %v4454 = vpop.trf.xlu0
        %v4455 = vpop.trf.xlu0
        %v4456 = vpop.trf.xlu0
        %v4457 = vpop.trf.xlu0
        %v4458 = vpop.trf.xlu0
        %v4459 = vpop.trf.xlu0
        %v4460 = vpop.trf.xlu0
        %v4461 = vpop.trf.xlu0
        %v4462 = vpop.trf.xlu0
        %v4463 = vpop.trf.xlu0
        %v4464 = vpop.trf.xlu0
        %v4465 = vpop.trf.xlu0
        %v4466 = vpop.trf.xlu0
        %v4467 = vpop.trf.xlu0
        %v4468 = vpop.trf.xlu0
        %v4469 = vpop.trf.xlu0
        %4470 = vxpose.xlu0.b32.start [1/16] %v4291, 128
        %4471 = vxpose.xlu0.b32.cont [2/16] %v4293, 128
        %4472 = vxpose.xlu0.b32.cont [3/16] 0.0, 128
        %4473 = vxpose.xlu0.b32.cont [4/16] 0.0, 128
        %4474 = vxpose.xlu0.b32.cont [5/16] 0.0, 128
        %4475 = vxpose.xlu0.b32.cont [6/16] 0.0, 128
        %4476 = vxpose.xlu0.b32.cont [7/16] 0.0, 128
        %4477 = vxpose.xlu0.b32.cont [8/16] 0.0, 128
        %4478 = vxpose.xlu0.b32.cont [9/16] 0.0, 128
        %4479 = vxpose.xlu0.b32.cont [10/16] 0.0, 128
        %4480 = vxpose.xlu0.b32.cont [11/16] 0.0, 128
        %4481 = vxpose.xlu0.b32.cont [12/16] 0.0, 128
        %4482 = vxpose.xlu0.b32.cont [13/16] 0.0, 128
        %4483 = vxpose.xlu0.b32.cont [14/16] 0.0, 128
        %4484 = vxpose.xlu0.b32.cont [15/16] 0.0, 128
        %4485 = vxpose.xlu0.b32.end [16/16] 0.0, 128
        %v4486 = vpop.trf.xlu0
        %v4487 = vpop.trf.xlu0
        %v4488 = vpop.trf.xlu0
        %v4489 = vpop.trf.xlu0
        %v4490 = vpop.trf.xlu0
        %v4491 = vpop.trf.xlu0
        %v4492 = vpop.trf.xlu0
        %v4493 = vpop.trf.xlu0
        %v4494 = vpop.trf.xlu0
        %v4495 = vpop.trf.xlu0
        %v4496 = vpop.trf.xlu0
        %v4497 = vpop.trf.xlu0
        %v4498 = vpop.trf.xlu0
        %v4499 = vpop.trf.xlu0
        %v4500 = vpop.trf.xlu0
        %v4501 = vpop.trf.xlu0
        %4502 = vxpose.xlu0.b32.start [1/16] %v4295, 128
        %4503 = vxpose.xlu0.b32.cont [2/16] %v4297, 128
        %4504 = vxpose.xlu0.b32.cont [3/16] 0.0, 128
        %4505 = vxpose.xlu0.b32.cont [4/16] 0.0, 128
        %4506 = vxpose.xlu0.b32.cont [5/16] 0.0, 128
        %4507 = vxpose.xlu0.b32.cont [6/16] 0.0, 128
        %4508 = vxpose.xlu0.b32.cont [7/16] 0.0, 128
        %4509 = vxpose.xlu0.b32.cont [8/16] 0.0, 128
        %4510 = vxpose.xlu0.b32.cont [9/16] 0.0, 128
        %4511 = vxpose.xlu0.b32.cont [10/16] 0.0, 128
        %4512 = vxpose.xlu0.b32.cont [11/16] 0.0, 128
        %4513 = vxpose.xlu0.b32.cont [12/16] 0.0, 128
        %4514 = vxpose.xlu0.b32.cont [13/16] 0.0, 128
        %4515 = vxpose.xlu0.b32.cont [14/16] 0.0, 128
        %4516 = vxpose.xlu0.b32.cont [15/16] 0.0, 128
        %4517 = vxpose.xlu0.b32.end [16/16] 0.0, 128
        %v4518 = vpop.trf.xlu0
        %v4519 = vpop.trf.xlu0
        %v4520 = vpop.trf.xlu0
        %v4521 = vpop.trf.xlu0
        %v4522 = vpop.trf.xlu0
        %v4523 = vpop.trf.xlu0
        %v4524 = vpop.trf.xlu0
        %v4525 = vpop.trf.xlu0
        %v4526 = vpop.trf.xlu0
        %v4527 = vpop.trf.xlu0
        %v4528 = vpop.trf.xlu0
        %v4529 = vpop.trf.xlu0
        %v4530 = vpop.trf.xlu0
        %v4531 = vpop.trf.xlu0
        %v4532 = vpop.trf.xlu0
        %v4533 = vpop.trf.xlu0
        %4534 = vxpose.xlu0.b32.start [1/16] %v4299, 128
        %4535 = vxpose.xlu0.b32.cont [2/16] %v4301, 128
        %4536 = vxpose.xlu0.b32.cont [3/16] 0.0, 128
        %4537 = vxpose.xlu0.b32.cont [4/16] 0.0, 128
        %4538 = vxpose.xlu0.b32.cont [5/16] 0.0, 128
        %4539 = vxpose.xlu0.b32.cont [6/16] 0.0, 128
        %4540 = vxpose.xlu0.b32.cont [7/16] 0.0, 128
        %4541 = vxpose.xlu0.b32.cont [8/16] 0.0, 128
        %4542 = vxpose.xlu0.b32.cont [9/16] 0.0, 128
        %4543 = vxpose.xlu0.b32.cont [10/16] 0.0, 128
        %4544 = vxpose.xlu0.b32.cont [11/16] 0.0, 128
        %4545 = vxpose.xlu0.b32.cont [12/16] 0.0, 128
        %4546 = vxpose.xlu0.b32.cont [13/16] 0.0, 128
        %4547 = vxpose.xlu0.b32.cont [14/16] 0.0, 128
        %4548 = vxpose.xlu0.b32.cont [15/16] 0.0, 128
        %4549 = vxpose.xlu0.b32.end [16/16] 0.0, 128
        %v4550 = vpop.trf.xlu0
        %v4551 = vpop.trf.xlu0
        %v4552 = vpop.trf.xlu0
        %v4553 = vpop.trf.xlu0
        %v4554 = vpop.trf.xlu0
        %v4555 = vpop.trf.xlu0
        %v4556 = vpop.trf.xlu0
        %v4557 = vpop.trf.xlu0
        %v4558 = vpop.trf.xlu0
        %v4559 = vpop.trf.xlu0
        %v4560 = vpop.trf.xlu0
        %v4561 = vpop.trf.xlu0
        %v4562 = vpop.trf.xlu0
        %v4563 = vpop.trf.xlu0
        %v4564 = vpop.trf.xlu0
        %v4565 = vpop.trf.xlu0
        %4566 = vxpose.xlu0.b32.start [1/16] %v4303, 128
        %4567 = vxpose.xlu0.b32.cont [2/16] %v4305, 128
        %4568 = vxpose.xlu0.b32.cont [3/16] 0.0, 128
        %4569 = vxpose.xlu0.b32.cont [4/16] 0.0, 128
        %4570 = vxpose.xlu0.b32.cont [5/16] 0.0, 128
        %4571 = vxpose.xlu0.b32.cont [6/16] 0.0, 128
        %4572 = vxpose.xlu0.b32.cont [7/16] 0.0, 128
        %4573 = vxpose.xlu0.b32.cont [8/16] 0.0, 128
        %4574 = vxpose.xlu0.b32.cont [9/16] 0.0, 128
        %4575 = vxpose.xlu0.b32.cont [10/16] 0.0, 128
        %4576 = vxpose.xlu0.b32.cont [11/16] 0.0, 128
        %4577 = vxpose.xlu0.b32.cont [12/16] 0.0, 128
        %4578 = vxpose.xlu0.b32.cont [13/16] 0.0, 128
        %4579 = vxpose.xlu0.b32.cont [14/16] 0.0, 128
        %4580 = vxpose.xlu0.b32.cont [15/16] 0.0, 128
        %4581 = vxpose.xlu0.b32.end [16/16] 0.0, 128
        %v4582 = vpop.trf.xlu0
        %v4583 = vpop.trf.xlu0
        %v4584 = vpop.trf.xlu0
        %v4585 = vpop.trf.xlu0
        %v4586 = vpop.trf.xlu0
        %v4587 = vpop.trf.xlu0
        %v4588 = vpop.trf.xlu0
        %v4589 = vpop.trf.xlu0
        %v4590 = vpop.trf.xlu0
        %v4591 = vpop.trf.xlu0
        %v4592 = vpop.trf.xlu0
        %v4593 = vpop.trf.xlu0
        %v4594 = vpop.trf.xlu0
        %v4595 = vpop.trf.xlu0
        %v4596 = vpop.trf.xlu0
        %v4597 = vpop.trf.xlu0
        %4598 = vxpose.xlu0.b32.start [1/16] %v4307, 128
        %4599 = vxpose.xlu0.b32.cont [2/16] %v4309, 128
        %4600 = vxpose.xlu0.b32.cont [3/16] 0.0, 128
        %4601 = vxpose.xlu0.b32.cont [4/16] 0.0, 128
        %4602 = vxpose.xlu0.b32.cont [5/16] 0.0, 128
        %4603 = vxpose.xlu0.b32.cont [6/16] 0.0, 128
        %4604 = vxpose.xlu0.b32.cont [7/16] 0.0, 128
        %4605 = vxpose.xlu0.b32.cont [8/16] 0.0, 128
        %4606 = vxpose.xlu0.b32.cont [9/16] 0.0, 128
        %4607 = vxpose.xlu0.b32.cont [10/16] 0.0, 128
        %4608 = vxpose.xlu0.b32.cont [11/16] 0.0, 128
        %4609 = vxpose.xlu0.b32.cont [12/16] 0.0, 128
        %4610 = vxpose.xlu0.b32.cont [13/16] 0.0, 128
        %4611 = vxpose.xlu0.b32.cont [14/16] 0.0, 128
        %4612 = vxpose.xlu0.b32.cont [15/16] 0.0, 128
        %4613 = vxpose.xlu0.b32.end [16/16] 0.0, 128
        %v4614 = vpop.trf.xlu0
        %v4615 = vpop.trf.xlu0
        %v4616 = vpop.trf.xlu0
        %v4617 = vpop.trf.xlu0
        %v4618 = vpop.trf.xlu0
        %v4619 = vpop.trf.xlu0
        %v4620 = vpop.trf.xlu0
        %v4621 = vpop.trf.xlu0
        %v4622 = vpop.trf.xlu0
        %v4623 = vpop.trf.xlu0
        %v4624 = vpop.trf.xlu0
        %v4625 = vpop.trf.xlu0
        %v4626 = vpop.trf.xlu0
        %v4627 = vpop.trf.xlu0
        %v4628 = vpop.trf.xlu0
        %v4629 = vpop.trf.xlu0
        %4630 = vxpose.xlu0.b32.start [1/16] %v4311, 128
        %4631 = vxpose.xlu0.b32.cont [2/16] %v4313, 128
        %4632 = vxpose.xlu0.b32.cont [3/16] 0.0, 128
        %4633 = vxpose.xlu0.b32.cont [4/16] 0.0, 128
        %4634 = vxpose.xlu0.b32.cont [5/16] 0.0, 128
        %4635 = vxpose.xlu0.b32.cont [6/16] 0.0, 128
        %4636 = vxpose.xlu0.b32.cont [7/16] 0.0, 128
        %4637 = vxpose.xlu0.b32.cont [8/16] 0.0, 128
        %4638 = vxpose.xlu0.b32.cont [9/16] 0.0, 128
        %4639 = vxpose.xlu0.b32.cont [10/16] 0.0, 128
        %4640 = vxpose.xlu0.b32.cont [11/16] 0.0, 128
        %4641 = vxpose.xlu0.b32.cont [12/16] 0.0, 128
        %4642 = vxpose.xlu0.b32.cont [13/16] 0.0, 128
        %4643 = vxpose.xlu0.b32.cont [14/16] 0.0, 128
        %4644 = vxpose.xlu0.b32.cont [15/16] 0.0, 128
        %4645 = vxpose.xlu0.b32.end [16/16] 0.0, 128
        %v4646 = vpop.trf.xlu0
        %v4647 = vpop.trf.xlu0
        %v4648 = vpop.trf.xlu0
        %v4649 = vpop.trf.xlu0
        %v4650 = vpop.trf.xlu0
        %v4651 = vpop.trf.xlu0
        %v4652 = vpop.trf.xlu0
        %v4653 = vpop.trf.xlu0
        %v4654 = vpop.trf.xlu0
        %v4655 = vpop.trf.xlu0
        %v4656 = vpop.trf.xlu0
        %v4657 = vpop.trf.xlu0
        %v4658 = vpop.trf.xlu0
        %v4659 = vpop.trf.xlu0
        %v4660 = vpop.trf.xlu0
        %v4661 = vpop.trf.xlu0
        %4662 = vxpose.xlu0.b32.start [1/16] %v4315, 128
        %4663 = vxpose.xlu0.b32.cont [2/16] %v4317, 128
        %4664 = vxpose.xlu0.b32.cont [3/16] 0.0, 128
        %4665 = vxpose.xlu0.b32.cont [4/16] 0.0, 128
        %4666 = vxpose.xlu0.b32.cont [5/16] 0.0, 128
        %4667 = vxpose.xlu0.b32.cont [6/16] 0.0, 128
        %4668 = vxpose.xlu0.b32.cont [7/16] 0.0, 128
        %4669 = vxpose.xlu0.b32.cont [8/16] 0.0, 128
        %4670 = vxpose.xlu0.b32.cont [9/16] 0.0, 128
        %4671 = vxpose.xlu0.b32.cont [10/16] 0.0, 128
        %4672 = vxpose.xlu0.b32.cont [11/16] 0.0, 128
        %4673 = vxpose.xlu0.b32.cont [12/16] 0.0, 128
        %4674 = vxpose.xlu0.b32.cont [13/16] 0.0, 128
        %4675 = vxpose.xlu0.b32.cont [14/16] 0.0, 128
        %4676 = vxpose.xlu0.b32.cont [15/16] 0.0, 128
        %4677 = vxpose.xlu0.b32.end [16/16] 0.0, 128
        %v4678 = vpop.trf.xlu0
        %v4679 = vpop.trf.xlu0
        %v4680 = vpop.trf.xlu0
        %v4681 = vpop.trf.xlu0
        %v4682 = vpop.trf.xlu0
        %v4683 = vpop.trf.xlu0
        %v4684 = vpop.trf.xlu0
        %v4685 = vpop.trf.xlu0
        %v4686 = vpop.trf.xlu0
        %v4687 = vpop.trf.xlu0
        %v4688 = vpop.trf.xlu0
        %v4689 = vpop.trf.xlu0
        %v4690 = vpop.trf.xlu0
        %v4691 = vpop.trf.xlu0
        %v4692 = vpop.trf.xlu0
        %v4693 = vpop.trf.xlu0
        %4694 = vxpose.xlu0.b32.start [1/16] %v4319, 128
        %4695 = vxpose.xlu0.b32.cont [2/16] %v4321, 128
        %4696 = vxpose.xlu0.b32.cont [3/16] 0.0, 128
        %4697 = vxpose.xlu0.b32.cont [4/16] 0.0, 128
        %4698 = vxpose.xlu0.b32.cont [5/16] 0.0, 128
        %4699 = vxpose.xlu0.b32.cont [6/16] 0.0, 128
        %4700 = vxpose.xlu0.b32.cont [7/16] 0.0, 128
        %4701 = vxpose.xlu0.b32.cont [8/16] 0.0, 128
        %4702 = vxpose.xlu0.b32.cont [9/16] 0.0, 128
        %4703 = vxpose.xlu0.b32.cont [10/16] 0.0, 128
        %4704 = vxpose.xlu0.b32.cont [11/16] 0.0, 128
        %4705 = vxpose.xlu0.b32.cont [12/16] 0.0, 128
        %4706 = vxpose.xlu0.b32.cont [13/16] 0.0, 128
        %4707 = vxpose.xlu0.b32.cont [14/16] 0.0, 128
        %4708 = vxpose.xlu0.b32.cont [15/16] 0.0, 128
        %4709 = vxpose.xlu0.b32.end [16/16] 0.0, 128
        %v4710 = vpop.trf.xlu0
        %v4711 = vpop.trf.xlu0
        %v4712 = vpop.trf.xlu0
        %v4713 = vpop.trf.xlu0
        %v4714 = vpop.trf.xlu0
        %v4715 = vpop.trf.xlu0
        %v4716 = vpop.trf.xlu0
        %v4717 = vpop.trf.xlu0
        %v4718 = vpop.trf.xlu0
        %v4719 = vpop.trf.xlu0
        %v4720 = vpop.trf.xlu0
        %v4721 = vpop.trf.xlu0
        %v4722 = vpop.trf.xlu0
        %v4723 = vpop.trf.xlu0
        %v4724 = vpop.trf.xlu0
        %v4725 = vpop.trf.xlu0
        %4726 = vxpose.xlu0.b32.start [1/16] %v4323, 128
        %4727 = vxpose.xlu0.b32.cont [2/16] %v4325, 128
        %4728 = vxpose.xlu0.b32.cont [3/16] 0.0, 128
        %4729 = vxpose.xlu0.b32.cont [4/16] 0.0, 128
        %4730 = vxpose.xlu0.b32.cont [5/16] 0.0, 128
        %4731 = vxpose.xlu0.b32.cont [6/16] 0.0, 128
        %4732 = vxpose.xlu0.b32.cont [7/16] 0.0, 128
        %4733 = vxpose.xlu0.b32.cont [8/16] 0.0, 128
        %4734 = vxpose.xlu0.b32.cont [9/16] 0.0, 128
        %4735 = vxpose.xlu0.b32.cont [10/16] 0.0, 128
        %4736 = vxpose.xlu0.b32.cont [11/16] 0.0, 128
        %4737 = vxpose.xlu0.b32.cont [12/16] 0.0, 128
        %4738 = vxpose.xlu0.b32.cont [13/16] 0.0, 128
        %4739 = vxpose.xlu0.b32.cont [14/16] 0.0, 128
        %4740 = vxpose.xlu0.b32.cont [15/16] 0.0, 128
        %4741 = vxpose.xlu0.b32.end [16/16] 0.0, 128
        %v4742 = vpop.trf.xlu0
        %v4743 = vpop.trf.xlu0
        %v4744 = vpop.trf.xlu0
        %v4745 = vpop.trf.xlu0
        %v4746 = vpop.trf.xlu0
        %v4747 = vpop.trf.xlu0
        %v4748 = vpop.trf.xlu0
        %v4749 = vpop.trf.xlu0
        %v4750 = vpop.trf.xlu0
        %v4751 = vpop.trf.xlu0
        %v4752 = vpop.trf.xlu0
        %v4753 = vpop.trf.xlu0
        %v4754 = vpop.trf.xlu0
        %v4755 = vpop.trf.xlu0
        %v4756 = vpop.trf.xlu0
        %v4757 = vpop.trf.xlu0
        %4758 = vxpose.xlu0.b32.start [1/16] %v4327, 128
        %4759 = vxpose.xlu0.b32.cont [2/16] %v4329, 128
        %4760 = vxpose.xlu0.b32.cont [3/16] 0.0, 128
        %4761 = vxpose.xlu0.b32.cont [4/16] 0.0, 128
        %4762 = vxpose.xlu0.b32.cont [5/16] 0.0, 128
        %4763 = vxpose.xlu0.b32.cont [6/16] 0.0, 128
        %4764 = vxpose.xlu0.b32.cont [7/16] 0.0, 128
        %4765 = vxpose.xlu0.b32.cont [8/16] 0.0, 128
        %4766 = vxpose.xlu0.b32.cont [9/16] 0.0, 128
        %4767 = vxpose.xlu0.b32.cont [10/16] 0.0, 128
        %4768 = vxpose.xlu0.b32.cont [11/16] 0.0, 128
        %4769 = vxpose.xlu0.b32.cont [12/16] 0.0, 128
        %4770 = vxpose.xlu0.b32.cont [13/16] 0.0, 128
        %4771 = vxpose.xlu0.b32.cont [14/16] 0.0, 128
        %4772 = vxpose.xlu0.b32.cont [15/16] 0.0, 128
        %4773 = vxpose.xlu0.b32.end [16/16] 0.0, 128
        %v4774 = vpop.trf.xlu0
        %v4775 = vpop.trf.xlu0
        %v4776 = vpop.trf.xlu0
        %v4777 = vpop.trf.xlu0
        %v4778 = vpop.trf.xlu0
        %v4779 = vpop.trf.xlu0
        %v4780 = vpop.trf.xlu0
        %v4781 = vpop.trf.xlu0
        %v4782 = vpop.trf.xlu0
        %v4783 = vpop.trf.xlu0
        %v4784 = vpop.trf.xlu0
        %v4785 = vpop.trf.xlu0
        %v4786 = vpop.trf.xlu0
        %v4787 = vpop.trf.xlu0
        %v4788 = vpop.trf.xlu0
        %v4789 = vpop.trf.xlu0
        %4790 = vxpose.xlu0.b32.start [1/16] %v4331, 128
        %4791 = vxpose.xlu0.b32.cont [2/16] %v4333, 128
        %4792 = vxpose.xlu0.b32.cont [3/16] 0.0, 128
        %4793 = vxpose.xlu0.b32.cont [4/16] 0.0, 128
        %4794 = vxpose.xlu0.b32.cont [5/16] 0.0, 128
        %4795 = vxpose.xlu0.b32.cont [6/16] 0.0, 128
        %4796 = vxpose.xlu0.b32.cont [7/16] 0.0, 128
        %4797 = vxpose.xlu0.b32.cont [8/16] 0.0, 128
        %4798 = vxpose.xlu0.b32.cont [9/16] 0.0, 128
        %4799 = vxpose.xlu0.b32.cont [10/16] 0.0, 128
        %4800 = vxpose.xlu0.b32.cont [11/16] 0.0, 128
        %4801 = vxpose.xlu0.b32.cont [12/16] 0.0, 128
        %4802 = vxpose.xlu0.b32.cont [13/16] 0.0, 128
        %4803 = vxpose.xlu0.b32.cont [14/16] 0.0, 128
        %4804 = vxpose.xlu0.b32.cont [15/16] 0.0, 128
        %4805 = vxpose.xlu0.b32.end [16/16] 0.0, 128
        %v4806 = vpop.trf.xlu0
        %v4807 = vpop.trf.xlu0
        %v4808 = vpop.trf.xlu0
        %v4809 = vpop.trf.xlu0
        %v4810 = vpop.trf.xlu0
        %v4811 = vpop.trf.xlu0
        %v4812 = vpop.trf.xlu0
        %v4813 = vpop.trf.xlu0
        %v4814 = vpop.trf.xlu0
        %v4815 = vpop.trf.xlu0
        %v4816 = vpop.trf.xlu0
        %v4817 = vpop.trf.xlu0
        %v4818 = vpop.trf.xlu0
        %v4819 = vpop.trf.xlu0
        %v4820 = vpop.trf.xlu0
        %v4821 = vpop.trf.xlu0
        %4822 = vxpose.xlu0.b32.start [1/16] %v4335, 128
        %4823 = vxpose.xlu0.b32.cont [2/16] %v4337, 128
        %4824 = vxpose.xlu0.b32.cont [3/16] 0.0, 128
        %4825 = vxpose.xlu0.b32.cont [4/16] 0.0, 128
        %4826 = vxpose.xlu0.b32.cont [5/16] 0.0, 128
        %4827 = vxpose.xlu0.b32.cont [6/16] 0.0, 128
        %4828 = vxpose.xlu0.b32.cont [7/16] 0.0, 128
        %4829 = vxpose.xlu0.b32.cont [8/16] 0.0, 128
        %4830 = vxpose.xlu0.b32.cont [9/16] 0.0, 128
        %4831 = vxpose.xlu0.b32.cont [10/16] 0.0, 128
        %4832 = vxpose.xlu0.b32.cont [11/16] 0.0, 128
        %4833 = vxpose.xlu0.b32.cont [12/16] 0.0, 128
        %4834 = vxpose.xlu0.b32.cont [13/16] 0.0, 128
        %4835 = vxpose.xlu0.b32.cont [14/16] 0.0, 128
        %4836 = vxpose.xlu0.b32.cont [15/16] 0.0, 128
        %4837 = vxpose.xlu0.b32.end [16/16] 0.0, 128
        %v4838 = vpop.trf.xlu0
        %v4839 = vpop.trf.xlu0
        %v4840 = vpop.trf.xlu0
        %v4841 = vpop.trf.xlu0
        %v4842 = vpop.trf.xlu0
        %v4843 = vpop.trf.xlu0
        %v4844 = vpop.trf.xlu0
        %v4845 = vpop.trf.xlu0
        %v4846 = vpop.trf.xlu0
        %v4847 = vpop.trf.xlu0
        %v4848 = vpop.trf.xlu0
        %v4849 = vpop.trf.xlu0
        %v4850 = vpop.trf.xlu0
        %v4851 = vpop.trf.xlu0
        %v4852 = vpop.trf.xlu0
        %v4853 = vpop.trf.xlu0
        %4854 = vxpose.xlu0.b32.start [1/16] %v4339, 128
        %4855 = vxpose.xlu0.b32.cont [2/16] %v4341, 128
        %4856 = vxpose.xlu0.b32.cont [3/16] 0.0, 128
        %4857 = vxpose.xlu0.b32.cont [4/16] 0.0, 128
        %4858 = vxpose.xlu0.b32.cont [5/16] 0.0, 128
        %4859 = vxpose.xlu0.b32.cont [6/16] 0.0, 128
        %4860 = vxpose.xlu0.b32.cont [7/16] 0.0, 128
        %4861 = vxpose.xlu0.b32.cont [8/16] 0.0, 128
        %4862 = vxpose.xlu0.b32.cont [9/16] 0.0, 128
        %4863 = vxpose.xlu0.b32.cont [10/16] 0.0, 128
        %4864 = vxpose.xlu0.b32.cont [11/16] 0.0, 128
        %4865 = vxpose.xlu0.b32.cont [12/16] 0.0, 128
        %4866 = vxpose.xlu0.b32.cont [13/16] 0.0, 128
        %4867 = vxpose.xlu0.b32.cont [14/16] 0.0, 128
        %4868 = vxpose.xlu0.b32.cont [15/16] 0.0, 128
        %4869 = vxpose.xlu0.b32.end [16/16] 0.0, 128
        %v4870 = vpop.trf.xlu0
        %v4871 = vpop.trf.xlu0
        %v4872 = vpop.trf.xlu0
        %v4873 = vpop.trf.xlu0
        %v4874 = vpop.trf.xlu0
        %v4875 = vpop.trf.xlu0
        %v4876 = vpop.trf.xlu0
        %v4877 = vpop.trf.xlu0
        %v4878 = vpop.trf.xlu0
        %v4879 = vpop.trf.xlu0
        %v4880 = vpop.trf.xlu0
        %v4881 = vpop.trf.xlu0
        %v4882 = vpop.trf.xlu0
        %v4883 = vpop.trf.xlu0
        %v4884 = vpop.trf.xlu0
        %v4885 = vpop.trf.xlu0
        %4886 = vset.pattern.permute.xlu0 16
        %4887 = vperm.xlu0 %4886, %v2902
        %v4888 = vpop.permute.xlu0 %4887
        %4890 = vset.pattern.permute.xlu0 16
        %4891 = vperm.xlu0 %4890, %v2903
        %v4892 = vpop.permute.xlu0 %4891
        %4894 = vset.pattern.permute.xlu0 16
        %4895 = vperm.xlu0 %4894, %v2904
        %v4896 = vpop.permute.xlu0 %4895
        %4898 = vset.pattern.permute.xlu0 16
        %4899 = vperm.xlu0 %4898, %v2905
        %v4900 = vpop.permute.xlu0 %4899
        %4902 = vset.pattern.permute.xlu0 16
        %4903 = vperm.xlu0 %4902, %v2906
        %v4904 = vpop.permute.xlu0 %4903
        %4906 = vset.pattern.permute.xlu0 16
        %4907 = vperm.xlu0 %4906, %v2907
        %v4908 = vpop.permute.xlu0 %4907
        %4910 = vset.pattern.permute.xlu0 16
        %4911 = vperm.xlu0 %4910, %v2908
        %v4912 = vpop.permute.xlu0 %4911
        %4914 = vset.pattern.permute.xlu0 16
        %4915 = vperm.xlu0 %4914, %v2909
        %v4916 = vpop.permute.xlu0 %4915
        %4918 = vset.pattern.permute.xlu0 16
        %4919 = vperm.xlu0 %4918, %v2910
        %v4920 = vpop.permute.xlu0 %4919
        %4922 = vset.pattern.permute.xlu0 16
        %4923 = vperm.xlu0 %4922, %v2911
        %v4924 = vpop.permute.xlu0 %4923
        %4926 = vset.pattern.permute.xlu0 16
        %4927 = vperm.xlu0 %4926, %v2912
        %v4928 = vpop.permute.xlu0 %4927
        %4930 = vset.pattern.permute.xlu0 16
        %4931 = vperm.xlu0 %4930, %v2913
        %v4932 = vpop.permute.xlu0 %4931
        %4934 = vset.pattern.permute.xlu0 16
        %4935 = vperm.xlu0 %4934, %v2914
        %v4936 = vpop.permute.xlu0 %4935
        %4938 = vset.pattern.permute.xlu0 16
        %4939 = vperm.xlu0 %4938, %v2915
        %v4940 = vpop.permute.xlu0 %4939
        %4942 = vset.pattern.permute.xlu0 16
        %4943 = vperm.xlu0 %4942, %v2916
        %v4944 = vpop.permute.xlu0 %4943
        %4946 = vset.pattern.permute.xlu0 16
        %4947 = vperm.xlu0 %4946, %v2917
        %v4948 = vpop.permute.xlu0 %4947
        %4950 = vset.pattern.permute.xlu0 16
        %4951 = vperm.xlu0 %4950, %v2918
        %v4952 = vpop.permute.xlu0 %4951
        %4954 = vset.pattern.permute.xlu0 16
        %4955 = vperm.xlu0 %4954, %v2919
        %v4956 = vpop.permute.xlu0 %4955
        %4958 = vset.pattern.permute.xlu0 16
        %4959 = vperm.xlu0 %4958, %v2920
        %v4960 = vpop.permute.xlu0 %4959
        %4962 = vset.pattern.permute.xlu0 16
        %4963 = vperm.xlu0 %4962, %v2921
        %v4964 = vpop.permute.xlu0 %4963
        %4966 = vset.pattern.permute.xlu0 16
        %4967 = vperm.xlu0 %4966, %v2922
        %v4968 = vpop.permute.xlu0 %4967
        %4970 = vset.pattern.permute.xlu0 16
        %4971 = vperm.xlu0 %4970, %v2923
        %v4972 = vpop.permute.xlu0 %4971
        %4974 = vset.pattern.permute.xlu0 16
        %4975 = vperm.xlu0 %4974, %v2924
        %v4976 = vpop.permute.xlu0 %4975
        %4978 = vset.pattern.permute.xlu0 16
        %4979 = vperm.xlu0 %4978, %v2925
        %v4980 = vpop.permute.xlu0 %4979
        %4982 = vset.pattern.permute.xlu0 16
        %4983 = vperm.xlu0 %4982, %v2926
        %v4984 = vpop.permute.xlu0 %4983
        %4986 = vset.pattern.permute.xlu0 16
        %4987 = vperm.xlu0 %4986, %v2927
        %v4988 = vpop.permute.xlu0 %4987
        %4990 = vset.pattern.permute.xlu0 16
        %4991 = vperm.xlu0 %4990, %v2928
        %v4992 = vpop.permute.xlu0 %4991
        %4994 = vset.pattern.permute.xlu0 16
        %4995 = vperm.xlu0 %4994, %v2929
        %v4996 = vpop.permute.xlu0 %4995
        %4998 = vset.pattern.permute.xlu0 16
        %4999 = vperm.xlu0 %4998, %v2930
        %v5000 = vpop.permute.xlu0 %4999
        %5002 = vset.pattern.permute.xlu0 16
        %5003 = vperm.xlu0 %5002, %v2931
        %v5004 = vpop.permute.xlu0 %5003
        %5006 = vset.pattern.permute.xlu0 16
        %5007 = vperm.xlu0 %5006, %v2932
        %v5008 = vpop.permute.xlu0 %5007
        %5010 = vset.pattern.permute.xlu0 16
        %5011 = vperm.xlu0 %5010, %v2933
        %v5012 = vpop.permute.xlu0 %5011
        %v5014 = vlaneseq
        %v5015 = vshrl.u32 %v5014, 7
        %v5016 = vsub.s32 0, %v5015
        %v5017 = vrot.slane %v3078, %v5016
        %v5018 = vlaneseq
        %v5019 = vshrl.u32 %v5018, 7
        %v5020 = vsub.s32 0, %v5019
        %v5021 = vrot.slane %v3110, %v5020
        %v5022 = vlaneseq
        %v5023 = vshrl.u32 %v5022, 7
        %v5024 = vsub.s32 0, %v5023
        %v5025 = vrot.slane %v3142, %v5024
        %v5026 = vlaneseq
        %v5027 = vshrl.u32 %v5026, 7
        %v5028 = vsub.s32 0, %v5027
        %v5029 = vrot.slane %v3174, %v5028
        %v5030 = vlaneseq
        %v5031 = vshrl.u32 %v5030, 7
        %v5032 = vsub.s32 0, %v5031
        %v5033 = vrot.slane %v3206, %v5032
        %v5034 = vlaneseq
        %v5035 = vshrl.u32 %v5034, 7
        %v5036 = vsub.s32 0, %v5035
        %v5037 = vrot.slane %v3238, %v5036
        %v5038 = vlaneseq
        %v5039 = vshrl.u32 %v5038, 7
        %v5040 = vsub.s32 0, %v5039
        %v5041 = vrot.slane %v3270, %v5040
        %v5042 = vlaneseq
        %v5043 = vshrl.u32 %v5042, 7
        %v5044 = vsub.s32 0, %v5043
        %v5045 = vrot.slane %v3302, %v5044
        %v5046 = vlaneseq
        %v5047 = vshrl.u32 %v5046, 7
        %v5048 = vsub.s32 0, %v5047
        %v5049 = vrot.slane %v3334, %v5048
        %v5050 = vlaneseq
        %v5051 = vshrl.u32 %v5050, 7
        %v5052 = vsub.s32 0, %v5051
        %v5053 = vrot.slane %v3366, %v5052
        %v5054 = vlaneseq
        %v5055 = vshrl.u32 %v5054, 7
        %v5056 = vsub.s32 0, %v5055
        %v5057 = vrot.slane %v3398, %v5056
        %v5058 = vlaneseq
        %v5059 = vshrl.u32 %v5058, 7
        %v5060 = vsub.s32 0, %v5059
        %v5061 = vrot.slane %v3430, %v5060
        %v5062 = vlaneseq
        %v5063 = vshrl.u32 %v5062, 7
        %v5064 = vsub.s32 0, %v5063
        %v5065 = vrot.slane %v3462, %v5064
        %v5066 = vlaneseq
        %v5067 = vshrl.u32 %v5066, 7
        %v5068 = vsub.s32 0, %v5067
        %v5069 = vrot.slane %v3494, %v5068
        %v5070 = vlaneseq
        %v5071 = vshrl.u32 %v5070, 7
        %v5072 = vsub.s32 0, %v5071
        %v5073 = vrot.slane %v3526, %v5072
        %v5074 = vlaneseq
        %v5075 = vshrl.u32 %v5074, 7
        %v5076 = vsub.s32 0, %v5075
        %v5077 = vrot.slane %v3558, %v5076
        %v5078 = vmul.f32 %v4888, %v5017
        %v5079 = vmul.f32 %v4892, %v5017
        %v5080 = vmul.f32 %v4896, %v5021
        %v5081 = vmul.f32 %v4900, %v5021
        %v5082 = vmul.f32 %v4904, %v5025
        %v5083 = vmul.f32 %v4908, %v5025
        %v5084 = vmul.f32 %v4912, %v5029
        %v5085 = vmul.f32 %v4916, %v5029
        %v5086 = vmul.f32 %v4920, %v5033
        %v5087 = vmul.f32 %v4924, %v5033
        %v5088 = vmul.f32 %v4928, %v5037
        %v5089 = vmul.f32 %v4932, %v5037
        %v5090 = vmul.f32 %v4936, %v5041
        %v5091 = vmul.f32 %v4940, %v5041
        %v5092 = vmul.f32 %v4944, %v5045
        %v5093 = vmul.f32 %v4948, %v5045
        %v5094 = vmul.f32 %v4952, %v5049
        %v5095 = vmul.f32 %v4956, %v5049
        %v5096 = vmul.f32 %v4960, %v5053
        %v5097 = vmul.f32 %v4964, %v5053
        %v5098 = vmul.f32 %v4968, %v5057
        %v5099 = vmul.f32 %v4972, %v5057
        %v5100 = vmul.f32 %v4976, %v5061
        %v5101 = vmul.f32 %v4980, %v5061
        %v5102 = vmul.f32 %v4984, %v5065
        %v5103 = vmul.f32 %v4988, %v5065
        %v5104 = vmul.f32 %v4992, %v5069
        %v5105 = vmul.f32 %v4996, %v5069
        %v5106 = vmul.f32 %v5000, %v5073
        %v5107 = vmul.f32 %v5004, %v5073
        %v5108 = vmul.f32 %v5008, %v5077
        %v5109 = vmul.f32 %v5012, %v5077
        %5111 = vset.pattern.permute.xlu0 0
        %5112 = vperm.xlu0 %5111, %v3798
        %v5113 = vpop.permute.xlu0 %5112
        %5116 = vset.pattern.permute.xlu0 0
        %5117 = vperm.xlu0 %5116, %v3934
        %v5118 = vpop.permute.xlu0 %5117
        %5121 = vset.pattern.permute.xlu0 0
        %5122 = vperm.xlu0 %5121, %v3799
        %v5123 = vpop.permute.xlu0 %5122
        %5126 = vset.pattern.permute.xlu0 0
        %5127 = vperm.xlu0 %5126, %v3935
        %v5128 = vpop.permute.xlu0 %5127
        %5131 = vset.pattern.permute.xlu0 0
        %5132 = vperm.xlu0 %5131, %v3800
        %v5133 = vpop.permute.xlu0 %5132
        %5136 = vset.pattern.permute.xlu0 0
        %5137 = vperm.xlu0 %5136, %v3936
        %v5138 = vpop.permute.xlu0 %5137
        %5141 = vset.pattern.permute.xlu0 0
        %5142 = vperm.xlu0 %5141, %v3801
        %v5143 = vpop.permute.xlu0 %5142
        %5146 = vset.pattern.permute.xlu0 0
        %5147 = vperm.xlu0 %5146, %v3937
        %v5148 = vpop.permute.xlu0 %5147
        %5151 = vset.pattern.permute.xlu0 0
        %5152 = vperm.xlu0 %5151, %v3802
        %v5153 = vpop.permute.xlu0 %5152
        %5156 = vset.pattern.permute.xlu0 0
        %5157 = vperm.xlu0 %5156, %v3938
        %v5158 = vpop.permute.xlu0 %5157
        %5161 = vset.pattern.permute.xlu0 0
        %5162 = vperm.xlu0 %5161, %v3803
        %v5163 = vpop.permute.xlu0 %5162
        %5166 = vset.pattern.permute.xlu0 0
        %5167 = vperm.xlu0 %5166, %v3939
        %v5168 = vpop.permute.xlu0 %5167
        %5171 = vset.pattern.permute.xlu0 0
        %5172 = vperm.xlu0 %5171, %v3804
        %v5173 = vpop.permute.xlu0 %5172
        %5176 = vset.pattern.permute.xlu0 0
        %5177 = vperm.xlu0 %5176, %v3940
        %v5178 = vpop.permute.xlu0 %5177
        %5181 = vset.pattern.permute.xlu0 0
        %5182 = vperm.xlu0 %5181, %v3805
        %v5183 = vpop.permute.xlu0 %5182
        %5186 = vset.pattern.permute.xlu0 0
        %5187 = vperm.xlu0 %5186, %v3941
        %v5188 = vpop.permute.xlu0 %5187
        %5191 = vset.pattern.permute.xlu0 0
        %5192 = vperm.xlu0 %5191, %v4070
        %v5193 = vpop.permute.xlu0 %5192
        %5196 = vset.pattern.permute.xlu0 0
        %5197 = vperm.xlu0 %5196, %v4206
        %v5198 = vpop.permute.xlu0 %5197
        %5201 = vset.pattern.permute.xlu0 0
        %5202 = vperm.xlu0 %5201, %v4071
        %v5203 = vpop.permute.xlu0 %5202
        %5206 = vset.pattern.permute.xlu0 0
        %5207 = vperm.xlu0 %5206, %v4207
        %v5208 = vpop.permute.xlu0 %5207
        %5211 = vset.pattern.permute.xlu0 0
        %5212 = vperm.xlu0 %5211, %v4072
        %v5213 = vpop.permute.xlu0 %5212
        %5216 = vset.pattern.permute.xlu0 0
        %5217 = vperm.xlu0 %5216, %v4208
        %v5218 = vpop.permute.xlu0 %5217
        %5221 = vset.pattern.permute.xlu0 0
        %5222 = vperm.xlu0 %5221, %v4073
        %v5223 = vpop.permute.xlu0 %5222
        %5226 = vset.pattern.permute.xlu0 0
        %5227 = vperm.xlu0 %5226, %v4209
        %v5228 = vpop.permute.xlu0 %5227
        %5231 = vset.pattern.permute.xlu0 0
        %5232 = vperm.xlu0 %5231, %v4074
        %v5233 = vpop.permute.xlu0 %5232
        %5236 = vset.pattern.permute.xlu0 0
        %5237 = vperm.xlu0 %5236, %v4210
        %v5238 = vpop.permute.xlu0 %5237
        %5241 = vset.pattern.permute.xlu0 0
        %5242 = vperm.xlu0 %5241, %v4075
        %v5243 = vpop.permute.xlu0 %5242
        %5246 = vset.pattern.permute.xlu0 0
        %5247 = vperm.xlu0 %5246, %v4211
        %v5248 = vpop.permute.xlu0 %5247
        %5251 = vset.pattern.permute.xlu0 0
        %5252 = vperm.xlu0 %5251, %v4076
        %v5253 = vpop.permute.xlu0 %5252
        %5256 = vset.pattern.permute.xlu0 0
        %5257 = vperm.xlu0 %5256, %v4212
        %v5258 = vpop.permute.xlu0 %5257
        %5261 = vset.pattern.permute.xlu0 0
        %5262 = vperm.xlu0 %5261, %v4077
        %v5263 = vpop.permute.xlu0 %5262
        %5266 = vset.pattern.permute.xlu0 0
        %5267 = vperm.xlu0 %5266, %v4213
        %v5268 = vpop.permute.xlu0 %5267
        %v5270 = vlaneseq
        %v5271 = vshrl.u32 %v5270, 7
        %v5272 = vsub.s32 0, %v5271
        %v5273 = vrot.slane %v4390, %v5272
        %v5274 = vlaneseq
        %v5275 = vshrl.u32 %v5274, 7
        %v5276 = vsub.s32 0, %v5275
        %v5277 = vrot.slane %v4422, %v5276
        %v5278 = vlaneseq
        %v5279 = vshrl.u32 %v5278, 7
        %v5280 = vsub.s32 0, %v5279
        %v5281 = vrot.slane %v4454, %v5280
        %v5282 = vlaneseq
        %v5283 = vshrl.u32 %v5282, 7
        %v5284 = vsub.s32 0, %v5283
        %v5285 = vrot.slane %v4486, %v5284
        %v5286 = vlaneseq
        %v5287 = vshrl.u32 %v5286, 7
        %v5288 = vsub.s32 0, %v5287
        %v5289 = vrot.slane %v4518, %v5288
        %v5290 = vlaneseq
        %v5291 = vshrl.u32 %v5290, 7
        %v5292 = vsub.s32 0, %v5291
        %v5293 = vrot.slane %v4550, %v5292
        %v5294 = vlaneseq
        %v5295 = vshrl.u32 %v5294, 7
        %v5296 = vsub.s32 0, %v5295
        %v5297 = vrot.slane %v4582, %v5296
        %v5298 = vlaneseq
        %v5299 = vshrl.u32 %v5298, 7
        %v5300 = vsub.s32 0, %v5299
        %v5301 = vrot.slane %v4614, %v5300
        %v5302 = vlaneseq
        %v5303 = vshrl.u32 %v5302, 7
        %v5304 = vsub.s32 0, %v5303
        %v5305 = vrot.slane %v4646, %v5304
        %v5306 = vlaneseq
        %v5307 = vshrl.u32 %v5306, 7
        %v5308 = vsub.s32 0, %v5307
        %v5309 = vrot.slane %v4678, %v5308
        %v5310 = vlaneseq
        %v5311 = vshrl.u32 %v5310, 7
        %v5312 = vsub.s32 0, %v5311
        %v5313 = vrot.slane %v4710, %v5312
        %v5314 = vlaneseq
        %v5315 = vshrl.u32 %v5314, 7
        %v5316 = vsub.s32 0, %v5315
        %v5317 = vrot.slane %v4742, %v5316
        %v5318 = vlaneseq
        %v5319 = vshrl.u32 %v5318, 7
        %v5320 = vsub.s32 0, %v5319
        %v5321 = vrot.slane %v4774, %v5320
        %v5322 = vlaneseq
        %v5323 = vshrl.u32 %v5322, 7
        %v5324 = vsub.s32 0, %v5323
        %v5325 = vrot.slane %v4806, %v5324
        %v5326 = vlaneseq
        %v5327 = vshrl.u32 %v5326, 7
        %v5328 = vsub.s32 0, %v5327
        %v5329 = vrot.slane %v4838, %v5328
        %v5330 = vlaneseq
        %v5331 = vshrl.u32 %v5330, 7
        %v5332 = vsub.s32 0, %v5331
        %v5333 = vrot.slane %v4870, %v5332
        %v5334 = vmul.f32 %v5113, %v5273
        %v5335 = vmul.f32 %v5118, %v5273
        %v5336 = vmul.f32 %v5123, %v5277
        %v5337 = vmul.f32 %v5128, %v5277
        %v5338 = vmul.f32 %v5133, %v5281
        %v5339 = vmul.f32 %v5138, %v5281
        %v5340 = vmul.f32 %v5143, %v5285
        %v5341 = vmul.f32 %v5148, %v5285
        %v5342 = vmul.f32 %v5153, %v5289
        %v5343 = vmul.f32 %v5158, %v5289
        %v5344 = vmul.f32 %v5163, %v5293
        %v5345 = vmul.f32 %v5168, %v5293
        %v5346 = vmul.f32 %v5173, %v5297
        %v5347 = vmul.f32 %v5178, %v5297
        %v5348 = vmul.f32 %v5183, %v5301
        %v5349 = vmul.f32 %v5188, %v5301
        %v5350 = vmul.f32 %v5193, %v5305
        %v5351 = vmul.f32 %v5198, %v5305
        %v5352 = vmul.f32 %v5203, %v5309
        %v5353 = vmul.f32 %v5208, %v5309
        %v5354 = vmul.f32 %v5213, %v5313
        %v5355 = vmul.f32 %v5218, %v5313
        %v5356 = vmul.f32 %v5223, %v5317
        %v5357 = vmul.f32 %v5228, %v5317
        %v5358 = vmul.f32 %v5233, %v5321
        %v5359 = vmul.f32 %v5238, %v5321
        %v5360 = vmul.f32 %v5243, %v5325
        %v5361 = vmul.f32 %v5248, %v5325
        %v5362 = vmul.f32 %v5253, %v5329
        %v5363 = vmul.f32 %v5258, %v5329
        %v5364 = vmul.f32 %v5263, %v5333
        %v5365 = vmul.f32 %v5268, %v5333
        %5366 = vset.pattern.permute.xlu0 17
        %5367 = vperm.xlu0 %5366, %v2902
        %v5368 = vpop.permute.xlu0 %5367
        %5370 = vset.pattern.permute.xlu0 17
        %5371 = vperm.xlu0 %5370, %v2903
        %v5372 = vpop.permute.xlu0 %5371
        %5374 = vset.pattern.permute.xlu0 17
        %5375 = vperm.xlu0 %5374, %v2904
        %v5376 = vpop.permute.xlu0 %5375
        %5378 = vset.pattern.permute.xlu0 17
        %5379 = vperm.xlu0 %5378, %v2905
        %v5380 = vpop.permute.xlu0 %5379
        %5382 = vset.pattern.permute.xlu0 17
        %5383 = vperm.xlu0 %5382, %v2906
        %v5384 = vpop.permute.xlu0 %5383
        %5386 = vset.pattern.permute.xlu0 17
        %5387 = vperm.xlu0 %5386, %v2907
        %v5388 = vpop.permute.xlu0 %5387
        %5390 = vset.pattern.permute.xlu0 17
        %5391 = vperm.xlu0 %5390, %v2908
        %v5392 = vpop.permute.xlu0 %5391
        %5394 = vset.pattern.permute.xlu0 17
        %5395 = vperm.xlu0 %5394, %v2909
        %v5396 = vpop.permute.xlu0 %5395
        %5398 = vset.pattern.permute.xlu0 17
        %5399 = vperm.xlu0 %5398, %v2910
        %v5400 = vpop.permute.xlu0 %5399
        %5402 = vset.pattern.permute.xlu0 17
        %5403 = vperm.xlu0 %5402, %v2911
        %v5404 = vpop.permute.xlu0 %5403
        %5406 = vset.pattern.permute.xlu0 17
        %5407 = vperm.xlu0 %5406, %v2912
        %v5408 = vpop.permute.xlu0 %5407
        %5410 = vset.pattern.permute.xlu0 17
        %5411 = vperm.xlu0 %5410, %v2913
        %v5412 = vpop.permute.xlu0 %5411
        %5414 = vset.pattern.permute.xlu0 17
        %5415 = vperm.xlu0 %5414, %v2914
        %v5416 = vpop.permute.xlu0 %5415
        %5418 = vset.pattern.permute.xlu0 17
        %5419 = vperm.xlu0 %5418, %v2915
        %v5420 = vpop.permute.xlu0 %5419
        %5422 = vset.pattern.permute.xlu0 17
        %5423 = vperm.xlu0 %5422, %v2916
        %v5424 = vpop.permute.xlu0 %5423
        %5426 = vset.pattern.permute.xlu0 17
        %5427 = vperm.xlu0 %5426, %v2917
        %v5428 = vpop.permute.xlu0 %5427
        %5430 = vset.pattern.permute.xlu0 17
        %5431 = vperm.xlu0 %5430, %v2918
        %v5432 = vpop.permute.xlu0 %5431
        %5434 = vset.pattern.permute.xlu0 17
        %5435 = vperm.xlu0 %5434, %v2919
        %v5436 = vpop.permute.xlu0 %5435
        %5438 = vset.pattern.permute.xlu0 17
        %5439 = vperm.xlu0 %5438, %v2920
        %v5440 = vpop.permute.xlu0 %5439
        %5442 = vset.pattern.permute.xlu0 17
        %5443 = vperm.xlu0 %5442, %v2921
        %v5444 = vpop.permute.xlu0 %5443
        %5446 = vset.pattern.permute.xlu0 17
        %5447 = vperm.xlu0 %5446, %v2922
        %v5448 = vpop.permute.xlu0 %5447
        %5450 = vset.pattern.permute.xlu0 17
        %5451 = vperm.xlu0 %5450, %v2923
        %v5452 = vpop.permute.xlu0 %5451
        %5454 = vset.pattern.permute.xlu0 17
        %5455 = vperm.xlu0 %5454, %v2924
        %v5456 = vpop.permute.xlu0 %5455
        %5458 = vset.pattern.permute.xlu0 17
        %5459 = vperm.xlu0 %5458, %v2925
        %v5460 = vpop.permute.xlu0 %5459
        %5462 = vset.pattern.permute.xlu0 17
        %5463 = vperm.xlu0 %5462, %v2926
        %v5464 = vpop.permute.xlu0 %5463
        %5466 = vset.pattern.permute.xlu0 17
        %5467 = vperm.xlu0 %5466, %v2927
        %v5468 = vpop.permute.xlu0 %5467
        %5470 = vset.pattern.permute.xlu0 17
        %5471 = vperm.xlu0 %5470, %v2928
        %v5472 = vpop.permute.xlu0 %5471
        %5474 = vset.pattern.permute.xlu0 17
        %5475 = vperm.xlu0 %5474, %v2929
        %v5476 = vpop.permute.xlu0 %5475
        %5478 = vset.pattern.permute.xlu0 17
        %5479 = vperm.xlu0 %5478, %v2930
        %v5480 = vpop.permute.xlu0 %5479
        %5482 = vset.pattern.permute.xlu0 17
        %5483 = vperm.xlu0 %5482, %v2931
        %v5484 = vpop.permute.xlu0 %5483
        %5486 = vset.pattern.permute.xlu0 17
        %5487 = vperm.xlu0 %5486, %v2932
        %v5488 = vpop.permute.xlu0 %5487
        %5490 = vset.pattern.permute.xlu0 17
        %5491 = vperm.xlu0 %5490, %v2933
        %v5492 = vpop.permute.xlu0 %5491
        %v5494 = vlaneseq
        %v5495 = vshrl.u32 %v5494, 7
        %v5496 = vsub.s32 1, %v5495
        %v5497 = vrot.slane %v3078, %v5496
        %v5498 = vlaneseq
        %v5499 = vshrl.u32 %v5498, 7
        %v5500 = vsub.s32 1, %v5499
        %v5501 = vrot.slane %v3110, %v5500
        %v5502 = vlaneseq
        %v5503 = vshrl.u32 %v5502, 7
        %v5504 = vsub.s32 1, %v5503
        %v5505 = vrot.slane %v3142, %v5504
        %v5506 = vlaneseq
        %v5507 = vshrl.u32 %v5506, 7
        %v5508 = vsub.s32 1, %v5507
        %v5509 = vrot.slane %v3174, %v5508
        %v5510 = vlaneseq
        %v5511 = vshrl.u32 %v5510, 7
        %v5512 = vsub.s32 1, %v5511
        %v5513 = vrot.slane %v3206, %v5512
        %v5514 = vlaneseq
        %v5515 = vshrl.u32 %v5514, 7
        %v5516 = vsub.s32 1, %v5515
        %v5517 = vrot.slane %v3238, %v5516
        %v5518 = vlaneseq
        %v5519 = vshrl.u32 %v5518, 7
        %v5520 = vsub.s32 1, %v5519
        %v5521 = vrot.slane %v3270, %v5520
        %v5522 = vlaneseq
        %v5523 = vshrl.u32 %v5522, 7
        %v5524 = vsub.s32 1, %v5523
        %v5525 = vrot.slane %v3302, %v5524
        %v5526 = vlaneseq
        %v5527 = vshrl.u32 %v5526, 7
        %v5528 = vsub.s32 1, %v5527
        %v5529 = vrot.slane %v3334, %v5528
        %v5530 = vlaneseq
        %v5531 = vshrl.u32 %v5530, 7
        %v5532 = vsub.s32 1, %v5531
        %v5533 = vrot.slane %v3366, %v5532
        %v5534 = vlaneseq
        %v5535 = vshrl.u32 %v5534, 7
        %v5536 = vsub.s32 1, %v5535
        %v5537 = vrot.slane %v3398, %v5536
        %v5538 = vlaneseq
        %v5539 = vshrl.u32 %v5538, 7
        %v5540 = vsub.s32 1, %v5539
        %v5541 = vrot.slane %v3430, %v5540
        %v5542 = vlaneseq
        %v5543 = vshrl.u32 %v5542, 7
        %v5544 = vsub.s32 1, %v5543
        %v5545 = vrot.slane %v3462, %v5544
        %v5546 = vlaneseq
        %v5547 = vshrl.u32 %v5546, 7
        %v5548 = vsub.s32 1, %v5547
        %v5549 = vrot.slane %v3494, %v5548
        %v5550 = vlaneseq
        %v5551 = vshrl.u32 %v5550, 7
        %v5552 = vsub.s32 1, %v5551
        %v5553 = vrot.slane %v3526, %v5552
        %v5554 = vlaneseq
        %v5555 = vshrl.u32 %v5554, 7
        %v5556 = vsub.s32 1, %v5555
        %v5557 = vrot.slane %v3558, %v5556
        %v5558 = vmul.f32 %v5368, %v5497
        %v5559 = vmul.f32 %v5372, %v5497
        %v5560 = vmul.f32 %v5376, %v5501
        %v5561 = vmul.f32 %v5380, %v5501
        %v5562 = vmul.f32 %v5384, %v5505
        %v5563 = vmul.f32 %v5388, %v5505
        %v5564 = vmul.f32 %v5392, %v5509
        %v5565 = vmul.f32 %v5396, %v5509
        %v5566 = vmul.f32 %v5400, %v5513
        %v5567 = vmul.f32 %v5404, %v5513
        %v5568 = vmul.f32 %v5408, %v5517
        %v5569 = vmul.f32 %v5412, %v5517
        %v5570 = vmul.f32 %v5416, %v5521
        %v5571 = vmul.f32 %v5420, %v5521
        %v5572 = vmul.f32 %v5424, %v5525
        %v5573 = vmul.f32 %v5428, %v5525
        %v5574 = vmul.f32 %v5432, %v5529
        %v5575 = vmul.f32 %v5436, %v5529
        %v5576 = vmul.f32 %v5440, %v5533
        %v5577 = vmul.f32 %v5444, %v5533
        %v5578 = vmul.f32 %v5448, %v5537
        %v5579 = vmul.f32 %v5452, %v5537
        %v5580 = vmul.f32 %v5456, %v5541
        %v5581 = vmul.f32 %v5460, %v5541
        %v5582 = vmul.f32 %v5464, %v5545
        %v5583 = vmul.f32 %v5468, %v5545
        %v5584 = vmul.f32 %v5472, %v5549
        %v5585 = vmul.f32 %v5476, %v5549
        %v5586 = vmul.f32 %v5480, %v5553
        %v5587 = vmul.f32 %v5484, %v5553
        %v5588 = vmul.f32 %v5488, %v5557
        %v5589 = vmul.f32 %v5492, %v5557
        %v5590 = vadd.f32 %v5078, %v5558
        %v5591 = vadd.f32 %v5079, %v5559
        %v5592 = vadd.f32 %v5080, %v5560
        %v5593 = vadd.f32 %v5081, %v5561
        %v5594 = vadd.f32 %v5082, %v5562
        %v5595 = vadd.f32 %v5083, %v5563
        %v5596 = vadd.f32 %v5084, %v5564
        %v5597 = vadd.f32 %v5085, %v5565
        %v5598 = vadd.f32 %v5086, %v5566
        %v5599 = vadd.f32 %v5087, %v5567
        %v5600 = vadd.f32 %v5088, %v5568
        %v5601 = vadd.f32 %v5089, %v5569
        %v5602 = vadd.f32 %v5090, %v5570
        %v5603 = vadd.f32 %v5091, %v5571
        %v5604 = vadd.f32 %v5092, %v5572
        %v5605 = vadd.f32 %v5093, %v5573
        %v5606 = vadd.f32 %v5094, %v5574
        %v5607 = vadd.f32 %v5095, %v5575
        %v5608 = vadd.f32 %v5096, %v5576
        %v5609 = vadd.f32 %v5097, %v5577
        %v5610 = vadd.f32 %v5098, %v5578
        %v5611 = vadd.f32 %v5099, %v5579
        %v5612 = vadd.f32 %v5100, %v5580
        %v5613 = vadd.f32 %v5101, %v5581
        %v5614 = vadd.f32 %v5102, %v5582
        %v5615 = vadd.f32 %v5103, %v5583
        %v5616 = vadd.f32 %v5104, %v5584
        %v5617 = vadd.f32 %v5105, %v5585
        %v5618 = vadd.f32 %v5106, %v5586
        %v5619 = vadd.f32 %v5107, %v5587
        %v5620 = vadd.f32 %v5108, %v5588
        %v5621 = vadd.f32 %v5109, %v5589
        %5622 = vset.pattern.permute.xlu0 1
        %5623 = vperm.xlu0 %5622, %v3798
        %v5624 = vpop.permute.xlu0 %5623
        %5626 = vset.pattern.permute.xlu0 1
        %5627 = vperm.xlu0 %5626, %v3934
        %v5628 = vpop.permute.xlu0 %5627
        %5630 = vset.pattern.permute.xlu0 1
        %5631 = vperm.xlu0 %5630, %v3799
        %v5632 = vpop.permute.xlu0 %5631
        %5634 = vset.pattern.permute.xlu0 1
        %5635 = vperm.xlu0 %5634, %v3935
        %v5636 = vpop.permute.xlu0 %5635
        %5638 = vset.pattern.permute.xlu0 1
        %5639 = vperm.xlu0 %5638, %v3800
        %v5640 = vpop.permute.xlu0 %5639
        %5642 = vset.pattern.permute.xlu0 1
        %5643 = vperm.xlu0 %5642, %v3936
        %v5644 = vpop.permute.xlu0 %5643
        %5646 = vset.pattern.permute.xlu0 1
        %5647 = vperm.xlu0 %5646, %v3801
        %v5648 = vpop.permute.xlu0 %5647
        %5650 = vset.pattern.permute.xlu0 1
        %5651 = vperm.xlu0 %5650, %v3937
        %v5652 = vpop.permute.xlu0 %5651
        %5654 = vset.pattern.permute.xlu0 1
        %5655 = vperm.xlu0 %5654, %v3802
        %v5656 = vpop.permute.xlu0 %5655
        %5658 = vset.pattern.permute.xlu0 1
        %5659 = vperm.xlu0 %5658, %v3938
        %v5660 = vpop.permute.xlu0 %5659
        %5662 = vset.pattern.permute.xlu0 1
        %5663 = vperm.xlu0 %5662, %v3803
        %v5664 = vpop.permute.xlu0 %5663
        %5666 = vset.pattern.permute.xlu0 1
        %5667 = vperm.xlu0 %5666, %v3939
        %v5668 = vpop.permute.xlu0 %5667
        %5670 = vset.pattern.permute.xlu0 1
        %5671 = vperm.xlu0 %5670, %v3804
        %v5672 = vpop.permute.xlu0 %5671
        %5674 = vset.pattern.permute.xlu0 1
        %5675 = vperm.xlu0 %5674, %v3940
        %v5676 = vpop.permute.xlu0 %5675
        %5678 = vset.pattern.permute.xlu0 1
        %5679 = vperm.xlu0 %5678, %v3805
        %v5680 = vpop.permute.xlu0 %5679
        %5682 = vset.pattern.permute.xlu0 1
        %5683 = vperm.xlu0 %5682, %v3941
        %v5684 = vpop.permute.xlu0 %5683
        %5686 = vset.pattern.permute.xlu0 1
        %5687 = vperm.xlu0 %5686, %v4070
        %v5688 = vpop.permute.xlu0 %5687
        %5690 = vset.pattern.permute.xlu0 1
        %5691 = vperm.xlu0 %5690, %v4206
        %v5692 = vpop.permute.xlu0 %5691
        %5694 = vset.pattern.permute.xlu0 1
        %5695 = vperm.xlu0 %5694, %v4071
        %v5696 = vpop.permute.xlu0 %5695
        %5698 = vset.pattern.permute.xlu0 1
        %5699 = vperm.xlu0 %5698, %v4207
        %v5700 = vpop.permute.xlu0 %5699
        %5702 = vset.pattern.permute.xlu0 1
        %5703 = vperm.xlu0 %5702, %v4072
        %v5704 = vpop.permute.xlu0 %5703
        %5706 = vset.pattern.permute.xlu0 1
        %5707 = vperm.xlu0 %5706, %v4208
        %v5708 = vpop.permute.xlu0 %5707
        %5710 = vset.pattern.permute.xlu0 1
        %5711 = vperm.xlu0 %5710, %v4073
        %v5712 = vpop.permute.xlu0 %5711
        %5714 = vset.pattern.permute.xlu0 1
        %5715 = vperm.xlu0 %5714, %v4209
        %v5716 = vpop.permute.xlu0 %5715
        %5718 = vset.pattern.permute.xlu0 1
        %5719 = vperm.xlu0 %5718, %v4074
        %v5720 = vpop.permute.xlu0 %5719
        %5722 = vset.pattern.permute.xlu0 1
        %5723 = vperm.xlu0 %5722, %v4210
        %v5724 = vpop.permute.xlu0 %5723
        %5726 = vset.pattern.permute.xlu0 1
        %5727 = vperm.xlu0 %5726, %v4075
        %v5728 = vpop.permute.xlu0 %5727
        %5730 = vset.pattern.permute.xlu0 1
        %5731 = vperm.xlu0 %5730, %v4211
        %v5732 = vpop.permute.xlu0 %5731
        %5734 = vset.pattern.permute.xlu0 1
        %5735 = vperm.xlu0 %5734, %v4076
        %v5736 = vpop.permute.xlu0 %5735
        %5738 = vset.pattern.permute.xlu0 1
        %5739 = vperm.xlu0 %5738, %v4212
        %v5740 = vpop.permute.xlu0 %5739
        %5742 = vset.pattern.permute.xlu0 1
        %5743 = vperm.xlu0 %5742, %v4077
        %v5744 = vpop.permute.xlu0 %5743
        %5746 = vset.pattern.permute.xlu0 1
        %5747 = vperm.xlu0 %5746, %v4213
        %v5748 = vpop.permute.xlu0 %5747
        %v5750 = vlaneseq
        %v5751 = vshrl.u32 %v5750, 7
        %v5752 = vsub.s32 1, %v5751
        %v5753 = vrot.slane %v4390, %v5752
        %v5754 = vlaneseq
        %v5755 = vshrl.u32 %v5754, 7
        %v5756 = vsub.s32 1, %v5755
        %v5757 = vrot.slane %v4422, %v5756
        %v5758 = vlaneseq
        %v5759 = vshrl.u32 %v5758, 7
        %v5760 = vsub.s32 1, %v5759
        %v5761 = vrot.slane %v4454, %v5760
        %v5762 = vlaneseq
        %v5763 = vshrl.u32 %v5762, 7
        %v5764 = vsub.s32 1, %v5763
        %v5765 = vrot.slane %v4486, %v5764
        %v5766 = vlaneseq
        %v5767 = vshrl.u32 %v5766, 7
        %v5768 = vsub.s32 1, %v5767
        %v5769 = vrot.slane %v4518, %v5768
        %v5770 = vlaneseq
        %v5771 = vshrl.u32 %v5770, 7
        %v5772 = vsub.s32 1, %v5771
        %v5773 = vrot.slane %v4550, %v5772
        %v5774 = vlaneseq
        %v5775 = vshrl.u32 %v5774, 7
        %v5776 = vsub.s32 1, %v5775
        %v5777 = vrot.slane %v4582, %v5776
        %v5778 = vlaneseq
        %v5779 = vshrl.u32 %v5778, 7
        %v5780 = vsub.s32 1, %v5779
        %v5781 = vrot.slane %v4614, %v5780
        %v5782 = vlaneseq
        %v5783 = vshrl.u32 %v5782, 7
        %v5784 = vsub.s32 1, %v5783
        %v5785 = vrot.slane %v4646, %v5784
        %v5786 = vlaneseq
        %v5787 = vshrl.u32 %v5786, 7
        %v5788 = vsub.s32 1, %v5787
        %v5789 = vrot.slane %v4678, %v5788
        %v5790 = vlaneseq
        %v5791 = vshrl.u32 %v5790, 7
        %v5792 = vsub.s32 1, %v5791
        %v5793 = vrot.slane %v4710, %v5792
        %v5794 = vlaneseq
        %v5795 = vshrl.u32 %v5794, 7
        %v5796 = vsub.s32 1, %v5795
        %v5797 = vrot.slane %v4742, %v5796
        %v5798 = vlaneseq
        %v5799 = vshrl.u32 %v5798, 7
        %v5800 = vsub.s32 1, %v5799
        %v5801 = vrot.slane %v4774, %v5800
        %v5802 = vlaneseq
        %v5803 = vshrl.u32 %v5802, 7
        %v5804 = vsub.s32 1, %v5803
        %v5805 = vrot.slane %v4806, %v5804
        %v5806 = vlaneseq
        %v5807 = vshrl.u32 %v5806, 7
        %v5808 = vsub.s32 1, %v5807
        %v5809 = vrot.slane %v4838, %v5808
        %v5810 = vlaneseq
        %v5811 = vshrl.u32 %v5810, 7
        %v5812 = vsub.s32 1, %v5811
        %v5813 = vrot.slane %v4870, %v5812
        %v5814 = vmul.f32 %v5624, %v5753
        %v5815 = vmul.f32 %v5628, %v5753
        %v5816 = vmul.f32 %v5632, %v5757
        %v5817 = vmul.f32 %v5636, %v5757
        %v5818 = vmul.f32 %v5640, %v5761
        %v5819 = vmul.f32 %v5644, %v5761
        %v5820 = vmul.f32 %v5648, %v5765
        %v5821 = vmul.f32 %v5652, %v5765
        %v5822 = vmul.f32 %v5656, %v5769
        %v5823 = vmul.f32 %v5660, %v5769
        %v5824 = vmul.f32 %v5664, %v5773
        %v5825 = vmul.f32 %v5668, %v5773
        %v5826 = vmul.f32 %v5672, %v5777
        %v5827 = vmul.f32 %v5676, %v5777
        %v5828 = vmul.f32 %v5680, %v5781
        %v5829 = vmul.f32 %v5684, %v5781
        %v5830 = vmul.f32 %v5688, %v5785
        %v5831 = vmul.f32 %v5692, %v5785
        %v5832 = vmul.f32 %v5696, %v5789
        %v5833 = vmul.f32 %v5700, %v5789
        %v5834 = vmul.f32 %v5704, %v5793
        %v5835 = vmul.f32 %v5708, %v5793
        %v5836 = vmul.f32 %v5712, %v5797
        %v5837 = vmul.f32 %v5716, %v5797
        %v5838 = vmul.f32 %v5720, %v5801
        %v5839 = vmul.f32 %v5724, %v5801
        %v5840 = vmul.f32 %v5728, %v5805
        %v5841 = vmul.f32 %v5732, %v5805
        %v5842 = vmul.f32 %v5736, %v5809
        %v5843 = vmul.f32 %v5740, %v5809
        %v5844 = vmul.f32 %v5744, %v5813
        %v5845 = vmul.f32 %v5748, %v5813
        %v5846 = vadd.f32 %v5334, %v5814
        %v5847 = vadd.f32 %v5335, %v5815
        %v5848 = vadd.f32 %v5336, %v5816
        %v5849 = vadd.f32 %v5337, %v5817
        %v5850 = vadd.f32 %v5338, %v5818
        %v5851 = vadd.f32 %v5339, %v5819
        %v5852 = vadd.f32 %v5340, %v5820
        %v5853 = vadd.f32 %v5341, %v5821
        %v5854 = vadd.f32 %v5342, %v5822
        %v5855 = vadd.f32 %v5343, %v5823
        %v5856 = vadd.f32 %v5344, %v5824
        %v5857 = vadd.f32 %v5345, %v5825
        %v5858 = vadd.f32 %v5346, %v5826
        %v5859 = vadd.f32 %v5347, %v5827
        %v5860 = vadd.f32 %v5348, %v5828
        %v5861 = vadd.f32 %v5349, %v5829
        %v5862 = vadd.f32 %v5350, %v5830
        %v5863 = vadd.f32 %v5351, %v5831
        %v5864 = vadd.f32 %v5352, %v5832
        %v5865 = vadd.f32 %v5353, %v5833
        %v5866 = vadd.f32 %v5354, %v5834
        %v5867 = vadd.f32 %v5355, %v5835
        %v5868 = vadd.f32 %v5356, %v5836
        %v5869 = vadd.f32 %v5357, %v5837
        %v5870 = vadd.f32 %v5358, %v5838
        %v5871 = vadd.f32 %v5359, %v5839
        %v5872 = vadd.f32 %v5360, %v5840
        %v5873 = vadd.f32 %v5361, %v5841
        %v5874 = vadd.f32 %v5362, %v5842
        %v5875 = vadd.f32 %v5363, %v5843
        %v5876 = vadd.f32 %v5364, %v5844
        %v5877 = vadd.f32 %v5365, %v5845
        %v5878 = vlaneseq
        %v5879 = vand.u32 %v5878, 127
        %v5880 = vlaneseq
        %v5881 = vshrl.u32 %v5880, 7
        %v5882 = vadd.s32 %v5881, 8
        %s5883 = smul.u32 %s28, 16
        %v5884 = vstv %s5883
        %v5885 = vadd.s32 %v5881, %v5884
        %v5886 = vadd.s32 %v5882, %v5884
        %vm5887 = vcmp.eq.s32.totalorder %v5879, %v5885
        %vm5888 = vcmp.eq.s32.totalorder %v5879, %v5886
        %v5889 = vsel %vm5887, 1, 0
        %v5890 = vsel %vm5888, 1, 0
        %vm5891 = vcmp.eq.s32.totalorder %v5889, 1
        %vm5892 = vcmp.eq.s32.totalorder %v5890, 1
        %v5893 = vsel %vm5891, -inf, %v5846
        %v5894 = vsel %vm5892, -inf, %v5847
        %v5895 = vsel %vm5891, -inf, %v5848
        %v5896 = vsel %vm5892, -inf, %v5849
        %v5897 = vsel %vm5891, -inf, %v5850
        %v5898 = vsel %vm5892, -inf, %v5851
        %v5899 = vsel %vm5891, -inf, %v5852
        %v5900 = vsel %vm5892, -inf, %v5853
        %v5901 = vsel %vm5891, -inf, %v5854
        %v5902 = vsel %vm5892, -inf, %v5855
        %v5903 = vsel %vm5891, -inf, %v5856
        %v5904 = vsel %vm5892, -inf, %v5857
        %v5905 = vsel %vm5891, -inf, %v5858
        %v5906 = vsel %vm5892, -inf, %v5859
        %v5907 = vsel %vm5891, -inf, %v5860
        %v5908 = vsel %vm5892, -inf, %v5861
        %v5909 = vsel %vm5891, -inf, %v5862
        %v5910 = vsel %vm5892, -inf, %v5863
        %v5911 = vsel %vm5891, -inf, %v5864
        %v5912 = vsel %vm5892, -inf, %v5865
        %v5913 = vsel %vm5891, -inf, %v5866
        %v5914 = vsel %vm5892, -inf, %v5867
        %v5915 = vsel %vm5891, -inf, %v5868
        %v5916 = vsel %vm5892, -inf, %v5869
        %v5917 = vsel %vm5891, -inf, %v5870
        %v5918 = vsel %vm5892, -inf, %v5871
        %v5919 = vsel %vm5891, -inf, %v5872
        %v5920 = vsel %vm5892, -inf, %v5873
        %v5921 = vsel %vm5891, -inf, %v5874
        %v5922 = vsel %vm5892, -inf, %v5875
        %v5923 = vsel %vm5891, -inf, %v5876
        %v5924 = vsel %vm5892, -inf, %v5877
        %vm5925 = vcmask 130048
        %v5926 = vsel %vm5925, %v5893, -inf
        %5927 = vmax.xlane.f32.xlu0 %v5926
        %v5928 = vpop.xlane.xlu0 %5927
        %v5929 = vsel %vm5925, %v5894, -inf
        %5930 = vmax.xlane.f32.xlu0 %v5929
        %v5931 = vpop.xlane.xlu0 %5930
        %v5932 = vsel %vm5925, %v5895, -inf
        %5933 = vmax.xlane.f32.xlu0 %v5932
        %v5934 = vpop.xlane.xlu0 %5933
        %v5935 = vsel %vm5925, %v5896, -inf
        %5936 = vmax.xlane.f32.xlu0 %v5935
        %v5937 = vpop.xlane.xlu0 %5936
        %v5938 = vsel %vm5925, %v5897, -inf
        %5939 = vmax.xlane.f32.xlu0 %v5938
        %v5940 = vpop.xlane.xlu0 %5939
        %v5941 = vsel %vm5925, %v5898, -inf
        %5942 = vmax.xlane.f32.xlu0 %v5941
        %v5943 = vpop.xlane.xlu0 %5942
        %v5944 = vsel %vm5925, %v5899, -inf
        %5945 = vmax.xlane.f32.xlu0 %v5944
        %v5946 = vpop.xlane.xlu0 %5945
        %v5947 = vsel %vm5925, %v5900, -inf
        %5948 = vmax.xlane.f32.xlu0 %v5947
        %v5949 = vpop.xlane.xlu0 %5948
        %v5950 = vsel %vm5925, %v5901, -inf
        %5951 = vmax.xlane.f32.xlu0 %v5950
        %v5952 = vpop.xlane.xlu0 %5951
        %v5953 = vsel %vm5925, %v5902, -inf
        %5954 = vmax.xlane.f32.xlu0 %v5953
        %v5955 = vpop.xlane.xlu0 %5954
        %v5956 = vsel %vm5925, %v5903, -inf
        %5957 = vmax.xlane.f32.xlu0 %v5956
        %v5958 = vpop.xlane.xlu0 %5957
        %v5959 = vsel %vm5925, %v5904, -inf
        %5960 = vmax.xlane.f32.xlu0 %v5959
        %v5961 = vpop.xlane.xlu0 %5960
        %v5962 = vsel %vm5925, %v5905, -inf
        %5963 = vmax.xlane.f32.xlu0 %v5962
        %v5964 = vpop.xlane.xlu0 %5963
        %v5965 = vsel %vm5925, %v5906, -inf
        %5966 = vmax.xlane.f32.xlu0 %v5965
        %v5967 = vpop.xlane.xlu0 %5966
        %v5968 = vsel %vm5925, %v5907, -inf
        %5969 = vmax.xlane.f32.xlu0 %v5968
        %v5970 = vpop.xlane.xlu0 %5969
        %v5971 = vsel %vm5925, %v5908, -inf
        %5972 = vmax.xlane.f32.xlu0 %v5971
        %v5973 = vpop.xlane.xlu0 %5972
        %v5974 = vsel %vm5925, %v5909, -inf
        %5975 = vmax.xlane.f32.xlu0 %v5974
        %v5976 = vpop.xlane.xlu0 %5975
        %v5977 = vsel %vm5925, %v5910, -inf
        %5978 = vmax.xlane.f32.xlu0 %v5977
        %v5979 = vpop.xlane.xlu0 %5978
        %v5980 = vsel %vm5925, %v5911, -inf
        %5981 = vmax.xlane.f32.xlu0 %v5980
        %v5982 = vpop.xlane.xlu0 %5981
        %v5983 = vsel %vm5925, %v5912, -inf
        %5984 = vmax.xlane.f32.xlu0 %v5983
        %v5985 = vpop.xlane.xlu0 %5984
        %v5986 = vsel %vm5925, %v5913, -inf
        %5987 = vmax.xlane.f32.xlu0 %v5986
        %v5988 = vpop.xlane.xlu0 %5987
        %v5989 = vsel %vm5925, %v5914, -inf
        %5990 = vmax.xlane.f32.xlu0 %v5989
        %v5991 = vpop.xlane.xlu0 %5990
        %v5992 = vsel %vm5925, %v5915, -inf
        %5993 = vmax.xlane.f32.xlu0 %v5992
        %v5994 = vpop.xlane.xlu0 %5993
        %v5995 = vsel %vm5925, %v5916, -inf
        %5996 = vmax.xlane.f32.xlu0 %v5995
        %v5997 = vpop.xlane.xlu0 %5996
        %v5998 = vsel %vm5925, %v5917, -inf
        %5999 = vmax.xlane.f32.xlu0 %v5998
        %v6000 = vpop.xlane.xlu0 %5999
        %v6001 = vsel %vm5925, %v5918, -inf
        %6002 = vmax.xlane.f32.xlu0 %v6001
        %v6003 = vpop.xlane.xlu0 %6002
        %v6004 = vsel %vm5925, %v5919, -inf
        %6005 = vmax.xlane.f32.xlu0 %v6004
        %v6006 = vpop.xlane.xlu0 %6005
        %v6007 = vsel %vm5925, %v5920, -inf
        %6008 = vmax.xlane.f32.xlu0 %v6007
        %v6009 = vpop.xlane.xlu0 %6008
        %v6010 = vsel %vm5925, %v5921, -inf
        %6011 = vmax.xlane.f32.xlu0 %v6010
        %v6012 = vpop.xlane.xlu0 %6011
        %v6013 = vsel %vm5925, %v5922, -inf
        %6014 = vmax.xlane.f32.xlu0 %v6013
        %v6015 = vpop.xlane.xlu0 %6014
        %v6016 = vsel %vm5925, %v5923, -inf
        %6017 = vmax.xlane.f32.xlu0 %v6016
        %v6018 = vpop.xlane.xlu0 %6017
        %v6019 = vsel %vm5925, %v5924, -inf
        %6020 = vmax.xlane.f32.xlu0 %v6019
        %v6021 = vpop.xlane.xlu0 %6020
        %v6054 = vlaneseq
        %v6055 = vshrl.u32 %v6054, 7
        %v6056 = vsub.s32 %v5879, %v6055
        %v6057 = vrot.slane %v5928, %v6056
        %v6058 = vadd.s32 %v5879, 4294967288
        %v6059 = vlaneseq
        %v6060 = vshrl.u32 %v6059, 7
        %v6061 = vsub.s32 %v6058, %v6060
        %v6062 = vrot.slane %v5931, %v6061
        %vm6063 = vcmask 130112
        %v6064 = vsel %vm6063, %v6062, %v6057
        %v6065 = vlaneseq
        %v6066 = vshrl.u32 %v6065, 7
        %v6067 = vsub.s32 %v5879, %v6066
        %v6068 = vrot.slane %v5934, %v6067
        %v6069 = vlaneseq
        %v6070 = vshrl.u32 %v6069, 7
        %v6071 = vsub.s32 %v6058, %v6070
        %v6072 = vrot.slane %v5937, %v6071
        %v6073 = vsel %vm6063, %v6072, %v6068
        %v6074 = vlaneseq
        %v6075 = vshrl.u32 %v6074, 7
        %v6076 = vsub.s32 %v5879, %v6075
        %v6077 = vrot.slane %v5940, %v6076
        %v6078 = vlaneseq
        %v6079 = vshrl.u32 %v6078, 7
        %v6080 = vsub.s32 %v6058, %v6079
        %v6081 = vrot.slane %v5943, %v6080
        %v6082 = vsel %vm6063, %v6081, %v6077
        %v6083 = vlaneseq
        %v6084 = vshrl.u32 %v6083, 7
        %v6085 = vsub.s32 %v5879, %v6084
        %v6086 = vrot.slane %v5946, %v6085
        %v6087 = vlaneseq
        %v6088 = vshrl.u32 %v6087, 7
        %v6089 = vsub.s32 %v6058, %v6088
        %v6090 = vrot.slane %v5949, %v6089
        %v6091 = vsel %vm6063, %v6090, %v6086
        %v6092 = vlaneseq
        %v6093 = vshrl.u32 %v6092, 7
        %v6094 = vsub.s32 %v5879, %v6093
        %v6095 = vrot.slane %v5952, %v6094
        %v6096 = vlaneseq
        %v6097 = vshrl.u32 %v6096, 7
        %v6098 = vsub.s32 %v6058, %v6097
        %v6099 = vrot.slane %v5955, %v6098
        %v6100 = vsel %vm6063, %v6099, %v6095
        %v6101 = vlaneseq
        %v6102 = vshrl.u32 %v6101, 7
        %v6103 = vsub.s32 %v5879, %v6102
        %v6104 = vrot.slane %v5958, %v6103
        %v6105 = vlaneseq
        %v6106 = vshrl.u32 %v6105, 7
        %v6107 = vsub.s32 %v6058, %v6106
        %v6108 = vrot.slane %v5961, %v6107
        %v6109 = vsel %vm6063, %v6108, %v6104
        %v6110 = vlaneseq
        %v6111 = vshrl.u32 %v6110, 7
        %v6112 = vsub.s32 %v5879, %v6111
        %v6113 = vrot.slane %v5964, %v6112
        %v6114 = vlaneseq
        %v6115 = vshrl.u32 %v6114, 7
        %v6116 = vsub.s32 %v6058, %v6115
        %v6117 = vrot.slane %v5967, %v6116
        %v6118 = vsel %vm6063, %v6117, %v6113
        %v6119 = vlaneseq
        %v6120 = vshrl.u32 %v6119, 7
        %v6121 = vsub.s32 %v5879, %v6120
        %v6122 = vrot.slane %v5970, %v6121
        %v6123 = vlaneseq
        %v6124 = vshrl.u32 %v6123, 7
        %v6125 = vsub.s32 %v6058, %v6124
        %v6126 = vrot.slane %v5973, %v6125
        %v6127 = vsel %vm6063, %v6126, %v6122
        %v6128 = vlaneseq
        %v6129 = vshrl.u32 %v6128, 7
        %v6130 = vsub.s32 %v5879, %v6129
        %v6131 = vrot.slane %v5976, %v6130
        %v6132 = vlaneseq
        %v6133 = vshrl.u32 %v6132, 7
        %v6134 = vsub.s32 %v6058, %v6133
        %v6135 = vrot.slane %v5979, %v6134
        %v6136 = vsel %vm6063, %v6135, %v6131
        %v6137 = vlaneseq
        %v6138 = vshrl.u32 %v6137, 7
        %v6139 = vsub.s32 %v5879, %v6138
        %v6140 = vrot.slane %v5982, %v6139
        %v6141 = vlaneseq
        %v6142 = vshrl.u32 %v6141, 7
        %v6143 = vsub.s32 %v6058, %v6142
        %v6144 = vrot.slane %v5985, %v6143
        %v6145 = vsel %vm6063, %v6144, %v6140
        %v6146 = vlaneseq
        %v6147 = vshrl.u32 %v6146, 7
        %v6148 = vsub.s32 %v5879, %v6147
        %v6149 = vrot.slane %v5988, %v6148
        %v6150 = vlaneseq
        %v6151 = vshrl.u32 %v6150, 7
        %v6152 = vsub.s32 %v6058, %v6151
        %v6153 = vrot.slane %v5991, %v6152
        %v6154 = vsel %vm6063, %v6153, %v6149
        %v6155 = vlaneseq
        %v6156 = vshrl.u32 %v6155, 7
        %v6157 = vsub.s32 %v5879, %v6156
        %v6158 = vrot.slane %v5994, %v6157
        %v6159 = vlaneseq
        %v6160 = vshrl.u32 %v6159, 7
        %v6161 = vsub.s32 %v6058, %v6160
        %v6162 = vrot.slane %v5997, %v6161
        %v6163 = vsel %vm6063, %v6162, %v6158
        %v6164 = vlaneseq
        %v6165 = vshrl.u32 %v6164, 7
        %v6166 = vsub.s32 %v5879, %v6165
        %v6167 = vrot.slane %v6000, %v6166
        %v6168 = vlaneseq
        %v6169 = vshrl.u32 %v6168, 7
        %v6170 = vsub.s32 %v6058, %v6169
        %v6171 = vrot.slane %v6003, %v6170
        %v6172 = vsel %vm6063, %v6171, %v6167
        %v6173 = vlaneseq
        %v6174 = vshrl.u32 %v6173, 7
        %v6175 = vsub.s32 %v5879, %v6174
        %v6176 = vrot.slane %v6006, %v6175
        %v6177 = vlaneseq
        %v6178 = vshrl.u32 %v6177, 7
        %v6179 = vsub.s32 %v6058, %v6178
        %v6180 = vrot.slane %v6009, %v6179
        %v6181 = vsel %vm6063, %v6180, %v6176
        %v6182 = vlaneseq
        %v6183 = vshrl.u32 %v6182, 7
        %v6184 = vsub.s32 %v5879, %v6183
        %v6185 = vrot.slane %v6012, %v6184
        %v6186 = vlaneseq
        %v6187 = vshrl.u32 %v6186, 7
        %v6188 = vsub.s32 %v6058, %v6187
        %v6189 = vrot.slane %v6015, %v6188
        %v6190 = vsel %vm6063, %v6189, %v6185
        %v6191 = vlaneseq
        %v6192 = vshrl.u32 %v6191, 7
        %v6193 = vsub.s32 %v5879, %v6192
        %v6194 = vrot.slane %v6018, %v6193
        %v6195 = vlaneseq
        %v6196 = vshrl.u32 %v6195, 7
        %v6197 = vsub.s32 %v6058, %v6196
        %v6198 = vrot.slane %v6021, %v6197
        %v6199 = vsel %vm6063, %v6198, %v6194
        %vm6200 = vcmask 1041409
        %v6201 = vsel %vm6200, %v6073, %v6064
        %vm6202 = vcmask 1042434
        %v6203 = vsel %vm6202, %v6082, %v6201
        %vm6204 = vcmask 1043459
        %v6205 = vsel %vm6204, %v6091, %v6203
        %vm6206 = vcmask 1044484
        %v6207 = vsel %vm6206, %v6100, %v6205
        %vm6208 = vcmask 1045509
        %v6209 = vsel %vm6208, %v6109, %v6207
        %vm6210 = vcmask 1046534
        %v6211 = vsel %vm6210, %v6118, %v6209
        %vm6212 = vcmask 1047559
        %v6213 = vsel %vm6212, %v6127, %v6211
        %v6214 = vsel %vm6200, %v6145, %v6136
        %v6215 = vsel %vm6202, %v6154, %v6214
        %v6216 = vsel %vm6204, %v6163, %v6215
        %v6217 = vsel %vm6206, %v6172, %v6216
        %v6218 = vsel %vm6208, %v6181, %v6217
        %v6219 = vsel %vm6210, %v6190, %v6218
        %v6220 = vsel %vm6212, %v6199, %v6219
        %6223 = vxpose.xlu0.b32.start [1/16] %v6213, 128
        %6224 = vxpose.xlu0.b32.cont [2/16] %v6220, 128
        %6225 = vxpose.xlu0.b32.cont [3/16] 0.0, 128
        %6226 = vxpose.xlu0.b32.cont [4/16] 0.0, 128
        %6227 = vxpose.xlu0.b32.cont [5/16] 0.0, 128
        %6228 = vxpose.xlu0.b32.cont [6/16] 0.0, 128
        %6229 = vxpose.xlu0.b32.cont [7/16] 0.0, 128
        %6230 = vxpose.xlu0.b32.cont [8/16] 0.0, 128
        %6231 = vxpose.xlu0.b32.cont [9/16] 0.0, 128
        %6232 = vxpose.xlu0.b32.cont [10/16] 0.0, 128
        %6233 = vxpose.xlu0.b32.cont [11/16] 0.0, 128
        %6234 = vxpose.xlu0.b32.cont [12/16] 0.0, 128
        %6235 = vxpose.xlu0.b32.cont [13/16] 0.0, 128
        %6236 = vxpose.xlu0.b32.cont [14/16] 0.0, 128
        %6237 = vxpose.xlu0.b32.cont [15/16] 0.0, 128
        %6238 = vxpose.xlu0.b32.end [16/16] 0.0, 128
        %v6239 = vpop.trf.xlu0
        %v6240 = vpop.trf.xlu0
        %v6241 = vpop.trf.xlu0
        %v6242 = vpop.trf.xlu0
        %v6243 = vpop.trf.xlu0
        %v6244 = vpop.trf.xlu0
        %v6245 = vpop.trf.xlu0
        %v6246 = vpop.trf.xlu0
        %v6247 = vpop.trf.xlu0
        %v6248 = vpop.trf.xlu0
        %v6249 = vpop.trf.xlu0
        %v6250 = vpop.trf.xlu0
        %v6251 = vpop.trf.xlu0
        %v6252 = vpop.trf.xlu0
        %v6253 = vpop.trf.xlu0
        %v6254 = vpop.trf.xlu0
        %v6255 = vsel %vm5925, %v5590, -inf
        %6256 = vmax.xlane.f32.xlu0 %v6255
        %v6257 = vpop.xlane.xlu0 %6256
        %v6258 = vsel %vm5925, %v5591, -inf
        %6259 = vmax.xlane.f32.xlu0 %v6258
        %v6260 = vpop.xlane.xlu0 %6259
        %v6261 = vsel %vm5925, %v5592, -inf
        %6262 = vmax.xlane.f32.xlu0 %v6261
        %v6263 = vpop.xlane.xlu0 %6262
        %v6264 = vsel %vm5925, %v5593, -inf
        %6265 = vmax.xlane.f32.xlu0 %v6264
        %v6266 = vpop.xlane.xlu0 %6265
        %v6267 = vsel %vm5925, %v5594, -inf
        %6268 = vmax.xlane.f32.xlu0 %v6267
        %v6269 = vpop.xlane.xlu0 %6268
        %v6270 = vsel %vm5925, %v5595, -inf
        %6271 = vmax.xlane.f32.xlu0 %v6270
        %v6272 = vpop.xlane.xlu0 %6271
        %v6273 = vsel %vm5925, %v5596, -inf
        %6274 = vmax.xlane.f32.xlu0 %v6273
        %v6275 = vpop.xlane.xlu0 %6274
        %v6276 = vsel %vm5925, %v5597, -inf
        %6277 = vmax.xlane.f32.xlu0 %v6276
        %v6278 = vpop.xlane.xlu0 %6277
        %v6279 = vsel %vm5925, %v5598, -inf
        %6280 = vmax.xlane.f32.xlu0 %v6279
        %v6281 = vpop.xlane.xlu0 %6280
        %v6282 = vsel %vm5925, %v5599, -inf
        %6283 = vmax.xlane.f32.xlu0 %v6282
        %v6284 = vpop.xlane.xlu0 %6283
        %v6285 = vsel %vm5925, %v5600, -inf
        %6286 = vmax.xlane.f32.xlu0 %v6285
        %v6287 = vpop.xlane.xlu0 %6286
        %v6288 = vsel %vm5925, %v5601, -inf
        %6289 = vmax.xlane.f32.xlu0 %v6288
        %v6290 = vpop.xlane.xlu0 %6289
        %v6291 = vsel %vm5925, %v5602, -inf
        %6292 = vmax.xlane.f32.xlu0 %v6291
        %v6293 = vpop.xlane.xlu0 %6292
        %v6294 = vsel %vm5925, %v5603, -inf
        %6295 = vmax.xlane.f32.xlu0 %v6294
        %v6296 = vpop.xlane.xlu0 %6295
        %v6297 = vsel %vm5925, %v5604, -inf
        %6298 = vmax.xlane.f32.xlu0 %v6297
        %v6299 = vpop.xlane.xlu0 %6298
        %v6300 = vsel %vm5925, %v5605, -inf
        %6301 = vmax.xlane.f32.xlu0 %v6300
        %v6302 = vpop.xlane.xlu0 %6301
        %v6303 = vsel %vm5925, %v5606, -inf
        %6304 = vmax.xlane.f32.xlu0 %v6303
        %v6305 = vpop.xlane.xlu0 %6304
        %v6306 = vsel %vm5925, %v5607, -inf
        %6307 = vmax.xlane.f32.xlu0 %v6306
        %v6308 = vpop.xlane.xlu0 %6307
        %v6309 = vsel %vm5925, %v5608, -inf
        %6310 = vmax.xlane.f32.xlu0 %v6309
        %v6311 = vpop.xlane.xlu0 %6310
        %v6312 = vsel %vm5925, %v5609, -inf
        %6313 = vmax.xlane.f32.xlu0 %v6312
        %v6314 = vpop.xlane.xlu0 %6313
        %v6315 = vsel %vm5925, %v5610, -inf
        %6316 = vmax.xlane.f32.xlu0 %v6315
        %v6317 = vpop.xlane.xlu0 %6316
        %v6318 = vsel %vm5925, %v5611, -inf
        %6319 = vmax.xlane.f32.xlu0 %v6318
        %v6320 = vpop.xlane.xlu0 %6319
        %v6321 = vsel %vm5925, %v5612, -inf
        %6322 = vmax.xlane.f32.xlu0 %v6321
        %v6323 = vpop.xlane.xlu0 %6322
        %v6324 = vsel %vm5925, %v5613, -inf
        %6325 = vmax.xlane.f32.xlu0 %v6324
        %v6326 = vpop.xlane.xlu0 %6325
        %v6327 = vsel %vm5925, %v5614, -inf
        %6328 = vmax.xlane.f32.xlu0 %v6327
        %v6329 = vpop.xlane.xlu0 %6328
        %v6330 = vsel %vm5925, %v5615, -inf
        %6331 = vmax.xlane.f32.xlu0 %v6330
        %v6332 = vpop.xlane.xlu0 %6331
        %v6333 = vsel %vm5925, %v5616, -inf
        %6334 = vmax.xlane.f32.xlu0 %v6333
        %v6335 = vpop.xlane.xlu0 %6334
        %v6336 = vsel %vm5925, %v5617, -inf
        %6337 = vmax.xlane.f32.xlu0 %v6336
        %v6338 = vpop.xlane.xlu0 %6337
        %v6339 = vsel %vm5925, %v5618, -inf
        %6340 = vmax.xlane.f32.xlu0 %v6339
        %v6341 = vpop.xlane.xlu0 %6340
        %v6342 = vsel %vm5925, %v5619, -inf
        %6343 = vmax.xlane.f32.xlu0 %v6342
        %v6344 = vpop.xlane.xlu0 %6343
        %v6345 = vsel %vm5925, %v5620, -inf
        %6346 = vmax.xlane.f32.xlu0 %v6345
        %v6347 = vpop.xlane.xlu0 %6346
        %v6348 = vsel %vm5925, %v5621, -inf
        %6349 = vmax.xlane.f32.xlu0 %v6348
        %v6350 = vpop.xlane.xlu0 %6349
        %v6383 = vlaneseq
        %v6384 = vshrl.u32 %v6383, 7
        %v6385 = vsub.s32 %v5879, %v6384
        %v6386 = vrot.slane %v6257, %v6385
        %v6387 = vlaneseq
        %v6388 = vshrl.u32 %v6387, 7
        %v6389 = vsub.s32 %v6058, %v6388
        %v6390 = vrot.slane %v6260, %v6389
        %v6391 = vsel %vm6063, %v6390, %v6386
        %v6392 = vlaneseq
        %v6393 = vshrl.u32 %v6392, 7
        %v6394 = vsub.s32 %v5879, %v6393
        %v6395 = vrot.slane %v6263, %v6394
        %v6396 = vlaneseq
        %v6397 = vshrl.u32 %v6396, 7
        %v6398 = vsub.s32 %v6058, %v6397
        %v6399 = vrot.slane %v6266, %v6398
        %v6400 = vsel %vm6063, %v6399, %v6395
        %v6401 = vlaneseq
        %v6402 = vshrl.u32 %v6401, 7
        %v6403 = vsub.s32 %v5879, %v6402
        %v6404 = vrot.slane %v6269, %v6403
        %v6405 = vlaneseq
        %v6406 = vshrl.u32 %v6405, 7
        %v6407 = vsub.s32 %v6058, %v6406
        %v6408 = vrot.slane %v6272, %v6407
        %v6409 = vsel %vm6063, %v6408, %v6404
        %v6410 = vlaneseq
        %v6411 = vshrl.u32 %v6410, 7
        %v6412 = vsub.s32 %v5879, %v6411
        %v6413 = vrot.slane %v6275, %v6412
        %v6414 = vlaneseq
        %v6415 = vshrl.u32 %v6414, 7
        %v6416 = vsub.s32 %v6058, %v6415
        %v6417 = vrot.slane %v6278, %v6416
        %v6418 = vsel %vm6063, %v6417, %v6413
        %v6419 = vlaneseq
        %v6420 = vshrl.u32 %v6419, 7
        %v6421 = vsub.s32 %v5879, %v6420
        %v6422 = vrot.slane %v6281, %v6421
        %v6423 = vlaneseq
        %v6424 = vshrl.u32 %v6423, 7
        %v6425 = vsub.s32 %v6058, %v6424
        %v6426 = vrot.slane %v6284, %v6425
        %v6427 = vsel %vm6063, %v6426, %v6422
        %v6428 = vlaneseq
        %v6429 = vshrl.u32 %v6428, 7
        %v6430 = vsub.s32 %v5879, %v6429
        %v6431 = vrot.slane %v6287, %v6430
        %v6432 = vlaneseq
        %v6433 = vshrl.u32 %v6432, 7
        %v6434 = vsub.s32 %v6058, %v6433
        %v6435 = vrot.slane %v6290, %v6434
        %v6436 = vsel %vm6063, %v6435, %v6431
        %v6437 = vlaneseq
        %v6438 = vshrl.u32 %v6437, 7
        %v6439 = vsub.s32 %v5879, %v6438
        %v6440 = vrot.slane %v6293, %v6439
        %v6441 = vlaneseq
        %v6442 = vshrl.u32 %v6441, 7
        %v6443 = vsub.s32 %v6058, %v6442
        %v6444 = vrot.slane %v6296, %v6443
        %v6445 = vsel %vm6063, %v6444, %v6440
        %v6446 = vlaneseq
        %v6447 = vshrl.u32 %v6446, 7
        %v6448 = vsub.s32 %v5879, %v6447
        %v6449 = vrot.slane %v6299, %v6448
        %v6450 = vlaneseq
        %v6451 = vshrl.u32 %v6450, 7
        %v6452 = vsub.s32 %v6058, %v6451
        %v6453 = vrot.slane %v6302, %v6452
        %v6454 = vsel %vm6063, %v6453, %v6449
        %v6455 = vlaneseq
        %v6456 = vshrl.u32 %v6455, 7
        %v6457 = vsub.s32 %v5879, %v6456
        %v6458 = vrot.slane %v6305, %v6457
        %v6459 = vlaneseq
        %v6460 = vshrl.u32 %v6459, 7
        %v6461 = vsub.s32 %v6058, %v6460
        %v6462 = vrot.slane %v6308, %v6461
        %v6463 = vsel %vm6063, %v6462, %v6458
        %v6464 = vlaneseq
        %v6465 = vshrl.u32 %v6464, 7
        %v6466 = vsub.s32 %v5879, %v6465
        %v6467 = vrot.slane %v6311, %v6466
        %v6468 = vlaneseq
        %v6469 = vshrl.u32 %v6468, 7
        %v6470 = vsub.s32 %v6058, %v6469
        %v6471 = vrot.slane %v6314, %v6470
        %v6472 = vsel %vm6063, %v6471, %v6467
        %v6473 = vlaneseq
        %v6474 = vshrl.u32 %v6473, 7
        %v6475 = vsub.s32 %v5879, %v6474
        %v6476 = vrot.slane %v6317, %v6475
        %v6477 = vlaneseq
        %v6478 = vshrl.u32 %v6477, 7
        %v6479 = vsub.s32 %v6058, %v6478
        %v6480 = vrot.slane %v6320, %v6479
        %v6481 = vsel %vm6063, %v6480, %v6476
        %v6482 = vlaneseq
        %v6483 = vshrl.u32 %v6482, 7
        %v6484 = vsub.s32 %v5879, %v6483
        %v6485 = vrot.slane %v6323, %v6484
        %v6486 = vlaneseq
        %v6487 = vshrl.u32 %v6486, 7
        %v6488 = vsub.s32 %v6058, %v6487
        %v6489 = vrot.slane %v6326, %v6488
        %v6490 = vsel %vm6063, %v6489, %v6485
        %v6491 = vlaneseq
        %v6492 = vshrl.u32 %v6491, 7
        %v6493 = vsub.s32 %v5879, %v6492
        %v6494 = vrot.slane %v6329, %v6493
        %v6495 = vlaneseq
        %v6496 = vshrl.u32 %v6495, 7
        %v6497 = vsub.s32 %v6058, %v6496
        %v6498 = vrot.slane %v6332, %v6497
        %v6499 = vsel %vm6063, %v6498, %v6494
        %v6500 = vlaneseq
        %v6501 = vshrl.u32 %v6500, 7
        %v6502 = vsub.s32 %v5879, %v6501
        %v6503 = vrot.slane %v6335, %v6502
        %v6504 = vlaneseq
        %v6505 = vshrl.u32 %v6504, 7
        %v6506 = vsub.s32 %v6058, %v6505
        %v6507 = vrot.slane %v6338, %v6506
        %v6508 = vsel %vm6063, %v6507, %v6503
        %v6509 = vlaneseq
        %v6510 = vshrl.u32 %v6509, 7
        %v6511 = vsub.s32 %v5879, %v6510
        %v6512 = vrot.slane %v6341, %v6511
        %v6513 = vlaneseq
        %v6514 = vshrl.u32 %v6513, 7
        %v6515 = vsub.s32 %v6058, %v6514
        %v6516 = vrot.slane %v6344, %v6515
        %v6517 = vsel %vm6063, %v6516, %v6512
        %v6518 = vlaneseq
        %v6519 = vshrl.u32 %v6518, 7
        %v6520 = vsub.s32 %v5879, %v6519
        %v6521 = vrot.slane %v6347, %v6520
        %v6522 = vlaneseq
        %v6523 = vshrl.u32 %v6522, 7
        %v6524 = vsub.s32 %v6058, %v6523
        %v6525 = vrot.slane %v6350, %v6524
        %v6526 = vsel %vm6063, %v6525, %v6521
        %v6527 = vsel %vm6200, %v6400, %v6391
        %v6528 = vsel %vm6202, %v6409, %v6527
        %v6529 = vsel %vm6204, %v6418, %v6528
        %v6530 = vsel %vm6206, %v6427, %v6529
        %v6531 = vsel %vm6208, %v6436, %v6530
        %v6532 = vsel %vm6210, %v6445, %v6531
        %v6533 = vsel %vm6212, %v6454, %v6532
        %v6534 = vsel %vm6200, %v6472, %v6463
        %v6535 = vsel %vm6202, %v6481, %v6534
        %v6536 = vsel %vm6204, %v6490, %v6535
        %v6537 = vsel %vm6206, %v6499, %v6536
        %v6538 = vsel %vm6208, %v6508, %v6537
        %v6539 = vsel %vm6210, %v6517, %v6538
        %v6540 = vsel %vm6212, %v6526, %v6539
        %v6543 = vmax.f32 %v6239, %v6533
        %v6544 = vmax.f32 %v6240, %v6540
        %6545 = vxpose.xlu0.b32.start [1/16] %v6543, 128
        %6546 = vxpose.xlu0.b32.cont [2/16] %v6544, 128
        %6547 = vxpose.xlu0.b32.cont [3/16] 0.0, 128
        %6548 = vxpose.xlu0.b32.cont [4/16] 0.0, 128
        %6549 = vxpose.xlu0.b32.cont [5/16] 0.0, 128
        %6550 = vxpose.xlu0.b32.cont [6/16] 0.0, 128
        %6551 = vxpose.xlu0.b32.cont [7/16] 0.0, 128
        %6552 = vxpose.xlu0.b32.cont [8/16] 0.0, 128
        %6553 = vxpose.xlu0.b32.cont [9/16] 0.0, 128
        %6554 = vxpose.xlu0.b32.cont [10/16] 0.0, 128
        %6555 = vxpose.xlu0.b32.cont [11/16] 0.0, 128
        %6556 = vxpose.xlu0.b32.cont [12/16] 0.0, 128
        %6557 = vxpose.xlu0.b32.cont [13/16] 0.0, 128
        %6558 = vxpose.xlu0.b32.cont [14/16] 0.0, 128
        %6559 = vxpose.xlu0.b32.cont [15/16] 0.0, 128
        %6560 = vxpose.xlu0.b32.end [16/16] 0.0, 128
        %v6561 = vpop.trf.xlu0
        %v6562 = vpop.trf.xlu0
        %v6563 = vpop.trf.xlu0
        %v6564 = vpop.trf.xlu0
        %v6565 = vpop.trf.xlu0
        %v6566 = vpop.trf.xlu0
        %v6567 = vpop.trf.xlu0
        %v6568 = vpop.trf.xlu0
        %v6569 = vpop.trf.xlu0
        %v6570 = vpop.trf.xlu0
        %v6571 = vpop.trf.xlu0
        %v6572 = vpop.trf.xlu0
        %v6573 = vpop.trf.xlu0
        %v6574 = vpop.trf.xlu0
        %v6575 = vpop.trf.xlu0
        %v6576 = vpop.trf.xlu0
        %v6577 = vlaneseq
        %v6578 = vshrl.u32 %v6577, 7
        %v6579 = vsub.s32 0, %v6578
        %v6580 = vrot.slane %v6561, %v6579
        %6582 = vbcast.lane.b32.xlu0 %v6580, 256
        %v6583 = vpop.permute.xlu0 %6582
        %s6585 = sor.u32 256, 8
        %6586 = vbcast.lane.b32.xlu0 %v6580, %s6585
        %v6587 = vpop.permute.xlu0 %6586
        %v6588 = vlaneseq
        %v6589 = vshrl.u32 %v6588, 7
        %v6590 = vsub.s32 1, %v6589
        %v6591 = vrot.slane %v6561, %v6590
        %6593 = vbcast.lane.b32.xlu0 %v6591, 256
        %v6594 = vpop.permute.xlu0 %6593
        %s6596 = sor.u32 256, 8
        %6597 = vbcast.lane.b32.xlu0 %v6591, %s6596
        %v6598 = vpop.permute.xlu0 %6597
        %v6599 = vlaneseq
        %v6600 = vshrl.u32 %v6599, 7
        %v6601 = vsub.s32 2, %v6600
        %v6602 = vrot.slane %v6561, %v6601
        %6604 = vbcast.lane.b32.xlu0 %v6602, 256
        %v6605 = vpop.permute.xlu0 %6604
        %s6607 = sor.u32 256, 8
        %6608 = vbcast.lane.b32.xlu0 %v6602, %s6607
        %v6609 = vpop.permute.xlu0 %6608
        %v6610 = vlaneseq
        %v6611 = vshrl.u32 %v6610, 7
        %v6612 = vsub.s32 3, %v6611
        %v6613 = vrot.slane %v6561, %v6612
        %6615 = vbcast.lane.b32.xlu0 %v6613, 256
        %v6616 = vpop.permute.xlu0 %6615
        %s6618 = sor.u32 256, 8
        %6619 = vbcast.lane.b32.xlu0 %v6613, %s6618
        %v6620 = vpop.permute.xlu0 %6619
        %v6621 = vlaneseq
        %v6622 = vshrl.u32 %v6621, 7
        %v6623 = vsub.s32 4, %v6622
        %v6624 = vrot.slane %v6561, %v6623
        %6626 = vbcast.lane.b32.xlu0 %v6624, 256
        %v6627 = vpop.permute.xlu0 %6626
        %s6629 = sor.u32 256, 8
        %6630 = vbcast.lane.b32.xlu0 %v6624, %s6629
        %v6631 = vpop.permute.xlu0 %6630
        %v6632 = vlaneseq
        %v6633 = vshrl.u32 %v6632, 7
        %v6634 = vsub.s32 5, %v6633
        %v6635 = vrot.slane %v6561, %v6634
        %6637 = vbcast.lane.b32.xlu0 %v6635, 256
        %v6638 = vpop.permute.xlu0 %6637
        %s6640 = sor.u32 256, 8
        %6641 = vbcast.lane.b32.xlu0 %v6635, %s6640
        %v6642 = vpop.permute.xlu0 %6641
        %v6643 = vlaneseq
        %v6644 = vshrl.u32 %v6643, 7
        %v6645 = vsub.s32 6, %v6644
        %v6646 = vrot.slane %v6561, %v6645
        %6648 = vbcast.lane.b32.xlu0 %v6646, 256
        %v6649 = vpop.permute.xlu0 %6648
        %s6651 = sor.u32 256, 8
        %6652 = vbcast.lane.b32.xlu0 %v6646, %s6651
        %v6653 = vpop.permute.xlu0 %6652
        %v6654 = vlaneseq
        %v6655 = vshrl.u32 %v6654, 7
        %v6656 = vsub.s32 7, %v6655
        %v6657 = vrot.slane %v6561, %v6656
        %6659 = vbcast.lane.b32.xlu0 %v6657, 256
        %v6660 = vpop.permute.xlu0 %6659
        %s6662 = sor.u32 256, 8
        %6663 = vbcast.lane.b32.xlu0 %v6657, %s6662
        %v6664 = vpop.permute.xlu0 %6663
        %v6665 = vlaneseq
        %v6666 = vshrl.u32 %v6665, 7
        %v6667 = vsub.s32 0, %v6666
        %v6668 = vrot.slane %v6562, %v6667
        %6670 = vbcast.lane.b32.xlu0 %v6668, 256
        %v6671 = vpop.permute.xlu0 %6670
        %s6673 = sor.u32 256, 8
        %6674 = vbcast.lane.b32.xlu0 %v6668, %s6673
        %v6675 = vpop.permute.xlu0 %6674
        %v6676 = vlaneseq
        %v6677 = vshrl.u32 %v6676, 7
        %v6678 = vsub.s32 1, %v6677
        %v6679 = vrot.slane %v6562, %v6678
        %6681 = vbcast.lane.b32.xlu0 %v6679, 256
        %v6682 = vpop.permute.xlu0 %6681
        %s6684 = sor.u32 256, 8
        %6685 = vbcast.lane.b32.xlu0 %v6679, %s6684
        %v6686 = vpop.permute.xlu0 %6685
        %v6687 = vlaneseq
        %v6688 = vshrl.u32 %v6687, 7
        %v6689 = vsub.s32 2, %v6688
        %v6690 = vrot.slane %v6562, %v6689
        %6692 = vbcast.lane.b32.xlu0 %v6690, 256
        %v6693 = vpop.permute.xlu0 %6692
        %s6695 = sor.u32 256, 8
        %6696 = vbcast.lane.b32.xlu0 %v6690, %s6695
        %v6697 = vpop.permute.xlu0 %6696
        %v6698 = vlaneseq
        %v6699 = vshrl.u32 %v6698, 7
        %v6700 = vsub.s32 3, %v6699
        %v6701 = vrot.slane %v6562, %v6700
        %6703 = vbcast.lane.b32.xlu0 %v6701, 256
        %v6704 = vpop.permute.xlu0 %6703
        %s6706 = sor.u32 256, 8
        %6707 = vbcast.lane.b32.xlu0 %v6701, %s6706
        %v6708 = vpop.permute.xlu0 %6707
        %v6709 = vlaneseq
        %v6710 = vshrl.u32 %v6709, 7
        %v6711 = vsub.s32 4, %v6710
        %v6712 = vrot.slane %v6562, %v6711
        %6714 = vbcast.lane.b32.xlu0 %v6712, 256
        %v6715 = vpop.permute.xlu0 %6714
        %s6717 = sor.u32 256, 8
        %6718 = vbcast.lane.b32.xlu0 %v6712, %s6717
        %v6719 = vpop.permute.xlu0 %6718
        %v6720 = vlaneseq
        %v6721 = vshrl.u32 %v6720, 7
        %v6722 = vsub.s32 5, %v6721
        %v6723 = vrot.slane %v6562, %v6722
        %6725 = vbcast.lane.b32.xlu0 %v6723, 256
        %v6726 = vpop.permute.xlu0 %6725
        %s6728 = sor.u32 256, 8
        %6729 = vbcast.lane.b32.xlu0 %v6723, %s6728
        %v6730 = vpop.permute.xlu0 %6729
        %v6731 = vlaneseq
        %v6732 = vshrl.u32 %v6731, 7
        %v6733 = vsub.s32 6, %v6732
        %v6734 = vrot.slane %v6562, %v6733
        %6736 = vbcast.lane.b32.xlu0 %v6734, 256
        %v6737 = vpop.permute.xlu0 %6736
        %s6739 = sor.u32 256, 8
        %6740 = vbcast.lane.b32.xlu0 %v6734, %s6739
        %v6741 = vpop.permute.xlu0 %6740
        %v6742 = vlaneseq
        %v6743 = vshrl.u32 %v6742, 7
        %v6744 = vsub.s32 7, %v6743
        %v6745 = vrot.slane %v6562, %v6744
        %6747 = vbcast.lane.b32.xlu0 %v6745, 256
        %v6748 = vpop.permute.xlu0 %6747
        %s6750 = sor.u32 256, 8
        %6751 = vbcast.lane.b32.xlu0 %v6745, %s6750
        %v6752 = vpop.permute.xlu0 %6751
        %v6753 = vsub.f32 %v5893, %v6583
        %v6754 = vsub.f32 %v5894, %v6587
        %v6755 = vsub.f32 %v5895, %v6594
        %v6756 = vsub.f32 %v5896, %v6598
        %v6757 = vsub.f32 %v5897, %v6605
        %v6758 = vsub.f32 %v5898, %v6609
        %v6759 = vsub.f32 %v5899, %v6616
        %v6760 = vsub.f32 %v5900, %v6620
        %v6761 = vsub.f32 %v5901, %v6627
        %v6762 = vsub.f32 %v5902, %v6631
        %v6763 = vsub.f32 %v5903, %v6638
        %v6764 = vsub.f32 %v5904, %v6642
        %v6765 = vsub.f32 %v5905, %v6649
        %v6766 = vsub.f32 %v5906, %v6653
        %v6767 = vsub.f32 %v5907, %v6660
        %v6768 = vsub.f32 %v5908, %v6664
        %v6769 = vsub.f32 %v5909, %v6671
        %v6770 = vsub.f32 %v5910, %v6675
        %v6771 = vsub.f32 %v5911, %v6682
        %v6772 = vsub.f32 %v5912, %v6686
        %v6773 = vsub.f32 %v5913, %v6693
        %v6774 = vsub.f32 %v5914, %v6697
        %v6775 = vsub.f32 %v5915, %v6704
        %v6776 = vsub.f32 %v5916, %v6708
        %v6777 = vsub.f32 %v5917, %v6715
        %v6778 = vsub.f32 %v5918, %v6719
        %v6779 = vsub.f32 %v5919, %v6726
        %v6780 = vsub.f32 %v5920, %v6730
        %v6781 = vsub.f32 %v5921, %v6737
        %v6782 = vsub.f32 %v5922, %v6741
        %v6783 = vsub.f32 %v5923, %v6748
        %v6784 = vsub.f32 %v5924, %v6752
        %v6785 = vmul.f32 %v6753, 1.442695
        %v6786 = vpow.pop %v6785
        %v6787 = vmul.f32 %v6754, 1.442695
        %v6788 = vpow.pop %v6787
        %v6789 = vmul.f32 %v6755, 1.442695
        %v6790 = vpow.pop %v6789
        %v6791 = vmul.f32 %v6756, 1.442695
        %v6792 = vpow.pop %v6791
        %v6793 = vmul.f32 %v6757, 1.442695
        %v6794 = vpow.pop %v6793
        %v6795 = vmul.f32 %v6758, 1.442695
        %v6796 = vpow.pop %v6795
        %v6797 = vmul.f32 %v6759, 1.442695
        %v6798 = vpow.pop %v6797
        %v6799 = vmul.f32 %v6760, 1.442695
        %v6800 = vpow.pop %v6799
        %v6801 = vmul.f32 %v6761, 1.442695
        %v6802 = vpow.pop %v6801
        %v6803 = vmul.f32 %v6762, 1.442695
        %v6804 = vpow.pop %v6803
        %v6805 = vmul.f32 %v6763, 1.442695
        %v6806 = vpow.pop %v6805
        %v6807 = vmul.f32 %v6764, 1.442695
        %v6808 = vpow.pop %v6807
        %v6809 = vmul.f32 %v6765, 1.442695
        %v6810 = vpow.pop %v6809
        %v6811 = vmul.f32 %v6766, 1.442695
        %v6812 = vpow.pop %v6811
        %v6813 = vmul.f32 %v6767, 1.442695
        %v6814 = vpow.pop %v6813
        %v6815 = vmul.f32 %v6768, 1.442695
        %v6816 = vpow.pop %v6815
        %v6817 = vmul.f32 %v6769, 1.442695
        %v6818 = vpow.pop %v6817
        %v6819 = vmul.f32 %v6770, 1.442695
        %v6820 = vpow.pop %v6819
        %v6821 = vmul.f32 %v6771, 1.442695
        %v6822 = vpow.pop %v6821
        %v6823 = vmul.f32 %v6772, 1.442695
        %v6824 = vpow.pop %v6823
        %v6825 = vmul.f32 %v6773, 1.442695
        %v6826 = vpow.pop %v6825
        %v6827 = vmul.f32 %v6774, 1.442695
        %v6828 = vpow.pop %v6827
        %v6829 = vmul.f32 %v6775, 1.442695
        %v6830 = vpow.pop %v6829
        %v6831 = vmul.f32 %v6776, 1.442695
        %v6832 = vpow.pop %v6831
        %v6833 = vmul.f32 %v6777, 1.442695
        %v6834 = vpow.pop %v6833
        %v6835 = vmul.f32 %v6778, 1.442695
        %v6836 = vpow.pop %v6835
        %v6837 = vmul.f32 %v6779, 1.442695
        %v6838 = vpow.pop %v6837
        %v6839 = vmul.f32 %v6780, 1.442695
        %v6840 = vpow.pop %v6839
        %v6841 = vmul.f32 %v6781, 1.442695
        %v6842 = vpow.pop %v6841
        %v6843 = vmul.f32 %v6782, 1.442695
        %v6844 = vpow.pop %v6843
        %v6845 = vmul.f32 %v6783, 1.442695
        %v6846 = vpow.pop %v6845
        %v6847 = vmul.f32 %v6784, 1.442695
        %v6848 = vpow.pop %v6847
        %v6849 = vlaneseq
        %v6850 = vshrl.u32 %v6849, 7
        %v6851 = vsub.s32 0, %v6850
        %v6852 = vrot.slane %v6543, %v6851
        %6854 = vbcast.lane.b32.xlu0 %v6852, 256
        %v6855 = vpop.permute.xlu0 %6854
        %s6857 = sor.u32 256, 8
        %6858 = vbcast.lane.b32.xlu0 %v6852, %s6857
        %v6859 = vpop.permute.xlu0 %6858
        %v6860 = vlaneseq
        %v6861 = vshrl.u32 %v6860, 7
        %v6862 = vsub.s32 1, %v6861
        %v6863 = vrot.slane %v6543, %v6862
        %6865 = vbcast.lane.b32.xlu0 %v6863, 256
        %v6866 = vpop.permute.xlu0 %6865
        %s6868 = sor.u32 256, 8
        %6869 = vbcast.lane.b32.xlu0 %v6863, %s6868
        %v6870 = vpop.permute.xlu0 %6869
        %v6871 = vlaneseq
        %v6872 = vshrl.u32 %v6871, 7
        %v6873 = vsub.s32 2, %v6872
        %v6874 = vrot.slane %v6543, %v6873
        %6876 = vbcast.lane.b32.xlu0 %v6874, 256
        %v6877 = vpop.permute.xlu0 %6876
        %s6879 = sor.u32 256, 8
        %6880 = vbcast.lane.b32.xlu0 %v6874, %s6879
        %v6881 = vpop.permute.xlu0 %6880
        %v6882 = vlaneseq
        %v6883 = vshrl.u32 %v6882, 7
        %v6884 = vsub.s32 3, %v6883
        %v6885 = vrot.slane %v6543, %v6884
        %6887 = vbcast.lane.b32.xlu0 %v6885, 256
        %v6888 = vpop.permute.xlu0 %6887
        %s6890 = sor.u32 256, 8
        %6891 = vbcast.lane.b32.xlu0 %v6885, %s6890
        %v6892 = vpop.permute.xlu0 %6891
        %v6893 = vlaneseq
        %v6894 = vshrl.u32 %v6893, 7
        %v6895 = vsub.s32 4, %v6894
        %v6896 = vrot.slane %v6543, %v6895
        %6898 = vbcast.lane.b32.xlu0 %v6896, 256
        %v6899 = vpop.permute.xlu0 %6898
        %s6901 = sor.u32 256, 8
        %6902 = vbcast.lane.b32.xlu0 %v6896, %s6901
        %v6903 = vpop.permute.xlu0 %6902
        %v6904 = vlaneseq
        %v6905 = vshrl.u32 %v6904, 7
        %v6906 = vsub.s32 5, %v6905
        %v6907 = vrot.slane %v6543, %v6906
        %6909 = vbcast.lane.b32.xlu0 %v6907, 256
        %v6910 = vpop.permute.xlu0 %6909
        %s6912 = sor.u32 256, 8
        %6913 = vbcast.lane.b32.xlu0 %v6907, %s6912
        %v6914 = vpop.permute.xlu0 %6913
        %v6915 = vlaneseq
        %v6916 = vshrl.u32 %v6915, 7
        %v6917 = vsub.s32 6, %v6916
        %v6918 = vrot.slane %v6543, %v6917
        %6920 = vbcast.lane.b32.xlu0 %v6918, 256
        %v6921 = vpop.permute.xlu0 %6920
        %s6923 = sor.u32 256, 8
        %6924 = vbcast.lane.b32.xlu0 %v6918, %s6923
        %v6925 = vpop.permute.xlu0 %6924
        %v6926 = vlaneseq
        %v6927 = vshrl.u32 %v6926, 7
        %v6928 = vsub.s32 7, %v6927
        %v6929 = vrot.slane %v6543, %v6928
        %6931 = vbcast.lane.b32.xlu0 %v6929, 256
        %v6932 = vpop.permute.xlu0 %6931
        %s6934 = sor.u32 256, 8
        %6935 = vbcast.lane.b32.xlu0 %v6929, %s6934
        %v6936 = vpop.permute.xlu0 %6935
        %v6937 = vlaneseq
        %v6938 = vshrl.u32 %v6937, 7
        %v6939 = vsub.s32 0, %v6938
        %v6940 = vrot.slane %v6544, %v6939
        %6942 = vbcast.lane.b32.xlu0 %v6940, 256
        %v6943 = vpop.permute.xlu0 %6942
        %s6945 = sor.u32 256, 8
        %6946 = vbcast.lane.b32.xlu0 %v6940, %s6945
        %v6947 = vpop.permute.xlu0 %6946
        %v6948 = vlaneseq
        %v6949 = vshrl.u32 %v6948, 7
        %v6950 = vsub.s32 1, %v6949
        %v6951 = vrot.slane %v6544, %v6950
        %6953 = vbcast.lane.b32.xlu0 %v6951, 256
        %v6954 = vpop.permute.xlu0 %6953
        %s6956 = sor.u32 256, 8
        %6957 = vbcast.lane.b32.xlu0 %v6951, %s6956
        %v6958 = vpop.permute.xlu0 %6957
        %v6959 = vlaneseq
        %v6960 = vshrl.u32 %v6959, 7
        %v6961 = vsub.s32 2, %v6960
        %v6962 = vrot.slane %v6544, %v6961
        %6964 = vbcast.lane.b32.xlu0 %v6962, 256
        %v6965 = vpop.permute.xlu0 %6964
        %s6967 = sor.u32 256, 8
        %6968 = vbcast.lane.b32.xlu0 %v6962, %s6967
        %v6969 = vpop.permute.xlu0 %6968
        %v6970 = vlaneseq
        %v6971 = vshrl.u32 %v6970, 7
        %v6972 = vsub.s32 3, %v6971
        %v6973 = vrot.slane %v6544, %v6972
        %6975 = vbcast.lane.b32.xlu0 %v6973, 256
        %v6976 = vpop.permute.xlu0 %6975
        %s6978 = sor.u32 256, 8
        %6979 = vbcast.lane.b32.xlu0 %v6973, %s6978
        %v6980 = vpop.permute.xlu0 %6979
        %v6981 = vlaneseq
        %v6982 = vshrl.u32 %v6981, 7
        %v6983 = vsub.s32 4, %v6982
        %v6984 = vrot.slane %v6544, %v6983
        %6986 = vbcast.lane.b32.xlu0 %v6984, 256
        %v6987 = vpop.permute.xlu0 %6986
        %s6989 = sor.u32 256, 8
        %6990 = vbcast.lane.b32.xlu0 %v6984, %s6989
        %v6991 = vpop.permute.xlu0 %6990
        %v6992 = vlaneseq
        %v6993 = vshrl.u32 %v6992, 7
        %v6994 = vsub.s32 5, %v6993
        %v6995 = vrot.slane %v6544, %v6994
        %6997 = vbcast.lane.b32.xlu0 %v6995, 256
        %v6998 = vpop.permute.xlu0 %6997
        %s7000 = sor.u32 256, 8
        %7001 = vbcast.lane.b32.xlu0 %v6995, %s7000
        %v7002 = vpop.permute.xlu0 %7001
        %v7003 = vlaneseq
        %v7004 = vshrl.u32 %v7003, 7
        %v7005 = vsub.s32 6, %v7004
        %v7006 = vrot.slane %v6544, %v7005
        %7008 = vbcast.lane.b32.xlu0 %v7006, 256
        %v7009 = vpop.permute.xlu0 %7008
        %s7011 = sor.u32 256, 8
        %7012 = vbcast.lane.b32.xlu0 %v7006, %s7011
        %v7013 = vpop.permute.xlu0 %7012
        %v7014 = vlaneseq
        %v7015 = vshrl.u32 %v7014, 7
        %v7016 = vsub.s32 7, %v7015
        %v7017 = vrot.slane %v6544, %v7016
        %7019 = vbcast.lane.b32.xlu0 %v7017, 256
        %v7020 = vpop.permute.xlu0 %7019
        %s7022 = sor.u32 256, 8
        %7023 = vbcast.lane.b32.xlu0 %v7017, %s7022
        %v7024 = vpop.permute.xlu0 %7023
        %v7025 = vsub.f32 %v5590, %v6855
        %v7026 = vsub.f32 %v5591, %v6859
        %v7027 = vsub.f32 %v5592, %v6866
        %v7028 = vsub.f32 %v5593, %v6870
        %v7029 = vsub.f32 %v5594, %v6877
        %v7030 = vsub.f32 %v5595, %v6881
        %v7031 = vsub.f32 %v5596, %v6888
        %v7032 = vsub.f32 %v5597, %v6892
        %v7033 = vsub.f32 %v5598, %v6899
        %v7034 = vsub.f32 %v5599, %v6903
        %v7035 = vsub.f32 %v5600, %v6910
        %v7036 = vsub.f32 %v5601, %v6914
        %v7037 = vsub.f32 %v5602, %v6921
        %v7038 = vsub.f32 %v5603, %v6925
        %v7039 = vsub.f32 %v5604, %v6932
        %v7040 = vsub.f32 %v5605, %v6936
        %v7041 = vsub.f32 %v5606, %v6943
        %v7042 = vsub.f32 %v5607, %v6947
        %v7043 = vsub.f32 %v5608, %v6954
        %v7044 = vsub.f32 %v5609, %v6958
        %v7045 = vsub.f32 %v5610, %v6965
        %v7046 = vsub.f32 %v5611, %v6969
        %v7047 = vsub.f32 %v5612, %v6976
        %v7048 = vsub.f32 %v5613, %v6980
        %v7049 = vsub.f32 %v5614, %v6987
        %v7050 = vsub.f32 %v5615, %v6991
        %v7051 = vsub.f32 %v5616, %v6998
        %v7052 = vsub.f32 %v5617, %v7002
        %v7053 = vsub.f32 %v5618, %v7009
        %v7054 = vsub.f32 %v5619, %v7013
        %v7055 = vsub.f32 %v5620, %v7020
        %v7056 = vsub.f32 %v5621, %v7024
        %v7057 = vmul.f32 %v7025, 1.442695
        %v7058 = vpow.pop %v7057
        %v7059 = vmul.f32 %v7026, 1.442695
        %v7060 = vpow.pop %v7059
        %v7061 = vmul.f32 %v7027, 1.442695
        %v7062 = vpow.pop %v7061
        %v7063 = vmul.f32 %v7028, 1.442695
        %v7064 = vpow.pop %v7063
        %v7065 = vmul.f32 %v7029, 1.442695
        %v7066 = vpow.pop %v7065
        %v7067 = vmul.f32 %v7030, 1.442695
        %v7068 = vpow.pop %v7067
        %v7069 = vmul.f32 %v7031, 1.442695
        %v7070 = vpow.pop %v7069
        %v7071 = vmul.f32 %v7032, 1.442695
        %v7072 = vpow.pop %v7071
        %v7073 = vmul.f32 %v7033, 1.442695
        %v7074 = vpow.pop %v7073
        %v7075 = vmul.f32 %v7034, 1.442695
        %v7076 = vpow.pop %v7075
        %v7077 = vmul.f32 %v7035, 1.442695
        %v7078 = vpow.pop %v7077
        %v7079 = vmul.f32 %v7036, 1.442695
        %v7080 = vpow.pop %v7079
        %v7081 = vmul.f32 %v7037, 1.442695
        %v7082 = vpow.pop %v7081
        %v7083 = vmul.f32 %v7038, 1.442695
        %v7084 = vpow.pop %v7083
        %v7085 = vmul.f32 %v7039, 1.442695
        %v7086 = vpow.pop %v7085
        %v7087 = vmul.f32 %v7040, 1.442695
        %v7088 = vpow.pop %v7087
        %v7089 = vmul.f32 %v7041, 1.442695
        %v7090 = vpow.pop %v7089
        %v7091 = vmul.f32 %v7042, 1.442695
        %v7092 = vpow.pop %v7091
        %v7093 = vmul.f32 %v7043, 1.442695
        %v7094 = vpow.pop %v7093
        %v7095 = vmul.f32 %v7044, 1.442695
        %v7096 = vpow.pop %v7095
        %v7097 = vmul.f32 %v7045, 1.442695
        %v7098 = vpow.pop %v7097
        %v7099 = vmul.f32 %v7046, 1.442695
        %v7100 = vpow.pop %v7099
        %v7101 = vmul.f32 %v7047, 1.442695
        %v7102 = vpow.pop %v7101
        %v7103 = vmul.f32 %v7048, 1.442695
        %v7104 = vpow.pop %v7103
        %v7105 = vmul.f32 %v7049, 1.442695
        %v7106 = vpow.pop %v7105
        %v7107 = vmul.f32 %v7050, 1.442695
        %v7108 = vpow.pop %v7107
        %v7109 = vmul.f32 %v7051, 1.442695
        %v7110 = vpow.pop %v7109
        %v7111 = vmul.f32 %v7052, 1.442695
        %v7112 = vpow.pop %v7111
        %v7113 = vmul.f32 %v7053, 1.442695
        %v7114 = vpow.pop %v7113
        %v7115 = vmul.f32 %v7054, 1.442695
        %v7116 = vpow.pop %v7115
        %v7117 = vmul.f32 %v7055, 1.442695
        %v7118 = vpow.pop %v7117
        %v7119 = vmul.f32 %v7056, 1.442695
        %v7120 = vpow.pop %v7119
        %v7121 = vsel %vm5925, %v6786, 0.0
        %7122 = vadd.xlane.f32.xlu0 %v7121
        %v7123 = vpop.xlane.xlu0 %7122
        %v7124 = vsel %vm5925, %v6788, 0.0
        %7125 = vadd.xlane.f32.xlu0 %v7124
        %v7126 = vpop.xlane.xlu0 %7125
        %v7127 = vsel %vm5925, %v6790, 0.0
        %7128 = vadd.xlane.f32.xlu0 %v7127
        %v7129 = vpop.xlane.xlu0 %7128
        %v7130 = vsel %vm5925, %v6792, 0.0
        %7131 = vadd.xlane.f32.xlu0 %v7130
        %v7132 = vpop.xlane.xlu0 %7131
        %v7133 = vsel %vm5925, %v6794, 0.0
        %7134 = vadd.xlane.f32.xlu0 %v7133
        %v7135 = vpop.xlane.xlu0 %7134
        %v7136 = vsel %vm5925, %v6796, 0.0
        %7137 = vadd.xlane.f32.xlu0 %v7136
        %v7138 = vpop.xlane.xlu0 %7137
        %v7139 = vsel %vm5925, %v6798, 0.0
        %7140 = vadd.xlane.f32.xlu0 %v7139
        %v7141 = vpop.xlane.xlu0 %7140
        %v7142 = vsel %vm5925, %v6800, 0.0
        %7143 = vadd.xlane.f32.xlu0 %v7142
        %v7144 = vpop.xlane.xlu0 %7143
        %v7145 = vsel %vm5925, %v6802, 0.0
        %7146 = vadd.xlane.f32.xlu0 %v7145
        %v7147 = vpop.xlane.xlu0 %7146
        %v7148 = vsel %vm5925, %v6804, 0.0
        %7149 = vadd.xlane.f32.xlu0 %v7148
        %v7150 = vpop.xlane.xlu0 %7149
        %v7151 = vsel %vm5925, %v6806, 0.0
        %7152 = vadd.xlane.f32.xlu0 %v7151
        %v7153 = vpop.xlane.xlu0 %7152
        %v7154 = vsel %vm5925, %v6808, 0.0
        %7155 = vadd.xlane.f32.xlu0 %v7154
        %v7156 = vpop.xlane.xlu0 %7155
        %v7157 = vsel %vm5925, %v6810, 0.0
        %7158 = vadd.xlane.f32.xlu0 %v7157
        %v7159 = vpop.xlane.xlu0 %7158
        %v7160 = vsel %vm5925, %v6812, 0.0
        %7161 = vadd.xlane.f32.xlu0 %v7160
        %v7162 = vpop.xlane.xlu0 %7161
        %v7163 = vsel %vm5925, %v6814, 0.0
        %7164 = vadd.xlane.f32.xlu0 %v7163
        %v7165 = vpop.xlane.xlu0 %7164
        %v7166 = vsel %vm5925, %v6816, 0.0
        %7167 = vadd.xlane.f32.xlu0 %v7166
        %v7168 = vpop.xlane.xlu0 %7167
        %v7169 = vsel %vm5925, %v6818, 0.0
        %7170 = vadd.xlane.f32.xlu0 %v7169
        %v7171 = vpop.xlane.xlu0 %7170
        %v7172 = vsel %vm5925, %v6820, 0.0
        %7173 = vadd.xlane.f32.xlu0 %v7172
        %v7174 = vpop.xlane.xlu0 %7173
        %v7175 = vsel %vm5925, %v6822, 0.0
        %7176 = vadd.xlane.f32.xlu0 %v7175
        %v7177 = vpop.xlane.xlu0 %7176
        %v7178 = vsel %vm5925, %v6824, 0.0
        %7179 = vadd.xlane.f32.xlu0 %v7178
        %v7180 = vpop.xlane.xlu0 %7179
        %v7181 = vsel %vm5925, %v6826, 0.0
        %7182 = vadd.xlane.f32.xlu0 %v7181
        %v7183 = vpop.xlane.xlu0 %7182
        %v7184 = vsel %vm5925, %v6828, 0.0
        %7185 = vadd.xlane.f32.xlu0 %v7184
        %v7186 = vpop.xlane.xlu0 %7185
        %v7187 = vsel %vm5925, %v6830, 0.0
        %7188 = vadd.xlane.f32.xlu0 %v7187
        %v7189 = vpop.xlane.xlu0 %7188
        %v7190 = vsel %vm5925, %v6832, 0.0
        %7191 = vadd.xlane.f32.xlu0 %v7190
        %v7192 = vpop.xlane.xlu0 %7191
        %v7193 = vsel %vm5925, %v6834, 0.0
        %7194 = vadd.xlane.f32.xlu0 %v7193
        %v7195 = vpop.xlane.xlu0 %7194
        %v7196 = vsel %vm5925, %v6836, 0.0
        %7197 = vadd.xlane.f32.xlu0 %v7196
        %v7198 = vpop.xlane.xlu0 %7197
        %v7199 = vsel %vm5925, %v6838, 0.0
        %7200 = vadd.xlane.f32.xlu0 %v7199
        %v7201 = vpop.xlane.xlu0 %7200
        %v7202 = vsel %vm5925, %v6840, 0.0
        %7203 = vadd.xlane.f32.xlu0 %v7202
        %v7204 = vpop.xlane.xlu0 %7203
        %v7205 = vsel %vm5925, %v6842, 0.0
        %7206 = vadd.xlane.f32.xlu0 %v7205
        %v7207 = vpop.xlane.xlu0 %7206
        %v7208 = vsel %vm5925, %v6844, 0.0
        %7209 = vadd.xlane.f32.xlu0 %v7208
        %v7210 = vpop.xlane.xlu0 %7209
        %v7211 = vsel %vm5925, %v6846, 0.0
        %7212 = vadd.xlane.f32.xlu0 %v7211
        %v7213 = vpop.xlane.xlu0 %7212
        %v7214 = vsel %vm5925, %v6848, 0.0
        %7215 = vadd.xlane.f32.xlu0 %v7214
        %v7216 = vpop.xlane.xlu0 %7215
        %v7249 = vlaneseq
        %v7250 = vshrl.u32 %v7249, 7
        %v7251 = vsub.s32 %v5879, %v7250
        %v7252 = vrot.slane %v7123, %v7251
        %v7253 = vlaneseq
        %v7254 = vshrl.u32 %v7253, 7
        %v7255 = vsub.s32 %v6058, %v7254
        %v7256 = vrot.slane %v7126, %v7255
        %v7257 = vsel %vm6063, %v7256, %v7252
        %v7258 = vlaneseq
        %v7259 = vshrl.u32 %v7258, 7
        %v7260 = vsub.s32 %v5879, %v7259
        %v7261 = vrot.slane %v7129, %v7260
        %v7262 = vlaneseq
        %v7263 = vshrl.u32 %v7262, 7
        %v7264 = vsub.s32 %v6058, %v7263
        %v7265 = vrot.slane %v7132, %v7264
        %v7266 = vsel %vm6063, %v7265, %v7261
        %v7267 = vlaneseq
        %v7268 = vshrl.u32 %v7267, 7
        %v7269 = vsub.s32 %v5879, %v7268
        %v7270 = vrot.slane %v7135, %v7269
        %v7271 = vlaneseq
        %v7272 = vshrl.u32 %v7271, 7
        %v7273 = vsub.s32 %v6058, %v7272
        %v7274 = vrot.slane %v7138, %v7273
        %v7275 = vsel %vm6063, %v7274, %v7270
        %v7276 = vlaneseq
        %v7277 = vshrl.u32 %v7276, 7
        %v7278 = vsub.s32 %v5879, %v7277
        %v7279 = vrot.slane %v7141, %v7278
        %v7280 = vlaneseq
        %v7281 = vshrl.u32 %v7280, 7
        %v7282 = vsub.s32 %v6058, %v7281
        %v7283 = vrot.slane %v7144, %v7282
        %v7284 = vsel %vm6063, %v7283, %v7279
        %v7285 = vlaneseq
        %v7286 = vshrl.u32 %v7285, 7
        %v7287 = vsub.s32 %v5879, %v7286
        %v7288 = vrot.slane %v7147, %v7287
        %v7289 = vlaneseq
        %v7290 = vshrl.u32 %v7289, 7
        %v7291 = vsub.s32 %v6058, %v7290
        %v7292 = vrot.slane %v7150, %v7291
        %v7293 = vsel %vm6063, %v7292, %v7288
        %v7294 = vlaneseq
        %v7295 = vshrl.u32 %v7294, 7
        %v7296 = vsub.s32 %v5879, %v7295
        %v7297 = vrot.slane %v7153, %v7296
        %v7298 = vlaneseq
        %v7299 = vshrl.u32 %v7298, 7
        %v7300 = vsub.s32 %v6058, %v7299
        %v7301 = vrot.slane %v7156, %v7300
        %v7302 = vsel %vm6063, %v7301, %v7297
        %v7303 = vlaneseq
        %v7304 = vshrl.u32 %v7303, 7
        %v7305 = vsub.s32 %v5879, %v7304
        %v7306 = vrot.slane %v7159, %v7305
        %v7307 = vlaneseq
        %v7308 = vshrl.u32 %v7307, 7
        %v7309 = vsub.s32 %v6058, %v7308
        %v7310 = vrot.slane %v7162, %v7309
        %v7311 = vsel %vm6063, %v7310, %v7306
        %v7312 = vlaneseq
        %v7313 = vshrl.u32 %v7312, 7
        %v7314 = vsub.s32 %v5879, %v7313
        %v7315 = vrot.slane %v7165, %v7314
        %v7316 = vlaneseq
        %v7317 = vshrl.u32 %v7316, 7
        %v7318 = vsub.s32 %v6058, %v7317
        %v7319 = vrot.slane %v7168, %v7318
        %v7320 = vsel %vm6063, %v7319, %v7315
        %v7321 = vlaneseq
        %v7322 = vshrl.u32 %v7321, 7
        %v7323 = vsub.s32 %v5879, %v7322
        %v7324 = vrot.slane %v7171, %v7323
        %v7325 = vlaneseq
        %v7326 = vshrl.u32 %v7325, 7
        %v7327 = vsub.s32 %v6058, %v7326
        %v7328 = vrot.slane %v7174, %v7327
        %v7329 = vsel %vm6063, %v7328, %v7324
        %v7330 = vlaneseq
        %v7331 = vshrl.u32 %v7330, 7
        %v7332 = vsub.s32 %v5879, %v7331
        %v7333 = vrot.slane %v7177, %v7332
        %v7334 = vlaneseq
        %v7335 = vshrl.u32 %v7334, 7
        %v7336 = vsub.s32 %v6058, %v7335
        %v7337 = vrot.slane %v7180, %v7336
        %v7338 = vsel %vm6063, %v7337, %v7333
        %v7339 = vlaneseq
        %v7340 = vshrl.u32 %v7339, 7
        %v7341 = vsub.s32 %v5879, %v7340
        %v7342 = vrot.slane %v7183, %v7341
        %v7343 = vlaneseq
        %v7344 = vshrl.u32 %v7343, 7
        %v7345 = vsub.s32 %v6058, %v7344
        %v7346 = vrot.slane %v7186, %v7345
        %v7347 = vsel %vm6063, %v7346, %v7342
        %v7348 = vlaneseq
        %v7349 = vshrl.u32 %v7348, 7
        %v7350 = vsub.s32 %v5879, %v7349
        %v7351 = vrot.slane %v7189, %v7350
        %v7352 = vlaneseq
        %v7353 = vshrl.u32 %v7352, 7
        %v7354 = vsub.s32 %v6058, %v7353
        %v7355 = vrot.slane %v7192, %v7354
        %v7356 = vsel %vm6063, %v7355, %v7351
        %v7357 = vlaneseq
        %v7358 = vshrl.u32 %v7357, 7
        %v7359 = vsub.s32 %v5879, %v7358
        %v7360 = vrot.slane %v7195, %v7359
        %v7361 = vlaneseq
        %v7362 = vshrl.u32 %v7361, 7
        %v7363 = vsub.s32 %v6058, %v7362
        %v7364 = vrot.slane %v7198, %v7363
        %v7365 = vsel %vm6063, %v7364, %v7360
        %v7366 = vlaneseq
        %v7367 = vshrl.u32 %v7366, 7
        %v7368 = vsub.s32 %v5879, %v7367
        %v7369 = vrot.slane %v7201, %v7368
        %v7370 = vlaneseq
        %v7371 = vshrl.u32 %v7370, 7
        %v7372 = vsub.s32 %v6058, %v7371
        %v7373 = vrot.slane %v7204, %v7372
        %v7374 = vsel %vm6063, %v7373, %v7369
        %v7375 = vlaneseq
        %v7376 = vshrl.u32 %v7375, 7
        %v7377 = vsub.s32 %v5879, %v7376
        %v7378 = vrot.slane %v7207, %v7377
        %v7379 = vlaneseq
        %v7380 = vshrl.u32 %v7379, 7
        %v7381 = vsub.s32 %v6058, %v7380
        %v7382 = vrot.slane %v7210, %v7381
        %v7383 = vsel %vm6063, %v7382, %v7378
        %v7384 = vlaneseq
        %v7385 = vshrl.u32 %v7384, 7
        %v7386 = vsub.s32 %v5879, %v7385
        %v7387 = vrot.slane %v7213, %v7386
        %v7388 = vlaneseq
        %v7389 = vshrl.u32 %v7388, 7
        %v7390 = vsub.s32 %v6058, %v7389
        %v7391 = vrot.slane %v7216, %v7390
        %v7392 = vsel %vm6063, %v7391, %v7387
        %v7393 = vsel %vm6200, %v7266, %v7257
        %v7394 = vsel %vm6202, %v7275, %v7393
        %v7395 = vsel %vm6204, %v7284, %v7394
        %v7396 = vsel %vm6206, %v7293, %v7395
        %v7397 = vsel %vm6208, %v7302, %v7396
        %v7398 = vsel %vm6210, %v7311, %v7397
        %v7399 = vsel %vm6212, %v7320, %v7398
        %v7400 = vsel %vm6200, %v7338, %v7329
        %v7401 = vsel %vm6202, %v7347, %v7400
        %v7402 = vsel %vm6204, %v7356, %v7401
        %v7403 = vsel %vm6206, %v7365, %v7402
        %v7404 = vsel %vm6208, %v7374, %v7403
        %v7405 = vsel %vm6210, %v7383, %v7404
        %v7406 = vsel %vm6212, %v7392, %v7405
        %7409 = vxpose.xlu0.b32.start [1/16] %v7399, 128
        %7410 = vxpose.xlu0.b32.cont [2/16] %v7406, 128
        %7411 = vxpose.xlu0.b32.cont [3/16] 0.0, 128
        %7412 = vxpose.xlu0.b32.cont [4/16] 0.0, 128
        %7413 = vxpose.xlu0.b32.cont [5/16] 0.0, 128
        %7414 = vxpose.xlu0.b32.cont [6/16] 0.0, 128
        %7415 = vxpose.xlu0.b32.cont [7/16] 0.0, 128
        %7416 = vxpose.xlu0.b32.cont [8/16] 0.0, 128
        %7417 = vxpose.xlu0.b32.cont [9/16] 0.0, 128
        %7418 = vxpose.xlu0.b32.cont [10/16] 0.0, 128
        %7419 = vxpose.xlu0.b32.cont [11/16] 0.0, 128
        %7420 = vxpose.xlu0.b32.cont [12/16] 0.0, 128
        %7421 = vxpose.xlu0.b32.cont [13/16] 0.0, 128
        %7422 = vxpose.xlu0.b32.cont [14/16] 0.0, 128
        %7423 = vxpose.xlu0.b32.cont [15/16] 0.0, 128
        %7424 = vxpose.xlu0.b32.end [16/16] 0.0, 128
        %v7425 = vpop.trf.xlu0
        %v7426 = vpop.trf.xlu0
        %v7427 = vpop.trf.xlu0
        %v7428 = vpop.trf.xlu0
        %v7429 = vpop.trf.xlu0
        %v7430 = vpop.trf.xlu0
        %v7431 = vpop.trf.xlu0
        %v7432 = vpop.trf.xlu0
        %v7433 = vpop.trf.xlu0
        %v7434 = vpop.trf.xlu0
        %v7435 = vpop.trf.xlu0
        %v7436 = vpop.trf.xlu0
        %v7437 = vpop.trf.xlu0
        %v7438 = vpop.trf.xlu0
        %v7439 = vpop.trf.xlu0
        %v7440 = vpop.trf.xlu0
        %v7441 = vsel %vm5925, %v7058, 0.0
        %7442 = vadd.xlane.f32.xlu0 %v7441
        %v7443 = vpop.xlane.xlu0 %7442
        %v7444 = vsel %vm5925, %v7060, 0.0
        %7445 = vadd.xlane.f32.xlu0 %v7444
        %v7446 = vpop.xlane.xlu0 %7445
        %v7447 = vsel %vm5925, %v7062, 0.0
        %7448 = vadd.xlane.f32.xlu0 %v7447
        %v7449 = vpop.xlane.xlu0 %7448
        %v7450 = vsel %vm5925, %v7064, 0.0
        %7451 = vadd.xlane.f32.xlu0 %v7450
        %v7452 = vpop.xlane.xlu0 %7451
        %v7453 = vsel %vm5925, %v7066, 0.0
        %7454 = vadd.xlane.f32.xlu0 %v7453
        %v7455 = vpop.xlane.xlu0 %7454
        %v7456 = vsel %vm5925, %v7068, 0.0
        %7457 = vadd.xlane.f32.xlu0 %v7456
        %v7458 = vpop.xlane.xlu0 %7457
        %v7459 = vsel %vm5925, %v7070, 0.0
        %7460 = vadd.xlane.f32.xlu0 %v7459
        %v7461 = vpop.xlane.xlu0 %7460
        %v7462 = vsel %vm5925, %v7072, 0.0
        %7463 = vadd.xlane.f32.xlu0 %v7462
        %v7464 = vpop.xlane.xlu0 %7463
        %v7465 = vsel %vm5925, %v7074, 0.0
        %7466 = vadd.xlane.f32.xlu0 %v7465
        %v7467 = vpop.xlane.xlu0 %7466
        %v7468 = vsel %vm5925, %v7076, 0.0
        %7469 = vadd.xlane.f32.xlu0 %v7468
        %v7470 = vpop.xlane.xlu0 %7469
        %v7471 = vsel %vm5925, %v7078, 0.0
        %7472 = vadd.xlane.f32.xlu0 %v7471
        %v7473 = vpop.xlane.xlu0 %7472
        %v7474 = vsel %vm5925, %v7080, 0.0
        %7475 = vadd.xlane.f32.xlu0 %v7474
        %v7476 = vpop.xlane.xlu0 %7475
        %v7477 = vsel %vm5925, %v7082, 0.0
        %7478 = vadd.xlane.f32.xlu0 %v7477
        %v7479 = vpop.xlane.xlu0 %7478
        %v7480 = vsel %vm5925, %v7084, 0.0
        %7481 = vadd.xlane.f32.xlu0 %v7480
        %v7482 = vpop.xlane.xlu0 %7481
        %v7483 = vsel %vm5925, %v7086, 0.0
        %7484 = vadd.xlane.f32.xlu0 %v7483
        %v7485 = vpop.xlane.xlu0 %7484
        %v7486 = vsel %vm5925, %v7088, 0.0
        %7487 = vadd.xlane.f32.xlu0 %v7486
        %v7488 = vpop.xlane.xlu0 %7487
        %v7489 = vsel %vm5925, %v7090, 0.0
        %7490 = vadd.xlane.f32.xlu0 %v7489
        %v7491 = vpop.xlane.xlu0 %7490
        %v7492 = vsel %vm5925, %v7092, 0.0
        %7493 = vadd.xlane.f32.xlu0 %v7492
        %v7494 = vpop.xlane.xlu0 %7493
        %v7495 = vsel %vm5925, %v7094, 0.0
        %7496 = vadd.xlane.f32.xlu0 %v7495
        %v7497 = vpop.xlane.xlu0 %7496
        %v7498 = vsel %vm5925, %v7096, 0.0
        %7499 = vadd.xlane.f32.xlu0 %v7498
        %v7500 = vpop.xlane.xlu0 %7499
        %v7501 = vsel %vm5925, %v7098, 0.0
        %7502 = vadd.xlane.f32.xlu0 %v7501
        %v7503 = vpop.xlane.xlu0 %7502
        %v7504 = vsel %vm5925, %v7100, 0.0
        %7505 = vadd.xlane.f32.xlu0 %v7504
        %v7506 = vpop.xlane.xlu0 %7505
        %v7507 = vsel %vm5925, %v7102, 0.0
        %7508 = vadd.xlane.f32.xlu0 %v7507
        %v7509 = vpop.xlane.xlu0 %7508
        %v7510 = vsel %vm5925, %v7104, 0.0
        %7511 = vadd.xlane.f32.xlu0 %v7510
        %v7512 = vpop.xlane.xlu0 %7511
        %v7513 = vsel %vm5925, %v7106, 0.0
        %7514 = vadd.xlane.f32.xlu0 %v7513
        %v7515 = vpop.xlane.xlu0 %7514
        %v7516 = vsel %vm5925, %v7108, 0.0
        %7517 = vadd.xlane.f32.xlu0 %v7516
        %v7518 = vpop.xlane.xlu0 %7517
        %v7519 = vsel %vm5925, %v7110, 0.0
        %7520 = vadd.xlane.f32.xlu0 %v7519
        %v7521 = vpop.xlane.xlu0 %7520
        %v7522 = vsel %vm5925, %v7112, 0.0
        %7523 = vadd.xlane.f32.xlu0 %v7522
        %v7524 = vpop.xlane.xlu0 %7523
        %v7525 = vsel %vm5925, %v7114, 0.0
        %7526 = vadd.xlane.f32.xlu0 %v7525
        %v7527 = vpop.xlane.xlu0 %7526
        %v7528 = vsel %vm5925, %v7116, 0.0
        %7529 = vadd.xlane.f32.xlu0 %v7528
        %v7530 = vpop.xlane.xlu0 %7529
        %v7531 = vsel %vm5925, %v7118, 0.0
        %7532 = vadd.xlane.f32.xlu0 %v7531
        %v7533 = vpop.xlane.xlu0 %7532
        %v7534 = vsel %vm5925, %v7120, 0.0
        %7535 = vadd.xlane.f32.xlu0 %v7534
        %v7536 = vpop.xlane.xlu0 %7535
        %v7569 = vlaneseq
        %v7570 = vshrl.u32 %v7569, 7
        %v7571 = vsub.s32 %v5879, %v7570
        %v7572 = vrot.slane %v7443, %v7571
        %v7573 = vlaneseq
        %v7574 = vshrl.u32 %v7573, 7
        %v7575 = vsub.s32 %v6058, %v7574
        %v7576 = vrot.slane %v7446, %v7575
        %v7577 = vsel %vm6063, %v7576, %v7572
        %v7578 = vlaneseq
        %v7579 = vshrl.u32 %v7578, 7
        %v7580 = vsub.s32 %v5879, %v7579
        %v7581 = vrot.slane %v7449, %v7580
        %v7582 = vlaneseq
        %v7583 = vshrl.u32 %v7582, 7
        %v7584 = vsub.s32 %v6058, %v7583
        %v7585 = vrot.slane %v7452, %v7584
        %v7586 = vsel %vm6063, %v7585, %v7581
        %v7587 = vlaneseq
        %v7588 = vshrl.u32 %v7587, 7
        %v7589 = vsub.s32 %v5879, %v7588
        %v7590 = vrot.slane %v7455, %v7589
        %v7591 = vlaneseq
        %v7592 = vshrl.u32 %v7591, 7
        %v7593 = vsub.s32 %v6058, %v7592
        %v7594 = vrot.slane %v7458, %v7593
        %v7595 = vsel %vm6063, %v7594, %v7590
        %v7596 = vlaneseq
        %v7597 = vshrl.u32 %v7596, 7
        %v7598 = vsub.s32 %v5879, %v7597
        %v7599 = vrot.slane %v7461, %v7598
        %v7600 = vlaneseq
        %v7601 = vshrl.u32 %v7600, 7
        %v7602 = vsub.s32 %v6058, %v7601
        %v7603 = vrot.slane %v7464, %v7602
        %v7604 = vsel %vm6063, %v7603, %v7599
        %v7605 = vlaneseq
        %v7606 = vshrl.u32 %v7605, 7
        %v7607 = vsub.s32 %v5879, %v7606
        %v7608 = vrot.slane %v7467, %v7607
        %v7609 = vlaneseq
        %v7610 = vshrl.u32 %v7609, 7
        %v7611 = vsub.s32 %v6058, %v7610
        %v7612 = vrot.slane %v7470, %v7611
        %v7613 = vsel %vm6063, %v7612, %v7608
        %v7614 = vlaneseq
        %v7615 = vshrl.u32 %v7614, 7
        %v7616 = vsub.s32 %v5879, %v7615
        %v7617 = vrot.slane %v7473, %v7616
        %v7618 = vlaneseq
        %v7619 = vshrl.u32 %v7618, 7
        %v7620 = vsub.s32 %v6058, %v7619
        %v7621 = vrot.slane %v7476, %v7620
        %v7622 = vsel %vm6063, %v7621, %v7617
        %v7623 = vlaneseq
        %v7624 = vshrl.u32 %v7623, 7
        %v7625 = vsub.s32 %v5879, %v7624
        %v7626 = vrot.slane %v7479, %v7625
        %v7627 = vlaneseq
        %v7628 = vshrl.u32 %v7627, 7
        %v7629 = vsub.s32 %v6058, %v7628
        %v7630 = vrot.slane %v7482, %v7629
        %v7631 = vsel %vm6063, %v7630, %v7626
        %v7632 = vlaneseq
        %v7633 = vshrl.u32 %v7632, 7
        %v7634 = vsub.s32 %v5879, %v7633
        %v7635 = vrot.slane %v7485, %v7634
        %v7636 = vlaneseq
        %v7637 = vshrl.u32 %v7636, 7
        %v7638 = vsub.s32 %v6058, %v7637
        %v7639 = vrot.slane %v7488, %v7638
        %v7640 = vsel %vm6063, %v7639, %v7635
        %v7641 = vlaneseq
        %v7642 = vshrl.u32 %v7641, 7
        %v7643 = vsub.s32 %v5879, %v7642
        %v7644 = vrot.slane %v7491, %v7643
        %v7645 = vlaneseq
        %v7646 = vshrl.u32 %v7645, 7
        %v7647 = vsub.s32 %v6058, %v7646
        %v7648 = vrot.slane %v7494, %v7647
        %v7649 = vsel %vm6063, %v7648, %v7644
        %v7650 = vlaneseq
        %v7651 = vshrl.u32 %v7650, 7
        %v7652 = vsub.s32 %v5879, %v7651
        %v7653 = vrot.slane %v7497, %v7652
        %v7654 = vlaneseq
        %v7655 = vshrl.u32 %v7654, 7
        %v7656 = vsub.s32 %v6058, %v7655
        %v7657 = vrot.slane %v7500, %v7656
        %v7658 = vsel %vm6063, %v7657, %v7653
        %v7659 = vlaneseq
        %v7660 = vshrl.u32 %v7659, 7
        %v7661 = vsub.s32 %v5879, %v7660
        %v7662 = vrot.slane %v7503, %v7661
        %v7663 = vlaneseq
        %v7664 = vshrl.u32 %v7663, 7
        %v7665 = vsub.s32 %v6058, %v7664
        %v7666 = vrot.slane %v7506, %v7665
        %v7667 = vsel %vm6063, %v7666, %v7662
        %v7668 = vlaneseq
        %v7669 = vshrl.u32 %v7668, 7
        %v7670 = vsub.s32 %v5879, %v7669
        %v7671 = vrot.slane %v7509, %v7670
        %v7672 = vlaneseq
        %v7673 = vshrl.u32 %v7672, 7
        %v7674 = vsub.s32 %v6058, %v7673
        %v7675 = vrot.slane %v7512, %v7674
        %v7676 = vsel %vm6063, %v7675, %v7671
        %v7677 = vlaneseq
        %v7678 = vshrl.u32 %v7677, 7
        %v7679 = vsub.s32 %v5879, %v7678
        %v7680 = vrot.slane %v7515, %v7679
        %v7681 = vlaneseq
        %v7682 = vshrl.u32 %v7681, 7
        %v7683 = vsub.s32 %v6058, %v7682
        %v7684 = vrot.slane %v7518, %v7683
        %v7685 = vsel %vm6063, %v7684, %v7680
        %v7686 = vlaneseq
        %v7687 = vshrl.u32 %v7686, 7
        %v7688 = vsub.s32 %v5879, %v7687
        %v7689 = vrot.slane %v7521, %v7688
        %v7690 = vlaneseq
        %v7691 = vshrl.u32 %v7690, 7
        %v7692 = vsub.s32 %v6058, %v7691
        %v7693 = vrot.slane %v7524, %v7692
        %v7694 = vsel %vm6063, %v7693, %v7689
        %v7695 = vlaneseq
        %v7696 = vshrl.u32 %v7695, 7
        %v7697 = vsub.s32 %v5879, %v7696
        %v7698 = vrot.slane %v7527, %v7697
        %v7699 = vlaneseq
        %v7700 = vshrl.u32 %v7699, 7
        %v7701 = vsub.s32 %v6058, %v7700
        %v7702 = vrot.slane %v7530, %v7701
        %v7703 = vsel %vm6063, %v7702, %v7698
        %v7704 = vlaneseq
        %v7705 = vshrl.u32 %v7704, 7
        %v7706 = vsub.s32 %v5879, %v7705
        %v7707 = vrot.slane %v7533, %v7706
        %v7708 = vlaneseq
        %v7709 = vshrl.u32 %v7708, 7
        %v7710 = vsub.s32 %v6058, %v7709
        %v7711 = vrot.slane %v7536, %v7710
        %v7712 = vsel %vm6063, %v7711, %v7707
        %v7713 = vsel %vm6200, %v7586, %v7577
        %v7714 = vsel %vm6202, %v7595, %v7713
        %v7715 = vsel %vm6204, %v7604, %v7714
        %v7716 = vsel %vm6206, %v7613, %v7715
        %v7717 = vsel %vm6208, %v7622, %v7716
        %v7718 = vsel %vm6210, %v7631, %v7717
        %v7719 = vsel %vm6212, %v7640, %v7718
        %v7720 = vsel %vm6200, %v7658, %v7649
        %v7721 = vsel %vm6202, %v7667, %v7720
        %v7722 = vsel %vm6204, %v7676, %v7721
        %v7723 = vsel %vm6206, %v7685, %v7722
        %v7724 = vsel %vm6208, %v7694, %v7723
        %v7725 = vsel %vm6210, %v7703, %v7724
        %v7726 = vsel %vm6212, %v7712, %v7725
        %v7729 = vadd.f32 %v7425, %v7719
        %v7730 = vadd.f32 %v7426, %v7726
        %v7731 = vrcp.pop %v7729
        %v7732 = vrcp.pop %v7730
        %v7733 = vpack.c.bf16 %v6788, %v6786
        %v7734 = vpack.c.bf16 %v6792, %v6790
        %v7735 = vpack.c.bf16 %v6796, %v6794
        %v7736 = vpack.c.bf16 %v6800, %v6798
        %v7737 = vpack.c.bf16 %v6804, %v6802
        %v7738 = vpack.c.bf16 %v6808, %v6806
        %v7739 = vpack.c.bf16 %v6812, %v6810
        %v7740 = vpack.c.bf16 %v6816, %v6814
        %v7741 = vpack.c.bf16 %v6820, %v6818
        %v7742 = vpack.c.bf16 %v6824, %v6822
        %v7743 = vpack.c.bf16 %v6828, %v6826
        %v7744 = vpack.c.bf16 %v6832, %v6830
        %v7745 = vpack.c.bf16 %v6836, %v6834
        %v7746 = vpack.c.bf16 %v6840, %v6838
        %v7747 = vpack.c.bf16 %v6844, %v6842
        %v7748 = vpack.c.bf16 %v6848, %v6846
        %v7750 = vsel %vm5925, %v7733, 0
        %7752 = vmatprep.subr.bf16.mxu0 0
        %7753 = vmatpush1.bf16.msra.mxu0 %v2886
        %7754 = vmatprep.subr.bf16.mxu0 0
        %7755 = vmatpush1.bf16.msra.mxu0 0
        %7756 = vmatprep.subr.bf16.mxu0 0
        %7757 = vmatpush1.bf16.msra.mxu0 0
        %7758 = vmatprep.subr.bf16.mxu0 0
        %7759 = vmatpush1.bf16.msra.mxu0 0
        %7760 = vmatprep.subr.bf16.mxu0 0
        %7761 = vmatpush1.bf16.msra.mxu0 0
        %7762 = vmatprep.subr.bf16.mxu0 0
        %7763 = vmatpush1.bf16.msra.mxu0 0
        %7764 = vmatprep.subr.bf16.mxu0 0
        %7765 = vmatpush1.bf16.msra.mxu0 0
        %7766 = vmatprep.subr.bf16.mxu0 0
        %7767 = vmatpush1.bf16.msra.mxu0 0
        %7768 = vmatprep.subr.bf16.mxu0 0
        %7769 = vmatpush1.bf16.msra.mxu0 0
        %7770 = vmatprep.subr.bf16.mxu0 0
        %7771 = vmatpush1.bf16.msra.mxu0 0
        %7772 = vmatprep.subr.bf16.mxu0 0
        %7773 = vmatpush1.bf16.msra.mxu0 0
        %7774 = vmatprep.subr.bf16.mxu0 0
        %7775 = vmatpush1.bf16.msra.mxu0 0
        %7776 = vmatprep.subr.bf16.mxu0 0
        %7777 = vmatpush1.bf16.msra.mxu0 0
        %7778 = vmatprep.subr.bf16.mxu0 0
        %7779 = vmatpush1.bf16.msra.mxu0 0
        %7780 = vmatprep.subr.bf16.mxu0 0
        %7781 = vmatpush1.bf16.msra.mxu0 0
        %7782 = vmatprep.subr.bf16.mxu0 0
        %7783 = vmatpush1.bf16.msra.mxu0 0
        %7784 = vmatprep.mubr.bf16.mxu0 0
        %7785 = vmatmul.mubr.bf16.gmra.mrb[0].mxu0 %v7750
        %v7786 = vpop.f32.mrb[0].mxu0
        %v7787 = vadd.f32 0.0, %v7786
        %v7788 = vpop.f32.mrb[0].mxu0
        %v7789 = vpop.f32.mrb[0].mxu0
        %v7790 = vadd.f32 0.0, %v7789
        %v7791 = vpop.f32.mrb[0].mxu0
        %7792 = vdwg.mxu0
        %v7794 = vsel %vm5925, %v7734, 0
        %7796 = vmatprep.subr.bf16.mxu0 0
        %7797 = vmatpush1.bf16.msra.mxu0 %v2887
        %7798 = vmatprep.subr.bf16.mxu0 0
        %7799 = vmatpush1.bf16.msra.mxu0 0
        %7800 = vmatprep.subr.bf16.mxu0 0
        %7801 = vmatpush1.bf16.msra.mxu0 0
        %7802 = vmatprep.subr.bf16.mxu0 0
        %7803 = vmatpush1.bf16.msra.mxu0 0
        %7804 = vmatprep.subr.bf16.mxu0 0
        %7805 = vmatpush1.bf16.msra.mxu0 0
        %7806 = vmatprep.subr.bf16.mxu0 0
        %7807 = vmatpush1.bf16.msra.mxu0 0
        %7808 = vmatprep.subr.bf16.mxu0 0
        %7809 = vmatpush1.bf16.msra.mxu0 0
        %7810 = vmatprep.subr.bf16.mxu0 0
        %7811 = vmatpush1.bf16.msra.mxu0 0
        %7812 = vmatprep.subr.bf16.mxu0 0
        %7813 = vmatpush1.bf16.msra.mxu0 0
        %7814 = vmatprep.subr.bf16.mxu0 0
        %7815 = vmatpush1.bf16.msra.mxu0 0
        %7816 = vmatprep.subr.bf16.mxu0 0
        %7817 = vmatpush1.bf16.msra.mxu0 0
        %7818 = vmatprep.subr.bf16.mxu0 0
        %7819 = vmatpush1.bf16.msra.mxu0 0
        %7820 = vmatprep.subr.bf16.mxu0 0
        %7821 = vmatpush1.bf16.msra.mxu0 0
        %7822 = vmatprep.subr.bf16.mxu0 0
        %7823 = vmatpush1.bf16.msra.mxu0 0
        %7824 = vmatprep.subr.bf16.mxu0 0
        %7825 = vmatpush1.bf16.msra.mxu0 0
        %7826 = vmatprep.subr.bf16.mxu0 0
        %7827 = vmatpush1.bf16.msra.mxu0 0
        %7828 = vmatprep.mubr.bf16.mxu0 0
        %7829 = vmatmul.mubr.bf16.gmra.mrb[0].mxu0 %v7794
        %v7830 = vpop.f32.mrb[0].mxu0
        %v7831 = vadd.f32 0.0, %v7830
        %v7832 = vpop.f32.mrb[0].mxu0
        %v7833 = vpop.f32.mrb[0].mxu0
        %v7834 = vadd.f32 0.0, %v7833
        %v7835 = vpop.f32.mrb[0].mxu0
        %7836 = vdwg.mxu0
        %v7838 = vsel %vm5925, %v7735, 0
        %7840 = vmatprep.subr.bf16.mxu0 0
        %7841 = vmatpush1.bf16.msra.mxu0 %v2888
        %7842 = vmatprep.subr.bf16.mxu0 0
        %7843 = vmatpush1.bf16.msra.mxu0 0
        %7844 = vmatprep.subr.bf16.mxu0 0
        %7845 = vmatpush1.bf16.msra.mxu0 0
        %7846 = vmatprep.subr.bf16.mxu0 0
        %7847 = vmatpush1.bf16.msra.mxu0 0
        %7848 = vmatprep.subr.bf16.mxu0 0
        %7849 = vmatpush1.bf16.msra.mxu0 0
        %7850 = vmatprep.subr.bf16.mxu0 0
        %7851 = vmatpush1.bf16.msra.mxu0 0
        %7852 = vmatprep.subr.bf16.mxu0 0
        %7853 = vmatpush1.bf16.msra.mxu0 0
        %7854 = vmatprep.subr.bf16.mxu0 0
        %7855 = vmatpush1.bf16.msra.mxu0 0
        %7856 = vmatprep.subr.bf16.mxu0 0
        %7857 = vmatpush1.bf16.msra.mxu0 0
        %7858 = vmatprep.subr.bf16.mxu0 0
        %7859 = vmatpush1.bf16.msra.mxu0 0
        %7860 = vmatprep.subr.bf16.mxu0 0
        %7861 = vmatpush1.bf16.msra.mxu0 0
        %7862 = vmatprep.subr.bf16.mxu0 0
        %7863 = vmatpush1.bf16.msra.mxu0 0
        %7864 = vmatprep.subr.bf16.mxu0 0
        %7865 = vmatpush1.bf16.msra.mxu0 0
        %7866 = vmatprep.subr.bf16.mxu0 0
        %7867 = vmatpush1.bf16.msra.mxu0 0
        %7868 = vmatprep.subr.bf16.mxu0 0
        %7869 = vmatpush1.bf16.msra.mxu0 0
        %7870 = vmatprep.subr.bf16.mxu0 0
        %7871 = vmatpush1.bf16.msra.mxu0 0
        %7872 = vmatprep.mubr.bf16.mxu0 0
        %7873 = vmatmul.mubr.bf16.gmra.mrb[0].mxu0 %v7838
        %v7874 = vpop.f32.mrb[0].mxu0
        %v7875 = vadd.f32 0.0, %v7874
        %v7876 = vpop.f32.mrb[0].mxu0
        %v7877 = vpop.f32.mrb[0].mxu0
        %v7878 = vadd.f32 0.0, %v7877
        %v7879 = vpop.f32.mrb[0].mxu0
        %7880 = vdwg.mxu0
        %v7882 = vsel %vm5925, %v7736, 0
        %7884 = vmatprep.subr.bf16.mxu0 0
        %7885 = vmatpush1.bf16.msra.mxu0 %v2889
        %7886 = vmatprep.subr.bf16.mxu0 0
        %7887 = vmatpush1.bf16.msra.mxu0 0
        %7888 = vmatprep.subr.bf16.mxu0 0
        %7889 = vmatpush1.bf16.msra.mxu0 0
        %7890 = vmatprep.subr.bf16.mxu0 0
        %7891 = vmatpush1.bf16.msra.mxu0 0
        %7892 = vmatprep.subr.bf16.mxu0 0
        %7893 = vmatpush1.bf16.msra.mxu0 0
        %7894 = vmatprep.subr.bf16.mxu0 0
        %7895 = vmatpush1.bf16.msra.mxu0 0
        %7896 = vmatprep.subr.bf16.mxu0 0
        %7897 = vmatpush1.bf16.msra.mxu0 0
        %7898 = vmatprep.subr.bf16.mxu0 0
        %7899 = vmatpush1.bf16.msra.mxu0 0
        %7900 = vmatprep.subr.bf16.mxu0 0
        %7901 = vmatpush1.bf16.msra.mxu0 0
        %7902 = vmatprep.subr.bf16.mxu0 0
        %7903 = vmatpush1.bf16.msra.mxu0 0
        %7904 = vmatprep.subr.bf16.mxu0 0
        %7905 = vmatpush1.bf16.msra.mxu0 0
        %7906 = vmatprep.subr.bf16.mxu0 0
        %7907 = vmatpush1.bf16.msra.mxu0 0
        %7908 = vmatprep.subr.bf16.mxu0 0
        %7909 = vmatpush1.bf16.msra.mxu0 0
        %7910 = vmatprep.subr.bf16.mxu0 0
        %7911 = vmatpush1.bf16.msra.mxu0 0
        %7912 = vmatprep.subr.bf16.mxu0 0
        %7913 = vmatpush1.bf16.msra.mxu0 0
        %7914 = vmatprep.subr.bf16.mxu0 0
        %7915 = vmatpush1.bf16.msra.mxu0 0
        %7916 = vmatprep.mubr.bf16.mxu0 0
        %7917 = vmatmul.mubr.bf16.gmra.mrb[0].mxu0 %v7882
        %v7918 = vpop.f32.mrb[0].mxu0
        %v7919 = vadd.f32 0.0, %v7918
        %v7920 = vpop.f32.mrb[0].mxu0
        %v7921 = vpop.f32.mrb[0].mxu0
        %v7922 = vadd.f32 0.0, %v7921
        %v7923 = vpop.f32.mrb[0].mxu0
        %7924 = vdwg.mxu0
        %v7926 = vsel %vm5925, %v7737, 0
        %7928 = vmatprep.subr.bf16.mxu0 0
        %7929 = vmatpush1.bf16.msra.mxu0 %v2890
        %7930 = vmatprep.subr.bf16.mxu0 0
        %7931 = vmatpush1.bf16.msra.mxu0 0
        %7932 = vmatprep.subr.bf16.mxu0 0
        %7933 = vmatpush1.bf16.msra.mxu0 0
        %7934 = vmatprep.subr.bf16.mxu0 0
        %7935 = vmatpush1.bf16.msra.mxu0 0
        %7936 = vmatprep.subr.bf16.mxu0 0
        %7937 = vmatpush1.bf16.msra.mxu0 0
        %7938 = vmatprep.subr.bf16.mxu0 0
        %7939 = vmatpush1.bf16.msra.mxu0 0
        %7940 = vmatprep.subr.bf16.mxu0 0
        %7941 = vmatpush1.bf16.msra.mxu0 0
        %7942 = vmatprep.subr.bf16.mxu0 0
        %7943 = vmatpush1.bf16.msra.mxu0 0
        %7944 = vmatprep.subr.bf16.mxu0 0
        %7945 = vmatpush1.bf16.msra.mxu0 0
        %7946 = vmatprep.subr.bf16.mxu0 0
        %7947 = vmatpush1.bf16.msra.mxu0 0
        %7948 = vmatprep.subr.bf16.mxu0 0
        %7949 = vmatpush1.bf16.msra.mxu0 0
        %7950 = vmatprep.subr.bf16.mxu0 0
        %7951 = vmatpush1.bf16.msra.mxu0 0
        %7952 = vmatprep.subr.bf16.mxu0 0
        %7953 = vmatpush1.bf16.msra.mxu0 0
        %7954 = vmatprep.subr.bf16.mxu0 0
        %7955 = vmatpush1.bf16.msra.mxu0 0
        %7956 = vmatprep.subr.bf16.mxu0 0
        %7957 = vmatpush1.bf16.msra.mxu0 0
        %7958 = vmatprep.subr.bf16.mxu0 0
        %7959 = vmatpush1.bf16.msra.mxu0 0
        %7960 = vmatprep.mubr.bf16.mxu0 0
        %7961 = vmatmul.mubr.bf16.gmra.mrb[0].mxu0 %v7926
        %v7962 = vpop.f32.mrb[0].mxu0
        %v7963 = vadd.f32 0.0, %v7962
        %v7964 = vpop.f32.mrb[0].mxu0
        %v7965 = vpop.f32.mrb[0].mxu0
        %v7966 = vadd.f32 0.0, %v7965
        %v7967 = vpop.f32.mrb[0].mxu0
        %7968 = vdwg.mxu0
        %v7970 = vsel %vm5925, %v7738, 0
        %7972 = vmatprep.subr.bf16.mxu0 0
        %7973 = vmatpush1.bf16.msra.mxu0 %v2891
        %7974 = vmatprep.subr.bf16.mxu0 0
        %7975 = vmatpush1.bf16.msra.mxu0 0
        %7976 = vmatprep.subr.bf16.mxu0 0
        %7977 = vmatpush1.bf16.msra.mxu0 0
        %7978 = vmatprep.subr.bf16.mxu0 0
        %7979 = vmatpush1.bf16.msra.mxu0 0
        %7980 = vmatprep.subr.bf16.mxu0 0
        %7981 = vmatpush1.bf16.msra.mxu0 0
        %7982 = vmatprep.subr.bf16.mxu0 0
        %7983 = vmatpush1.bf16.msra.mxu0 0
        %7984 = vmatprep.subr.bf16.mxu0 0
        %7985 = vmatpush1.bf16.msra.mxu0 0
        %7986 = vmatprep.subr.bf16.mxu0 0
        %7987 = vmatpush1.bf16.msra.mxu0 0
        %7988 = vmatprep.subr.bf16.mxu0 0
        %7989 = vmatpush1.bf16.msra.mxu0 0
        %7990 = vmatprep.subr.bf16.mxu0 0
        %7991 = vmatpush1.bf16.msra.mxu0 0
        %7992 = vmatprep.subr.bf16.mxu0 0
        %7993 = vmatpush1.bf16.msra.mxu0 0
        %7994 = vmatprep.subr.bf16.mxu0 0
        %7995 = vmatpush1.bf16.msra.mxu0 0
        %7996 = vmatprep.subr.bf16.mxu0 0
        %7997 = vmatpush1.bf16.msra.mxu0 0
        %7998 = vmatprep.subr.bf16.mxu0 0
        %7999 = vmatpush1.bf16.msra.mxu0 0
        %8000 = vmatprep.subr.bf16.mxu0 0
        %8001 = vmatpush1.bf16.msra.mxu0 0
        %8002 = vmatprep.subr.bf16.mxu0 0
        %8003 = vmatpush1.bf16.msra.mxu0 0
        %8004 = vmatprep.mubr.bf16.mxu0 0
        %8005 = vmatmul.mubr.bf16.gmra.mrb[0].mxu0 %v7970
        %v8006 = vpop.f32.mrb[0].mxu0
        %v8007 = vadd.f32 0.0, %v8006
        %v8008 = vpop.f32.mrb[0].mxu0
        %v8009 = vpop.f32.mrb[0].mxu0
        %v8010 = vadd.f32 0.0, %v8009
        %v8011 = vpop.f32.mrb[0].mxu0
        %8012 = vdwg.mxu0
        %v8014 = vsel %vm5925, %v7739, 0
        %8016 = vmatprep.subr.bf16.mxu0 0
        %8017 = vmatpush1.bf16.msra.mxu0 %v2892
        %8018 = vmatprep.subr.bf16.mxu0 0
        %8019 = vmatpush1.bf16.msra.mxu0 0
        %8020 = vmatprep.subr.bf16.mxu0 0
        %8021 = vmatpush1.bf16.msra.mxu0 0
        %8022 = vmatprep.subr.bf16.mxu0 0
        %8023 = vmatpush1.bf16.msra.mxu0 0
        %8024 = vmatprep.subr.bf16.mxu0 0
        %8025 = vmatpush1.bf16.msra.mxu0 0
        %8026 = vmatprep.subr.bf16.mxu0 0
        %8027 = vmatpush1.bf16.msra.mxu0 0
        %8028 = vmatprep.subr.bf16.mxu0 0
        %8029 = vmatpush1.bf16.msra.mxu0 0
        %8030 = vmatprep.subr.bf16.mxu0 0
        %8031 = vmatpush1.bf16.msra.mxu0 0
        %8032 = vmatprep.subr.bf16.mxu0 0
        %8033 = vmatpush1.bf16.msra.mxu0 0
        %8034 = vmatprep.subr.bf16.mxu0 0
        %8035 = vmatpush1.bf16.msra.mxu0 0
        %8036 = vmatprep.subr.bf16.mxu0 0
        %8037 = vmatpush1.bf16.msra.mxu0 0
        %8038 = vmatprep.subr.bf16.mxu0 0
        %8039 = vmatpush1.bf16.msra.mxu0 0
        %8040 = vmatprep.subr.bf16.mxu0 0
        %8041 = vmatpush1.bf16.msra.mxu0 0
        %8042 = vmatprep.subr.bf16.mxu0 0
        %8043 = vmatpush1.bf16.msra.mxu0 0
        %8044 = vmatprep.subr.bf16.mxu0 0
        %8045 = vmatpush1.bf16.msra.mxu0 0
        %8046 = vmatprep.subr.bf16.mxu0 0
        %8047 = vmatpush1.bf16.msra.mxu0 0
        %8048 = vmatprep.mubr.bf16.mxu0 0
        %8049 = vmatmul.mubr.bf16.gmra.mrb[0].mxu0 %v8014
        %v8050 = vpop.f32.mrb[0].mxu0
        %v8051 = vadd.f32 0.0, %v8050
        %v8052 = vpop.f32.mrb[0].mxu0
        %v8053 = vpop.f32.mrb[0].mxu0
        %v8054 = vadd.f32 0.0, %v8053
        %v8055 = vpop.f32.mrb[0].mxu0
        %8056 = vdwg.mxu0
        %v8058 = vsel %vm5925, %v7740, 0
        %8060 = vmatprep.subr.bf16.mxu0 0
        %8061 = vmatpush1.bf16.msra.mxu0 %v2893
        %8062 = vmatprep.subr.bf16.mxu0 0
        %8063 = vmatpush1.bf16.msra.mxu0 0
        %8064 = vmatprep.subr.bf16.mxu0 0
        %8065 = vmatpush1.bf16.msra.mxu0 0
        %8066 = vmatprep.subr.bf16.mxu0 0
        %8067 = vmatpush1.bf16.msra.mxu0 0
        %8068 = vmatprep.subr.bf16.mxu0 0
        %8069 = vmatpush1.bf16.msra.mxu0 0
        %8070 = vmatprep.subr.bf16.mxu0 0
        %8071 = vmatpush1.bf16.msra.mxu0 0
        %8072 = vmatprep.subr.bf16.mxu0 0
        %8073 = vmatpush1.bf16.msra.mxu0 0
        %8074 = vmatprep.subr.bf16.mxu0 0
        %8075 = vmatpush1.bf16.msra.mxu0 0
        %8076 = vmatprep.subr.bf16.mxu0 0
        %8077 = vmatpush1.bf16.msra.mxu0 0
        %8078 = vmatprep.subr.bf16.mxu0 0
        %8079 = vmatpush1.bf16.msra.mxu0 0
        %8080 = vmatprep.subr.bf16.mxu0 0
        %8081 = vmatpush1.bf16.msra.mxu0 0
        %8082 = vmatprep.subr.bf16.mxu0 0
        %8083 = vmatpush1.bf16.msra.mxu0 0
        %8084 = vmatprep.subr.bf16.mxu0 0
        %8085 = vmatpush1.bf16.msra.mxu0 0
        %8086 = vmatprep.subr.bf16.mxu0 0
        %8087 = vmatpush1.bf16.msra.mxu0 0
        %8088 = vmatprep.subr.bf16.mxu0 0
        %8089 = vmatpush1.bf16.msra.mxu0 0
        %8090 = vmatprep.subr.bf16.mxu0 0
        %8091 = vmatpush1.bf16.msra.mxu0 0
        %8092 = vmatprep.mubr.bf16.mxu0 0
        %8093 = vmatmul.mubr.bf16.gmra.mrb[0].mxu0 %v8058
        %v8094 = vpop.f32.mrb[0].mxu0
        %v8095 = vadd.f32 0.0, %v8094
        %v8096 = vpop.f32.mrb[0].mxu0
        %v8097 = vpop.f32.mrb[0].mxu0
        %v8098 = vadd.f32 0.0, %v8097
        %v8099 = vpop.f32.mrb[0].mxu0
        %8100 = vdwg.mxu0
        %v8102 = vsel %vm5925, %v7741, 0
        %8104 = vmatprep.subr.bf16.mxu0 0
        %8105 = vmatpush1.bf16.msra.mxu0 %v2894
        %8106 = vmatprep.subr.bf16.mxu0 0
        %8107 = vmatpush1.bf16.msra.mxu0 0
        %8108 = vmatprep.subr.bf16.mxu0 0
        %8109 = vmatpush1.bf16.msra.mxu0 0
        %8110 = vmatprep.subr.bf16.mxu0 0
        %8111 = vmatpush1.bf16.msra.mxu0 0
        %8112 = vmatprep.subr.bf16.mxu0 0
        %8113 = vmatpush1.bf16.msra.mxu0 0
        %8114 = vmatprep.subr.bf16.mxu0 0
        %8115 = vmatpush1.bf16.msra.mxu0 0
        %8116 = vmatprep.subr.bf16.mxu0 0
        %8117 = vmatpush1.bf16.msra.mxu0 0
        %8118 = vmatprep.subr.bf16.mxu0 0
        %8119 = vmatpush1.bf16.msra.mxu0 0
        %8120 = vmatprep.subr.bf16.mxu0 0
        %8121 = vmatpush1.bf16.msra.mxu0 0
        %8122 = vmatprep.subr.bf16.mxu0 0
        %8123 = vmatpush1.bf16.msra.mxu0 0
        %8124 = vmatprep.subr.bf16.mxu0 0
        %8125 = vmatpush1.bf16.msra.mxu0 0
        %8126 = vmatprep.subr.bf16.mxu0 0
        %8127 = vmatpush1.bf16.msra.mxu0 0
        %8128 = vmatprep.subr.bf16.mxu0 0
        %8129 = vmatpush1.bf16.msra.mxu0 0
        %8130 = vmatprep.subr.bf16.mxu0 0
        %8131 = vmatpush1.bf16.msra.mxu0 0
        %8132 = vmatprep.subr.bf16.mxu0 0
        %8133 = vmatpush1.bf16.msra.mxu0 0
        %8134 = vmatprep.subr.bf16.mxu0 0
        %8135 = vmatpush1.bf16.msra.mxu0 0
        %8136 = vmatprep.mubr.bf16.mxu0 0
        %8137 = vmatmul.mubr.bf16.gmra.mrb[0].mxu0 %v8102
        %v8138 = vpop.f32.mrb[0].mxu0
        %v8139 = vadd.f32 0.0, %v8138
        %v8140 = vpop.f32.mrb[0].mxu0
        %v8141 = vpop.f32.mrb[0].mxu0
        %v8142 = vadd.f32 0.0, %v8141
        %v8143 = vpop.f32.mrb[0].mxu0
        %8144 = vdwg.mxu0
        %v8146 = vsel %vm5925, %v7742, 0
        %8148 = vmatprep.subr.bf16.mxu0 0
        %8149 = vmatpush1.bf16.msra.mxu0 %v2895
        %8150 = vmatprep.subr.bf16.mxu0 0
        %8151 = vmatpush1.bf16.msra.mxu0 0
        %8152 = vmatprep.subr.bf16.mxu0 0
        %8153 = vmatpush1.bf16.msra.mxu0 0
        %8154 = vmatprep.subr.bf16.mxu0 0
        %8155 = vmatpush1.bf16.msra.mxu0 0
        %8156 = vmatprep.subr.bf16.mxu0 0
        %8157 = vmatpush1.bf16.msra.mxu0 0
        %8158 = vmatprep.subr.bf16.mxu0 0
        %8159 = vmatpush1.bf16.msra.mxu0 0
        %8160 = vmatprep.subr.bf16.mxu0 0
        %8161 = vmatpush1.bf16.msra.mxu0 0
        %8162 = vmatprep.subr.bf16.mxu0 0
        %8163 = vmatpush1.bf16.msra.mxu0 0
        %8164 = vmatprep.subr.bf16.mxu0 0
        %8165 = vmatpush1.bf16.msra.mxu0 0
        %8166 = vmatprep.subr.bf16.mxu0 0
        %8167 = vmatpush1.bf16.msra.mxu0 0
        %8168 = vmatprep.subr.bf16.mxu0 0
        %8169 = vmatpush1.bf16.msra.mxu0 0
        %8170 = vmatprep.subr.bf16.mxu0 0
        %8171 = vmatpush1.bf16.msra.mxu0 0
        %8172 = vmatprep.subr.bf16.mxu0 0
        %8173 = vmatpush1.bf16.msra.mxu0 0
        %8174 = vmatprep.subr.bf16.mxu0 0
        %8175 = vmatpush1.bf16.msra.mxu0 0
        %8176 = vmatprep.subr.bf16.mxu0 0
        %8177 = vmatpush1.bf16.msra.mxu0 0
        %8178 = vmatprep.subr.bf16.mxu0 0
        %8179 = vmatpush1.bf16.msra.mxu0 0
        %8180 = vmatprep.mubr.bf16.mxu0 0
        %8181 = vmatmul.mubr.bf16.gmra.mrb[0].mxu0 %v8146
        %v8182 = vpop.f32.mrb[0].mxu0
        %v8183 = vadd.f32 0.0, %v8182
        %v8184 = vpop.f32.mrb[0].mxu0
        %v8185 = vpop.f32.mrb[0].mxu0
        %v8186 = vadd.f32 0.0, %v8185
        %v8187 = vpop.f32.mrb[0].mxu0
        %8188 = vdwg.mxu0
        %v8190 = vsel %vm5925, %v7743, 0
        %8192 = vmatprep.subr.bf16.mxu0 0
        %8193 = vmatpush1.bf16.msra.mxu0 %v2896
        %8194 = vmatprep.subr.bf16.mxu0 0
        %8195 = vmatpush1.bf16.msra.mxu0 0
        %8196 = vmatprep.subr.bf16.mxu0 0
        %8197 = vmatpush1.bf16.msra.mxu0 0
        %8198 = vmatprep.subr.bf16.mxu0 0
        %8199 = vmatpush1.bf16.msra.mxu0 0
        %8200 = vmatprep.subr.bf16.mxu0 0
        %8201 = vmatpush1.bf16.msra.mxu0 0
        %8202 = vmatprep.subr.bf16.mxu0 0
        %8203 = vmatpush1.bf16.msra.mxu0 0
        %8204 = vmatprep.subr.bf16.mxu0 0
        %8205 = vmatpush1.bf16.msra.mxu0 0
        %8206 = vmatprep.subr.bf16.mxu0 0
        %8207 = vmatpush1.bf16.msra.mxu0 0
        %8208 = vmatprep.subr.bf16.mxu0 0
        %8209 = vmatpush1.bf16.msra.mxu0 0
        %8210 = vmatprep.subr.bf16.mxu0 0
        %8211 = vmatpush1.bf16.msra.mxu0 0
        %8212 = vmatprep.subr.bf16.mxu0 0
        %8213 = vmatpush1.bf16.msra.mxu0 0
        %8214 = vmatprep.subr.bf16.mxu0 0
        %8215 = vmatpush1.bf16.msra.mxu0 0
        %8216 = vmatprep.subr.bf16.mxu0 0
        %8217 = vmatpush1.bf16.msra.mxu0 0
        %8218 = vmatprep.subr.bf16.mxu0 0
        %8219 = vmatpush1.bf16.msra.mxu0 0
        %8220 = vmatprep.subr.bf16.mxu0 0
        %8221 = vmatpush1.bf16.msra.mxu0 0
        %8222 = vmatprep.subr.bf16.mxu0 0
        %8223 = vmatpush1.bf16.msra.mxu0 0
        %8224 = vmatprep.mubr.bf16.mxu0 0
        %8225 = vmatmul.mubr.bf16.gmra.mrb[0].mxu0 %v8190
        %v8226 = vpop.f32.mrb[0].mxu0
        %v8227 = vadd.f32 0.0, %v8226
        %v8228 = vpop.f32.mrb[0].mxu0
        %v8229 = vpop.f32.mrb[0].mxu0
        %v8230 = vadd.f32 0.0, %v8229
        %v8231 = vpop.f32.mrb[0].mxu0
        %8232 = vdwg.mxu0
        %v8234 = vsel %vm5925, %v7744, 0
        %8236 = vmatprep.subr.bf16.mxu0 0
        %8237 = vmatpush1.bf16.msra.mxu0 %v2897
        %8238 = vmatprep.subr.bf16.mxu0 0
        %8239 = vmatpush1.bf16.msra.mxu0 0
        %8240 = vmatprep.subr.bf16.mxu0 0
        %8241 = vmatpush1.bf16.msra.mxu0 0
        %8242 = vmatprep.subr.bf16.mxu0 0
        %8243 = vmatpush1.bf16.msra.mxu0 0
        %8244 = vmatprep.subr.bf16.mxu0 0
        %8245 = vmatpush1.bf16.msra.mxu0 0
        %8246 = vmatprep.subr.bf16.mxu0 0
        %8247 = vmatpush1.bf16.msra.mxu0 0
        %8248 = vmatprep.subr.bf16.mxu0 0
        %8249 = vmatpush1.bf16.msra.mxu0 0
        %8250 = vmatprep.subr.bf16.mxu0 0
        %8251 = vmatpush1.bf16.msra.mxu0 0
        %8252 = vmatprep.subr.bf16.mxu0 0
        %8253 = vmatpush1.bf16.msra.mxu0 0
        %8254 = vmatprep.subr.bf16.mxu0 0
        %8255 = vmatpush1.bf16.msra.mxu0 0
        %8256 = vmatprep.subr.bf16.mxu0 0
        %8257 = vmatpush1.bf16.msra.mxu0 0
        %8258 = vmatprep.subr.bf16.mxu0 0
        %8259 = vmatpush1.bf16.msra.mxu0 0
        %8260 = vmatprep.subr.bf16.mxu0 0
        %8261 = vmatpush1.bf16.msra.mxu0 0
        %8262 = vmatprep.subr.bf16.mxu0 0
        %8263 = vmatpush1.bf16.msra.mxu0 0
        %8264 = vmatprep.subr.bf16.mxu0 0
        %8265 = vmatpush1.bf16.msra.mxu0 0
        %8266 = vmatprep.subr.bf16.mxu0 0
        %8267 = vmatpush1.bf16.msra.mxu0 0
        %8268 = vmatprep.mubr.bf16.mxu0 0
        %8269 = vmatmul.mubr.bf16.gmra.mrb[0].mxu0 %v8234
        %v8270 = vpop.f32.mrb[0].mxu0
        %v8271 = vadd.f32 0.0, %v8270
        %v8272 = vpop.f32.mrb[0].mxu0
        %v8273 = vpop.f32.mrb[0].mxu0
        %v8274 = vadd.f32 0.0, %v8273
        %v8275 = vpop.f32.mrb[0].mxu0
        %8276 = vdwg.mxu0
        %v8278 = vsel %vm5925, %v7745, 0
        %8280 = vmatprep.subr.bf16.mxu0 0
        %8281 = vmatpush1.bf16.msra.mxu0 %v2898
        %8282 = vmatprep.subr.bf16.mxu0 0
        %8283 = vmatpush1.bf16.msra.mxu0 0
        %8284 = vmatprep.subr.bf16.mxu0 0
        %8285 = vmatpush1.bf16.msra.mxu0 0
        %8286 = vmatprep.subr.bf16.mxu0 0
        %8287 = vmatpush1.bf16.msra.mxu0 0
        %8288 = vmatprep.subr.bf16.mxu0 0
        %8289 = vmatpush1.bf16.msra.mxu0 0
        %8290 = vmatprep.subr.bf16.mxu0 0
        %8291 = vmatpush1.bf16.msra.mxu0 0
        %8292 = vmatprep.subr.bf16.mxu0 0
        %8293 = vmatpush1.bf16.msra.mxu0 0
        %8294 = vmatprep.subr.bf16.mxu0 0
        %8295 = vmatpush1.bf16.msra.mxu0 0
        %8296 = vmatprep.subr.bf16.mxu0 0
        %8297 = vmatpush1.bf16.msra.mxu0 0
        %8298 = vmatprep.subr.bf16.mxu0 0
        %8299 = vmatpush1.bf16.msra.mxu0 0
        %8300 = vmatprep.subr.bf16.mxu0 0
        %8301 = vmatpush1.bf16.msra.mxu0 0
        %8302 = vmatprep.subr.bf16.mxu0 0
        %8303 = vmatpush1.bf16.msra.mxu0 0
        %8304 = vmatprep.subr.bf16.mxu0 0
        %8305 = vmatpush1.bf16.msra.mxu0 0
        %8306 = vmatprep.subr.bf16.mxu0 0
        %8307 = vmatpush1.bf16.msra.mxu0 0
        %8308 = vmatprep.subr.bf16.mxu0 0
        %8309 = vmatpush1.bf16.msra.mxu0 0
        %8310 = vmatprep.subr.bf16.mxu0 0
        %8311 = vmatpush1.bf16.msra.mxu0 0
        %8312 = vmatprep.mubr.bf16.mxu0 0
        %8313 = vmatmul.mubr.bf16.gmra.mrb[0].mxu0 %v8278
        %v8314 = vpop.f32.mrb[0].mxu0
        %v8315 = vadd.f32 0.0, %v8314
        %v8316 = vpop.f32.mrb[0].mxu0
        %v8317 = vpop.f32.mrb[0].mxu0
        %v8318 = vadd.f32 0.0, %v8317
        %v8319 = vpop.f32.mrb[0].mxu0
        %8320 = vdwg.mxu0
        %v8322 = vsel %vm5925, %v7746, 0
        %8324 = vmatprep.subr.bf16.mxu0 0
        %8325 = vmatpush1.bf16.msra.mxu0 %v2899
        %8326 = vmatprep.subr.bf16.mxu0 0
        %8327 = vmatpush1.bf16.msra.mxu0 0
        %8328 = vmatprep.subr.bf16.mxu0 0
        %8329 = vmatpush1.bf16.msra.mxu0 0
        %8330 = vmatprep.subr.bf16.mxu0 0
        %8331 = vmatpush1.bf16.msra.mxu0 0
        %8332 = vmatprep.subr.bf16.mxu0 0
        %8333 = vmatpush1.bf16.msra.mxu0 0
        %8334 = vmatprep.subr.bf16.mxu0 0
        %8335 = vmatpush1.bf16.msra.mxu0 0
        %8336 = vmatprep.subr.bf16.mxu0 0
        %8337 = vmatpush1.bf16.msra.mxu0 0
        %8338 = vmatprep.subr.bf16.mxu0 0
        %8339 = vmatpush1.bf16.msra.mxu0 0
        %8340 = vmatprep.subr.bf16.mxu0 0
        %8341 = vmatpush1.bf16.msra.mxu0 0
        %8342 = vmatprep.subr.bf16.mxu0 0
        %8343 = vmatpush1.bf16.msra.mxu0 0
        %8344 = vmatprep.subr.bf16.mxu0 0
        %8345 = vmatpush1.bf16.msra.mxu0 0
        %8346 = vmatprep.subr.bf16.mxu0 0
        %8347 = vmatpush1.bf16.msra.mxu0 0
        %8348 = vmatprep.subr.bf16.mxu0 0
        %8349 = vmatpush1.bf16.msra.mxu0 0
        %8350 = vmatprep.subr.bf16.mxu0 0
        %8351 = vmatpush1.bf16.msra.mxu0 0
        %8352 = vmatprep.subr.bf16.mxu0 0
        %8353 = vmatpush1.bf16.msra.mxu0 0
        %8354 = vmatprep.subr.bf16.mxu0 0
        %8355 = vmatpush1.bf16.msra.mxu0 0
        %8356 = vmatprep.mubr.bf16.mxu0 0
        %8357 = vmatmul.mubr.bf16.gmra.mrb[0].mxu0 %v8322
        %v8358 = vpop.f32.mrb[0].mxu0
        %v8359 = vadd.f32 0.0, %v8358
        %v8360 = vpop.f32.mrb[0].mxu0
        %v8361 = vpop.f32.mrb[0].mxu0
        %v8362 = vadd.f32 0.0, %v8361
        %v8363 = vpop.f32.mrb[0].mxu0
        %8364 = vdwg.mxu0
        %v8366 = vsel %vm5925, %v7747, 0
        %8368 = vmatprep.subr.bf16.mxu0 0
        %8369 = vmatpush1.bf16.msra.mxu0 %v2900
        %8370 = vmatprep.subr.bf16.mxu0 0
        %8371 = vmatpush1.bf16.msra.mxu0 0
        %8372 = vmatprep.subr.bf16.mxu0 0
        %8373 = vmatpush1.bf16.msra.mxu0 0
        %8374 = vmatprep.subr.bf16.mxu0 0
        %8375 = vmatpush1.bf16.msra.mxu0 0
        %8376 = vmatprep.subr.bf16.mxu0 0
        %8377 = vmatpush1.bf16.msra.mxu0 0
        %8378 = vmatprep.subr.bf16.mxu0 0
        %8379 = vmatpush1.bf16.msra.mxu0 0
        %8380 = vmatprep.subr.bf16.mxu0 0
        %8381 = vmatpush1.bf16.msra.mxu0 0
        %8382 = vmatprep.subr.bf16.mxu0 0
        %8383 = vmatpush1.bf16.msra.mxu0 0
        %8384 = vmatprep.subr.bf16.mxu0 0
        %8385 = vmatpush1.bf16.msra.mxu0 0
        %8386 = vmatprep.subr.bf16.mxu0 0
        %8387 = vmatpush1.bf16.msra.mxu0 0
        %8388 = vmatprep.subr.bf16.mxu0 0
        %8389 = vmatpush1.bf16.msra.mxu0 0
        %8390 = vmatprep.subr.bf16.mxu0 0
        %8391 = vmatpush1.bf16.msra.mxu0 0
        %8392 = vmatprep.subr.bf16.mxu0 0
        %8393 = vmatpush1.bf16.msra.mxu0 0
        %8394 = vmatprep.subr.bf16.mxu0 0
        %8395 = vmatpush1.bf16.msra.mxu0 0
        %8396 = vmatprep.subr.bf16.mxu0 0
        %8397 = vmatpush1.bf16.msra.mxu0 0
        %8398 = vmatprep.subr.bf16.mxu0 0
        %8399 = vmatpush1.bf16.msra.mxu0 0
        %8400 = vmatprep.mubr.bf16.mxu0 0
        %8401 = vmatmul.mubr.bf16.gmra.mrb[0].mxu0 %v8366
        %v8402 = vpop.f32.mrb[0].mxu0
        %v8403 = vadd.f32 0.0, %v8402
        %v8404 = vpop.f32.mrb[0].mxu0
        %v8405 = vpop.f32.mrb[0].mxu0
        %v8406 = vadd.f32 0.0, %v8405
        %v8407 = vpop.f32.mrb[0].mxu0
        %8408 = vdwg.mxu0
        %v8410 = vsel %vm5925, %v7748, 0
        %8412 = vmatprep.subr.bf16.mxu0 0
        %8413 = vmatpush1.bf16.msra.mxu0 %v2901
        %8414 = vmatprep.subr.bf16.mxu0 0
        %8415 = vmatpush1.bf16.msra.mxu0 0
        %8416 = vmatprep.subr.bf16.mxu0 0
        %8417 = vmatpush1.bf16.msra.mxu0 0
        %8418 = vmatprep.subr.bf16.mxu0 0
        %8419 = vmatpush1.bf16.msra.mxu0 0
        %8420 = vmatprep.subr.bf16.mxu0 0
        %8421 = vmatpush1.bf16.msra.mxu0 0
        %8422 = vmatprep.subr.bf16.mxu0 0
        %8423 = vmatpush1.bf16.msra.mxu0 0
        %8424 = vmatprep.subr.bf16.mxu0 0
        %8425 = vmatpush1.bf16.msra.mxu0 0
        %8426 = vmatprep.subr.bf16.mxu0 0
        %8427 = vmatpush1.bf16.msra.mxu0 0
        %8428 = vmatprep.subr.bf16.mxu0 0
        %8429 = vmatpush1.bf16.msra.mxu0 0
        %8430 = vmatprep.subr.bf16.mxu0 0
        %8431 = vmatpush1.bf16.msra.mxu0 0
        %8432 = vmatprep.subr.bf16.mxu0 0
        %8433 = vmatpush1.bf16.msra.mxu0 0
        %8434 = vmatprep.subr.bf16.mxu0 0
        %8435 = vmatpush1.bf16.msra.mxu0 0
        %8436 = vmatprep.subr.bf16.mxu0 0
        %8437 = vmatpush1.bf16.msra.mxu0 0
        %8438 = vmatprep.subr.bf16.mxu0 0
        %8439 = vmatpush1.bf16.msra.mxu0 0
        %8440 = vmatprep.subr.bf16.mxu0 0
        %8441 = vmatpush1.bf16.msra.mxu0 0
        %8442 = vmatprep.subr.bf16.mxu0 0
        %8443 = vmatpush1.bf16.msra.mxu0 0
        %8444 = vmatprep.mubr.bf16.mxu0 0
        %8445 = vmatmul.mubr.bf16.gmra.mrb[0].mxu0 %v8410
        %v8446 = vpop.f32.mrb[0].mxu0
        %v8447 = vadd.f32 0.0, %v8446
        %v8448 = vpop.f32.mrb[0].mxu0
        %v8449 = vpop.f32.mrb[0].mxu0
        %v8450 = vadd.f32 0.0, %v8449
        %v8451 = vpop.f32.mrb[0].mxu0
        %8452 = vdwg.mxu0
        %v8453 = vcombine.low %v7787, %v7875
        %v8454 = vcombine.high %v7787, %v7875
        %v8456 = vunpack.c.l.s4 1983009808
        %v8457 = vunpack.c.0.s8 %v8456
        %v8458 = vlaneseq
        %v8459 = vshrl.u32 %v8458, 7
        %v8460 = vsub.s32 %v8457, %v8459
        %v8461 = vrot.slane %v8453, %v8460
        %v8463 = vunpack.c.l.s4 1983009808
        %v8464 = vunpack.c.0.s8 %v8463
        %v8465 = vlaneseq
        %v8466 = vshrl.u32 %v8465, 7
        %v8467 = vsub.s32 %v8464, %v8466
        %v8468 = vrot.slane %v8454, %v8467
        %v8469 = vcombine.low %v7831, %v7919
        %v8470 = vcombine.high %v7831, %v7919
        %v8472 = vunpack.c.l.s4 1983009808
        %v8473 = vunpack.c.0.s8 %v8472
        %v8474 = vlaneseq
        %v8475 = vshrl.u32 %v8474, 7
        %v8476 = vsub.s32 %v8473, %v8475
        %v8477 = vrot.slane %v8469, %v8476
        %v8479 = vunpack.c.l.s4 1983009808
        %v8480 = vunpack.c.0.s8 %v8479
        %v8481 = vlaneseq
        %v8482 = vshrl.u32 %v8481, 7
        %v8483 = vsub.s32 %v8480, %v8482
        %v8484 = vrot.slane %v8470, %v8483
        %v8485 = vcombine.low %v7963, %v8051
        %v8486 = vcombine.high %v7963, %v8051
        %v8488 = vunpack.c.l.s4 1983009808
        %v8489 = vunpack.c.0.s8 %v8488
        %v8490 = vlaneseq
        %v8491 = vshrl.u32 %v8490, 7
        %v8492 = vsub.s32 %v8489, %v8491
        %v8493 = vrot.slane %v8485, %v8492
        %v8495 = vunpack.c.l.s4 1983009808
        %v8496 = vunpack.c.0.s8 %v8495
        %v8497 = vlaneseq
        %v8498 = vshrl.u32 %v8497, 7
        %v8499 = vsub.s32 %v8496, %v8498
        %v8500 = vrot.slane %v8486, %v8499
        %v8501 = vcombine.low %v8007, %v8095
        %v8502 = vcombine.high %v8007, %v8095
        %v8504 = vunpack.c.l.s4 1983009808
        %v8505 = vunpack.c.0.s8 %v8504
        %v8506 = vlaneseq
        %v8507 = vshrl.u32 %v8506, 7
        %v8508 = vsub.s32 %v8505, %v8507
        %v8509 = vrot.slane %v8501, %v8508
        %v8511 = vunpack.c.l.s4 1983009808
        %v8512 = vunpack.c.0.s8 %v8511
        %v8513 = vlaneseq
        %v8514 = vshrl.u32 %v8513, 7
        %v8515 = vsub.s32 %v8512, %v8514
        %v8516 = vrot.slane %v8502, %v8515
        %v8517 = vcombine.low %v8461, %v8477
        %v8518 = vcombine.high %v8461, %v8477
        %v8520 = vunpack.c.l.s4 1934713408
        %v8521 = vunpack.c.0.s8 %v8520
        %v8522 = vlaneseq
        %v8523 = vshrl.u32 %v8522, 7
        %v8524 = vsub.s32 %v8521, %v8523
        %v8525 = vrot.slane %v8517, %v8524
        %v8527 = vunpack.c.l.s4 1934713408
        %v8528 = vunpack.c.0.s8 %v8527
        %v8529 = vlaneseq
        %v8530 = vshrl.u32 %v8529, 7
        %v8531 = vsub.s32 %v8528, %v8530
        %v8532 = vrot.slane %v8518, %v8531
        %v8533 = vcombine.low %v8468, %v8484
        %v8534 = vcombine.high %v8468, %v8484
        %v8536 = vunpack.c.l.s4 1934713408
        %v8537 = vunpack.c.0.s8 %v8536
        %v8538 = vlaneseq
        %v8539 = vshrl.u32 %v8538, 7
        %v8540 = vsub.s32 %v8537, %v8539
        %v8541 = vrot.slane %v8533, %v8540
        %v8543 = vunpack.c.l.s4 1934713408
        %v8544 = vunpack.c.0.s8 %v8543
        %v8545 = vlaneseq
        %v8546 = vshrl.u32 %v8545, 7
        %v8547 = vsub.s32 %v8544, %v8546
        %v8548 = vrot.slane %v8534, %v8547
        %v8549 = vcombine.low %v8493, %v8509
        %v8550 = vcombine.high %v8493, %v8509
        %v8552 = vunpack.c.l.s4 1934713408
        %v8553 = vunpack.c.0.s8 %v8552
        %v8554 = vlaneseq
        %v8555 = vshrl.u32 %v8554, 7
        %v8556 = vsub.s32 %v8553, %v8555
        %v8557 = vrot.slane %v8549, %v8556
        %v8559 = vunpack.c.l.s4 1934713408
        %v8560 = vunpack.c.0.s8 %v8559
        %v8561 = vlaneseq
        %v8562 = vshrl.u32 %v8561, 7
        %v8563 = vsub.s32 %v8560, %v8562
        %v8564 = vrot.slane %v8550, %v8563
        %v8565 = vcombine.low %v8500, %v8516
        %v8566 = vcombine.high %v8500, %v8516
        %v8568 = vunpack.c.l.s4 1934713408
        %v8569 = vunpack.c.0.s8 %v8568
        %v8570 = vlaneseq
        %v8571 = vshrl.u32 %v8570, 7
        %v8572 = vsub.s32 %v8569, %v8571
        %v8573 = vrot.slane %v8565, %v8572
        %v8575 = vunpack.c.l.s4 1934713408
        %v8576 = vunpack.c.0.s8 %v8575
        %v8577 = vlaneseq
        %v8578 = vshrl.u32 %v8577, 7
        %v8579 = vsub.s32 %v8576, %v8578
        %v8580 = vrot.slane %v8566, %v8579
        %v8581 = vcombine.low %v8525, %v8557
        %v8582 = vcombine.high %v8525, %v8557
        %v8583 = vcombine.low %v8532, %v8564
        %v8584 = vcombine.high %v8532, %v8564
        %v8585 = vcombine.low %v8541, %v8573
        %v8586 = vcombine.high %v8541, %v8573
        %v8587 = vcombine.low %v8548, %v8580
        %v8588 = vcombine.high %v8548, %v8580
        %v8589 = vcombine.low %v8139, %v8227
        %v8590 = vcombine.high %v8139, %v8227
        %v8592 = vunpack.c.l.s4 1983009808
        %v8593 = vunpack.c.0.s8 %v8592
        %v8594 = vlaneseq
        %v8595 = vshrl.u32 %v8594, 7
        %v8596 = vsub.s32 %v8593, %v8595
        %v8597 = vrot.slane %v8589, %v8596
        %v8599 = vunpack.c.l.s4 1983009808
        %v8600 = vunpack.c.0.s8 %v8599
        %v8601 = vlaneseq
        %v8602 = vshrl.u32 %v8601, 7
        %v8603 = vsub.s32 %v8600, %v8602
        %v8604 = vrot.slane %v8590, %v8603
        %v8605 = vcombine.low %v8183, %v8271
        %v8606 = vcombine.high %v8183, %v8271
        %v8608 = vunpack.c.l.s4 1983009808
        %v8609 = vunpack.c.0.s8 %v8608
        %v8610 = vlaneseq
        %v8611 = vshrl.u32 %v8610, 7
        %v8612 = vsub.s32 %v8609, %v8611
        %v8613 = vrot.slane %v8605, %v8612
        %v8615 = vunpack.c.l.s4 1983009808
        %v8616 = vunpack.c.0.s8 %v8615
        %v8617 = vlaneseq
        %v8618 = vshrl.u32 %v8617, 7
        %v8619 = vsub.s32 %v8616, %v8618
        %v8620 = vrot.slane %v8606, %v8619
        %v8621 = vcombine.low %v8315, %v8403
        %v8622 = vcombine.high %v8315, %v8403
        %v8624 = vunpack.c.l.s4 1983009808
        %v8625 = vunpack.c.0.s8 %v8624
        %v8626 = vlaneseq
        %v8627 = vshrl.u32 %v8626, 7
        %v8628 = vsub.s32 %v8625, %v8627
        %v8629 = vrot.slane %v8621, %v8628
        %v8631 = vunpack.c.l.s4 1983009808
        %v8632 = vunpack.c.0.s8 %v8631
        %v8633 = vlaneseq
        %v8634 = vshrl.u32 %v8633, 7
        %v8635 = vsub.s32 %v8632, %v8634
        %v8636 = vrot.slane %v8622, %v8635
        %v8637 = vcombine.low %v8359, %v8447
        %v8638 = vcombine.high %v8359, %v8447
        %v8640 = vunpack.c.l.s4 1983009808
        %v8641 = vunpack.c.0.s8 %v8640
        %v8642 = vlaneseq
        %v8643 = vshrl.u32 %v8642, 7
        %v8644 = vsub.s32 %v8641, %v8643
        %v8645 = vrot.slane %v8637, %v8644
        %v8647 = vunpack.c.l.s4 1983009808
        %v8648 = vunpack.c.0.s8 %v8647
        %v8649 = vlaneseq
        %v8650 = vshrl.u32 %v8649, 7
        %v8651 = vsub.s32 %v8648, %v8650
        %v8652 = vrot.slane %v8638, %v8651
        %v8653 = vcombine.low %v8597, %v8613
        %v8654 = vcombine.high %v8597, %v8613
        %v8656 = vunpack.c.l.s4 1934713408
        %v8657 = vunpack.c.0.s8 %v8656
        %v8658 = vlaneseq
        %v8659 = vshrl.u32 %v8658, 7
        %v8660 = vsub.s32 %v8657, %v8659
        %v8661 = vrot.slane %v8653, %v8660
        %v8663 = vunpack.c.l.s4 1934713408
        %v8664 = vunpack.c.0.s8 %v8663
        %v8665 = vlaneseq
        %v8666 = vshrl.u32 %v8665, 7
        %v8667 = vsub.s32 %v8664, %v8666
        %v8668 = vrot.slane %v8654, %v8667
        %v8669 = vcombine.low %v8604, %v8620
        %v8670 = vcombine.high %v8604, %v8620
        %v8672 = vunpack.c.l.s4 1934713408
        %v8673 = vunpack.c.0.s8 %v8672
        %v8674 = vlaneseq
        %v8675 = vshrl.u32 %v8674, 7
        %v8676 = vsub.s32 %v8673, %v8675
        %v8677 = vrot.slane %v8669, %v8676
        %v8679 = vunpack.c.l.s4 1934713408
        %v8680 = vunpack.c.0.s8 %v8679
        %v8681 = vlaneseq
        %v8682 = vshrl.u32 %v8681, 7
        %v8683 = vsub.s32 %v8680, %v8682
        %v8684 = vrot.slane %v8670, %v8683
        %v8685 = vcombine.low %v8629, %v8645
        %v8686 = vcombine.high %v8629, %v8645
        %v8688 = vunpack.c.l.s4 1934713408
        %v8689 = vunpack.c.0.s8 %v8688
        %v8690 = vlaneseq
        %v8691 = vshrl.u32 %v8690, 7
        %v8692 = vsub.s32 %v8689, %v8691
        %v8693 = vrot.slane %v8685, %v8692
        %v8695 = vunpack.c.l.s4 1934713408
        %v8696 = vunpack.c.0.s8 %v8695
        %v8697 = vlaneseq
        %v8698 = vshrl.u32 %v8697, 7
        %v8699 = vsub.s32 %v8696, %v8698
        %v8700 = vrot.slane %v8686, %v8699
        %v8701 = vcombine.low %v8636, %v8652
        %v8702 = vcombine.high %v8636, %v8652
        %v8704 = vunpack.c.l.s4 1934713408
        %v8705 = vunpack.c.0.s8 %v8704
        %v8706 = vlaneseq
        %v8707 = vshrl.u32 %v8706, 7
        %v8708 = vsub.s32 %v8705, %v8707
        %v8709 = vrot.slane %v8701, %v8708
        %v8711 = vunpack.c.l.s4 1934713408
        %v8712 = vunpack.c.0.s8 %v8711
        %v8713 = vlaneseq
        %v8714 = vshrl.u32 %v8713, 7
        %v8715 = vsub.s32 %v8712, %v8714
        %v8716 = vrot.slane %v8702, %v8715
        %v8717 = vcombine.low %v8661, %v8693
        %v8718 = vcombine.high %v8661, %v8693
        %v8719 = vcombine.low %v8668, %v8700
        %v8720 = vcombine.high %v8668, %v8700
        %v8721 = vcombine.low %v8677, %v8709
        %v8722 = vcombine.high %v8677, %v8709
        %v8723 = vcombine.low %v8684, %v8716
        %v8724 = vcombine.high %v8684, %v8716
        %v8725 = vcombine.low %v7790, %v7878
        %v8726 = vcombine.high %v7790, %v7878
        %v8728 = vunpack.c.l.s4 1983009808
        %v8729 = vunpack.c.0.s8 %v8728
        %v8730 = vlaneseq
        %v8731 = vshrl.u32 %v8730, 7
        %v8732 = vsub.s32 %v8729, %v8731
        %v8733 = vrot.slane %v8725, %v8732
        %v8735 = vunpack.c.l.s4 1983009808
        %v8736 = vunpack.c.0.s8 %v8735
        %v8737 = vlaneseq
        %v8738 = vshrl.u32 %v8737, 7
        %v8739 = vsub.s32 %v8736, %v8738
        %v8740 = vrot.slane %v8726, %v8739
        %v8741 = vcombine.low %v7834, %v7922
        %v8742 = vcombine.high %v7834, %v7922
        %v8744 = vunpack.c.l.s4 1983009808
        %v8745 = vunpack.c.0.s8 %v8744
        %v8746 = vlaneseq
        %v8747 = vshrl.u32 %v8746, 7
        %v8748 = vsub.s32 %v8745, %v8747
        %v8749 = vrot.slane %v8741, %v8748
        %v8751 = vunpack.c.l.s4 1983009808
        %v8752 = vunpack.c.0.s8 %v8751
        %v8753 = vlaneseq
        %v8754 = vshrl.u32 %v8753, 7
        %v8755 = vsub.s32 %v8752, %v8754
        %v8756 = vrot.slane %v8742, %v8755
        %v8757 = vcombine.low %v7966, %v8054
        %v8758 = vcombine.high %v7966, %v8054
        %v8760 = vunpack.c.l.s4 1983009808
        %v8761 = vunpack.c.0.s8 %v8760
        %v8762 = vlaneseq
        %v8763 = vshrl.u32 %v8762, 7
        %v8764 = vsub.s32 %v8761, %v8763
        %v8765 = vrot.slane %v8757, %v8764
        %v8767 = vunpack.c.l.s4 1983009808
        %v8768 = vunpack.c.0.s8 %v8767
        %v8769 = vlaneseq
        %v8770 = vshrl.u32 %v8769, 7
        %v8771 = vsub.s32 %v8768, %v8770
        %v8772 = vrot.slane %v8758, %v8771
        %v8773 = vcombine.low %v8010, %v8098
        %v8774 = vcombine.high %v8010, %v8098
        %v8776 = vunpack.c.l.s4 1983009808
        %v8777 = vunpack.c.0.s8 %v8776
        %v8778 = vlaneseq
        %v8779 = vshrl.u32 %v8778, 7
        %v8780 = vsub.s32 %v8777, %v8779
        %v8781 = vrot.slane %v8773, %v8780
        %v8783 = vunpack.c.l.s4 1983009808
        %v8784 = vunpack.c.0.s8 %v8783
        %v8785 = vlaneseq
        %v8786 = vshrl.u32 %v8785, 7
        %v8787 = vsub.s32 %v8784, %v8786
        %v8788 = vrot.slane %v8774, %v8787
        %v8789 = vcombine.low %v8733, %v8749
        %v8790 = vcombine.high %v8733, %v8749
        %v8792 = vunpack.c.l.s4 1934713408
        %v8793 = vunpack.c.0.s8 %v8792
        %v8794 = vlaneseq
        %v8795 = vshrl.u32 %v8794, 7
        %v8796 = vsub.s32 %v8793, %v8795
        %v8797 = vrot.slane %v8789, %v8796
        %v8799 = vunpack.c.l.s4 1934713408
        %v8800 = vunpack.c.0.s8 %v8799
        %v8801 = vlaneseq
        %v8802 = vshrl.u32 %v8801, 7
        %v8803 = vsub.s32 %v8800, %v8802
        %v8804 = vrot.slane %v8790, %v8803
        %v8805 = vcombine.low %v8740, %v8756
        %v8806 = vcombine.high %v8740, %v8756
        %v8808 = vunpack.c.l.s4 1934713408
        %v8809 = vunpack.c.0.s8 %v8808
        %v8810 = vlaneseq
        %v8811 = vshrl.u32 %v8810, 7
        %v8812 = vsub.s32 %v8809, %v8811
        %v8813 = vrot.slane %v8805, %v8812
        %v8815 = vunpack.c.l.s4 1934713408
        %v8816 = vunpack.c.0.s8 %v8815
        %v8817 = vlaneseq
        %v8818 = vshrl.u32 %v8817, 7
        %v8819 = vsub.s32 %v8816, %v8818
        %v8820 = vrot.slane %v8806, %v8819
        %v8821 = vcombine.low %v8765, %v8781
        %v8822 = vcombine.high %v8765, %v8781
        %v8824 = vunpack.c.l.s4 1934713408
        %v8825 = vunpack.c.0.s8 %v8824
        %v8826 = vlaneseq
        %v8827 = vshrl.u32 %v8826, 7
        %v8828 = vsub.s32 %v8825, %v8827
        %v8829 = vrot.slane %v8821, %v8828
        %v8831 = vunpack.c.l.s4 1934713408
        %v8832 = vunpack.c.0.s8 %v8831
        %v8833 = vlaneseq
        %v8834 = vshrl.u32 %v8833, 7
        %v8835 = vsub.s32 %v8832, %v8834
        %v8836 = vrot.slane %v8822, %v8835
        %v8837 = vcombine.low %v8772, %v8788
        %v8838 = vcombine.high %v8772, %v8788
        %v8840 = vunpack.c.l.s4 1934713408
        %v8841 = vunpack.c.0.s8 %v8840
        %v8842 = vlaneseq
        %v8843 = vshrl.u32 %v8842, 7
        %v8844 = vsub.s32 %v8841, %v8843
        %v8845 = vrot.slane %v8837, %v8844
        %v8847 = vunpack.c.l.s4 1934713408
        %v8848 = vunpack.c.0.s8 %v8847
        %v8849 = vlaneseq
        %v8850 = vshrl.u32 %v8849, 7
        %v8851 = vsub.s32 %v8848, %v8850
        %v8852 = vrot.slane %v8838, %v8851
        %v8853 = vcombine.low %v8797, %v8829
        %v8854 = vcombine.high %v8797, %v8829
        %v8855 = vcombine.low %v8804, %v8836
        %v8856 = vcombine.high %v8804, %v8836
        %v8857 = vcombine.low %v8813, %v8845
        %v8858 = vcombine.high %v8813, %v8845
        %v8859 = vcombine.low %v8820, %v8852
        %v8860 = vcombine.high %v8820, %v8852
        %v8861 = vcombine.low %v8142, %v8230
        %v8862 = vcombine.high %v8142, %v8230
        %v8864 = vunpack.c.l.s4 1983009808
        %v8865 = vunpack.c.0.s8 %v8864
        %v8866 = vlaneseq
        %v8867 = vshrl.u32 %v8866, 7
        %v8868 = vsub.s32 %v8865, %v8867
        %v8869 = vrot.slane %v8861, %v8868
        %v8871 = vunpack.c.l.s4 1983009808
        %v8872 = vunpack.c.0.s8 %v8871
        %v8873 = vlaneseq
        %v8874 = vshrl.u32 %v8873, 7
        %v8875 = vsub.s32 %v8872, %v8874
        %v8876 = vrot.slane %v8862, %v8875
        %v8877 = vcombine.low %v8186, %v8274
        %v8878 = vcombine.high %v8186, %v8274
        %v8880 = vunpack.c.l.s4 1983009808
        %v8881 = vunpack.c.0.s8 %v8880
        %v8882 = vlaneseq
        %v8883 = vshrl.u32 %v8882, 7
        %v8884 = vsub.s32 %v8881, %v8883
        %v8885 = vrot.slane %v8877, %v8884
        %v8887 = vunpack.c.l.s4 1983009808
        %v8888 = vunpack.c.0.s8 %v8887
        %v8889 = vlaneseq
        %v8890 = vshrl.u32 %v8889, 7
        %v8891 = vsub.s32 %v8888, %v8890
        %v8892 = vrot.slane %v8878, %v8891
        %v8893 = vcombine.low %v8318, %v8406
        %v8894 = vcombine.high %v8318, %v8406
        %v8896 = vunpack.c.l.s4 1983009808
        %v8897 = vunpack.c.0.s8 %v8896
        %v8898 = vlaneseq
        %v8899 = vshrl.u32 %v8898, 7
        %v8900 = vsub.s32 %v8897, %v8899
        %v8901 = vrot.slane %v8893, %v8900
        %v8903 = vunpack.c.l.s4 1983009808
        %v8904 = vunpack.c.0.s8 %v8903
        %v8905 = vlaneseq
        %v8906 = vshrl.u32 %v8905, 7
        %v8907 = vsub.s32 %v8904, %v8906
        %v8908 = vrot.slane %v8894, %v8907
        %v8909 = vcombine.low %v8362, %v8450
        %v8910 = vcombine.high %v8362, %v8450
        %v8912 = vunpack.c.l.s4 1983009808
        %v8913 = vunpack.c.0.s8 %v8912
        %v8914 = vlaneseq
        %v8915 = vshrl.u32 %v8914, 7
        %v8916 = vsub.s32 %v8913, %v8915
        %v8917 = vrot.slane %v8909, %v8916
        %v8919 = vunpack.c.l.s4 1983009808
        %v8920 = vunpack.c.0.s8 %v8919
        %v8921 = vlaneseq
        %v8922 = vshrl.u32 %v8921, 7
        %v8923 = vsub.s32 %v8920, %v8922
        %v8924 = vrot.slane %v8910, %v8923
        %v8925 = vcombine.low %v8869, %v8885
        %v8926 = vcombine.high %v8869, %v8885
        %v8928 = vunpack.c.l.s4 1934713408
        %v8929 = vunpack.c.0.s8 %v8928
        %v8930 = vlaneseq
        %v8931 = vshrl.u32 %v8930, 7
        %v8932 = vsub.s32 %v8929, %v8931
        %v8933 = vrot.slane %v8925, %v8932
        %v8935 = vunpack.c.l.s4 1934713408
        %v8936 = vunpack.c.0.s8 %v8935
        %v8937 = vlaneseq
        %v8938 = vshrl.u32 %v8937, 7
        %v8939 = vsub.s32 %v8936, %v8938
        %v8940 = vrot.slane %v8926, %v8939
        %v8941 = vcombine.low %v8876, %v8892
        %v8942 = vcombine.high %v8876, %v8892
        %v8944 = vunpack.c.l.s4 1934713408
        %v8945 = vunpack.c.0.s8 %v8944
        %v8946 = vlaneseq
        %v8947 = vshrl.u32 %v8946, 7
        %v8948 = vsub.s32 %v8945, %v8947
        %v8949 = vrot.slane %v8941, %v8948
        %v8951 = vunpack.c.l.s4 1934713408
        %v8952 = vunpack.c.0.s8 %v8951
        %v8953 = vlaneseq
        %v8954 = vshrl.u32 %v8953, 7
        %v8955 = vsub.s32 %v8952, %v8954
        %v8956 = vrot.slane %v8942, %v8955
        %v8957 = vcombine.low %v8901, %v8917
        %v8958 = vcombine.high %v8901, %v8917
        %v8960 = vunpack.c.l.s4 1934713408
        %v8961 = vunpack.c.0.s8 %v8960
        %v8962 = vlaneseq
        %v8963 = vshrl.u32 %v8962, 7
        %v8964 = vsub.s32 %v8961, %v8963
        %v8965 = vrot.slane %v8957, %v8964
        %v8967 = vunpack.c.l.s4 1934713408
        %v8968 = vunpack.c.0.s8 %v8967
        %v8969 = vlaneseq
        %v8970 = vshrl.u32 %v8969, 7
        %v8971 = vsub.s32 %v8968, %v8970
        %v8972 = vrot.slane %v8958, %v8971
        %v8973 = vcombine.low %v8908, %v8924
        %v8974 = vcombine.high %v8908, %v8924
        %v8976 = vunpack.c.l.s4 1934713408
        %v8977 = vunpack.c.0.s8 %v8976
        %v8978 = vlaneseq
        %v8979 = vshrl.u32 %v8978, 7
        %v8980 = vsub.s32 %v8977, %v8979
        %v8981 = vrot.slane %v8973, %v8980
        %v8983 = vunpack.c.l.s4 1934713408
        %v8984 = vunpack.c.0.s8 %v8983
        %v8985 = vlaneseq
        %v8986 = vshrl.u32 %v8985, 7
        %v8987 = vsub.s32 %v8984, %v8986
        %v8988 = vrot.slane %v8974, %v8987
        %v8989 = vcombine.low %v8933, %v8965
        %v8990 = vcombine.high %v8933, %v8965
        %v8991 = vcombine.low %v8940, %v8972
        %v8992 = vcombine.high %v8940, %v8972
        %v8993 = vcombine.low %v8949, %v8981
        %v8994 = vcombine.high %v8949, %v8981
        %v8995 = vcombine.low %v8956, %v8988
        %v8996 = vcombine.high %v8956, %v8988
        %v8997 = vpack.c.bf16 %v7060, %v7058
        %v8998 = vpack.c.bf16 %v7064, %v7062
        %v8999 = vpack.c.bf16 %v7068, %v7066
        %v9000 = vpack.c.bf16 %v7072, %v7070
        %v9001 = vpack.c.bf16 %v7076, %v7074
        %v9002 = vpack.c.bf16 %v7080, %v7078
        %v9003 = vpack.c.bf16 %v7084, %v7082
        %v9004 = vpack.c.bf16 %v7088, %v7086
        %v9005 = vpack.c.bf16 %v7092, %v7090
        %v9006 = vpack.c.bf16 %v7096, %v7094
        %v9007 = vpack.c.bf16 %v7100, %v7098
        %v9008 = vpack.c.bf16 %v7104, %v7102
        %v9009 = vpack.c.bf16 %v7108, %v7106
        %v9010 = vpack.c.bf16 %v7112, %v7110
        %v9011 = vpack.c.bf16 %v7116, %v7114
        %v9012 = vpack.c.bf16 %v7120, %v7118
        %v9014 = vsel %vm5925, %v8997, 0
        %9016 = vmatprep.subr.bf16.mxu0 0
        %9017 = vmatpush1.bf16.msra.mxu0 %v2838
        %9018 = vmatprep.subr.bf16.mxu0 0
        %9019 = vmatpush1.bf16.msra.mxu0 0
        %9020 = vmatprep.subr.bf16.mxu0 0
        %9021 = vmatpush1.bf16.msra.mxu0 0
        %9022 = vmatprep.subr.bf16.mxu0 0
        %9023 = vmatpush1.bf16.msra.mxu0 0
        %9024 = vmatprep.subr.bf16.mxu0 0
        %9025 = vmatpush1.bf16.msra.mxu0 0
        %9026 = vmatprep.subr.bf16.mxu0 0
        %9027 = vmatpush1.bf16.msra.mxu0 0
        %9028 = vmatprep.subr.bf16.mxu0 0
        %9029 = vmatpush1.bf16.msra.mxu0 0
        %9030 = vmatprep.subr.bf16.mxu0 0
        %9031 = vmatpush1.bf16.msra.mxu0 0
        %9032 = vmatprep.subr.bf16.mxu0 0
        %9033 = vmatpush1.bf16.msra.mxu0 0
        %9034 = vmatprep.subr.bf16.mxu0 0
        %9035 = vmatpush1.bf16.msra.mxu0 0
        %9036 = vmatprep.subr.bf16.mxu0 0
        %9037 = vmatpush1.bf16.msra.mxu0 0
        %9038 = vmatprep.subr.bf16.mxu0 0
        %9039 = vmatpush1.bf16.msra.mxu0 0
        %9040 = vmatprep.subr.bf16.mxu0 0
        %9041 = vmatpush1.bf16.msra.mxu0 0
        %9042 = vmatprep.subr.bf16.mxu0 0
        %9043 = vmatpush1.bf16.msra.mxu0 0
        %9044 = vmatprep.subr.bf16.mxu0 0
        %9045 = vmatpush1.bf16.msra.mxu0 0
        %9046 = vmatprep.subr.bf16.mxu0 0
        %9047 = vmatpush1.bf16.msra.mxu0 0
        %9048 = vmatprep.mubr.bf16.mxu0 0
        %9049 = vmatmul.mubr.bf16.gmra.mrb[0].mxu0 %v9014
        %v9050 = vpop.f32.mrb[0].mxu0
        %v9051 = vadd.f32 0.0, %v9050
        %v9052 = vpop.f32.mrb[0].mxu0
        %v9053 = vpop.f32.mrb[0].mxu0
        %v9054 = vadd.f32 0.0, %v9053
        %v9055 = vpop.f32.mrb[0].mxu0
        %9056 = vdwg.mxu0
        %v9058 = vsel %vm5925, %v8998, 0
        %9060 = vmatprep.subr.bf16.mxu0 0
        %9061 = vmatpush1.bf16.msra.mxu0 %v2839
        %9062 = vmatprep.subr.bf16.mxu0 0
        %9063 = vmatpush1.bf16.msra.mxu0 0
        %9064 = vmatprep.subr.bf16.mxu0 0
        %9065 = vmatpush1.bf16.msra.mxu0 0
        %9066 = vmatprep.subr.bf16.mxu0 0
        %9067 = vmatpush1.bf16.msra.mxu0 0
        %9068 = vmatprep.subr.bf16.mxu0 0
        %9069 = vmatpush1.bf16.msra.mxu0 0
        %9070 = vmatprep.subr.bf16.mxu0 0
        %9071 = vmatpush1.bf16.msra.mxu0 0
        %9072 = vmatprep.subr.bf16.mxu0 0
        %9073 = vmatpush1.bf16.msra.mxu0 0
        %9074 = vmatprep.subr.bf16.mxu0 0
        %9075 = vmatpush1.bf16.msra.mxu0 0
        %9076 = vmatprep.subr.bf16.mxu0 0
        %9077 = vmatpush1.bf16.msra.mxu0 0
        %9078 = vmatprep.subr.bf16.mxu0 0
        %9079 = vmatpush1.bf16.msra.mxu0 0
        %9080 = vmatprep.subr.bf16.mxu0 0
        %9081 = vmatpush1.bf16.msra.mxu0 0
        %9082 = vmatprep.subr.bf16.mxu0 0
        %9083 = vmatpush1.bf16.msra.mxu0 0
        %9084 = vmatprep.subr.bf16.mxu0 0
        %9085 = vmatpush1.bf16.msra.mxu0 0
        %9086 = vmatprep.subr.bf16.mxu0 0
        %9087 = vmatpush1.bf16.msra.mxu0 0
        %9088 = vmatprep.subr.bf16.mxu0 0
        %9089 = vmatpush1.bf16.msra.mxu0 0
        %9090 = vmatprep.subr.bf16.mxu0 0
        %9091 = vmatpush1.bf16.msra.mxu0 0
        %9092 = vmatprep.mubr.bf16.mxu0 0
        %9093 = vmatmul.mubr.bf16.gmra.mrb[0].mxu0 %v9058
        %v9094 = vpop.f32.mrb[0].mxu0
        %v9095 = vadd.f32 0.0, %v9094
        %v9096 = vpop.f32.mrb[0].mxu0
        %v9097 = vpop.f32.mrb[0].mxu0
        %v9098 = vadd.f32 0.0, %v9097
        %v9099 = vpop.f32.mrb[0].mxu0
        %9100 = vdwg.mxu0
        %v9102 = vsel %vm5925, %v8999, 0
        %9104 = vmatprep.subr.bf16.mxu0 0
        %9105 = vmatpush1.bf16.msra.mxu0 %v2840
        %9106 = vmatprep.subr.bf16.mxu0 0
        %9107 = vmatpush1.bf16.msra.mxu0 0
        %9108 = vmatprep.subr.bf16.mxu0 0
        %9109 = vmatpush1.bf16.msra.mxu0 0
        %9110 = vmatprep.subr.bf16.mxu0 0
        %9111 = vmatpush1.bf16.msra.mxu0 0
        %9112 = vmatprep.subr.bf16.mxu0 0
        %9113 = vmatpush1.bf16.msra.mxu0 0
        %9114 = vmatprep.subr.bf16.mxu0 0
        %9115 = vmatpush1.bf16.msra.mxu0 0
        %9116 = vmatprep.subr.bf16.mxu0 0
        %9117 = vmatpush1.bf16.msra.mxu0 0
        %9118 = vmatprep.subr.bf16.mxu0 0
        %9119 = vmatpush1.bf16.msra.mxu0 0
        %9120 = vmatprep.subr.bf16.mxu0 0
        %9121 = vmatpush1.bf16.msra.mxu0 0
        %9122 = vmatprep.subr.bf16.mxu0 0
        %9123 = vmatpush1.bf16.msra.mxu0 0
        %9124 = vmatprep.subr.bf16.mxu0 0
        %9125 = vmatpush1.bf16.msra.mxu0 0
        %9126 = vmatprep.subr.bf16.mxu0 0
        %9127 = vmatpush1.bf16.msra.mxu0 0
        %9128 = vmatprep.subr.bf16.mxu0 0
        %9129 = vmatpush1.bf16.msra.mxu0 0
        %9130 = vmatprep.subr.bf16.mxu0 0
        %9131 = vmatpush1.bf16.msra.mxu0 0
        %9132 = vmatprep.subr.bf16.mxu0 0
        %9133 = vmatpush1.bf16.msra.mxu0 0
        %9134 = vmatprep.subr.bf16.mxu0 0
        %9135 = vmatpush1.bf16.msra.mxu0 0
        %9136 = vmatprep.mubr.bf16.mxu0 0
        %9137 = vmatmul.mubr.bf16.gmra.mrb[0].mxu0 %v9102
        %v9138 = vpop.f32.mrb[0].mxu0
        %v9139 = vadd.f32 0.0, %v9138
        %v9140 = vpop.f32.mrb[0].mxu0
        %v9141 = vpop.f32.mrb[0].mxu0
        %v9142 = vadd.f32 0.0, %v9141
        %v9143 = vpop.f32.mrb[0].mxu0
        %9144 = vdwg.mxu0
        %v9146 = vsel %vm5925, %v9000, 0
        %9148 = vmatprep.subr.bf16.mxu0 0
        %9149 = vmatpush1.bf16.msra.mxu0 %v2841
        %9150 = vmatprep.subr.bf16.mxu0 0
        %9151 = vmatpush1.bf16.msra.mxu0 0
        %9152 = vmatprep.subr.bf16.mxu0 0
        %9153 = vmatpush1.bf16.msra.mxu0 0
        %9154 = vmatprep.subr.bf16.mxu0 0
        %9155 = vmatpush1.bf16.msra.mxu0 0
        %9156 = vmatprep.subr.bf16.mxu0 0
        %9157 = vmatpush1.bf16.msra.mxu0 0
        %9158 = vmatprep.subr.bf16.mxu0 0
        %9159 = vmatpush1.bf16.msra.mxu0 0
        %9160 = vmatprep.subr.bf16.mxu0 0
        %9161 = vmatpush1.bf16.msra.mxu0 0
        %9162 = vmatprep.subr.bf16.mxu0 0
        %9163 = vmatpush1.bf16.msra.mxu0 0
        %9164 = vmatprep.subr.bf16.mxu0 0
        %9165 = vmatpush1.bf16.msra.mxu0 0
        %9166 = vmatprep.subr.bf16.mxu0 0
        %9167 = vmatpush1.bf16.msra.mxu0 0
        %9168 = vmatprep.subr.bf16.mxu0 0
        %9169 = vmatpush1.bf16.msra.mxu0 0
        %9170 = vmatprep.subr.bf16.mxu0 0
        %9171 = vmatpush1.bf16.msra.mxu0 0
        %9172 = vmatprep.subr.bf16.mxu0 0
        %9173 = vmatpush1.bf16.msra.mxu0 0
        %9174 = vmatprep.subr.bf16.mxu0 0
        %9175 = vmatpush1.bf16.msra.mxu0 0
        %9176 = vmatprep.subr.bf16.mxu0 0
        %9177 = vmatpush1.bf16.msra.mxu0 0
        %9178 = vmatprep.subr.bf16.mxu0 0
        %9179 = vmatpush1.bf16.msra.mxu0 0
        %9180 = vmatprep.mubr.bf16.mxu0 0
        %9181 = vmatmul.mubr.bf16.gmra.mrb[0].mxu0 %v9146
        %v9182 = vpop.f32.mrb[0].mxu0
        %v9183 = vadd.f32 0.0, %v9182
        %v9184 = vpop.f32.mrb[0].mxu0
        %v9185 = vpop.f32.mrb[0].mxu0
        %v9186 = vadd.f32 0.0, %v9185
        %v9187 = vpop.f32.mrb[0].mxu0
        %9188 = vdwg.mxu0
        %v9190 = vsel %vm5925, %v9001, 0
        %9192 = vmatprep.subr.bf16.mxu0 0
        %9193 = vmatpush1.bf16.msra.mxu0 %v2842
        %9194 = vmatprep.subr.bf16.mxu0 0
        %9195 = vmatpush1.bf16.msra.mxu0 0
        %9196 = vmatprep.subr.bf16.mxu0 0
        %9197 = vmatpush1.bf16.msra.mxu0 0
        %9198 = vmatprep.subr.bf16.mxu0 0
        %9199 = vmatpush1.bf16.msra.mxu0 0
        %9200 = vmatprep.subr.bf16.mxu0 0
        %9201 = vmatpush1.bf16.msra.mxu0 0
        %9202 = vmatprep.subr.bf16.mxu0 0
        %9203 = vmatpush1.bf16.msra.mxu0 0
        %9204 = vmatprep.subr.bf16.mxu0 0
        %9205 = vmatpush1.bf16.msra.mxu0 0
        %9206 = vmatprep.subr.bf16.mxu0 0
        %9207 = vmatpush1.bf16.msra.mxu0 0
        %9208 = vmatprep.subr.bf16.mxu0 0
        %9209 = vmatpush1.bf16.msra.mxu0 0
        %9210 = vmatprep.subr.bf16.mxu0 0
        %9211 = vmatpush1.bf16.msra.mxu0 0
        %9212 = vmatprep.subr.bf16.mxu0 0
        %9213 = vmatpush1.bf16.msra.mxu0 0
        %9214 = vmatprep.subr.bf16.mxu0 0
        %9215 = vmatpush1.bf16.msra.mxu0 0
        %9216 = vmatprep.subr.bf16.mxu0 0
        %9217 = vmatpush1.bf16.msra.mxu0 0
        %9218 = vmatprep.subr.bf16.mxu0 0
        %9219 = vmatpush1.bf16.msra.mxu0 0
        %9220 = vmatprep.subr.bf16.mxu0 0
        %9221 = vmatpush1.bf16.msra.mxu0 0
        %9222 = vmatprep.subr.bf16.mxu0 0
        %9223 = vmatpush1.bf16.msra.mxu0 0
        %9224 = vmatprep.mubr.bf16.mxu0 0
        %9225 = vmatmul.mubr.bf16.gmra.mrb[0].mxu0 %v9190
        %v9226 = vpop.f32.mrb[0].mxu0
        %v9227 = vadd.f32 0.0, %v9226
        %v9228 = vpop.f32.mrb[0].mxu0
        %v9229 = vpop.f32.mrb[0].mxu0
        %v9230 = vadd.f32 0.0, %v9229
        %v9231 = vpop.f32.mrb[0].mxu0
        %9232 = vdwg.mxu0
        %v9234 = vsel %vm5925, %v9002, 0
        %9236 = vmatprep.subr.bf16.mxu0 0
        %9237 = vmatpush1.bf16.msra.mxu0 %v2843
        %9238 = vmatprep.subr.bf16.mxu0 0
        %9239 = vmatpush1.bf16.msra.mxu0 0
        %9240 = vmatprep.subr.bf16.mxu0 0
        %9241 = vmatpush1.bf16.msra.mxu0 0
        %9242 = vmatprep.subr.bf16.mxu0 0
        %9243 = vmatpush1.bf16.msra.mxu0 0
        %9244 = vmatprep.subr.bf16.mxu0 0
        %9245 = vmatpush1.bf16.msra.mxu0 0
        %9246 = vmatprep.subr.bf16.mxu0 0
        %9247 = vmatpush1.bf16.msra.mxu0 0
        %9248 = vmatprep.subr.bf16.mxu0 0
        %9249 = vmatpush1.bf16.msra.mxu0 0
        %9250 = vmatprep.subr.bf16.mxu0 0
        %9251 = vmatpush1.bf16.msra.mxu0 0
        %9252 = vmatprep.subr.bf16.mxu0 0
        %9253 = vmatpush1.bf16.msra.mxu0 0
        %9254 = vmatprep.subr.bf16.mxu0 0
        %9255 = vmatpush1.bf16.msra.mxu0 0
        %9256 = vmatprep.subr.bf16.mxu0 0
        %9257 = vmatpush1.bf16.msra.mxu0 0
        %9258 = vmatprep.subr.bf16.mxu0 0
        %9259 = vmatpush1.bf16.msra.mxu0 0
        %9260 = vmatprep.subr.bf16.mxu0 0
        %9261 = vmatpush1.bf16.msra.mxu0 0
        %9262 = vmatprep.subr.bf16.mxu0 0
        %9263 = vmatpush1.bf16.msra.mxu0 0
        %9264 = vmatprep.subr.bf16.mxu0 0
        %9265 = vmatpush1.bf16.msra.mxu0 0
        %9266 = vmatprep.subr.bf16.mxu0 0
        %9267 = vmatpush1.bf16.msra.mxu0 0
        %9268 = vmatprep.mubr.bf16.mxu0 0
        %9269 = vmatmul.mubr.bf16.gmra.mrb[0].mxu0 %v9234
        %v9270 = vpop.f32.mrb[0].mxu0
        %v9271 = vadd.f32 0.0, %v9270
        %v9272 = vpop.f32.mrb[0].mxu0
        %v9273 = vpop.f32.mrb[0].mxu0
        %v9274 = vadd.f32 0.0, %v9273
        %v9275 = vpop.f32.mrb[0].mxu0
        %9276 = vdwg.mxu0
        %v9278 = vsel %vm5925, %v9003, 0
        %9280 = vmatprep.subr.bf16.mxu0 0
        %9281 = vmatpush1.bf16.msra.mxu0 %v2844
        %9282 = vmatprep.subr.bf16.mxu0 0
        %9283 = vmatpush1.bf16.msra.mxu0 0
        %9284 = vmatprep.subr.bf16.mxu0 0
        %9285 = vmatpush1.bf16.msra.mxu0 0
        %9286 = vmatprep.subr.bf16.mxu0 0
        %9287 = vmatpush1.bf16.msra.mxu0 0
        %9288 = vmatprep.subr.bf16.mxu0 0
        %9289 = vmatpush1.bf16.msra.mxu0 0
        %9290 = vmatprep.subr.bf16.mxu0 0
        %9291 = vmatpush1.bf16.msra.mxu0 0
        %9292 = vmatprep.subr.bf16.mxu0 0
        %9293 = vmatpush1.bf16.msra.mxu0 0
        %9294 = vmatprep.subr.bf16.mxu0 0
        %9295 = vmatpush1.bf16.msra.mxu0 0
        %9296 = vmatprep.subr.bf16.mxu0 0
        %9297 = vmatpush1.bf16.msra.mxu0 0
        %9298 = vmatprep.subr.bf16.mxu0 0
        %9299 = vmatpush1.bf16.msra.mxu0 0
        %9300 = vmatprep.subr.bf16.mxu0 0
        %9301 = vmatpush1.bf16.msra.mxu0 0
        %9302 = vmatprep.subr.bf16.mxu0 0
        %9303 = vmatpush1.bf16.msra.mxu0 0
        %9304 = vmatprep.subr.bf16.mxu0 0
        %9305 = vmatpush1.bf16.msra.mxu0 0
        %9306 = vmatprep.subr.bf16.mxu0 0
        %9307 = vmatpush1.bf16.msra.mxu0 0
        %9308 = vmatprep.subr.bf16.mxu0 0
        %9309 = vmatpush1.bf16.msra.mxu0 0
        %9310 = vmatprep.subr.bf16.mxu0 0
        %9311 = vmatpush1.bf16.msra.mxu0 0
        %9312 = vmatprep.mubr.bf16.mxu0 0
        %9313 = vmatmul.mubr.bf16.gmra.mrb[0].mxu0 %v9278
        %v9314 = vpop.f32.mrb[0].mxu0
        %v9315 = vadd.f32 0.0, %v9314
        %v9316 = vpop.f32.mrb[0].mxu0
        %v9317 = vpop.f32.mrb[0].mxu0
        %v9318 = vadd.f32 0.0, %v9317
        %v9319 = vpop.f32.mrb[0].mxu0
        %9320 = vdwg.mxu0
        %v9322 = vsel %vm5925, %v9004, 0
        %9324 = vmatprep.subr.bf16.mxu0 0
        %9325 = vmatpush1.bf16.msra.mxu0 %v2845
        %9326 = vmatprep.subr.bf16.mxu0 0
        %9327 = vmatpush1.bf16.msra.mxu0 0
        %9328 = vmatprep.subr.bf16.mxu0 0
        %9329 = vmatpush1.bf16.msra.mxu0 0
        %9330 = vmatprep.subr.bf16.mxu0 0
        %9331 = vmatpush1.bf16.msra.mxu0 0
        %9332 = vmatprep.subr.bf16.mxu0 0
        %9333 = vmatpush1.bf16.msra.mxu0 0
        %9334 = vmatprep.subr.bf16.mxu0 0
        %9335 = vmatpush1.bf16.msra.mxu0 0
        %9336 = vmatprep.subr.bf16.mxu0 0
        %9337 = vmatpush1.bf16.msra.mxu0 0
        %9338 = vmatprep.subr.bf16.mxu0 0
        %9339 = vmatpush1.bf16.msra.mxu0 0
        %9340 = vmatprep.subr.bf16.mxu0 0
        %9341 = vmatpush1.bf16.msra.mxu0 0
        %9342 = vmatprep.subr.bf16.mxu0 0
        %9343 = vmatpush1.bf16.msra.mxu0 0
        %9344 = vmatprep.subr.bf16.mxu0 0
        %9345 = vmatpush1.bf16.msra.mxu0 0
        %9346 = vmatprep.subr.bf16.mxu0 0
        %9347 = vmatpush1.bf16.msra.mxu0 0
        %9348 = vmatprep.subr.bf16.mxu0 0
        %9349 = vmatpush1.bf16.msra.mxu0 0
        %9350 = vmatprep.subr.bf16.mxu0 0
        %9351 = vmatpush1.bf16.msra.mxu0 0
        %9352 = vmatprep.subr.bf16.mxu0 0
        %9353 = vmatpush1.bf16.msra.mxu0 0
        %9354 = vmatprep.subr.bf16.mxu0 0
        %9355 = vmatpush1.bf16.msra.mxu0 0
        %9356 = vmatprep.mubr.bf16.mxu0 0
        %9357 = vmatmul.mubr.bf16.gmra.mrb[0].mxu0 %v9322
        %v9358 = vpop.f32.mrb[0].mxu0
        %v9359 = vadd.f32 0.0, %v9358
        %v9360 = vpop.f32.mrb[0].mxu0
        %v9361 = vpop.f32.mrb[0].mxu0
        %v9362 = vadd.f32 0.0, %v9361
        %v9363 = vpop.f32.mrb[0].mxu0
        %9364 = vdwg.mxu0
        %v9366 = vsel %vm5925, %v9005, 0
        %9368 = vmatprep.subr.bf16.mxu0 0
        %9369 = vmatpush1.bf16.msra.mxu0 %v2846
        %9370 = vmatprep.subr.bf16.mxu0 0
        %9371 = vmatpush1.bf16.msra.mxu0 0
        %9372 = vmatprep.subr.bf16.mxu0 0
        %9373 = vmatpush1.bf16.msra.mxu0 0
        %9374 = vmatprep.subr.bf16.mxu0 0
        %9375 = vmatpush1.bf16.msra.mxu0 0
        %9376 = vmatprep.subr.bf16.mxu0 0
        %9377 = vmatpush1.bf16.msra.mxu0 0
        %9378 = vmatprep.subr.bf16.mxu0 0
        %9379 = vmatpush1.bf16.msra.mxu0 0
        %9380 = vmatprep.subr.bf16.mxu0 0
        %9381 = vmatpush1.bf16.msra.mxu0 0
        %9382 = vmatprep.subr.bf16.mxu0 0
        %9383 = vmatpush1.bf16.msra.mxu0 0
        %9384 = vmatprep.subr.bf16.mxu0 0
        %9385 = vmatpush1.bf16.msra.mxu0 0
        %9386 = vmatprep.subr.bf16.mxu0 0
        %9387 = vmatpush1.bf16.msra.mxu0 0
        %9388 = vmatprep.subr.bf16.mxu0 0
        %9389 = vmatpush1.bf16.msra.mxu0 0
        %9390 = vmatprep.subr.bf16.mxu0 0
        %9391 = vmatpush1.bf16.msra.mxu0 0
        %9392 = vmatprep.subr.bf16.mxu0 0
        %9393 = vmatpush1.bf16.msra.mxu0 0
        %9394 = vmatprep.subr.bf16.mxu0 0
        %9395 = vmatpush1.bf16.msra.mxu0 0
        %9396 = vmatprep.subr.bf16.mxu0 0
        %9397 = vmatpush1.bf16.msra.mxu0 0
        %9398 = vmatprep.subr.bf16.mxu0 0
        %9399 = vmatpush1.bf16.msra.mxu0 0
        %9400 = vmatprep.mubr.bf16.mxu0 0
        %9401 = vmatmul.mubr.bf16.gmra.mrb[0].mxu0 %v9366
        %v9402 = vpop.f32.mrb[0].mxu0
        %v9403 = vadd.f32 0.0, %v9402
        %v9404 = vpop.f32.mrb[0].mxu0
        %v9405 = vpop.f32.mrb[0].mxu0
        %v9406 = vadd.f32 0.0, %v9405
        %v9407 = vpop.f32.mrb[0].mxu0
        %9408 = vdwg.mxu0
        %v9410 = vsel %vm5925, %v9006, 0
        %9412 = vmatprep.subr.bf16.mxu0 0
        %9413 = vmatpush1.bf16.msra.mxu0 %v2847
        %9414 = vmatprep.subr.bf16.mxu0 0
        %9415 = vmatpush1.bf16.msra.mxu0 0
        %9416 = vmatprep.subr.bf16.mxu0 0
        %9417 = vmatpush1.bf16.msra.mxu0 0
        %9418 = vmatprep.subr.bf16.mxu0 0
        %9419 = vmatpush1.bf16.msra.mxu0 0
        %9420 = vmatprep.subr.bf16.mxu0 0
        %9421 = vmatpush1.bf16.msra.mxu0 0
        %9422 = vmatprep.subr.bf16.mxu0 0
        %9423 = vmatpush1.bf16.msra.mxu0 0
        %9424 = vmatprep.subr.bf16.mxu0 0
        %9425 = vmatpush1.bf16.msra.mxu0 0
        %9426 = vmatprep.subr.bf16.mxu0 0
        %9427 = vmatpush1.bf16.msra.mxu0 0
        %9428 = vmatprep.subr.bf16.mxu0 0
        %9429 = vmatpush1.bf16.msra.mxu0 0
        %9430 = vmatprep.subr.bf16.mxu0 0
        %9431 = vmatpush1.bf16.msra.mxu0 0
        %9432 = vmatprep.subr.bf16.mxu0 0
        %9433 = vmatpush1.bf16.msra.mxu0 0
        %9434 = vmatprep.subr.bf16.mxu0 0
        %9435 = vmatpush1.bf16.msra.mxu0 0
        %9436 = vmatprep.subr.bf16.mxu0 0
        %9437 = vmatpush1.bf16.msra.mxu0 0
        %9438 = vmatprep.subr.bf16.mxu0 0
        %9439 = vmatpush1.bf16.msra.mxu0 0
        %9440 = vmatprep.subr.bf16.mxu0 0
        %9441 = vmatpush1.bf16.msra.mxu0 0
        %9442 = vmatprep.subr.bf16.mxu0 0
        %9443 = vmatpush1.bf16.msra.mxu0 0
        %9444 = vmatprep.mubr.bf16.mxu0 0
        %9445 = vmatmul.mubr.bf16.gmra.mrb[0].mxu0 %v9410
        %v9446 = vpop.f32.mrb[0].mxu0
        %v9447 = vadd.f32 0.0, %v9446
        %v9448 = vpop.f32.mrb[0].mxu0
        %v9449 = vpop.f32.mrb[0].mxu0
        %v9450 = vadd.f32 0.0, %v9449
        %v9451 = vpop.f32.mrb[0].mxu0
        %9452 = vdwg.mxu0
        %v9454 = vsel %vm5925, %v9007, 0
        %9456 = vmatprep.subr.bf16.mxu0 0
        %9457 = vmatpush1.bf16.msra.mxu0 %v2848
        %9458 = vmatprep.subr.bf16.mxu0 0
        %9459 = vmatpush1.bf16.msra.mxu0 0
        %9460 = vmatprep.subr.bf16.mxu0 0
        %9461 = vmatpush1.bf16.msra.mxu0 0
        %9462 = vmatprep.subr.bf16.mxu0 0
        %9463 = vmatpush1.bf16.msra.mxu0 0
        %9464 = vmatprep.subr.bf16.mxu0 0
        %9465 = vmatpush1.bf16.msra.mxu0 0
        %9466 = vmatprep.subr.bf16.mxu0 0
        %9467 = vmatpush1.bf16.msra.mxu0 0
        %9468 = vmatprep.subr.bf16.mxu0 0
        %9469 = vmatpush1.bf16.msra.mxu0 0
        %9470 = vmatprep.subr.bf16.mxu0 0
        %9471 = vmatpush1.bf16.msra.mxu0 0
        %9472 = vmatprep.subr.bf16.mxu0 0
        %9473 = vmatpush1.bf16.msra.mxu0 0
        %9474 = vmatprep.subr.bf16.mxu0 0
        %9475 = vmatpush1.bf16.msra.mxu0 0
        %9476 = vmatprep.subr.bf16.mxu0 0
        %9477 = vmatpush1.bf16.msra.mxu0 0
        %9478 = vmatprep.subr.bf16.mxu0 0
        %9479 = vmatpush1.bf16.msra.mxu0 0
        %9480 = vmatprep.subr.bf16.mxu0 0
        %9481 = vmatpush1.bf16.msra.mxu0 0
        %9482 = vmatprep.subr.bf16.mxu0 0
        %9483 = vmatpush1.bf16.msra.mxu0 0
        %9484 = vmatprep.subr.bf16.mxu0 0
        %9485 = vmatpush1.bf16.msra.mxu0 0
        %9486 = vmatprep.subr.bf16.mxu0 0
        %9487 = vmatpush1.bf16.msra.mxu0 0
        %9488 = vmatprep.mubr.bf16.mxu0 0
        %9489 = vmatmul.mubr.bf16.gmra.mrb[0].mxu0 %v9454
        %v9490 = vpop.f32.mrb[0].mxu0
        %v9491 = vadd.f32 0.0, %v9490
        %v9492 = vpop.f32.mrb[0].mxu0
        %v9493 = vpop.f32.mrb[0].mxu0
        %v9494 = vadd.f32 0.0, %v9493
        %v9495 = vpop.f32.mrb[0].mxu0
        %9496 = vdwg.mxu0
        %v9498 = vsel %vm5925, %v9008, 0
        %9500 = vmatprep.subr.bf16.mxu0 0
        %9501 = vmatpush1.bf16.msra.mxu0 %v2849
        %9502 = vmatprep.subr.bf16.mxu0 0
        %9503 = vmatpush1.bf16.msra.mxu0 0
        %9504 = vmatprep.subr.bf16.mxu0 0
        %9505 = vmatpush1.bf16.msra.mxu0 0
        %9506 = vmatprep.subr.bf16.mxu0 0
        %9507 = vmatpush1.bf16.msra.mxu0 0
        %9508 = vmatprep.subr.bf16.mxu0 0
        %9509 = vmatpush1.bf16.msra.mxu0 0
        %9510 = vmatprep.subr.bf16.mxu0 0
        %9511 = vmatpush1.bf16.msra.mxu0 0
        %9512 = vmatprep.subr.bf16.mxu0 0
        %9513 = vmatpush1.bf16.msra.mxu0 0
        %9514 = vmatprep.subr.bf16.mxu0 0
        %9515 = vmatpush1.bf16.msra.mxu0 0
        %9516 = vmatprep.subr.bf16.mxu0 0
        %9517 = vmatpush1.bf16.msra.mxu0 0
        %9518 = vmatprep.subr.bf16.mxu0 0
        %9519 = vmatpush1.bf16.msra.mxu0 0
        %9520 = vmatprep.subr.bf16.mxu0 0
        %9521 = vmatpush1.bf16.msra.mxu0 0
        %9522 = vmatprep.subr.bf16.mxu0 0
        %9523 = vmatpush1.bf16.msra.mxu0 0
        %9524 = vmatprep.subr.bf16.mxu0 0
        %9525 = vmatpush1.bf16.msra.mxu0 0
        %9526 = vmatprep.subr.bf16.mxu0 0
        %9527 = vmatpush1.bf16.msra.mxu0 0
        %9528 = vmatprep.subr.bf16.mxu0 0
        %9529 = vmatpush1.bf16.msra.mxu0 0
        %9530 = vmatprep.subr.bf16.mxu0 0
        %9531 = vmatpush1.bf16.msra.mxu0 0
        %9532 = vmatprep.mubr.bf16.mxu0 0
        %9533 = vmatmul.mubr.bf16.gmra.mrb[0].mxu0 %v9498
        %v9534 = vpop.f32.mrb[0].mxu0
        %v9535 = vadd.f32 0.0, %v9534
        %v9536 = vpop.f32.mrb[0].mxu0
        %v9537 = vpop.f32.mrb[0].mxu0
        %v9538 = vadd.f32 0.0, %v9537
        %v9539 = vpop.f32.mrb[0].mxu0
        %9540 = vdwg.mxu0
        %v9542 = vsel %vm5925, %v9009, 0
        %9544 = vmatprep.subr.bf16.mxu0 0
        %9545 = vmatpush1.bf16.msra.mxu0 %v2850
        %9546 = vmatprep.subr.bf16.mxu0 0
        %9547 = vmatpush1.bf16.msra.mxu0 0
        %9548 = vmatprep.subr.bf16.mxu0 0
        %9549 = vmatpush1.bf16.msra.mxu0 0
        %9550 = vmatprep.subr.bf16.mxu0 0
        %9551 = vmatpush1.bf16.msra.mxu0 0
        %9552 = vmatprep.subr.bf16.mxu0 0
        %9553 = vmatpush1.bf16.msra.mxu0 0
        %9554 = vmatprep.subr.bf16.mxu0 0
        %9555 = vmatpush1.bf16.msra.mxu0 0
        %9556 = vmatprep.subr.bf16.mxu0 0
        %9557 = vmatpush1.bf16.msra.mxu0 0
        %9558 = vmatprep.subr.bf16.mxu0 0
        %9559 = vmatpush1.bf16.msra.mxu0 0
        %9560 = vmatprep.subr.bf16.mxu0 0
        %9561 = vmatpush1.bf16.msra.mxu0 0
        %9562 = vmatprep.subr.bf16.mxu0 0
        %9563 = vmatpush1.bf16.msra.mxu0 0
        %9564 = vmatprep.subr.bf16.mxu0 0
        %9565 = vmatpush1.bf16.msra.mxu0 0
        %9566 = vmatprep.subr.bf16.mxu0 0
        %9567 = vmatpush1.bf16.msra.mxu0 0
        %9568 = vmatprep.subr.bf16.mxu0 0
        %9569 = vmatpush1.bf16.msra.mxu0 0
        %9570 = vmatprep.subr.bf16.mxu0 0
        %9571 = vmatpush1.bf16.msra.mxu0 0
        %9572 = vmatprep.subr.bf16.mxu0 0
        %9573 = vmatpush1.bf16.msra.mxu0 0
        %9574 = vmatprep.subr.bf16.mxu0 0
        %9575 = vmatpush1.bf16.msra.mxu0 0
        %9576 = vmatprep.mubr.bf16.mxu0 0
        %9577 = vmatmul.mubr.bf16.gmra.mrb[0].mxu0 %v9542
        %v9578 = vpop.f32.mrb[0].mxu0
        %v9579 = vadd.f32 0.0, %v9578
        %v9580 = vpop.f32.mrb[0].mxu0
        %v9581 = vpop.f32.mrb[0].mxu0
        %v9582 = vadd.f32 0.0, %v9581
        %v9583 = vpop.f32.mrb[0].mxu0
        %9584 = vdwg.mxu0
        %v9586 = vsel %vm5925, %v9010, 0
        %9588 = vmatprep.subr.bf16.mxu0 0
        %9589 = vmatpush1.bf16.msra.mxu0 %v2851
        %9590 = vmatprep.subr.bf16.mxu0 0
        %9591 = vmatpush1.bf16.msra.mxu0 0
        %9592 = vmatprep.subr.bf16.mxu0 0
        %9593 = vmatpush1.bf16.msra.mxu0 0
        %9594 = vmatprep.subr.bf16.mxu0 0
        %9595 = vmatpush1.bf16.msra.mxu0 0
        %9596 = vmatprep.subr.bf16.mxu0 0
        %9597 = vmatpush1.bf16.msra.mxu0 0
        %9598 = vmatprep.subr.bf16.mxu0 0
        %9599 = vmatpush1.bf16.msra.mxu0 0
        %9600 = vmatprep.subr.bf16.mxu0 0
        %9601 = vmatpush1.bf16.msra.mxu0 0
        %9602 = vmatprep.subr.bf16.mxu0 0
        %9603 = vmatpush1.bf16.msra.mxu0 0
        %9604 = vmatprep.subr.bf16.mxu0 0
        %9605 = vmatpush1.bf16.msra.mxu0 0
        %9606 = vmatprep.subr.bf16.mxu0 0
        %9607 = vmatpush1.bf16.msra.mxu0 0
        %9608 = vmatprep.subr.bf16.mxu0 0
        %9609 = vmatpush1.bf16.msra.mxu0 0
        %9610 = vmatprep.subr.bf16.mxu0 0
        %9611 = vmatpush1.bf16.msra.mxu0 0
        %9612 = vmatprep.subr.bf16.mxu0 0
        %9613 = vmatpush1.bf16.msra.mxu0 0
        %9614 = vmatprep.subr.bf16.mxu0 0
        %9615 = vmatpush1.bf16.msra.mxu0 0
        %9616 = vmatprep.subr.bf16.mxu0 0
        %9617 = vmatpush1.bf16.msra.mxu0 0
        %9618 = vmatprep.subr.bf16.mxu0 0
        %9619 = vmatpush1.bf16.msra.mxu0 0
        %9620 = vmatprep.mubr.bf16.mxu0 0
        %9621 = vmatmul.mubr.bf16.gmra.mrb[0].mxu0 %v9586
        %v9622 = vpop.f32.mrb[0].mxu0
        %v9623 = vadd.f32 0.0, %v9622
        %v9624 = vpop.f32.mrb[0].mxu0
        %v9625 = vpop.f32.mrb[0].mxu0
        %v9626 = vadd.f32 0.0, %v9625
        %v9627 = vpop.f32.mrb[0].mxu0
        %9628 = vdwg.mxu0
        %v9630 = vsel %vm5925, %v9011, 0
        %9632 = vmatprep.subr.bf16.mxu0 0
        %9633 = vmatpush1.bf16.msra.mxu0 %v2852
        %9634 = vmatprep.subr.bf16.mxu0 0
        %9635 = vmatpush1.bf16.msra.mxu0 0
        %9636 = vmatprep.subr.bf16.mxu0 0
        %9637 = vmatpush1.bf16.msra.mxu0 0
        %9638 = vmatprep.subr.bf16.mxu0 0
        %9639 = vmatpush1.bf16.msra.mxu0 0
        %9640 = vmatprep.subr.bf16.mxu0 0
        %9641 = vmatpush1.bf16.msra.mxu0 0
        %9642 = vmatprep.subr.bf16.mxu0 0
        %9643 = vmatpush1.bf16.msra.mxu0 0
        %9644 = vmatprep.subr.bf16.mxu0 0
        %9645 = vmatpush1.bf16.msra.mxu0 0
        %9646 = vmatprep.subr.bf16.mxu0 0
        %9647 = vmatpush1.bf16.msra.mxu0 0
        %9648 = vmatprep.subr.bf16.mxu0 0
        %9649 = vmatpush1.bf16.msra.mxu0 0
        %9650 = vmatprep.subr.bf16.mxu0 0
        %9651 = vmatpush1.bf16.msra.mxu0 0
        %9652 = vmatprep.subr.bf16.mxu0 0
        %9653 = vmatpush1.bf16.msra.mxu0 0
        %9654 = vmatprep.subr.bf16.mxu0 0
        %9655 = vmatpush1.bf16.msra.mxu0 0
        %9656 = vmatprep.subr.bf16.mxu0 0
        %9657 = vmatpush1.bf16.msra.mxu0 0
        %9658 = vmatprep.subr.bf16.mxu0 0
        %9659 = vmatpush1.bf16.msra.mxu0 0
        %9660 = vmatprep.subr.bf16.mxu0 0
        %9661 = vmatpush1.bf16.msra.mxu0 0
        %9662 = vmatprep.subr.bf16.mxu0 0
        %9663 = vmatpush1.bf16.msra.mxu0 0
        %9664 = vmatprep.mubr.bf16.mxu0 0
        %9665 = vmatmul.mubr.bf16.gmra.mrb[0].mxu0 %v9630
        %v9666 = vpop.f32.mrb[0].mxu0
        %v9667 = vadd.f32 0.0, %v9666
        %v9668 = vpop.f32.mrb[0].mxu0
        %v9669 = vpop.f32.mrb[0].mxu0
        %v9670 = vadd.f32 0.0, %v9669
        %v9671 = vpop.f32.mrb[0].mxu0
        %9672 = vdwg.mxu0
        %v9674 = vsel %vm5925, %v9012, 0
        %9676 = vmatprep.subr.bf16.mxu0 0
        %9677 = vmatpush1.bf16.msra.mxu0 %v2853
        %9678 = vmatprep.subr.bf16.mxu0 0
        %9679 = vmatpush1.bf16.msra.mxu0 0
        %9680 = vmatprep.subr.bf16.mxu0 0
        %9681 = vmatpush1.bf16.msra.mxu0 0
        %9682 = vmatprep.subr.bf16.mxu0 0
        %9683 = vmatpush1.bf16.msra.mxu0 0
        %9684 = vmatprep.subr.bf16.mxu0 0
        %9685 = vmatpush1.bf16.msra.mxu0 0
        %9686 = vmatprep.subr.bf16.mxu0 0
        %9687 = vmatpush1.bf16.msra.mxu0 0
        %9688 = vmatprep.subr.bf16.mxu0 0
        %9689 = vmatpush1.bf16.msra.mxu0 0
        %9690 = vmatprep.subr.bf16.mxu0 0
        %9691 = vmatpush1.bf16.msra.mxu0 0
        %9692 = vmatprep.subr.bf16.mxu0 0
        %9693 = vmatpush1.bf16.msra.mxu0 0
        %9694 = vmatprep.subr.bf16.mxu0 0
        %9695 = vmatpush1.bf16.msra.mxu0 0
        %9696 = vmatprep.subr.bf16.mxu0 0
        %9697 = vmatpush1.bf16.msra.mxu0 0
        %9698 = vmatprep.subr.bf16.mxu0 0
        %9699 = vmatpush1.bf16.msra.mxu0 0
        %9700 = vmatprep.subr.bf16.mxu0 0
        %9701 = vmatpush1.bf16.msra.mxu0 0
        %9702 = vmatprep.subr.bf16.mxu0 0
        %9703 = vmatpush1.bf16.msra.mxu0 0
        %9704 = vmatprep.subr.bf16.mxu0 0
        %9705 = vmatpush1.bf16.msra.mxu0 0
        %9706 = vmatprep.subr.bf16.mxu0 0
        %9707 = vmatpush1.bf16.msra.mxu0 0
        %9708 = vmatprep.mubr.bf16.mxu0 0
        %9709 = vmatmul.mubr.bf16.gmra.mrb[0].mxu0 %v9674
        %v9710 = vpop.f32.mrb[0].mxu0
        %v9711 = vadd.f32 0.0, %v9710
        %v9712 = vpop.f32.mrb[0].mxu0
        %v9713 = vpop.f32.mrb[0].mxu0
        %v9714 = vadd.f32 0.0, %v9713
        %v9715 = vpop.f32.mrb[0].mxu0
        %9716 = vdwg.mxu0
        %s9717 = sld [smem:[#allocation5]]
        %v9718 = vlaneseq
        %v9719 = vshrl.u32 %v9718, 7
        %v9720 = vsub.s32 0, %v9719
        %v9721 = vrot.slane %v7731, %v9720
        %9723 = vbcast.lane.b32.xlu0 %v9721, 256
        %v9724 = vpop.permute.xlu0 %9723
        %s9726 = sor.u32 256, 8
        %9727 = vbcast.lane.b32.xlu0 %v9721, %s9726
        %v9728 = vpop.permute.xlu0 %9727
        %v9729 = vlaneseq
        %v9730 = vshrl.u32 %v9729, 7
        %v9731 = vsub.s32 1, %v9730
        %v9732 = vrot.slane %v7731, %v9731
        %9734 = vbcast.lane.b32.xlu0 %v9732, 256
        %v9735 = vpop.permute.xlu0 %9734
        %s9737 = sor.u32 256, 8
        %9738 = vbcast.lane.b32.xlu0 %v9732, %s9737
        %v9739 = vpop.permute.xlu0 %9738
        %v9740 = vlaneseq
        %v9741 = vshrl.u32 %v9740, 7
        %v9742 = vsub.s32 2, %v9741
        %v9743 = vrot.slane %v7731, %v9742
        %9745 = vbcast.lane.b32.xlu0 %v9743, 256
        %v9746 = vpop.permute.xlu0 %9745
        %s9748 = sor.u32 256, 8
        %9749 = vbcast.lane.b32.xlu0 %v9743, %s9748
        %v9750 = vpop.permute.xlu0 %9749
        %v9751 = vlaneseq
        %v9752 = vshrl.u32 %v9751, 7
        %v9753 = vsub.s32 3, %v9752
        %v9754 = vrot.slane %v7731, %v9753
        %9756 = vbcast.lane.b32.xlu0 %v9754, 256
        %v9757 = vpop.permute.xlu0 %9756
        %s9759 = sor.u32 256, 8
        %9760 = vbcast.lane.b32.xlu0 %v9754, %s9759
        %v9761 = vpop.permute.xlu0 %9760
        %v9762 = vlaneseq
        %v9763 = vshrl.u32 %v9762, 7
        %v9764 = vsub.s32 4, %v9763
        %v9765 = vrot.slane %v7731, %v9764
        %9767 = vbcast.lane.b32.xlu0 %v9765, 256
        %v9768 = vpop.permute.xlu0 %9767
        %s9770 = sor.u32 256, 8
        %9771 = vbcast.lane.b32.xlu0 %v9765, %s9770
        %v9772 = vpop.permute.xlu0 %9771
        %v9773 = vlaneseq
        %v9774 = vshrl.u32 %v9773, 7
        %v9775 = vsub.s32 5, %v9774
        %v9776 = vrot.slane %v7731, %v9775
        %9778 = vbcast.lane.b32.xlu0 %v9776, 256
        %v9779 = vpop.permute.xlu0 %9778
        %s9781 = sor.u32 256, 8
        %9782 = vbcast.lane.b32.xlu0 %v9776, %s9781
        %v9783 = vpop.permute.xlu0 %9782
        %v9784 = vlaneseq
        %v9785 = vshrl.u32 %v9784, 7
        %v9786 = vsub.s32 6, %v9785
        %v9787 = vrot.slane %v7731, %v9786
        %9789 = vbcast.lane.b32.xlu0 %v9787, 256
        %v9790 = vpop.permute.xlu0 %9789
        %s9792 = sor.u32 256, 8
        %9793 = vbcast.lane.b32.xlu0 %v9787, %s9792
        %v9794 = vpop.permute.xlu0 %9793
        %v9795 = vlaneseq
        %v9796 = vshrl.u32 %v9795, 7
        %v9797 = vsub.s32 7, %v9796
        %v9798 = vrot.slane %v7731, %v9797
        %9800 = vbcast.lane.b32.xlu0 %v9798, 256
        %v9801 = vpop.permute.xlu0 %9800
        %s9803 = sor.u32 256, 8
        %9804 = vbcast.lane.b32.xlu0 %v9798, %s9803
        %v9805 = vpop.permute.xlu0 %9804
        %v9806 = vlaneseq
        %v9807 = vshrl.u32 %v9806, 7
        %v9808 = vsub.s32 0, %v9807
        %v9809 = vrot.slane %v7732, %v9808
        %9811 = vbcast.lane.b32.xlu0 %v9809, 256
        %v9812 = vpop.permute.xlu0 %9811
        %s9814 = sor.u32 256, 8
        %9815 = vbcast.lane.b32.xlu0 %v9809, %s9814
        %v9816 = vpop.permute.xlu0 %9815
        %v9817 = vlaneseq
        %v9818 = vshrl.u32 %v9817, 7
        %v9819 = vsub.s32 1, %v9818
        %v9820 = vrot.slane %v7732, %v9819
        %9822 = vbcast.lane.b32.xlu0 %v9820, 256
        %v9823 = vpop.permute.xlu0 %9822
        %s9825 = sor.u32 256, 8
        %9826 = vbcast.lane.b32.xlu0 %v9820, %s9825
        %v9827 = vpop.permute.xlu0 %9826
        %v9828 = vlaneseq
        %v9829 = vshrl.u32 %v9828, 7
        %v9830 = vsub.s32 2, %v9829
        %v9831 = vrot.slane %v7732, %v9830
        %9833 = vbcast.lane.b32.xlu0 %v9831, 256
        %v9834 = vpop.permute.xlu0 %9833
        %s9836 = sor.u32 256, 8
        %9837 = vbcast.lane.b32.xlu0 %v9831, %s9836
        %v9838 = vpop.permute.xlu0 %9837
        %v9839 = vlaneseq
        %v9840 = vshrl.u32 %v9839, 7
        %v9841 = vsub.s32 3, %v9840
        %v9842 = vrot.slane %v7732, %v9841
        %9844 = vbcast.lane.b32.xlu0 %v9842, 256
        %v9845 = vpop.permute.xlu0 %9844
        %s9847 = sor.u32 256, 8
        %9848 = vbcast.lane.b32.xlu0 %v9842, %s9847
        %v9849 = vpop.permute.xlu0 %9848
        %v9850 = vlaneseq
        %v9851 = vshrl.u32 %v9850, 7
        %v9852 = vsub.s32 4, %v9851
        %v9853 = vrot.slane %v7732, %v9852
        %9855 = vbcast.lane.b32.xlu0 %v9853, 256
        %v9856 = vpop.permute.xlu0 %9855
        %s9858 = sor.u32 256, 8
        %9859 = vbcast.lane.b32.xlu0 %v9853, %s9858
        %v9860 = vpop.permute.xlu0 %9859
        %v9861 = vlaneseq
        %v9862 = vshrl.u32 %v9861, 7
        %v9863 = vsub.s32 5, %v9862
        %v9864 = vrot.slane %v7732, %v9863
        %9866 = vbcast.lane.b32.xlu0 %v9864, 256
        %v9867 = vpop.permute.xlu0 %9866
        %s9869 = sor.u32 256, 8
        %9870 = vbcast.lane.b32.xlu0 %v9864, %s9869
        %v9871 = vpop.permute.xlu0 %9870
        %v9872 = vlaneseq
        %v9873 = vshrl.u32 %v9872, 7
        %v9874 = vsub.s32 6, %v9873
        %v9875 = vrot.slane %v7732, %v9874
        %9877 = vbcast.lane.b32.xlu0 %v9875, 256
        %v9878 = vpop.permute.xlu0 %9877
        %s9880 = sor.u32 256, 8
        %9881 = vbcast.lane.b32.xlu0 %v9875, %s9880
        %v9882 = vpop.permute.xlu0 %9881
        %v9883 = vlaneseq
        %v9884 = vshrl.u32 %v9883, 7
        %v9885 = vsub.s32 7, %v9884
        %v9886 = vrot.slane %v7732, %v9885
        %9888 = vbcast.lane.b32.xlu0 %v9886, 256
        %v9889 = vpop.permute.xlu0 %9888
        %s9891 = sor.u32 256, 8
        %9892 = vbcast.lane.b32.xlu0 %v9886, %s9891
        %v9893 = vpop.permute.xlu0 %9892
        %v9894 = vstv %s9717
        %v9895 = vmul.f32 %v9894, %v9724
        %v9896 = vmul.f32 %v9894, %v9728
        %v9897 = vmul.f32 %v9894, %v9735
        %v9898 = vmul.f32 %v9894, %v9739
        %v9899 = vmul.f32 %v9894, %v9746
        %v9900 = vmul.f32 %v9894, %v9750
        %v9901 = vmul.f32 %v9894, %v9757
        %v9902 = vmul.f32 %v9894, %v9761
        %v9903 = vmul.f32 %v9894, %v9768
        %v9904 = vmul.f32 %v9894, %v9772
        %v9905 = vmul.f32 %v9894, %v9779
        %v9906 = vmul.f32 %v9894, %v9783
        %v9907 = vmul.f32 %v9894, %v9790
        %v9908 = vmul.f32 %v9894, %v9794
        %v9909 = vmul.f32 %v9894, %v9801
        %v9910 = vmul.f32 %v9894, %v9805
        %v9911 = vmul.f32 %v9894, %v9812
        %v9912 = vmul.f32 %v9894, %v9816
        %v9913 = vmul.f32 %v9894, %v9823
        %v9914 = vmul.f32 %v9894, %v9827
        %v9915 = vmul.f32 %v9894, %v9834
        %v9916 = vmul.f32 %v9894, %v9838
        %v9917 = vmul.f32 %v9894, %v9845
        %v9918 = vmul.f32 %v9894, %v9849
        %v9919 = vmul.f32 %v9894, %v9856
        %v9920 = vmul.f32 %v9894, %v9860
        %v9921 = vmul.f32 %v9894, %v9867
        %v9922 = vmul.f32 %v9894, %v9871
        %v9923 = vmul.f32 %v9894, %v9878
        %v9924 = vmul.f32 %v9894, %v9882
        %v9925 = vmul.f32 %v9894, %v9889
        %v9926 = vmul.f32 %v9894, %v9893
        %v9927 = vadd.f32 %v8581, %v9051
        %v9928 = vadd.f32 %v8717, %v9054
        %v9929 = vadd.f32 %v8582, %v9095
        %v9930 = vadd.f32 %v8718, %v9098
        %v9931 = vadd.f32 %v8583, %v9139
        %v9932 = vadd.f32 %v8719, %v9142
        %v9933 = vadd.f32 %v8584, %v9183
        %v9934 = vadd.f32 %v8720, %v9186
        %v9935 = vadd.f32 %v8585, %v9227
        %v9936 = vadd.f32 %v8721, %v9230
        %v9937 = vadd.f32 %v8586, %v9271
        %v9938 = vadd.f32 %v8722, %v9274
        %v9939 = vadd.f32 %v8587, %v9315
        %v9940 = vadd.f32 %v8723, %v9318
        %v9941 = vadd.f32 %v8588, %v9359
        %v9942 = vadd.f32 %v8724, %v9362
        %v9943 = vadd.f32 %v8853, %v9403
        %v9944 = vadd.f32 %v8989, %v9406
        %v9945 = vadd.f32 %v8854, %v9447
        %v9946 = vadd.f32 %v8990, %v9450
        %v9947 = vadd.f32 %v8855, %v9491
        %v9948 = vadd.f32 %v8991, %v9494
        %v9949 = vadd.f32 %v8856, %v9535
        %v9950 = vadd.f32 %v8992, %v9538
        %v9951 = vadd.f32 %v8857, %v9579
        %v9952 = vadd.f32 %v8993, %v9582
        %v9953 = vadd.f32 %v8858, %v9623
        %v9954 = vadd.f32 %v8994, %v9626
        %v9955 = vadd.f32 %v8859, %v9667
        %v9956 = vadd.f32 %v8995, %v9670
        %v9957 = vadd.f32 %v8860, %v9711
        %v9958 = vadd.f32 %v8996, %v9714
        %v9959 = vmul.f32 %v9895, %v9927
        %v9960 = vmul.f32 %v9896, %v9928
        %v9961 = vmul.f32 %v9897, %v9929
        %v9962 = vmul.f32 %v9898, %v9930
        %v9963 = vmul.f32 %v9899, %v9931
        %v9964 = vmul.f32 %v9900, %v9932
        %v9965 = vmul.f32 %v9901, %v9933
        %v9966 = vmul.f32 %v9902, %v9934
        %v9967 = vmul.f32 %v9903, %v9935
        %v9968 = vmul.f32 %v9904, %v9936
        %v9969 = vmul.f32 %v9905, %v9937
        %v9970 = vmul.f32 %v9906, %v9938
        %v9971 = vmul.f32 %v9907, %v9939
        %v9972 = vmul.f32 %v9908, %v9940
        %v9973 = vmul.f32 %v9909, %v9941
        %v9974 = vmul.f32 %v9910, %v9942
        %v9975 = vmul.f32 %v9911, %v9943
        %v9976 = vmul.f32 %v9912, %v9944
        %v9977 = vmul.f32 %v9913, %v9945
        %v9978 = vmul.f32 %v9914, %v9946
        %v9979 = vmul.f32 %v9915, %v9947
        %v9980 = vmul.f32 %v9916, %v9948
        %v9981 = vmul.f32 %v9917, %v9949
        %v9982 = vmul.f32 %v9918, %v9950
        %v9983 = vmul.f32 %v9919, %v9951
        %v9984 = vmul.f32 %v9920, %v9952
        %v9985 = vmul.f32 %v9921, %v9953
        %v9986 = vmul.f32 %v9922, %v9954
        %v9987 = vmul.f32 %v9923, %v9955
        %v9988 = vmul.f32 %v9924, %v9956
        %v9989 = vmul.f32 %v9925, %v9957
        %v9990 = vmul.f32 %v9926, %v9958
        %v9991 = vadd.f32 %v9959, %v2854
        %v9992 = vadd.f32 %v9960, %v2855
        %v9993 = vadd.f32 %v9961, %v2856
        %v9994 = vadd.f32 %v9962, %v2857
        %v9995 = vadd.f32 %v9963, %v2858
        %v9996 = vadd.f32 %v9964, %v2859
        %v9997 = vadd.f32 %v9965, %v2860
        %v9998 = vadd.f32 %v9966, %v2861
        %v9999 = vadd.f32 %v9967, %v2862
        %v10000 = vadd.f32 %v9968, %v2863
        %v10001 = vadd.f32 %v9969, %v2864
        %v10002 = vadd.f32 %v9970, %v2865
        %v10003 = vadd.f32 %v9971, %v2866
        %v10004 = vadd.f32 %v9972, %v2867
        %v10005 = vadd.f32 %v9973, %v2868
        %v10006 = vadd.f32 %v9974, %v2869
        %v10007 = vadd.f32 %v9975, %v2870
        %v10008 = vadd.f32 %v9976, %v2871
        %v10009 = vadd.f32 %v9977, %v2872
        %v10010 = vadd.f32 %v9978, %v2873
        %v10011 = vadd.f32 %v9979, %v2874
        %v10012 = vadd.f32 %v9980, %v2875
        %v10013 = vadd.f32 %v9981, %v2876
        %v10014 = vadd.f32 %v9982, %v2877
        %v10015 = vadd.f32 %v9983, %v2878
        %v10016 = vadd.f32 %v9984, %v2879
        %v10017 = vadd.f32 %v9985, %v2880
        %v10018 = vadd.f32 %v9986, %v2881
        %v10019 = vadd.f32 %v9987, %v2882
        %v10020 = vadd.f32 %v9988, %v2883
        %v10021 = vadd.f32 %v9989, %v2884
        %v10022 = vadd.f32 %v9990, %v2885
        %10023 = vxpose.xlu0.b32.start [1/16] %v9991, 128
        %10024 = vxpose.xlu0.b32.cont [2/16] %v9992, 128
        %10025 = vxpose.xlu0.b32.cont [3/16] 0.0, 128
        %10026 = vxpose.xlu0.b32.cont [4/16] 0.0, 128
        %10027 = vxpose.xlu0.b32.cont [5/16] 0.0, 128
        %10028 = vxpose.xlu0.b32.cont [6/16] 0.0, 128
        %10029 = vxpose.xlu0.b32.cont [7/16] 0.0, 128
        %10030 = vxpose.xlu0.b32.cont [8/16] 0.0, 128
        %10031 = vxpose.xlu0.b32.cont [9/16] 0.0, 128
        %10032 = vxpose.xlu0.b32.cont [10/16] 0.0, 128
        %10033 = vxpose.xlu0.b32.cont [11/16] 0.0, 128
        %10034 = vxpose.xlu0.b32.cont [12/16] 0.0, 128
        %10035 = vxpose.xlu0.b32.cont [13/16] 0.0, 128
        %10036 = vxpose.xlu0.b32.cont [14/16] 0.0, 128
        %10037 = vxpose.xlu0.b32.cont [15/16] 0.0, 128
        %10038 = vxpose.xlu0.b32.end [16/16] 0.0, 128
        %v10039 = vpop.trf.xlu0
        %v10040 = vpop.trf.xlu0
        %v10041 = vpop.trf.xlu0
        %v10042 = vpop.trf.xlu0
        %v10043 = vpop.trf.xlu0
        %v10044 = vpop.trf.xlu0
        %v10045 = vpop.trf.xlu0
        %v10046 = vpop.trf.xlu0
        %v10047 = vpop.trf.xlu0
        %v10048 = vpop.trf.xlu0
        %v10049 = vpop.trf.xlu0
        %v10050 = vpop.trf.xlu0
        %v10051 = vpop.trf.xlu0
        %v10052 = vpop.trf.xlu0
        %v10053 = vpop.trf.xlu0
        %v10054 = vpop.trf.xlu0
        %10055 = vxpose.xlu0.b32.start [1/16] %v9993, 128
        %10056 = vxpose.xlu0.b32.cont [2/16] %v9994, 128
        %10057 = vxpose.xlu0.b32.cont [3/16] 0.0, 128
        %10058 = vxpose.xlu0.b32.cont [4/16] 0.0, 128
        %10059 = vxpose.xlu0.b32.cont [5/16] 0.0, 128
        %10060 = vxpose.xlu0.b32.cont [6/16] 0.0, 128
        %10061 = vxpose.xlu0.b32.cont [7/16] 0.0, 128
        %10062 = vxpose.xlu0.b32.cont [8/16] 0.0, 128
        %10063 = vxpose.xlu0.b32.cont [9/16] 0.0, 128
        %10064 = vxpose.xlu0.b32.cont [10/16] 0.0, 128
        %10065 = vxpose.xlu0.b32.cont [11/16] 0.0, 128
        %10066 = vxpose.xlu0.b32.cont [12/16] 0.0, 128
        %10067 = vxpose.xlu0.b32.cont [13/16] 0.0, 128
        %10068 = vxpose.xlu0.b32.cont [14/16] 0.0, 128
        %10069 = vxpose.xlu0.b32.cont [15/16] 0.0, 128
        %10070 = vxpose.xlu0.b32.end [16/16] 0.0, 128
        %v10071 = vpop.trf.xlu0
        %v10072 = vpop.trf.xlu0
        %v10073 = vpop.trf.xlu0
        %v10074 = vpop.trf.xlu0
        %v10075 = vpop.trf.xlu0
        %v10076 = vpop.trf.xlu0
        %v10077 = vpop.trf.xlu0
        %v10078 = vpop.trf.xlu0
        %v10079 = vpop.trf.xlu0
        %v10080 = vpop.trf.xlu0
        %v10081 = vpop.trf.xlu0
        %v10082 = vpop.trf.xlu0
        %v10083 = vpop.trf.xlu0
        %v10084 = vpop.trf.xlu0
        %v10085 = vpop.trf.xlu0
        %v10086 = vpop.trf.xlu0
        %10087 = vxpose.xlu0.b32.start [1/16] %v9995, 128
        %10088 = vxpose.xlu0.b32.cont [2/16] %v9996, 128
        %10089 = vxpose.xlu0.b32.cont [3/16] 0.0, 128
        %10090 = vxpose.xlu0.b32.cont [4/16] 0.0, 128
        %10091 = vxpose.xlu0.b32.cont [5/16] 0.0, 128
        %10092 = vxpose.xlu0.b32.cont [6/16] 0.0, 128
        %10093 = vxpose.xlu0.b32.cont [7/16] 0.0, 128
        %10094 = vxpose.xlu0.b32.cont [8/16] 0.0, 128
        %10095 = vxpose.xlu0.b32.cont [9/16] 0.0, 128
        %10096 = vxpose.xlu0.b32.cont [10/16] 0.0, 128
        %10097 = vxpose.xlu0.b32.cont [11/16] 0.0, 128
        %10098 = vxpose.xlu0.b32.cont [12/16] 0.0, 128
        %10099 = vxpose.xlu0.b32.cont [13/16] 0.0, 128
        %10100 = vxpose.xlu0.b32.cont [14/16] 0.0, 128
        %10101 = vxpose.xlu0.b32.cont [15/16] 0.0, 128
        %10102 = vxpose.xlu0.b32.end [16/16] 0.0, 128
        %v10103 = vpop.trf.xlu0
        %v10104 = vpop.trf.xlu0
        %v10105 = vpop.trf.xlu0
        %v10106 = vpop.trf.xlu0
        %v10107 = vpop.trf.xlu0
        %v10108 = vpop.trf.xlu0
        %v10109 = vpop.trf.xlu0
        %v10110 = vpop.trf.xlu0
        %v10111 = vpop.trf.xlu0
        %v10112 = vpop.trf.xlu0
        %v10113 = vpop.trf.xlu0
        %v10114 = vpop.trf.xlu0
        %v10115 = vpop.trf.xlu0
        %v10116 = vpop.trf.xlu0
        %v10117 = vpop.trf.xlu0
        %v10118 = vpop.trf.xlu0
        %10119 = vxpose.xlu0.b32.start [1/16] %v9997, 128
        %10120 = vxpose.xlu0.b32.cont [2/16] %v9998, 128
        %10121 = vxpose.xlu0.b32.cont [3/16] 0.0, 128
        %10122 = vxpose.xlu0.b32.cont [4/16] 0.0, 128
        %10123 = vxpose.xlu0.b32.cont [5/16] 0.0, 128
        %10124 = vxpose.xlu0.b32.cont [6/16] 0.0, 128
        %10125 = vxpose.xlu0.b32.cont [7/16] 0.0, 128
        %10126 = vxpose.xlu0.b32.cont [8/16] 0.0, 128
        %10127 = vxpose.xlu0.b32.cont [9/16] 0.0, 128
        %10128 = vxpose.xlu0.b32.cont [10/16] 0.0, 128
        %10129 = vxpose.xlu0.b32.cont [11/16] 0.0, 128
        %10130 = vxpose.xlu0.b32.cont [12/16] 0.0, 128
        %10131 = vxpose.xlu0.b32.cont [13/16] 0.0, 128
        %10132 = vxpose.xlu0.b32.cont [14/16] 0.0, 128
        %10133 = vxpose.xlu0.b32.cont [15/16] 0.0, 128
        %10134 = vxpose.xlu0.b32.end [16/16] 0.0, 128
        %v10135 = vpop.trf.xlu0
        %v10136 = vpop.trf.xlu0
        %v10137 = vpop.trf.xlu0
        %v10138 = vpop.trf.xlu0
        %v10139 = vpop.trf.xlu0
        %v10140 = vpop.trf.xlu0
        %v10141 = vpop.trf.xlu0
        %v10142 = vpop.trf.xlu0
        %v10143 = vpop.trf.xlu0
        %v10144 = vpop.trf.xlu0
        %v10145 = vpop.trf.xlu0
        %v10146 = vpop.trf.xlu0
        %v10147 = vpop.trf.xlu0
        %v10148 = vpop.trf.xlu0
        %v10149 = vpop.trf.xlu0
        %v10150 = vpop.trf.xlu0
        %10151 = vxpose.xlu0.b32.start [1/16] %v9999, 128
        %10152 = vxpose.xlu0.b32.cont [2/16] %v10000, 128
        %10153 = vxpose.xlu0.b32.cont [3/16] 0.0, 128
        %10154 = vxpose.xlu0.b32.cont [4/16] 0.0, 128
        %10155 = vxpose.xlu0.b32.cont [5/16] 0.0, 128
        %10156 = vxpose.xlu0.b32.cont [6/16] 0.0, 128
        %10157 = vxpose.xlu0.b32.cont [7/16] 0.0, 128
        %10158 = vxpose.xlu0.b32.cont [8/16] 0.0, 128
        %10159 = vxpose.xlu0.b32.cont [9/16] 0.0, 128
        %10160 = vxpose.xlu0.b32.cont [10/16] 0.0, 128
        %10161 = vxpose.xlu0.b32.cont [11/16] 0.0, 128
        %10162 = vxpose.xlu0.b32.cont [12/16] 0.0, 128
        %10163 = vxpose.xlu0.b32.cont [13/16] 0.0, 128
        %10164 = vxpose.xlu0.b32.cont [14/16] 0.0, 128
        %10165 = vxpose.xlu0.b32.cont [15/16] 0.0, 128
        %10166 = vxpose.xlu0.b32.end [16/16] 0.0, 128
        %v10167 = vpop.trf.xlu0
        %v10168 = vpop.trf.xlu0
        %v10169 = vpop.trf.xlu0
        %v10170 = vpop.trf.xlu0
        %v10171 = vpop.trf.xlu0
        %v10172 = vpop.trf.xlu0
        %v10173 = vpop.trf.xlu0
        %v10174 = vpop.trf.xlu0
        %v10175 = vpop.trf.xlu0
        %v10176 = vpop.trf.xlu0
        %v10177 = vpop.trf.xlu0
        %v10178 = vpop.trf.xlu0
        %v10179 = vpop.trf.xlu0
        %v10180 = vpop.trf.xlu0
        %v10181 = vpop.trf.xlu0
        %v10182 = vpop.trf.xlu0
        %10183 = vxpose.xlu0.b32.start [1/16] %v10001, 128
        %10184 = vxpose.xlu0.b32.cont [2/16] %v10002, 128
        %10185 = vxpose.xlu0.b32.cont [3/16] 0.0, 128
        %10186 = vxpose.xlu0.b32.cont [4/16] 0.0, 128
        %10187 = vxpose.xlu0.b32.cont [5/16] 0.0, 128
        %10188 = vxpose.xlu0.b32.cont [6/16] 0.0, 128
        %10189 = vxpose.xlu0.b32.cont [7/16] 0.0, 128
        %10190 = vxpose.xlu0.b32.cont [8/16] 0.0, 128
        %10191 = vxpose.xlu0.b32.cont [9/16] 0.0, 128
        %10192 = vxpose.xlu0.b32.cont [10/16] 0.0, 128
        %10193 = vxpose.xlu0.b32.cont [11/16] 0.0, 128
        %10194 = vxpose.xlu0.b32.cont [12/16] 0.0, 128
        %10195 = vxpose.xlu0.b32.cont [13/16] 0.0, 128
        %10196 = vxpose.xlu0.b32.cont [14/16] 0.0, 128
        %10197 = vxpose.xlu0.b32.cont [15/16] 0.0, 128
        %10198 = vxpose.xlu0.b32.end [16/16] 0.0, 128
        %v10199 = vpop.trf.xlu0
        %v10200 = vpop.trf.xlu0
        %v10201 = vpop.trf.xlu0
        %v10202 = vpop.trf.xlu0
        %v10203 = vpop.trf.xlu0
        %v10204 = vpop.trf.xlu0
        %v10205 = vpop.trf.xlu0
        %v10206 = vpop.trf.xlu0
        %v10207 = vpop.trf.xlu0
        %v10208 = vpop.trf.xlu0
        %v10209 = vpop.trf.xlu0
        %v10210 = vpop.trf.xlu0
        %v10211 = vpop.trf.xlu0
        %v10212 = vpop.trf.xlu0
        %v10213 = vpop.trf.xlu0
        %v10214 = vpop.trf.xlu0
        %10215 = vxpose.xlu0.b32.start [1/16] %v10003, 128
        %10216 = vxpose.xlu0.b32.cont [2/16] %v10004, 128
        %10217 = vxpose.xlu0.b32.cont [3/16] 0.0, 128
        %10218 = vxpose.xlu0.b32.cont [4/16] 0.0, 128
        %10219 = vxpose.xlu0.b32.cont [5/16] 0.0, 128
        %10220 = vxpose.xlu0.b32.cont [6/16] 0.0, 128
        %10221 = vxpose.xlu0.b32.cont [7/16] 0.0, 128
        %10222 = vxpose.xlu0.b32.cont [8/16] 0.0, 128
        %10223 = vxpose.xlu0.b32.cont [9/16] 0.0, 128
        %10224 = vxpose.xlu0.b32.cont [10/16] 0.0, 128
        %10225 = vxpose.xlu0.b32.cont [11/16] 0.0, 128
        %10226 = vxpose.xlu0.b32.cont [12/16] 0.0, 128
        %10227 = vxpose.xlu0.b32.cont [13/16] 0.0, 128
        %10228 = vxpose.xlu0.b32.cont [14/16] 0.0, 128
        %10229 = vxpose.xlu0.b32.cont [15/16] 0.0, 128
        %10230 = vxpose.xlu0.b32.end [16/16] 0.0, 128
        %v10231 = vpop.trf.xlu0
        %v10232 = vpop.trf.xlu0
        %v10233 = vpop.trf.xlu0
        %v10234 = vpop.trf.xlu0
        %v10235 = vpop.trf.xlu0
        %v10236 = vpop.trf.xlu0
        %v10237 = vpop.trf.xlu0
        %v10238 = vpop.trf.xlu0
        %v10239 = vpop.trf.xlu0
        %v10240 = vpop.trf.xlu0
        %v10241 = vpop.trf.xlu0
        %v10242 = vpop.trf.xlu0
        %v10243 = vpop.trf.xlu0
        %v10244 = vpop.trf.xlu0
        %v10245 = vpop.trf.xlu0
        %v10246 = vpop.trf.xlu0
        %10247 = vxpose.xlu0.b32.start [1/16] %v10005, 128
        %10248 = vxpose.xlu0.b32.cont [2/16] %v10006, 128
        %10249 = vxpose.xlu0.b32.cont [3/16] 0.0, 128
        %10250 = vxpose.xlu0.b32.cont [4/16] 0.0, 128
        %10251 = vxpose.xlu0.b32.cont [5/16] 0.0, 128
        %10252 = vxpose.xlu0.b32.cont [6/16] 0.0, 128
        %10253 = vxpose.xlu0.b32.cont [7/16] 0.0, 128
        %10254 = vxpose.xlu0.b32.cont [8/16] 0.0, 128
        %10255 = vxpose.xlu0.b32.cont [9/16] 0.0, 128
        %10256 = vxpose.xlu0.b32.cont [10/16] 0.0, 128
        %10257 = vxpose.xlu0.b32.cont [11/16] 0.0, 128
        %10258 = vxpose.xlu0.b32.cont [12/16] 0.0, 128
        %10259 = vxpose.xlu0.b32.cont [13/16] 0.0, 128
        %10260 = vxpose.xlu0.b32.cont [14/16] 0.0, 128
        %10261 = vxpose.xlu0.b32.cont [15/16] 0.0, 128
        %10262 = vxpose.xlu0.b32.end [16/16] 0.0, 128
        %v10263 = vpop.trf.xlu0
        %v10264 = vpop.trf.xlu0
        %v10265 = vpop.trf.xlu0
        %v10266 = vpop.trf.xlu0
        %v10267 = vpop.trf.xlu0
        %v10268 = vpop.trf.xlu0
        %v10269 = vpop.trf.xlu0
        %v10270 = vpop.trf.xlu0
        %v10271 = vpop.trf.xlu0
        %v10272 = vpop.trf.xlu0
        %v10273 = vpop.trf.xlu0
        %v10274 = vpop.trf.xlu0
        %v10275 = vpop.trf.xlu0
        %v10276 = vpop.trf.xlu0
        %v10277 = vpop.trf.xlu0
        %v10278 = vpop.trf.xlu0
        %10279 = vxpose.xlu0.b32.start [1/16] %v10007, 128
        %10280 = vxpose.xlu0.b32.cont [2/16] %v10008, 128
        %10281 = vxpose.xlu0.b32.cont [3/16] 0.0, 128
        %10282 = vxpose.xlu0.b32.cont [4/16] 0.0, 128
        %10283 = vxpose.xlu0.b32.cont [5/16] 0.0, 128
        %10284 = vxpose.xlu0.b32.cont [6/16] 0.0, 128
        %10285 = vxpose.xlu0.b32.cont [7/16] 0.0, 128
        %10286 = vxpose.xlu0.b32.cont [8/16] 0.0, 128
        %10287 = vxpose.xlu0.b32.cont [9/16] 0.0, 128
        %10288 = vxpose.xlu0.b32.cont [10/16] 0.0, 128
        %10289 = vxpose.xlu0.b32.cont [11/16] 0.0, 128
        %10290 = vxpose.xlu0.b32.cont [12/16] 0.0, 128
        %10291 = vxpose.xlu0.b32.cont [13/16] 0.0, 128
        %10292 = vxpose.xlu0.b32.cont [14/16] 0.0, 128
        %10293 = vxpose.xlu0.b32.cont [15/16] 0.0, 128
        %10294 = vxpose.xlu0.b32.end [16/16] 0.0, 128
        %v10295 = vpop.trf.xlu0
        %v10296 = vpop.trf.xlu0
        %v10297 = vpop.trf.xlu0
        %v10298 = vpop.trf.xlu0
        %v10299 = vpop.trf.xlu0
        %v10300 = vpop.trf.xlu0
        %v10301 = vpop.trf.xlu0
        %v10302 = vpop.trf.xlu0
        %v10303 = vpop.trf.xlu0
        %v10304 = vpop.trf.xlu0
        %v10305 = vpop.trf.xlu0
        %v10306 = vpop.trf.xlu0
        %v10307 = vpop.trf.xlu0
        %v10308 = vpop.trf.xlu0
        %v10309 = vpop.trf.xlu0
        %v10310 = vpop.trf.xlu0
        %10311 = vxpose.xlu0.b32.start [1/16] %v10009, 128
        %10312 = vxpose.xlu0.b32.cont [2/16] %v10010, 128
        %10313 = vxpose.xlu0.b32.cont [3/16] 0.0, 128
        %10314 = vxpose.xlu0.b32.cont [4/16] 0.0, 128
        %10315 = vxpose.xlu0.b32.cont [5/16] 0.0, 128
        %10316 = vxpose.xlu0.b32.cont [6/16] 0.0, 128
        %10317 = vxpose.xlu0.b32.cont [7/16] 0.0, 128
        %10318 = vxpose.xlu0.b32.cont [8/16] 0.0, 128
        %10319 = vxpose.xlu0.b32.cont [9/16] 0.0, 128
        %10320 = vxpose.xlu0.b32.cont [10/16] 0.0, 128
        %10321 = vxpose.xlu0.b32.cont [11/16] 0.0, 128
        %10322 = vxpose.xlu0.b32.cont [12/16] 0.0, 128
        %10323 = vxpose.xlu0.b32.cont [13/16] 0.0, 128
        %10324 = vxpose.xlu0.b32.cont [14/16] 0.0, 128
        %10325 = vxpose.xlu0.b32.cont [15/16] 0.0, 128
        %10326 = vxpose.xlu0.b32.end [16/16] 0.0, 128
        %v10327 = vpop.trf.xlu0
        %v10328 = vpop.trf.xlu0
        %v10329 = vpop.trf.xlu0
        %v10330 = vpop.trf.xlu0
        %v10331 = vpop.trf.xlu0
        %v10332 = vpop.trf.xlu0
        %v10333 = vpop.trf.xlu0
        %v10334 = vpop.trf.xlu0
        %v10335 = vpop.trf.xlu0
        %v10336 = vpop.trf.xlu0
        %v10337 = vpop.trf.xlu0
        %v10338 = vpop.trf.xlu0
        %v10339 = vpop.trf.xlu0
        %v10340 = vpop.trf.xlu0
        %v10341 = vpop.trf.xlu0
        %v10342 = vpop.trf.xlu0
        %10343 = vxpose.xlu0.b32.start [1/16] %v10011, 128
        %10344 = vxpose.xlu0.b32.cont [2/16] %v10012, 128
        %10345 = vxpose.xlu0.b32.cont [3/16] 0.0, 128
        %10346 = vxpose.xlu0.b32.cont [4/16] 0.0, 128
        %10347 = vxpose.xlu0.b32.cont [5/16] 0.0, 128
        %10348 = vxpose.xlu0.b32.cont [6/16] 0.0, 128
        %10349 = vxpose.xlu0.b32.cont [7/16] 0.0, 128
        %10350 = vxpose.xlu0.b32.cont [8/16] 0.0, 128
        %10351 = vxpose.xlu0.b32.cont [9/16] 0.0, 128
        %10352 = vxpose.xlu0.b32.cont [10/16] 0.0, 128
        %10353 = vxpose.xlu0.b32.cont [11/16] 0.0, 128
        %10354 = vxpose.xlu0.b32.cont [12/16] 0.0, 128
        %10355 = vxpose.xlu0.b32.cont [13/16] 0.0, 128
        %10356 = vxpose.xlu0.b32.cont [14/16] 0.0, 128
        %10357 = vxpose.xlu0.b32.cont [15/16] 0.0, 128
        %10358 = vxpose.xlu0.b32.end [16/16] 0.0, 128
        %v10359 = vpop.trf.xlu0
        %v10360 = vpop.trf.xlu0
        %v10361 = vpop.trf.xlu0
        %v10362 = vpop.trf.xlu0
        %v10363 = vpop.trf.xlu0
        %v10364 = vpop.trf.xlu0
        %v10365 = vpop.trf.xlu0
        %v10366 = vpop.trf.xlu0
        %v10367 = vpop.trf.xlu0
        %v10368 = vpop.trf.xlu0
        %v10369 = vpop.trf.xlu0
        %v10370 = vpop.trf.xlu0
        %v10371 = vpop.trf.xlu0
        %v10372 = vpop.trf.xlu0
        %v10373 = vpop.trf.xlu0
        %v10374 = vpop.trf.xlu0
        %10375 = vxpose.xlu0.b32.start [1/16] %v10013, 128
        %10376 = vxpose.xlu0.b32.cont [2/16] %v10014, 128
        %10377 = vxpose.xlu0.b32.cont [3/16] 0.0, 128
        %10378 = vxpose.xlu0.b32.cont [4/16] 0.0, 128
        %10379 = vxpose.xlu0.b32.cont [5/16] 0.0, 128
        %10380 = vxpose.xlu0.b32.cont [6/16] 0.0, 128
        %10381 = vxpose.xlu0.b32.cont [7/16] 0.0, 128
        %10382 = vxpose.xlu0.b32.cont [8/16] 0.0, 128
        %10383 = vxpose.xlu0.b32.cont [9/16] 0.0, 128
        %10384 = vxpose.xlu0.b32.cont [10/16] 0.0, 128
        %10385 = vxpose.xlu0.b32.cont [11/16] 0.0, 128
        %10386 = vxpose.xlu0.b32.cont [12/16] 0.0, 128
        %10387 = vxpose.xlu0.b32.cont [13/16] 0.0, 128
        %10388 = vxpose.xlu0.b32.cont [14/16] 0.0, 128
        %10389 = vxpose.xlu0.b32.cont [15/16] 0.0, 128
        %10390 = vxpose.xlu0.b32.end [16/16] 0.0, 128
        %v10391 = vpop.trf.xlu0
        %v10392 = vpop.trf.xlu0
        %v10393 = vpop.trf.xlu0
        %v10394 = vpop.trf.xlu0
        %v10395 = vpop.trf.xlu0
        %v10396 = vpop.trf.xlu0
        %v10397 = vpop.trf.xlu0
        %v10398 = vpop.trf.xlu0
        %v10399 = vpop.trf.xlu0
        %v10400 = vpop.trf.xlu0
        %v10401 = vpop.trf.xlu0
        %v10402 = vpop.trf.xlu0
        %v10403 = vpop.trf.xlu0
        %v10404 = vpop.trf.xlu0
        %v10405 = vpop.trf.xlu0
        %v10406 = vpop.trf.xlu0
        %10407 = vxpose.xlu0.b32.start [1/16] %v10015, 128
        %10408 = vxpose.xlu0.b32.cont [2/16] %v10016, 128
        %10409 = vxpose.xlu0.b32.cont [3/16] 0.0, 128
        %10410 = vxpose.xlu0.b32.cont [4/16] 0.0, 128
        %10411 = vxpose.xlu0.b32.cont [5/16] 0.0, 128
        %10412 = vxpose.xlu0.b32.cont [6/16] 0.0, 128
        %10413 = vxpose.xlu0.b32.cont [7/16] 0.0, 128
        %10414 = vxpose.xlu0.b32.cont [8/16] 0.0, 128
        %10415 = vxpose.xlu0.b32.cont [9/16] 0.0, 128
        %10416 = vxpose.xlu0.b32.cont [10/16] 0.0, 128
        %10417 = vxpose.xlu0.b32.cont [11/16] 0.0, 128
        %10418 = vxpose.xlu0.b32.cont [12/16] 0.0, 128
        %10419 = vxpose.xlu0.b32.cont [13/16] 0.0, 128
        %10420 = vxpose.xlu0.b32.cont [14/16] 0.0, 128
        %10421 = vxpose.xlu0.b32.cont [15/16] 0.0, 128
        %10422 = vxpose.xlu0.b32.end [16/16] 0.0, 128
        %v10423 = vpop.trf.xlu0
        %v10424 = vpop.trf.xlu0
        %v10425 = vpop.trf.xlu0
        %v10426 = vpop.trf.xlu0
        %v10427 = vpop.trf.xlu0
        %v10428 = vpop.trf.xlu0
        %v10429 = vpop.trf.xlu0
        %v10430 = vpop.trf.xlu0
        %v10431 = vpop.trf.xlu0
        %v10432 = vpop.trf.xlu0
        %v10433 = vpop.trf.xlu0
        %v10434 = vpop.trf.xlu0
        %v10435 = vpop.trf.xlu0
        %v10436 = vpop.trf.xlu0
        %v10437 = vpop.trf.xlu0
        %v10438 = vpop.trf.xlu0
        %10439 = vxpose.xlu0.b32.start [1/16] %v10017, 128
        %10440 = vxpose.xlu0.b32.cont [2/16] %v10018, 128
        %10441 = vxpose.xlu0.b32.cont [3/16] 0.0, 128
        %10442 = vxpose.xlu0.b32.cont [4/16] 0.0, 128
        %10443 = vxpose.xlu0.b32.cont [5/16] 0.0, 128
        %10444 = vxpose.xlu0.b32.cont [6/16] 0.0, 128
        %10445 = vxpose.xlu0.b32.cont [7/16] 0.0, 128
        %10446 = vxpose.xlu0.b32.cont [8/16] 0.0, 128
        %10447 = vxpose.xlu0.b32.cont [9/16] 0.0, 128
        %10448 = vxpose.xlu0.b32.cont [10/16] 0.0, 128
        %10449 = vxpose.xlu0.b32.cont [11/16] 0.0, 128
        %10450 = vxpose.xlu0.b32.cont [12/16] 0.0, 128
        %10451 = vxpose.xlu0.b32.cont [13/16] 0.0, 128
        %10452 = vxpose.xlu0.b32.cont [14/16] 0.0, 128
        %10453 = vxpose.xlu0.b32.cont [15/16] 0.0, 128
        %10454 = vxpose.xlu0.b32.end [16/16] 0.0, 128
        %v10455 = vpop.trf.xlu0
        %v10456 = vpop.trf.xlu0
        %v10457 = vpop.trf.xlu0
        %v10458 = vpop.trf.xlu0
        %v10459 = vpop.trf.xlu0
        %v10460 = vpop.trf.xlu0
        %v10461 = vpop.trf.xlu0
        %v10462 = vpop.trf.xlu0
        %v10463 = vpop.trf.xlu0
        %v10464 = vpop.trf.xlu0
        %v10465 = vpop.trf.xlu0
        %v10466 = vpop.trf.xlu0
        %v10467 = vpop.trf.xlu0
        %v10468 = vpop.trf.xlu0
        %v10469 = vpop.trf.xlu0
        %v10470 = vpop.trf.xlu0
        %10471 = vxpose.xlu0.b32.start [1/16] %v10019, 128
        %10472 = vxpose.xlu0.b32.cont [2/16] %v10020, 128
        %10473 = vxpose.xlu0.b32.cont [3/16] 0.0, 128
        %10474 = vxpose.xlu0.b32.cont [4/16] 0.0, 128
        %10475 = vxpose.xlu0.b32.cont [5/16] 0.0, 128
        %10476 = vxpose.xlu0.b32.cont [6/16] 0.0, 128
        %10477 = vxpose.xlu0.b32.cont [7/16] 0.0, 128
        %10478 = vxpose.xlu0.b32.cont [8/16] 0.0, 128
        %10479 = vxpose.xlu0.b32.cont [9/16] 0.0, 128
        %10480 = vxpose.xlu0.b32.cont [10/16] 0.0, 128
        %10481 = vxpose.xlu0.b32.cont [11/16] 0.0, 128
        %10482 = vxpose.xlu0.b32.cont [12/16] 0.0, 128
        %10483 = vxpose.xlu0.b32.cont [13/16] 0.0, 128
        %10484 = vxpose.xlu0.b32.cont [14/16] 0.0, 128
        %10485 = vxpose.xlu0.b32.cont [15/16] 0.0, 128
        %10486 = vxpose.xlu0.b32.end [16/16] 0.0, 128
        %v10487 = vpop.trf.xlu0
        %v10488 = vpop.trf.xlu0
        %v10489 = vpop.trf.xlu0
        %v10490 = vpop.trf.xlu0
        %v10491 = vpop.trf.xlu0
        %v10492 = vpop.trf.xlu0
        %v10493 = vpop.trf.xlu0
        %v10494 = vpop.trf.xlu0
        %v10495 = vpop.trf.xlu0
        %v10496 = vpop.trf.xlu0
        %v10497 = vpop.trf.xlu0
        %v10498 = vpop.trf.xlu0
        %v10499 = vpop.trf.xlu0
        %v10500 = vpop.trf.xlu0
        %v10501 = vpop.trf.xlu0
        %v10502 = vpop.trf.xlu0
        %10503 = vxpose.xlu0.b32.start [1/16] %v10021, 128
        %10504 = vxpose.xlu0.b32.cont [2/16] %v10022, 128
        %10505 = vxpose.xlu0.b32.cont [3/16] 0.0, 128
        %10506 = vxpose.xlu0.b32.cont [4/16] 0.0, 128
        %10507 = vxpose.xlu0.b32.cont [5/16] 0.0, 128
        %10508 = vxpose.xlu0.b32.cont [6/16] 0.0, 128
        %10509 = vxpose.xlu0.b32.cont [7/16] 0.0, 128
        %10510 = vxpose.xlu0.b32.cont [8/16] 0.0, 128
        %10511 = vxpose.xlu0.b32.cont [9/16] 0.0, 128
        %10512 = vxpose.xlu0.b32.cont [10/16] 0.0, 128
        %10513 = vxpose.xlu0.b32.cont [11/16] 0.0, 128
        %10514 = vxpose.xlu0.b32.cont [12/16] 0.0, 128
        %10515 = vxpose.xlu0.b32.cont [13/16] 0.0, 128
        %10516 = vxpose.xlu0.b32.cont [14/16] 0.0, 128
        %10517 = vxpose.xlu0.b32.cont [15/16] 0.0, 128
        %10518 = vxpose.xlu0.b32.end [16/16] 0.0, 128
        %v10519 = vpop.trf.xlu0
        %v10520 = vpop.trf.xlu0
        %v10521 = vpop.trf.xlu0
        %v10522 = vpop.trf.xlu0
        %v10523 = vpop.trf.xlu0
        %v10524 = vpop.trf.xlu0
        %v10525 = vpop.trf.xlu0
        %v10526 = vpop.trf.xlu0
        %v10527 = vpop.trf.xlu0
        %v10528 = vpop.trf.xlu0
        %v10529 = vpop.trf.xlu0
        %v10530 = vpop.trf.xlu0
        %v10531 = vpop.trf.xlu0
        %v10532 = vpop.trf.xlu0
        %v10533 = vpop.trf.xlu0
        %v10534 = vpop.trf.xlu0
        %v10535 = vcombine.low %v10039, %v10103
        %v10536 = vcombine.high %v10039, %v10103
        %v10538 = vunpack.c.l.s4 1983009808
        %v10539 = vunpack.c.0.s8 %v10538
        %v10540 = vlaneseq
        %v10541 = vshrl.u32 %v10540, 7
        %v10542 = vsub.s32 %v10539, %v10541
        %v10543 = vrot.slane %v10535, %v10542
        %v10545 = vunpack.c.l.s4 1983009808
        %v10546 = vunpack.c.0.s8 %v10545
        %v10547 = vlaneseq
        %v10548 = vshrl.u32 %v10547, 7
        %v10549 = vsub.s32 %v10546, %v10548
        %v10550 = vrot.slane %v10536, %v10549
        %v10551 = vcombine.low %v10071, %v10135
        %v10552 = vcombine.high %v10071, %v10135
        %v10554 = vunpack.c.l.s4 1983009808
        %v10555 = vunpack.c.0.s8 %v10554
        %v10556 = vlaneseq
        %v10557 = vshrl.u32 %v10556, 7
        %v10558 = vsub.s32 %v10555, %v10557
        %v10559 = vrot.slane %v10551, %v10558
        %v10561 = vunpack.c.l.s4 1983009808
        %v10562 = vunpack.c.0.s8 %v10561
        %v10563 = vlaneseq
        %v10564 = vshrl.u32 %v10563, 7
        %v10565 = vsub.s32 %v10562, %v10564
        %v10566 = vrot.slane %v10552, %v10565
        %v10567 = vcombine.low %v10167, %v10231
        %v10568 = vcombine.high %v10167, %v10231
        %v10570 = vunpack.c.l.s4 1983009808
        %v10571 = vunpack.c.0.s8 %v10570
        %v10572 = vlaneseq
        %v10573 = vshrl.u32 %v10572, 7
        %v10574 = vsub.s32 %v10571, %v10573
        %v10575 = vrot.slane %v10567, %v10574
        %v10577 = vunpack.c.l.s4 1983009808
        %v10578 = vunpack.c.0.s8 %v10577
        %v10579 = vlaneseq
        %v10580 = vshrl.u32 %v10579, 7
        %v10581 = vsub.s32 %v10578, %v10580
        %v10582 = vrot.slane %v10568, %v10581
        %v10583 = vcombine.low %v10199, %v10263
        %v10584 = vcombine.high %v10199, %v10263
        %v10586 = vunpack.c.l.s4 1983009808
        %v10587 = vunpack.c.0.s8 %v10586
        %v10588 = vlaneseq
        %v10589 = vshrl.u32 %v10588, 7
        %v10590 = vsub.s32 %v10587, %v10589
        %v10591 = vrot.slane %v10583, %v10590
        %v10593 = vunpack.c.l.s4 1983009808
        %v10594 = vunpack.c.0.s8 %v10593
        %v10595 = vlaneseq
        %v10596 = vshrl.u32 %v10595, 7
        %v10597 = vsub.s32 %v10594, %v10596
        %v10598 = vrot.slane %v10584, %v10597
        %v10599 = vcombine.low %v10543, %v10559
        %v10600 = vcombine.high %v10543, %v10559
        %v10602 = vunpack.c.l.s4 1934713408
        %v10603 = vunpack.c.0.s8 %v10602
        %v10604 = vlaneseq
        %v10605 = vshrl.u32 %v10604, 7
        %v10606 = vsub.s32 %v10603, %v10605
        %v10607 = vrot.slane %v10599, %v10606
        %v10609 = vunpack.c.l.s4 1934713408
        %v10610 = vunpack.c.0.s8 %v10609
        %v10611 = vlaneseq
        %v10612 = vshrl.u32 %v10611, 7
        %v10613 = vsub.s32 %v10610, %v10612
        %v10614 = vrot.slane %v10600, %v10613
        %v10615 = vcombine.low %v10550, %v10566
        %v10616 = vcombine.high %v10550, %v10566
        %v10618 = vunpack.c.l.s4 1934713408
        %v10619 = vunpack.c.0.s8 %v10618
        %v10620 = vlaneseq
        %v10621 = vshrl.u32 %v10620, 7
        %v10622 = vsub.s32 %v10619, %v10621
        %v10623 = vrot.slane %v10615, %v10622
        %v10625 = vunpack.c.l.s4 1934713408
        %v10626 = vunpack.c.0.s8 %v10625
        %v10627 = vlaneseq
        %v10628 = vshrl.u32 %v10627, 7
        %v10629 = vsub.s32 %v10626, %v10628
        %v10630 = vrot.slane %v10616, %v10629
        %v10631 = vcombine.low %v10575, %v10591
        %v10632 = vcombine.high %v10575, %v10591
        %v10634 = vunpack.c.l.s4 1934713408
        %v10635 = vunpack.c.0.s8 %v10634
        %v10636 = vlaneseq
        %v10637 = vshrl.u32 %v10636, 7
        %v10638 = vsub.s32 %v10635, %v10637
        %v10639 = vrot.slane %v10631, %v10638
        %v10641 = vunpack.c.l.s4 1934713408
        %v10642 = vunpack.c.0.s8 %v10641
        %v10643 = vlaneseq
        %v10644 = vshrl.u32 %v10643, 7
        %v10645 = vsub.s32 %v10642, %v10644
        %v10646 = vrot.slane %v10632, %v10645
        %v10647 = vcombine.low %v10582, %v10598
        %v10648 = vcombine.high %v10582, %v10598
        %v10650 = vunpack.c.l.s4 1934713408
        %v10651 = vunpack.c.0.s8 %v10650
        %v10652 = vlaneseq
        %v10653 = vshrl.u32 %v10652, 7
        %v10654 = vsub.s32 %v10651, %v10653
        %v10655 = vrot.slane %v10647, %v10654
        %v10657 = vunpack.c.l.s4 1934713408
        %v10658 = vunpack.c.0.s8 %v10657
        %v10659 = vlaneseq
        %v10660 = vshrl.u32 %v10659, 7
        %v10661 = vsub.s32 %v10658, %v10660
        %v10662 = vrot.slane %v10648, %v10661
        %v10663 = vcombine.low %v10607, %v10639
        %v10664 = vcombine.high %v10607, %v10639
        %v10665 = vcombine.low %v10614, %v10646
        %v10666 = vcombine.high %v10614, %v10646
        %v10667 = vcombine.low %v10623, %v10655
        %v10668 = vcombine.high %v10623, %v10655
        %v10669 = vcombine.low %v10630, %v10662
        %v10670 = vcombine.high %v10630, %v10662
        %v10671 = vcombine.low %v10295, %v10359
        %v10672 = vcombine.high %v10295, %v10359
        %v10674 = vunpack.c.l.s4 1983009808
        %v10675 = vunpack.c.0.s8 %v10674
        %v10676 = vlaneseq
        %v10677 = vshrl.u32 %v10676, 7
        %v10678 = vsub.s32 %v10675, %v10677
        %v10679 = vrot.slane %v10671, %v10678
        %v10681 = vunpack.c.l.s4 1983009808
        %v10682 = vunpack.c.0.s8 %v10681
        %v10683 = vlaneseq
        %v10684 = vshrl.u32 %v10683, 7
        %v10685 = vsub.s32 %v10682, %v10684
        %v10686 = vrot.slane %v10672, %v10685
        %v10687 = vcombine.low %v10327, %v10391
        %v10688 = vcombine.high %v10327, %v10391
        %v10690 = vunpack.c.l.s4 1983009808
        %v10691 = vunpack.c.0.s8 %v10690
        %v10692 = vlaneseq
        %v10693 = vshrl.u32 %v10692, 7
        %v10694 = vsub.s32 %v10691, %v10693
        %v10695 = vrot.slane %v10687, %v10694
        %v10697 = vunpack.c.l.s4 1983009808
        %v10698 = vunpack.c.0.s8 %v10697
        %v10699 = vlaneseq
        %v10700 = vshrl.u32 %v10699, 7
        %v10701 = vsub.s32 %v10698, %v10700
        %v10702 = vrot.slane %v10688, %v10701
        %v10703 = vcombine.low %v10423, %v10487
        %v10704 = vcombine.high %v10423, %v10487
        %v10706 = vunpack.c.l.s4 1983009808
        %v10707 = vunpack.c.0.s8 %v10706
        %v10708 = vlaneseq
        %v10709 = vshrl.u32 %v10708, 7
        %v10710 = vsub.s32 %v10707, %v10709
        %v10711 = vrot.slane %v10703, %v10710
        %v10713 = vunpack.c.l.s4 1983009808
        %v10714 = vunpack.c.0.s8 %v10713
        %v10715 = vlaneseq
        %v10716 = vshrl.u32 %v10715, 7
        %v10717 = vsub.s32 %v10714, %v10716
        %v10718 = vrot.slane %v10704, %v10717
        %v10719 = vcombine.low %v10455, %v10519
        %v10720 = vcombine.high %v10455, %v10519
        %v10722 = vunpack.c.l.s4 1983009808
        %v10723 = vunpack.c.0.s8 %v10722
        %v10724 = vlaneseq
        %v10725 = vshrl.u32 %v10724, 7
        %v10726 = vsub.s32 %v10723, %v10725
        %v10727 = vrot.slane %v10719, %v10726
        %v10729 = vunpack.c.l.s4 1983009808
        %v10730 = vunpack.c.0.s8 %v10729
        %v10731 = vlaneseq
        %v10732 = vshrl.u32 %v10731, 7
        %v10733 = vsub.s32 %v10730, %v10732
        %v10734 = vrot.slane %v10720, %v10733
        %v10735 = vcombine.low %v10679, %v10695
        %v10736 = vcombine.high %v10679, %v10695
        %v10738 = vunpack.c.l.s4 1934713408
        %v10739 = vunpack.c.0.s8 %v10738
        %v10740 = vlaneseq
        %v10741 = vshrl.u32 %v10740, 7
        %v10742 = vsub.s32 %v10739, %v10741
        %v10743 = vrot.slane %v10735, %v10742
        %v10745 = vunpack.c.l.s4 1934713408
        %v10746 = vunpack.c.0.s8 %v10745
        %v10747 = vlaneseq
        %v10748 = vshrl.u32 %v10747, 7
        %v10749 = vsub.s32 %v10746, %v10748
        %v10750 = vrot.slane %v10736, %v10749
        %v10751 = vcombine.low %v10686, %v10702
        %v10752 = vcombine.high %v10686, %v10702
        %v10754 = vunpack.c.l.s4 1934713408
        %v10755 = vunpack.c.0.s8 %v10754
        %v10756 = vlaneseq
        %v10757 = vshrl.u32 %v10756, 7
        %v10758 = vsub.s32 %v10755, %v10757
        %v10759 = vrot.slane %v10751, %v10758
        %v10761 = vunpack.c.l.s4 1934713408
        %v10762 = vunpack.c.0.s8 %v10761
        %v10763 = vlaneseq
        %v10764 = vshrl.u32 %v10763, 7
        %v10765 = vsub.s32 %v10762, %v10764
        %v10766 = vrot.slane %v10752, %v10765
        %v10767 = vcombine.low %v10711, %v10727
        %v10768 = vcombine.high %v10711, %v10727
        %v10770 = vunpack.c.l.s4 1934713408
        %v10771 = vunpack.c.0.s8 %v10770
        %v10772 = vlaneseq
        %v10773 = vshrl.u32 %v10772, 7
        %v10774 = vsub.s32 %v10771, %v10773
        %v10775 = vrot.slane %v10767, %v10774
        %v10777 = vunpack.c.l.s4 1934713408
        %v10778 = vunpack.c.0.s8 %v10777
        %v10779 = vlaneseq
        %v10780 = vshrl.u32 %v10779, 7
        %v10781 = vsub.s32 %v10778, %v10780
        %v10782 = vrot.slane %v10768, %v10781
        %v10783 = vcombine.low %v10718, %v10734
        %v10784 = vcombine.high %v10718, %v10734
        %v10786 = vunpack.c.l.s4 1934713408
        %v10787 = vunpack.c.0.s8 %v10786
        %v10788 = vlaneseq
        %v10789 = vshrl.u32 %v10788, 7
        %v10790 = vsub.s32 %v10787, %v10789
        %v10791 = vrot.slane %v10783, %v10790
        %v10793 = vunpack.c.l.s4 1934713408
        %v10794 = vunpack.c.0.s8 %v10793
        %v10795 = vlaneseq
        %v10796 = vshrl.u32 %v10795, 7
        %v10797 = vsub.s32 %v10794, %v10796
        %v10798 = vrot.slane %v10784, %v10797
        %v10799 = vcombine.low %v10743, %v10775
        %v10800 = vcombine.high %v10743, %v10775
        %v10801 = vcombine.low %v10750, %v10782
        %v10802 = vcombine.high %v10750, %v10782
        %v10803 = vcombine.low %v10759, %v10791
        %v10804 = vcombine.high %v10759, %v10791
        %v10805 = vcombine.low %v10766, %v10798
        %v10806 = vcombine.high %v10766, %v10798
        %v10807 = vcombine.low %v10040, %v10104
        %v10808 = vcombine.high %v10040, %v10104
        %v10810 = vunpack.c.l.s4 1983009808
        %v10811 = vunpack.c.0.s8 %v10810
        %v10812 = vlaneseq
        %v10813 = vshrl.u32 %v10812, 7
        %v10814 = vsub.s32 %v10811, %v10813
        %v10815 = vrot.slane %v10807, %v10814
        %v10817 = vunpack.c.l.s4 1983009808
        %v10818 = vunpack.c.0.s8 %v10817
        %v10819 = vlaneseq
        %v10820 = vshrl.u32 %v10819, 7
        %v10821 = vsub.s32 %v10818, %v10820
        %v10822 = vrot.slane %v10808, %v10821
        %v10823 = vcombine.low %v10072, %v10136
        %v10824 = vcombine.high %v10072, %v10136
        %v10826 = vunpack.c.l.s4 1983009808
        %v10827 = vunpack.c.0.s8 %v10826
        %v10828 = vlaneseq
        %v10829 = vshrl.u32 %v10828, 7
        %v10830 = vsub.s32 %v10827, %v10829
        %v10831 = vrot.slane %v10823, %v10830
        %v10833 = vunpack.c.l.s4 1983009808
        %v10834 = vunpack.c.0.s8 %v10833
        %v10835 = vlaneseq
        %v10836 = vshrl.u32 %v10835, 7
        %v10837 = vsub.s32 %v10834, %v10836
        %v10838 = vrot.slane %v10824, %v10837
        %v10839 = vcombine.low %v10168, %v10232
        %v10840 = vcombine.high %v10168, %v10232
        %v10842 = vunpack.c.l.s4 1983009808
        %v10843 = vunpack.c.0.s8 %v10842
        %v10844 = vlaneseq
        %v10845 = vshrl.u32 %v10844, 7
        %v10846 = vsub.s32 %v10843, %v10845
        %v10847 = vrot.slane %v10839, %v10846
        %v10849 = vunpack.c.l.s4 1983009808
        %v10850 = vunpack.c.0.s8 %v10849
        %v10851 = vlaneseq
        %v10852 = vshrl.u32 %v10851, 7
        %v10853 = vsub.s32 %v10850, %v10852
        %v10854 = vrot.slane %v10840, %v10853
        %v10855 = vcombine.low %v10200, %v10264
        %v10856 = vcombine.high %v10200, %v10264
        %v10858 = vunpack.c.l.s4 1983009808
        %v10859 = vunpack.c.0.s8 %v10858
        %v10860 = vlaneseq
        %v10861 = vshrl.u32 %v10860, 7
        %v10862 = vsub.s32 %v10859, %v10861
        %v10863 = vrot.slane %v10855, %v10862
        %v10865 = vunpack.c.l.s4 1983009808
        %v10866 = vunpack.c.0.s8 %v10865
        %v10867 = vlaneseq
        %v10868 = vshrl.u32 %v10867, 7
        %v10869 = vsub.s32 %v10866, %v10868
        %v10870 = vrot.slane %v10856, %v10869
        %v10871 = vcombine.low %v10815, %v10831
        %v10872 = vcombine.high %v10815, %v10831
        %v10874 = vunpack.c.l.s4 1934713408
        %v10875 = vunpack.c.0.s8 %v10874
        %v10876 = vlaneseq
        %v10877 = vshrl.u32 %v10876, 7
        %v10878 = vsub.s32 %v10875, %v10877
        %v10879 = vrot.slane %v10871, %v10878
        %v10881 = vunpack.c.l.s4 1934713408
        %v10882 = vunpack.c.0.s8 %v10881
        %v10883 = vlaneseq
        %v10884 = vshrl.u32 %v10883, 7
        %v10885 = vsub.s32 %v10882, %v10884
        %v10886 = vrot.slane %v10872, %v10885
        %v10887 = vcombine.low %v10822, %v10838
        %v10888 = vcombine.high %v10822, %v10838
        %v10890 = vunpack.c.l.s4 1934713408
        %v10891 = vunpack.c.0.s8 %v10890
        %v10892 = vlaneseq
        %v10893 = vshrl.u32 %v10892, 7
        %v10894 = vsub.s32 %v10891, %v10893
        %v10895 = vrot.slane %v10887, %v10894
        %v10897 = vunpack.c.l.s4 1934713408
        %v10898 = vunpack.c.0.s8 %v10897
        %v10899 = vlaneseq
        %v10900 = vshrl.u32 %v10899, 7
        %v10901 = vsub.s32 %v10898, %v10900
        %v10902 = vrot.slane %v10888, %v10901
        %v10903 = vcombine.low %v10847, %v10863
        %v10904 = vcombine.high %v10847, %v10863
        %v10906 = vunpack.c.l.s4 1934713408
        %v10907 = vunpack.c.0.s8 %v10906
        %v10908 = vlaneseq
        %v10909 = vshrl.u32 %v10908, 7
        %v10910 = vsub.s32 %v10907, %v10909
        %v10911 = vrot.slane %v10903, %v10910
        %v10913 = vunpack.c.l.s4 1934713408
        %v10914 = vunpack.c.0.s8 %v10913
        %v10915 = vlaneseq
        %v10916 = vshrl.u32 %v10915, 7
        %v10917 = vsub.s32 %v10914, %v10916
        %v10918 = vrot.slane %v10904, %v10917
        %v10919 = vcombine.low %v10854, %v10870
        %v10920 = vcombine.high %v10854, %v10870
        %v10922 = vunpack.c.l.s4 1934713408
        %v10923 = vunpack.c.0.s8 %v10922
        %v10924 = vlaneseq
        %v10925 = vshrl.u32 %v10924, 7
        %v10926 = vsub.s32 %v10923, %v10925
        %v10927 = vrot.slane %v10919, %v10926
        %v10929 = vunpack.c.l.s4 1934713408
        %v10930 = vunpack.c.0.s8 %v10929
        %v10931 = vlaneseq
        %v10932 = vshrl.u32 %v10931, 7
        %v10933 = vsub.s32 %v10930, %v10932
        %v10934 = vrot.slane %v10920, %v10933
        %v10935 = vcombine.low %v10879, %v10911
        %v10936 = vcombine.high %v10879, %v10911
        %v10937 = vcombine.low %v10886, %v10918
        %v10938 = vcombine.high %v10886, %v10918
        %v10939 = vcombine.low %v10895, %v10927
        %v10940 = vcombine.high %v10895, %v10927
        %v10941 = vcombine.low %v10902, %v10934
        %v10942 = vcombine.high %v10902, %v10934
        %v10943 = vcombine.low %v10296, %v10360
        %v10944 = vcombine.high %v10296, %v10360
        %v10946 = vunpack.c.l.s4 1983009808
        %v10947 = vunpack.c.0.s8 %v10946
        %v10948 = vlaneseq
        %v10949 = vshrl.u32 %v10948, 7
        %v10950 = vsub.s32 %v10947, %v10949
        %v10951 = vrot.slane %v10943, %v10950
        %v10953 = vunpack.c.l.s4 1983009808
        %v10954 = vunpack.c.0.s8 %v10953
        %v10955 = vlaneseq
        %v10956 = vshrl.u32 %v10955, 7
        %v10957 = vsub.s32 %v10954, %v10956
        %v10958 = vrot.slane %v10944, %v10957
        %v10959 = vcombine.low %v10328, %v10392
        %v10960 = vcombine.high %v10328, %v10392
        %v10962 = vunpack.c.l.s4 1983009808
        %v10963 = vunpack.c.0.s8 %v10962
        %v10964 = vlaneseq
        %v10965 = vshrl.u32 %v10964, 7
        %v10966 = vsub.s32 %v10963, %v10965
        %v10967 = vrot.slane %v10959, %v10966
        %v10969 = vunpack.c.l.s4 1983009808
        %v10970 = vunpack.c.0.s8 %v10969
        %v10971 = vlaneseq
        %v10972 = vshrl.u32 %v10971, 7
        %v10973 = vsub.s32 %v10970, %v10972
        %v10974 = vrot.slane %v10960, %v10973
        %v10975 = vcombine.low %v10424, %v10488
        %v10976 = vcombine.high %v10424, %v10488
        %v10978 = vunpack.c.l.s4 1983009808
        %v10979 = vunpack.c.0.s8 %v10978
        %v10980 = vlaneseq
        %v10981 = vshrl.u32 %v10980, 7
        %v10982 = vsub.s32 %v10979, %v10981
        %v10983 = vrot.slane %v10975, %v10982
        %v10985 = vunpack.c.l.s4 1983009808
        %v10986 = vunpack.c.0.s8 %v10985
        %v10987 = vlaneseq
        %v10988 = vshrl.u32 %v10987, 7
        %v10989 = vsub.s32 %v10986, %v10988
        %v10990 = vrot.slane %v10976, %v10989
        %v10991 = vcombine.low %v10456, %v10520
        %v10992 = vcombine.high %v10456, %v10520
        %v10994 = vunpack.c.l.s4 1983009808
        %v10995 = vunpack.c.0.s8 %v10994
        %v10996 = vlaneseq
        %v10997 = vshrl.u32 %v10996, 7
        %v10998 = vsub.s32 %v10995, %v10997
        %v10999 = vrot.slane %v10991, %v10998
        %v11001 = vunpack.c.l.s4 1983009808
        %v11002 = vunpack.c.0.s8 %v11001
        %v11003 = vlaneseq
        %v11004 = vshrl.u32 %v11003, 7
        %v11005 = vsub.s32 %v11002, %v11004
        %v11006 = vrot.slane %v10992, %v11005
        %v11007 = vcombine.low %v10951, %v10967
        %v11008 = vcombine.high %v10951, %v10967
        %v11010 = vunpack.c.l.s4 1934713408
        %v11011 = vunpack.c.0.s8 %v11010
        %v11012 = vlaneseq
        %v11013 = vshrl.u32 %v11012, 7
        %v11014 = vsub.s32 %v11011, %v11013
        %v11015 = vrot.slane %v11007, %v11014
        %v11017 = vunpack.c.l.s4 1934713408
        %v11018 = vunpack.c.0.s8 %v11017
        %v11019 = vlaneseq
        %v11020 = vshrl.u32 %v11019, 7
        %v11021 = vsub.s32 %v11018, %v11020
        %v11022 = vrot.slane %v11008, %v11021
        %v11023 = vcombine.low %v10958, %v10974
        %v11024 = vcombine.high %v10958, %v10974
        %v11026 = vunpack.c.l.s4 1934713408
        %v11027 = vunpack.c.0.s8 %v11026
        %v11028 = vlaneseq
        %v11029 = vshrl.u32 %v11028, 7
        %v11030 = vsub.s32 %v11027, %v11029
        %v11031 = vrot.slane %v11023, %v11030
        %v11033 = vunpack.c.l.s4 1934713408
        %v11034 = vunpack.c.0.s8 %v11033
        %v11035 = vlaneseq
        %v11036 = vshrl.u32 %v11035, 7
        %v11037 = vsub.s32 %v11034, %v11036
        %v11038 = vrot.slane %v11024, %v11037
        %v11039 = vcombine.low %v10983, %v10999
        %v11040 = vcombine.high %v10983, %v10999
        %v11042 = vunpack.c.l.s4 1934713408
        %v11043 = vunpack.c.0.s8 %v11042
        %v11044 = vlaneseq
        %v11045 = vshrl.u32 %v11044, 7
        %v11046 = vsub.s32 %v11043, %v11045
        %v11047 = vrot.slane %v11039, %v11046
        %v11049 = vunpack.c.l.s4 1934713408
        %v11050 = vunpack.c.0.s8 %v11049
        %v11051 = vlaneseq
        %v11052 = vshrl.u32 %v11051, 7
        %v11053 = vsub.s32 %v11050, %v11052
        %v11054 = vrot.slane %v11040, %v11053
        %v11055 = vcombine.low %v10990, %v11006
        %v11056 = vcombine.high %v10990, %v11006
        %v11058 = vunpack.c.l.s4 1934713408
        %v11059 = vunpack.c.0.s8 %v11058
        %v11060 = vlaneseq
        %v11061 = vshrl.u32 %v11060, 7
        %v11062 = vsub.s32 %v11059, %v11061
        %v11063 = vrot.slane %v11055, %v11062
        %v11065 = vunpack.c.l.s4 1934713408
        %v11066 = vunpack.c.0.s8 %v11065
        %v11067 = vlaneseq
        %v11068 = vshrl.u32 %v11067, 7
        %v11069 = vsub.s32 %v11066, %v11068
        %v11070 = vrot.slane %v11056, %v11069
        %v11071 = vcombine.low %v11015, %v11047
        %v11072 = vcombine.high %v11015, %v11047
        %v11073 = vcombine.low %v11022, %v11054
        %v11074 = vcombine.high %v11022, %v11054
        %v11075 = vcombine.low %v11031, %v11063
        %v11076 = vcombine.high %v11031, %v11063
        %v11077 = vcombine.low %v11038, %v11070
        %v11078 = vcombine.high %v11038, %v11070
        %v11079 = vcombine.low %v10663, %v10665
        %v11080 = vcombine.high %v10663, %v10665
        %v11082 = vunpack.c.l.s4 1983009808
        %v11083 = vunpack.c.0.s8 %v11082
        %v11084 = vlaneseq
        %v11085 = vshrl.u32 %v11084, 7
        %v11086 = vsub.s32 %v11083, %v11085
        %v11087 = vrot.slane %v11079, %v11086
        %v11089 = vunpack.c.l.s4 1983009808
        %v11090 = vunpack.c.0.s8 %v11089
        %v11091 = vlaneseq
        %v11092 = vshrl.u32 %v11091, 7
        %v11093 = vsub.s32 %v11090, %v11092
        %v11094 = vrot.slane %v11080, %v11093
        %v11095 = vcombine.low %v10664, %v10666
        %v11096 = vcombine.high %v10664, %v10666
        %v11098 = vunpack.c.l.s4 1983009808
        %v11099 = vunpack.c.0.s8 %v11098
        %v11100 = vlaneseq
        %v11101 = vshrl.u32 %v11100, 7
        %v11102 = vsub.s32 %v11099, %v11101
        %v11103 = vrot.slane %v11095, %v11102
        %v11105 = vunpack.c.l.s4 1983009808
        %v11106 = vunpack.c.0.s8 %v11105
        %v11107 = vlaneseq
        %v11108 = vshrl.u32 %v11107, 7
        %v11109 = vsub.s32 %v11106, %v11108
        %v11110 = vrot.slane %v11096, %v11109
        %v11111 = vcombine.low %v10667, %v10669
        %v11112 = vcombine.high %v10667, %v10669
        %v11114 = vunpack.c.l.s4 1983009808
        %v11115 = vunpack.c.0.s8 %v11114
        %v11116 = vlaneseq
        %v11117 = vshrl.u32 %v11116, 7
        %v11118 = vsub.s32 %v11115, %v11117
        %v11119 = vrot.slane %v11111, %v11118
        %v11121 = vunpack.c.l.s4 1983009808
        %v11122 = vunpack.c.0.s8 %v11121
        %v11123 = vlaneseq
        %v11124 = vshrl.u32 %v11123, 7
        %v11125 = vsub.s32 %v11122, %v11124
        %v11126 = vrot.slane %v11112, %v11125
        %v11127 = vcombine.low %v10668, %v10670
        %v11128 = vcombine.high %v10668, %v10670
        %v11130 = vunpack.c.l.s4 1983009808
        %v11131 = vunpack.c.0.s8 %v11130
        %v11132 = vlaneseq
        %v11133 = vshrl.u32 %v11132, 7
        %v11134 = vsub.s32 %v11131, %v11133
        %v11135 = vrot.slane %v11127, %v11134
        %v11137 = vunpack.c.l.s4 1983009808
        %v11138 = vunpack.c.0.s8 %v11137
        %v11139 = vlaneseq
        %v11140 = vshrl.u32 %v11139, 7
        %v11141 = vsub.s32 %v11138, %v11140
        %v11142 = vrot.slane %v11128, %v11141
        %v11143 = vcombine.low %v11087, %v11103
        %v11144 = vcombine.high %v11087, %v11103
        %v11146 = vunpack.c.l.s4 1934713408
        %v11147 = vunpack.c.0.s8 %v11146
        %v11148 = vlaneseq
        %v11149 = vshrl.u32 %v11148, 7
        %v11150 = vsub.s32 %v11147, %v11149
        %v11151 = vrot.slane %v11143, %v11150
        %v11153 = vunpack.c.l.s4 1934713408
        %v11154 = vunpack.c.0.s8 %v11153
        %v11155 = vlaneseq
        %v11156 = vshrl.u32 %v11155, 7
        %v11157 = vsub.s32 %v11154, %v11156
        %v11158 = vrot.slane %v11144, %v11157
        %v11159 = vcombine.low %v11094, %v11110
        %v11160 = vcombine.high %v11094, %v11110
        %v11162 = vunpack.c.l.s4 1934713408
        %v11163 = vunpack.c.0.s8 %v11162
        %v11164 = vlaneseq
        %v11165 = vshrl.u32 %v11164, 7
        %v11166 = vsub.s32 %v11163, %v11165
        %v11167 = vrot.slane %v11159, %v11166
        %v11169 = vunpack.c.l.s4 1934713408
        %v11170 = vunpack.c.0.s8 %v11169
        %v11171 = vlaneseq
        %v11172 = vshrl.u32 %v11171, 7
        %v11173 = vsub.s32 %v11170, %v11172
        %v11174 = vrot.slane %v11160, %v11173
        %v11175 = vcombine.low %v11119, %v11135
        %v11176 = vcombine.high %v11119, %v11135
        %v11178 = vunpack.c.l.s4 1934713408
        %v11179 = vunpack.c.0.s8 %v11178
        %v11180 = vlaneseq
        %v11181 = vshrl.u32 %v11180, 7
        %v11182 = vsub.s32 %v11179, %v11181
        %v11183 = vrot.slane %v11175, %v11182
        %v11185 = vunpack.c.l.s4 1934713408
        %v11186 = vunpack.c.0.s8 %v11185
        %v11187 = vlaneseq
        %v11188 = vshrl.u32 %v11187, 7
        %v11189 = vsub.s32 %v11186, %v11188
        %v11190 = vrot.slane %v11176, %v11189
        %v11191 = vcombine.low %v11126, %v11142
        %v11192 = vcombine.high %v11126, %v11142
        %v11194 = vunpack.c.l.s4 1934713408
        %v11195 = vunpack.c.0.s8 %v11194
        %v11196 = vlaneseq
        %v11197 = vshrl.u32 %v11196, 7
        %v11198 = vsub.s32 %v11195, %v11197
        %v11199 = vrot.slane %v11191, %v11198
        %v11201 = vunpack.c.l.s4 1934713408
        %v11202 = vunpack.c.0.s8 %v11201
        %v11203 = vlaneseq
        %v11204 = vshrl.u32 %v11203, 7
        %v11205 = vsub.s32 %v11202, %v11204
        %v11206 = vrot.slane %v11192, %v11205
        %v11207 = vcombine.low %v11151, %v11183
        %v11208 = vcombine.high %v11151, %v11183
        %v11209 = vcombine.low %v11158, %v11190
        %v11210 = vcombine.high %v11158, %v11190
        %v11211 = vcombine.low %v11167, %v11199
        %v11212 = vcombine.high %v11167, %v11199
        %v11213 = vcombine.low %v11174, %v11206
        %v11214 = vcombine.high %v11174, %v11206
        %v11215 = vcombine.low %v10935, %v10937
        %v11216 = vcombine.high %v10935, %v10937
        %v11218 = vunpack.c.l.s4 1983009808
        %v11219 = vunpack.c.0.s8 %v11218
        %v11220 = vlaneseq
        %v11221 = vshrl.u32 %v11220, 7
        %v11222 = vsub.s32 %v11219, %v11221
        %v11223 = vrot.slane %v11215, %v11222
        %v11225 = vunpack.c.l.s4 1983009808
        %v11226 = vunpack.c.0.s8 %v11225
        %v11227 = vlaneseq
        %v11228 = vshrl.u32 %v11227, 7
        %v11229 = vsub.s32 %v11226, %v11228
        %v11230 = vrot.slane %v11216, %v11229
        %v11231 = vcombine.low %v10936, %v10938
        %v11232 = vcombine.high %v10936, %v10938
        %v11234 = vunpack.c.l.s4 1983009808
        %v11235 = vunpack.c.0.s8 %v11234
        %v11236 = vlaneseq
        %v11237 = vshrl.u32 %v11236, 7
        %v11238 = vsub.s32 %v11235, %v11237
        %v11239 = vrot.slane %v11231, %v11238
        %v11241 = vunpack.c.l.s4 1983009808
        %v11242 = vunpack.c.0.s8 %v11241
        %v11243 = vlaneseq
        %v11244 = vshrl.u32 %v11243, 7
        %v11245 = vsub.s32 %v11242, %v11244
        %v11246 = vrot.slane %v11232, %v11245
        %v11247 = vcombine.low %v10939, %v10941
        %v11248 = vcombine.high %v10939, %v10941
        %v11250 = vunpack.c.l.s4 1983009808
        %v11251 = vunpack.c.0.s8 %v11250
        %v11252 = vlaneseq
        %v11253 = vshrl.u32 %v11252, 7
        %v11254 = vsub.s32 %v11251, %v11253
        %v11255 = vrot.slane %v11247, %v11254
        %v11257 = vunpack.c.l.s4 1983009808
        %v11258 = vunpack.c.0.s8 %v11257
        %v11259 = vlaneseq
        %v11260 = vshrl.u32 %v11259, 7
        %v11261 = vsub.s32 %v11258, %v11260
        %v11262 = vrot.slane %v11248, %v11261
        %v11263 = vcombine.low %v10940, %v10942
        %v11264 = vcombine.high %v10940, %v10942
        %v11266 = vunpack.c.l.s4 1983009808
        %v11267 = vunpack.c.0.s8 %v11266
        %v11268 = vlaneseq
        %v11269 = vshrl.u32 %v11268, 7
        %v11270 = vsub.s32 %v11267, %v11269
        %v11271 = vrot.slane %v11263, %v11270
        %v11273 = vunpack.c.l.s4 1983009808
        %v11274 = vunpack.c.0.s8 %v11273
        %v11275 = vlaneseq
        %v11276 = vshrl.u32 %v11275, 7
        %v11277 = vsub.s32 %v11274, %v11276
        %v11278 = vrot.slane %v11264, %v11277
        %v11279 = vcombine.low %v11223, %v11239
        %v11280 = vcombine.high %v11223, %v11239
        %v11282 = vunpack.c.l.s4 1934713408
        %v11283 = vunpack.c.0.s8 %v11282
        %v11284 = vlaneseq
        %v11285 = vshrl.u32 %v11284, 7
        %v11286 = vsub.s32 %v11283, %v11285
        %v11287 = vrot.slane %v11279, %v11286
        %v11289 = vunpack.c.l.s4 1934713408
        %v11290 = vunpack.c.0.s8 %v11289
        %v11291 = vlaneseq
        %v11292 = vshrl.u32 %v11291, 7
        %v11293 = vsub.s32 %v11290, %v11292
        %v11294 = vrot.slane %v11280, %v11293
        %v11295 = vcombine.low %v11230, %v11246
        %v11296 = vcombine.high %v11230, %v11246
        %v11298 = vunpack.c.l.s4 1934713408
        %v11299 = vunpack.c.0.s8 %v11298
        %v11300 = vlaneseq
        %v11301 = vshrl.u32 %v11300, 7
        %v11302 = vsub.s32 %v11299, %v11301
        %v11303 = vrot.slane %v11295, %v11302
        %v11305 = vunpack.c.l.s4 1934713408
        %v11306 = vunpack.c.0.s8 %v11305
        %v11307 = vlaneseq
        %v11308 = vshrl.u32 %v11307, 7
        %v11309 = vsub.s32 %v11306, %v11308
        %v11310 = vrot.slane %v11296, %v11309
        %v11311 = vcombine.low %v11255, %v11271
        %v11312 = vcombine.high %v11255, %v11271
        %v11314 = vunpack.c.l.s4 1934713408
        %v11315 = vunpack.c.0.s8 %v11314
        %v11316 = vlaneseq
        %v11317 = vshrl.u32 %v11316, 7
        %v11318 = vsub.s32 %v11315, %v11317
        %v11319 = vrot.slane %v11311, %v11318
        %v11321 = vunpack.c.l.s4 1934713408
        %v11322 = vunpack.c.0.s8 %v11321
        %v11323 = vlaneseq
        %v11324 = vshrl.u32 %v11323, 7
        %v11325 = vsub.s32 %v11322, %v11324
        %v11326 = vrot.slane %v11312, %v11325
        %v11327 = vcombine.low %v11262, %v11278
        %v11328 = vcombine.high %v11262, %v11278
        %v11330 = vunpack.c.l.s4 1934713408
        %v11331 = vunpack.c.0.s8 %v11330
        %v11332 = vlaneseq
        %v11333 = vshrl.u32 %v11332, 7
        %v11334 = vsub.s32 %v11331, %v11333
        %v11335 = vrot.slane %v11327, %v11334
        %v11337 = vunpack.c.l.s4 1934713408
        %v11338 = vunpack.c.0.s8 %v11337
        %v11339 = vlaneseq
        %v11340 = vshrl.u32 %v11339, 7
        %v11341 = vsub.s32 %v11338, %v11340
        %v11342 = vrot.slane %v11328, %v11341
        %v11343 = vcombine.low %v11287, %v11319
        %v11344 = vcombine.high %v11287, %v11319
        %v11345 = vcombine.low %v11294, %v11326
        %v11346 = vcombine.high %v11294, %v11326
        %v11347 = vcombine.low %v11303, %v11335
        %v11348 = vcombine.high %v11303, %v11335
        %v11349 = vcombine.low %v11310, %v11342
        %v11350 = vcombine.high %v11310, %v11342
        %v11351 = vcombine.low %v10799, %v10801
        %v11352 = vcombine.high %v10799, %v10801
        %v11354 = vunpack.c.l.s4 1983009808
        %v11355 = vunpack.c.0.s8 %v11354
        %v11356 = vlaneseq
        %v11357 = vshrl.u32 %v11356, 7
        %v11358 = vsub.s32 %v11355, %v11357
        %v11359 = vrot.slane %v11351, %v11358
        %v11361 = vunpack.c.l.s4 1983009808
        %v11362 = vunpack.c.0.s8 %v11361
        %v11363 = vlaneseq
        %v11364 = vshrl.u32 %v11363, 7
        %v11365 = vsub.s32 %v11362, %v11364
        %v11366 = vrot.slane %v11352, %v11365
        %v11367 = vcombine.low %v10800, %v10802
        %v11368 = vcombine.high %v10800, %v10802
        %v11370 = vunpack.c.l.s4 1983009808
        %v11371 = vunpack.c.0.s8 %v11370
        %v11372 = vlaneseq
        %v11373 = vshrl.u32 %v11372, 7
        %v11374 = vsub.s32 %v11371, %v11373
        %v11375 = vrot.slane %v11367, %v11374
        %v11377 = vunpack.c.l.s4 1983009808
        %v11378 = vunpack.c.0.s8 %v11377
        %v11379 = vlaneseq
        %v11380 = vshrl.u32 %v11379, 7
        %v11381 = vsub.s32 %v11378, %v11380
        %v11382 = vrot.slane %v11368, %v11381
        %v11383 = vcombine.low %v10803, %v10805
        %v11384 = vcombine.high %v10803, %v10805
        %v11386 = vunpack.c.l.s4 1983009808
        %v11387 = vunpack.c.0.s8 %v11386
        %v11388 = vlaneseq
        %v11389 = vshrl.u32 %v11388, 7
        %v11390 = vsub.s32 %v11387, %v11389
        %v11391 = vrot.slane %v11383, %v11390
        %v11393 = vunpack.c.l.s4 1983009808
        %v11394 = vunpack.c.0.s8 %v11393
        %v11395 = vlaneseq
        %v11396 = vshrl.u32 %v11395, 7
        %v11397 = vsub.s32 %v11394, %v11396
        %v11398 = vrot.slane %v11384, %v11397
        %v11399 = vcombine.low %v10804, %v10806
        %v11400 = vcombine.high %v10804, %v10806
        %v11402 = vunpack.c.l.s4 1983009808
        %v11403 = vunpack.c.0.s8 %v11402
        %v11404 = vlaneseq
        %v11405 = vshrl.u32 %v11404, 7
        %v11406 = vsub.s32 %v11403, %v11405
        %v11407 = vrot.slane %v11399, %v11406
        %v11409 = vunpack.c.l.s4 1983009808
        %v11410 = vunpack.c.0.s8 %v11409
        %v11411 = vlaneseq
        %v11412 = vshrl.u32 %v11411, 7
        %v11413 = vsub.s32 %v11410, %v11412
        %v11414 = vrot.slane %v11400, %v11413
        %v11415 = vcombine.low %v11359, %v11375
        %v11416 = vcombine.high %v11359, %v11375
        %v11418 = vunpack.c.l.s4 1934713408
        %v11419 = vunpack.c.0.s8 %v11418
        %v11420 = vlaneseq
        %v11421 = vshrl.u32 %v11420, 7
        %v11422 = vsub.s32 %v11419, %v11421
        %v11423 = vrot.slane %v11415, %v11422
        %v11425 = vunpack.c.l.s4 1934713408
        %v11426 = vunpack.c.0.s8 %v11425
        %v11427 = vlaneseq
        %v11428 = vshrl.u32 %v11427, 7
        %v11429 = vsub.s32 %v11426, %v11428
        %v11430 = vrot.slane %v11416, %v11429
        %v11431 = vcombine.low %v11366, %v11382
        %v11432 = vcombine.high %v11366, %v11382
        %v11434 = vunpack.c.l.s4 1934713408
        %v11435 = vunpack.c.0.s8 %v11434
        %v11436 = vlaneseq
        %v11437 = vshrl.u32 %v11436, 7
        %v11438 = vsub.s32 %v11435, %v11437
        %v11439 = vrot.slane %v11431, %v11438
        %v11441 = vunpack.c.l.s4 1934713408
        %v11442 = vunpack.c.0.s8 %v11441
        %v11443 = vlaneseq
        %v11444 = vshrl.u32 %v11443, 7
        %v11445 = vsub.s32 %v11442, %v11444
        %v11446 = vrot.slane %v11432, %v11445
        %v11447 = vcombine.low %v11391, %v11407
        %v11448 = vcombine.high %v11391, %v11407
        %v11450 = vunpack.c.l.s4 1934713408
        %v11451 = vunpack.c.0.s8 %v11450
        %v11452 = vlaneseq
        %v11453 = vshrl.u32 %v11452, 7
        %v11454 = vsub.s32 %v11451, %v11453
        %v11455 = vrot.slane %v11447, %v11454
        %v11457 = vunpack.c.l.s4 1934713408
        %v11458 = vunpack.c.0.s8 %v11457
        %v11459 = vlaneseq
        %v11460 = vshrl.u32 %v11459, 7
        %v11461 = vsub.s32 %v11458, %v11460
        %v11462 = vrot.slane %v11448, %v11461
        %v11463 = vcombine.low %v11398, %v11414
        %v11464 = vcombine.high %v11398, %v11414
        %v11466 = vunpack.c.l.s4 1934713408
        %v11467 = vunpack.c.0.s8 %v11466
        %v11468 = vlaneseq
        %v11469 = vshrl.u32 %v11468, 7
        %v11470 = vsub.s32 %v11467, %v11469
        %v11471 = vrot.slane %v11463, %v11470
        %v11473 = vunpack.c.l.s4 1934713408
        %v11474 = vunpack.c.0.s8 %v11473
        %v11475 = vlaneseq
        %v11476 = vshrl.u32 %v11475, 7
        %v11477 = vsub.s32 %v11474, %v11476
        %v11478 = vrot.slane %v11464, %v11477
        %v11479 = vcombine.low %v11423, %v11455
        %v11480 = vcombine.high %v11423, %v11455
        %v11481 = vcombine.low %v11430, %v11462
        %v11482 = vcombine.high %v11430, %v11462
        %v11483 = vcombine.low %v11439, %v11471
        %v11484 = vcombine.high %v11439, %v11471
        %v11485 = vcombine.low %v11446, %v11478
        %v11486 = vcombine.high %v11446, %v11478
        %v11487 = vcombine.low %v11071, %v11073
        %v11488 = vcombine.high %v11071, %v11073
        %v11490 = vunpack.c.l.s4 1983009808
        %v11491 = vunpack.c.0.s8 %v11490
        %v11492 = vlaneseq
        %v11493 = vshrl.u32 %v11492, 7
        %v11494 = vsub.s32 %v11491, %v11493
        %v11495 = vrot.slane %v11487, %v11494
        %v11497 = vunpack.c.l.s4 1983009808
        %v11498 = vunpack.c.0.s8 %v11497
        %v11499 = vlaneseq
        %v11500 = vshrl.u32 %v11499, 7
        %v11501 = vsub.s32 %v11498, %v11500
        %v11502 = vrot.slane %v11488, %v11501
        %v11503 = vcombine.low %v11072, %v11074
        %v11504 = vcombine.high %v11072, %v11074
        %v11506 = vunpack.c.l.s4 1983009808
        %v11507 = vunpack.c.0.s8 %v11506
        %v11508 = vlaneseq
        %v11509 = vshrl.u32 %v11508, 7
        %v11510 = vsub.s32 %v11507, %v11509
        %v11511 = vrot.slane %v11503, %v11510
        %v11513 = vunpack.c.l.s4 1983009808
        %v11514 = vunpack.c.0.s8 %v11513
        %v11515 = vlaneseq
        %v11516 = vshrl.u32 %v11515, 7
        %v11517 = vsub.s32 %v11514, %v11516
        %v11518 = vrot.slane %v11504, %v11517
        %v11519 = vcombine.low %v11075, %v11077
        %v11520 = vcombine.high %v11075, %v11077
        %v11522 = vunpack.c.l.s4 1983009808
        %v11523 = vunpack.c.0.s8 %v11522
        %v11524 = vlaneseq
        %v11525 = vshrl.u32 %v11524, 7
        %v11526 = vsub.s32 %v11523, %v11525
        %v11527 = vrot.slane %v11519, %v11526
        %v11529 = vunpack.c.l.s4 1983009808
        %v11530 = vunpack.c.0.s8 %v11529
        %v11531 = vlaneseq
        %v11532 = vshrl.u32 %v11531, 7
        %v11533 = vsub.s32 %v11530, %v11532
        %v11534 = vrot.slane %v11520, %v11533
        %v11535 = vcombine.low %v11076, %v11078
        %v11536 = vcombine.high %v11076, %v11078
        %v11538 = vunpack.c.l.s4 1983009808
        %v11539 = vunpack.c.0.s8 %v11538
        %v11540 = vlaneseq
        %v11541 = vshrl.u32 %v11540, 7
        %v11542 = vsub.s32 %v11539, %v11541
        %v11543 = vrot.slane %v11535, %v11542
        %v11545 = vunpack.c.l.s4 1983009808
        %v11546 = vunpack.c.0.s8 %v11545
        %v11547 = vlaneseq
        %v11548 = vshrl.u32 %v11547, 7
        %v11549 = vsub.s32 %v11546, %v11548
        %v11550 = vrot.slane %v11536, %v11549
        %v11551 = vcombine.low %v11495, %v11511
        %v11552 = vcombine.high %v11495, %v11511
        %v11554 = vunpack.c.l.s4 1934713408
        %v11555 = vunpack.c.0.s8 %v11554
        %v11556 = vlaneseq
        %v11557 = vshrl.u32 %v11556, 7
        %v11558 = vsub.s32 %v11555, %v11557
        %v11559 = vrot.slane %v11551, %v11558
        %v11561 = vunpack.c.l.s4 1934713408
        %v11562 = vunpack.c.0.s8 %v11561
        %v11563 = vlaneseq
        %v11564 = vshrl.u32 %v11563, 7
        %v11565 = vsub.s32 %v11562, %v11564
        %v11566 = vrot.slane %v11552, %v11565
        %v11567 = vcombine.low %v11502, %v11518
        %v11568 = vcombine.high %v11502, %v11518
        %v11570 = vunpack.c.l.s4 1934713408
        %v11571 = vunpack.c.0.s8 %v11570
        %v11572 = vlaneseq
        %v11573 = vshrl.u32 %v11572, 7
        %v11574 = vsub.s32 %v11571, %v11573
        %v11575 = vrot.slane %v11567, %v11574
        %v11577 = vunpack.c.l.s4 1934713408
        %v11578 = vunpack.c.0.s8 %v11577
        %v11579 = vlaneseq
        %v11580 = vshrl.u32 %v11579, 7
        %v11581 = vsub.s32 %v11578, %v11580
        %v11582 = vrot.slane %v11568, %v11581
        %v11583 = vcombine.low %v11527, %v11543
        %v11584 = vcombine.high %v11527, %v11543
        %v11586 = vunpack.c.l.s4 1934713408
        %v11587 = vunpack.c.0.s8 %v11586
        %v11588 = vlaneseq
        %v11589 = vshrl.u32 %v11588, 7
        %v11590 = vsub.s32 %v11587, %v11589
        %v11591 = vrot.slane %v11583, %v11590
        %v11593 = vunpack.c.l.s4 1934713408
        %v11594 = vunpack.c.0.s8 %v11593
        %v11595 = vlaneseq
        %v11596 = vshrl.u32 %v11595, 7
        %v11597 = vsub.s32 %v11594, %v11596
        %v11598 = vrot.slane %v11584, %v11597
        %v11599 = vcombine.low %v11534, %v11550
        %v11600 = vcombine.high %v11534, %v11550
        %v11602 = vunpack.c.l.s4 1934713408
        %v11603 = vunpack.c.0.s8 %v11602
        %v11604 = vlaneseq
        %v11605 = vshrl.u32 %v11604, 7
        %v11606 = vsub.s32 %v11603, %v11605
        %v11607 = vrot.slane %v11599, %v11606
        %v11609 = vunpack.c.l.s4 1934713408
        %v11610 = vunpack.c.0.s8 %v11609
        %v11611 = vlaneseq
        %v11612 = vshrl.u32 %v11611, 7
        %v11613 = vsub.s32 %v11610, %v11612
        %v11614 = vrot.slane %v11600, %v11613
        %v11615 = vcombine.low %v11559, %v11591
        %v11616 = vcombine.high %v11559, %v11591
        %v11617 = vcombine.low %v11566, %v11598
        %v11618 = vcombine.high %v11566, %v11598
        %v11619 = vcombine.low %v11575, %v11607
        %v11620 = vcombine.high %v11575, %v11607
        %v11621 = vcombine.low %v11582, %v11614
        %v11622 = vcombine.high %v11582, %v11614
        %11625 = vrot.lane.b32.xlu0 %v11208, 16
        %v11626 = vpop.permute.xlu0 %11625
        %11627 = vrot.lane.b32.xlu0 %v11344, 16
        %v11628 = vpop.permute.xlu0 %11627
        %11633 = vrot.lane.b32.xlu0 %v11209, 32
        %v11634 = vpop.permute.xlu0 %11633
        %11635 = vrot.lane.b32.xlu0 %v11345, 32
        %v11636 = vpop.permute.xlu0 %11635
        %11641 = vrot.lane.b32.xlu0 %v11210, 48
        %v11642 = vpop.permute.xlu0 %11641
        %11643 = vrot.lane.b32.xlu0 %v11346, 48
        %v11644 = vpop.permute.xlu0 %11643
        %11649 = vrot.lane.b32.xlu0 %v11211, 64
        %v11650 = vpop.permute.xlu0 %11649
        %11651 = vrot.lane.b32.xlu0 %v11347, 64
        %v11652 = vpop.permute.xlu0 %11651
        %11657 = vrot.lane.b32.xlu0 %v11212, 80
        %v11658 = vpop.permute.xlu0 %11657
        %11659 = vrot.lane.b32.xlu0 %v11348, 80
        %v11660 = vpop.permute.xlu0 %11659
        %11665 = vrot.lane.b32.xlu0 %v11213, 96
        %v11666 = vpop.permute.xlu0 %11665
        %11667 = vrot.lane.b32.xlu0 %v11349, 96
        %v11668 = vpop.permute.xlu0 %11667
        %11673 = vrot.lane.b32.xlu0 %v11214, 112
        %v11674 = vpop.permute.xlu0 %11673
        %11675 = vrot.lane.b32.xlu0 %v11350, 112
        %v11676 = vpop.permute.xlu0 %11675
        %11681 = vrot.lane.b32.xlu0 %v11480, 16
        %v11682 = vpop.permute.xlu0 %11681
        %11683 = vrot.lane.b32.xlu0 %v11616, 16
        %v11684 = vpop.permute.xlu0 %11683
        %11689 = vrot.lane.b32.xlu0 %v11481, 32
        %v11690 = vpop.permute.xlu0 %11689
        %11691 = vrot.lane.b32.xlu0 %v11617, 32
        %v11692 = vpop.permute.xlu0 %11691
        %11697 = vrot.lane.b32.xlu0 %v11482, 48
        %v11698 = vpop.permute.xlu0 %11697
        %11699 = vrot.lane.b32.xlu0 %v11618, 48
        %v11700 = vpop.permute.xlu0 %11699
        %11705 = vrot.lane.b32.xlu0 %v11483, 64
        %v11706 = vpop.permute.xlu0 %11705
        %11707 = vrot.lane.b32.xlu0 %v11619, 64
        %v11708 = vpop.permute.xlu0 %11707
        %11713 = vrot.lane.b32.xlu0 %v11484, 80
        %v11714 = vpop.permute.xlu0 %11713
        %11715 = vrot.lane.b32.xlu0 %v11620, 80
        %v11716 = vpop.permute.xlu0 %11715
        %11721 = vrot.lane.b32.xlu0 %v11485, 96
        %v11722 = vpop.permute.xlu0 %11721
        %11723 = vrot.lane.b32.xlu0 %v11621, 96
        %v11724 = vpop.permute.xlu0 %11723
        %11729 = vrot.lane.b32.xlu0 %v11486, 112
        %v11730 = vpop.permute.xlu0 %11729
        %11731 = vrot.lane.b32.xlu0 %v11622, 112
        %v11732 = vpop.permute.xlu0 %11731
        %v11735 = vsel %vm5925, %v11207, %v11626
        %v11736 = vsel %vm5925, %v11343, %v11628
        %vm11737 = vcmask 261120
        %v11738 = vsel %vm11737, %v11735, %v11634
        %v11739 = vsel %vm11737, %v11736, %v11636
        %vm11740 = vcmask 392192
        %v11741 = vsel %vm11740, %v11738, %v11642
        %v11742 = vsel %vm11740, %v11739, %v11644
        %vm11743 = vcmask 523264
        %v11744 = vsel %vm11743, %v11741, %v11650
        %v11745 = vsel %vm11743, %v11742, %v11652
        %vm11746 = vcmask 654336
        %v11747 = vsel %vm11746, %v11744, %v11658
        %v11748 = vsel %vm11746, %v11745, %v11660
        %vm11749 = vcmask 785408
        %v11750 = vsel %vm11749, %v11747, %v11666
        %v11751 = vsel %vm11749, %v11748, %v11668
        %vm11752 = vcmask 916480
        %v11753 = vsel %vm11752, %v11750, %v11674
        %v11754 = vsel %vm11752, %v11751, %v11676
        %v11755 = vsel %vm5925, %v11479, %v11682
        %v11756 = vsel %vm5925, %v11615, %v11684
        %v11757 = vsel %vm11737, %v11755, %v11690
        %v11758 = vsel %vm11737, %v11756, %v11692
        %v11759 = vsel %vm11740, %v11757, %v11698
        %v11760 = vsel %vm11740, %v11758, %v11700
        %v11761 = vsel %vm11743, %v11759, %v11706
        %v11762 = vsel %vm11743, %v11760, %v11708
        %v11763 = vsel %vm11746, %v11761, %v11714
        %v11764 = vsel %vm11746, %v11762, %v11716
        %v11765 = vsel %vm11749, %v11763, %v11722
        %v11766 = vsel %vm11749, %v11764, %v11724
        %v11767 = vsel %vm11752, %v11765, %v11730
        %v11768 = vsel %vm11752, %v11766, %v11732
        %11769 = vst [vmem:[%s257] sm:$0xff] %v11753
        %11770 = vst [vmem:[%s257 + $0x8] sm:$0xff] %v11767
        %11771 = vst [vmem:[%s257 + $0x10] sm:$0xff] %v11754
        %11772 = vst [vmem:[%s257 + $0x18] sm:$0xff] %v11768
        %s11773 = sand.u32 %s134, 1
        %s11774 = scalar_lea.sflag [#allocation8], %s11773
        %s11775 = sand.u32 %s134, 1
        %s11776 = smul.addr %s11775, 32
        %s11777 = scalar_lea.vmem [#allocation12], %s11776
        // Predicated region
        $region53: #{tpu_custom_call.1} parent=35 // pred_check
          %p11778 = pneg %p144
        $region54: #{tpu_custom_call.1} parent=35 // pred_check_branch
          %11780 = sbr.rel (%p11778) target = $region56
        $region55: #{tpu_custom_call.1} parent=35 // pred_region
          %s11781 = smul.u32 2, %s28
          %s11783 = ssub.s32 512, 512
          %11784 = vsyncadd %s11774, %s11783
          %s11785 = smul.addr %s27, 4
          %s11786 = sadd.s32 %s11781, %s11785
          %s11787 = smul.addr %s11786, 128
          %s11788 = scalar_lea.hbm %s4, %s11787
          %s11789 = sshll.u32 %s11777, 4
          %s11790 = int_to_ptr.vmem [resolvable:$true] %s11789
          %11795 = dma.vmem_to_hbm [thread:$0]  %s11790, 512, %s11788, %s11774, 256, 256, 16
        $region56: #{tpu_custom_call.1} parent=35 // pred_fallthru
          _
      $region36: #{tpu_custom_call.1} parent=5 // pred_fallthru
        _
      %p11796 = scmp.le.s32.totalorder 2, %s18
      // Predicated region
      $region57: #{tpu_custom_call.1} parent=5 // pred_check
        %p11797 = pneg %p11796
      $region58: #{tpu_custom_call.1} parent=5 // pred_check_branch
        %11799 = sbr.rel (%p11797) target = $region60
      $region59: #{tpu_custom_call.1} parent=5 // pred_region
        %s11800 = ssub.s32 %s18, 2
        // Predicated region
        $region61: #{tpu_custom_call.1} parent=59 // pred_check
          %p11801 = pneg %p150
        $region62: #{tpu_custom_call.1} parent=59 // pred_check_branch
          %11803 = sbr.rel (%p11801) target = $region64
        $region63: #{tpu_custom_call.1} parent=59 // pred_region
          %s11804 = sand.u32 %s135, 1
          %s11805 = scalar_lea.sflag [#allocation8], %s11804
          %s11806 = sand.u32 %s135, 1
          %s11807 = smul.addr %s11806, 32
          %s11808 = scalar_lea.vmem [#allocation12], %s11807
          %11809 = dma.done %s11805, 512
        $region64: #{tpu_custom_call.1} parent=59 // pred_fallthru
          _
      $region60: #{tpu_custom_call.1} parent=5 // pred_fallthru
        _
    $region6: #{tpu_custom_call.1} parent=1 // loop_footer
      %s22 = sadd.s32 1, %s18
    $region7: #{tpu_custom_call.1} parent=1 // loop_footer_branch
      %17 = sbr.rel target = $region3
    $region8: #{tpu_custom_call.1} parent=1 // loop_exit
      _
    %11810 = vsyncpa [#allocation7], 1
    %s11811 = scalar_lea.sflag [#allocation7], 1
    %11812 = vsyncpa %s11811, 1
    %11813 = vsyncpa [#allocation10], 1
    %11814 = vsyncpa [#allocation8], 1
    %s11815 = scalar_lea.sflag [#allocation8], 1
    %11816 = vsyncpa %s11815, 1

</llo_original>
